<compile_context>
chip_gen: v7x
topology: tpu7x:2x2x1
jax: 0.10.0
libtpu: 0.0.40
codegen_flags: <defaults>
</compile_context>

<pallas_src>
import functools

import jax
import jax.numpy as jnp
from jax.experimental import pallas as pl
from jax.experimental.pallas import tpu as pltpu

LRELU_SLOPE = 0.2
BN_EPS = 1e-5


def _round_up(x, m):
    return (x + m - 1) // m * m


# ------------------------------ Pallas kernel ------------------------------

def _conv_kernel(scale_ref, shift_ref, x_ref, w_ref, b_ref, *rest,
                 kk, kw, wp, wo, mg, in_act, out_act, emit_stats, slope):
    """One fused conv layer, one grid step per batch element.

    Prologue applies the pending BatchNorm affine + LeakyReLU of the previous
    layer into a bf16 VMEM scratch.  The conv is an unrolled chain of kh*kw
    shifted (M, Cin) x (Cin, Cout) MXU matmuls accumulated in f32 ("garbage
    column" trick keeps every tap a contiguous 2-D window; invalid columns
    are masked for the BN stats and dropped by the JAX glue).  Epilogue adds
    bias, emits per-channel sum / sum-of-squares for the following BatchNorm
    (per batch element; reduced in JAX) and stores the raw conv output
    (LeakyReLU'd for the norm-free first layer)."""
    idx = 0
    out_ref = rest[idx]; idx += 1
    if emit_stats:
        sum_ref = rest[idx]; sq_ref = rest[idx + 1]; idx += 2
    xact_ref = rest[idx] if in_act else None

    if in_act:
        xf = x_ref[...].astype(jnp.float32)
        y = xf * scale_ref[...] + shift_ref[...]
        xact_ref[...] = jnp.maximum(y, slope * y).astype(jnp.bfloat16)
        src = xact_ref
    else:
        src = x_ref                                  # already bf16, no transform

    acc = None
    for t in range(kk):                              # unrolled tap loop
        di = t // kw
        dj = t - di * kw
        start = di * wp + dj                         # static flat shift of this tap
        a = src[pl.ds(start, mg), :]
        p = jnp.dot(a, w_ref[t], preferred_element_type=jnp.float32)
        acc = p if acc is None else acc + p

    r = acc + b_ref[...]

    if emit_stats:
        col = jax.lax.broadcasted_iota(jnp.int32, (mg, 1), 0) % wp
        rm = jnp.where(col < wo, r, 0.0)             # drop wrap-around garbage cols
        sum_ref[...] = jnp.sum(rm, axis=0, keepdims=True)
        sq_ref[...] = jnp.sum(rm * r, axis=0, keepdims=True)

    if out_act:
        r = jnp.maximum(r, slope * r)                # LeakyReLU as mul+max
    out_ref[...] = r.astype(out_ref.dtype)


def conv_layer(x_flat, w, b, scale, shift, *, kw, wp, wo, ho,
               in_act, out_act, emit_stats, out_dtype, slope=LRELU_SLOPE):
    """x_flat: (N, HpWp_pad, Cin) bf16 flattened padded image.
       w: (kh*kw, Cin, Cout) bf16, b: (1, Cout) f32, scale/shift: (1, Cin) f32."""
    n_batch, hpwp_pad, cin = x_flat.shape
    kk, cin_w, cout = w.shape
    assert cin_w == cin
    mg = ho * wp

    kern = functools.partial(_conv_kernel, kk=kk, kw=kw, wp=wp, wo=wo, mg=mg,
                             in_act=in_act, out_act=out_act,
                             emit_stats=emit_stats, slope=slope)

    out_shape = [jax.ShapeDtypeStruct((n_batch, mg, cout), out_dtype)]
    out_specs = [pl.BlockSpec((None, mg, cout), lambda n: (n, 0, 0))]
    if emit_stats:
        out_shape += [jax.ShapeDtypeStruct((n_batch, 1, cout), jnp.float32)] * 2
        out_specs += [pl.BlockSpec((None, 1, cout), lambda n: (n, 0, 0)),
                      pl.BlockSpec((None, 1, cout), lambda n: (n, 0, 0))]

    scratch = []
    if in_act:
        scratch.append(pltpu.VMEM((hpwp_pad, cin), jnp.bfloat16))  # activated input

    # Explicit VMEM budget computed from the resident set (+ headroom).
    out_item = jnp.dtype(out_dtype).itemsize
    est = (2 * hpwp_pad * cin * 2            # double-buffered bf16 input image
           + 2 * kk * cin * cout * 2         # conv weights (worst-case 2 bufs)
           + 2 * mg * cout * out_item        # double-buffered output
           + (hpwp_pad * cin * 2 if in_act else 0)   # bf16 xact scratch
           + 3 * mg * cout * 4)              # f32 accumulation temporaries
    vmem_limit = int(min(max(2 * est + (2 << 20), 32 << 20), 100 << 20))

    res = pl.pallas_call(
        kern,
        out_shape=tuple(out_shape),
        grid=(n_batch,),
        in_specs=[
            pl.BlockSpec((1, cin), lambda n: (0, 0)),                  # BN scale
            pl.BlockSpec((1, cin), lambda n: (0, 0)),                  # BN shift
            pl.BlockSpec((None, hpwp_pad, cin), lambda n: (n, 0, 0)),  # image
            pl.BlockSpec((kk, cin, cout), lambda n: (0, 0, 0)),        # weights (resident)
            pl.BlockSpec((1, cout), lambda n: (0, 0)),                 # bias
        ],
        out_specs=tuple(out_specs),
        scratch_shapes=tuple(scratch),
        compiler_params=pltpu.CompilerParams(
            dimension_semantics=("parallel",),
            vmem_limit_bytes=vmem_limit),
    )(scale, shift, x_flat, w, b)

    if emit_stats:
        return res[0], res[1], res[2]
    return res[0], None, None


# ----------------------------- layout helpers ------------------------------

def _space_to_depth(x):
    """(N, H, W, C) -> (N, H/2, W/2, 4C); packed channel = (pi*2+pj)*C + c."""
    n, h, w, c = x.shape
    x = x.reshape(n, h // 2, 2, w // 2, 2, c)
    x = jnp.transpose(x, (0, 1, 3, 2, 4, 5))
    return x.reshape(n, h // 2, w // 2, 4 * c)


def _prep_conv_weight(w_oihw, stride):
    """(Cout, Cin, 4, 4) -> (kh*kw, Cin_eff, Cout) matching the kernel layout."""
    cout, cin, _, _ = w_oihw.shape
    w = jnp.transpose(w_oihw, (2, 3, 1, 0))           # (4, 4, Cin, Cout)
    if stride == 2:
        w = w.reshape(2, 2, 2, 2, cin, cout)          # (di, pi, dj, pj, Cin, Cout)
        w = jnp.transpose(w, (0, 2, 1, 3, 4, 5))      # (di, dj, pi, pj, Cin, Cout)
        w = w.reshape(4, 4 * cin, cout)               # 2x2 conv over phase-packed x
    else:
        w = w.reshape(16, cin, cout)
    return w.astype(jnp.bfloat16)


def _layer_defs(input_nc, ndf, n_layers):
    defs = [dict(cin=input_nc, cout=ndf, stride=2, bn=False, out_act=True)]
    nf = 1
    for n in range(1, n_layers):
        nf_prev, nf = nf, min(2 ** n, 8)
        defs.append(dict(cin=ndf * nf_prev, cout=ndf * nf, stride=2, bn=True, out_act=False))
    nf_prev, nf = nf, min(2 ** n_layers, 8)
    defs.append(dict(cin=ndf * nf_prev, cout=ndf * nf, stride=1, bn=True, out_act=False))
    defs.append(dict(cin=ndf * nf, cout=1, stride=1, bn=False, out_act=False))
    return defs


def init_params(key, input_nc, ndf, n_layers):
    defs = _layer_defs(input_nc, ndf, n_layers)
    torch_layers, pallas_layers = [], []
    prev_pad = input_nc                        # layer-0 input channels not padded
    for li, d in enumerate(defs):
        key, k1, k2, k3, k4 = jax.random.split(key, 5)
        cin, cout, stride = d['cin'], d['cout'], d['stride']
        w = jax.random.normal(k1, (cout, cin, 4, 4), jnp.float32) / jnp.sqrt(cin * 16.0)
        if d['bn']:
            b = jnp.zeros((cout,), jnp.float32)        # bias=False before BatchNorm
            gamma = 1.0 + 0.1 * jax.random.normal(k3, (cout,), jnp.float32)
            beta = 0.1 * jax.random.normal(k4, (cout,), jnp.float32)
            bn = (gamma, beta)
        else:
            b = 0.05 * jax.random.normal(k2, (cout,), jnp.float32)
            bn = None
        torch_layers.append(dict(w=w, b=b, stride=stride, bn=bn,
                                 act=(li != len(defs) - 1)))

        # Kernel-side layout: Cout padded to a lane-dense multiple of 128; Cin
        # padded to the previous layer's padded Cout (zero rows).  Padded
        # channels carry exact zeros through the whole net (gamma/beta pad=0).
        cin_pad = prev_pad
        cout_pad = _round_up(cout, 128)
        w_p = jnp.zeros((cout_pad, cin_pad, 4, 4), jnp.float32)
        w_p = w_p.at[:cout, :cin].set(w)
        wk = _prep_conv_weight(w_p, stride)
        bk = jnp.zeros((cout_pad,), jnp.float32).at[:cout].set(b)
        if bn is not None:
            bn_pad = (jnp.zeros((cout_pad,), jnp.float32).at[:cout].set(gamma),
                      jnp.zeros((cout_pad,), jnp.float32).at[:cout].set(beta))
        else:
            bn_pad = None
        pallas_layers.append(dict(w=wk, b=bk.reshape(1, -1),
                                  stride=stride, bn=bn_pad, out_act=d['out_act']))
        prev_pad = cout_pad
    return dict(torch=torch_layers, pallas=pallas_layers, out_channels=1)


# ------------------------------- forward pass ------------------------------

def nlayer_discriminator_forward(x_nchw, params):
    layers = params['pallas']
    cur = jnp.transpose(x_nchw, (0, 2, 3, 1)).astype(jnp.bfloat16)   # NHWC bf16
    in_act = False
    scale = jnp.ones((cur.shape[-1],), jnp.float32)
    shift = jnp.zeros((cur.shape[-1],), jnp.float32)

    for li, L in enumerate(layers):
        N, H, W, C = cur.shape
        stride = L['stride']
        is_last = li == len(layers) - 1

        # Per-channel value that the fused (scale, shift, LeakyReLU) input
        # transform maps (to bf16 precision) to zero -> emulates zero padding.
        # TODO(synk): do the spatial pad inside the kernel prologue (exact 0).
        if in_act:
            safe = jnp.where(scale == 0, 1.0, scale)
            pv = jnp.where(scale == 0, 0.0, -shift / safe)
        else:
            pv = jnp.zeros((C,), jnp.float32)
        xp = jnp.broadcast_to(pv.astype(jnp.bfloat16), (N, H + 2, W + 2, C))
        xp = xp.at[:, 1:-1, 1:-1, :].set(cur)

        s_vec, t_vec = scale, shift
        if stride == 2:
            assert (H + 2) % 2 == 0 and (W + 2) % 2 == 0, "stride-2 conv needs even H, W"
            xp = _space_to_depth(xp)                  # stride-2 4x4 -> stride-1 2x2
            s_vec = jnp.tile(scale, 4)
            t_vec = jnp.tile(shift, 4)
            kh = kw = 2
        else:
            kh = kw = 4

        _, Hp, Wp, Cin = xp.shape
        Ho, Wo = Hp - kh + 1, Wp - kw + 1
        hpwp = Hp * Wp
        hpwp_pad = _round_up(hpwp + kw - 1, 8)
        x_flat = jnp.pad(xp.reshape(N, hpwp, Cin),
                         ((0, 0), (0, hpwp_pad - hpwp), (0, 0)))

        emit_stats = L['bn'] is not None
        out_flat, sums, sqs = conv_layer(
            x_flat, L['w'], L['b'],
            s_vec.reshape(1, -1).astype(jnp.float32),
            t_vec.reshape(1, -1).astype(jnp.float32),
            kw=kw, wp=Wp, wo=Wo, ho=Ho,
            in_act=in_act, out_act=L['out_act'], emit_stats=emit_stats,
            out_dtype=jnp.float32 if is_last else jnp.bfloat16)

        cout = L['w'].shape[-1]
        # TODO(synk): fuse this garbage-column drop + next layer's pad/s2d glue
        # into the kernels to remove the extra HBM passes per layer.
        cur = out_flat.reshape(N, Ho, Wp, cout)[:, :, :Wo, :]

        if emit_stats:
            gamma, beta = L['bn']
            cnt = N * Ho * Wo
            s = jnp.sum(sums, axis=(0, 1))
            q = jnp.sum(sqs, axis=(0, 1))
            mean = s / cnt
            var = jnp.maximum(q / cnt - mean * mean, 0.0)   # biased (train-mode BN)
            scale = gamma / jnp.sqrt(var + BN_EPS)
            shift = beta - mean * scale
            in_act = True
        else:
            scale = jnp.ones((cout,), jnp.float32)
            shift = jnp.zeros((cout,), jnp.float32)
            in_act = False

    out = cur[:, :, :, :params['out_channels']].astype(jnp.float32)
    return jnp.transpose(out, (0, 3, 1, 2))                      # back to NCHW


# ---------------------------- pure-JAX reference ---------------------------

def reference_forward(x_nchw, params):
    x = x_nchw.astype(jnp.float32)
    for L in params['torch']:
        y = jax.lax.conv_general_dilated(
            x, L['w'], window_strides=(L['stride'], L['stride']),
            padding=((1, 1), (1, 1)),
            dimension_numbers=('NCHW', 'OIHW', 'NCHW'))
        y = y + L['b'].reshape(1, -1, 1, 1)
        if L['bn'] is not None:
            gamma, beta = L['bn']
            mean = jnp.mean(y, axis=(0, 2, 3), keepdims=True)
            var = jnp.mean((y - mean) ** 2, axis=(0, 2, 3), keepdims=True)
            y = (y - mean) / jnp.sqrt(var + BN_EPS)
            y = y * gamma.reshape(1, -1, 1, 1) + beta.reshape(1, -1, 1, 1)
        if L['act']:
            y = jnp.where(y >= 0, y, LRELU_SLOPE * y)
        x = y
    return x


if __name__ == "__main__":
    key = jax.random.PRNGKey(0)
    k_in, k_p = jax.random.split(key)

    input_nc, ndf, n_layers = 4, 8, 3
    # spatial must be >= 32 so the two final stride-1 k=4 convs stay valid
    x = jax.random.normal(k_in, (2, input_nc, 32, 32), jnp.float32)
    params = init_params(k_p, input_nc, ndf, n_layers)

    fwd = jax.jit(lambda inp: nlayer_discriminator_forward(inp, params))
    out = jax.block_until_ready(fwd(x))

    # 32 ->16 ->8 ->4 (three stride-2 convs), then 4->3->2 (two stride-1 convs)
    assert out.shape == (2, 1, 2, 2), out.shape
    assert bool(jnp.all(jnp.isfinite(out)))

    ref = reference_forward(x, params)
    err = float(jnp.max(jnp.abs(out - ref)))
    tol = 0.1 * max(1.0, float(jnp.max(jnp.abs(ref))))
    assert err < tol, (err, tol)

    print("KERNEL_OK")
</pallas_src>

<mosaic_0001>
module attributes {stable_mosaic.version = 11 : i64} {
  func.func @_conv_kernel(%arg0: i32, %arg1: memref<1x16xf32, #tpu.memory_space<vmem>>, %arg2: memref<1x16xf32, #tpu.memory_space<vmem>>, %arg3: memref<1x296x16xbf16, #tpu.memory_space<vmem>>, %arg4: memref<4x16x128xbf16, #tpu.memory_space<vmem>>, %arg5: memref<1x128xf32, #tpu.memory_space<vmem>>, %arg6: memref<1x272x128xbf16, #tpu.memory_space<vmem>>) attributes {dimension_semantics = [#tpu.dimension_semantics<parallel>], iteration_bounds = array<i64: 2>, scalar_prefetch = 0 : i64, scratch_operands = 0 : i64, tpu.core_type = #tpu.core_type<tc>, window_params = [{pipeline_mode = #tpu.pipeline_mode<synchronous>, transform_indices = @transform_0, window_bounds = array<i64: 1, 16>}, {pipeline_mode = #tpu.pipeline_mode<synchronous>, transform_indices = @transform_1, window_bounds = array<i64: 1, 16>}, {transform_indices = @transform_2, window_bounds = array<i64: 1, 296, 16>}, {pipeline_mode = #tpu.pipeline_mode<synchronous>, transform_indices = @transform_3, window_bounds = array<i64: 4, 16, 128>}, {pipeline_mode = #tpu.pipeline_mode<synchronous>, transform_indices = @transform_4, window_bounds = array<i64: 1, 128>}, {transform_indices = @transform_5, window_bounds = array<i64: 1, 272, 128>}]} {
    %c0 = arith.constant 0 : index
    %c0_0 = arith.constant 0 : index
    %c0_1 = arith.constant 0 : index
    %0 = vector.load %arg3[%c0, %c0_0, %c0_1] : memref<1x296x16xbf16, #tpu.memory_space<vmem>>, vector<1x272x16xbf16>
    %1 = vector.shape_cast %0 : vector<1x272x16xbf16> to vector<272x16xbf16>
    %c0_2 = arith.constant 0 : index
    %c0_3 = arith.constant 0 : index
    %c0_4 = arith.constant 0 : index
    %2 = vector.load %arg4[%c0_2, %c0_3, %c0_4] : memref<4x16x128xbf16, #tpu.memory_space<vmem>>, vector<1x16x128xbf16>
    %3 = vector.shape_cast %2 : vector<1x16x128xbf16> to vector<16x128xbf16>
    %cst = arith.constant dense<0.000000e+00> : vector<272x128xf32>
    %4 = tpu.matmul %1, %3, %cst {dimension_numbers = #tpu.dot_dimension_numbers<[1], [0], [0], [1], [0, 0, 1, 1], [], []>} : vector<272x16xbf16>, vector<16x128xbf16>, vector<272x128xf32> -> vector<272x128xf32>
    %c0_5 = arith.constant 0 : index
    %c1 = arith.constant 1 : index
    %c0_6 = arith.constant 0 : index
    %5 = vector.load %arg3[%c0_5, %c1, %c0_6] : memref<1x296x16xbf16, #tpu.memory_space<vmem>>, vector<1x272x16xbf16>
    %6 = vector.shape_cast %5 : vector<1x272x16xbf16> to vector<272x16xbf16>
    %c1_7 = arith.constant 1 : index
    %c0_8 = arith.constant 0 : index
    %c0_9 = arith.constant 0 : index
    %7 = vector.load %arg4[%c1_7, %c0_8, %c0_9] : memref<4x16x128xbf16, #tpu.memory_space<vmem>>, vector<1x16x128xbf16>
    %8 = vector.shape_cast %7 : vector<1x16x128xbf16> to vector<16x128xbf16>
    %cst_10 = arith.constant dense<0.000000e+00> : vector<272x128xf32>
    %9 = tpu.matmul %6, %8, %cst_10 {dimension_numbers = #tpu.dot_dimension_numbers<[1], [0], [0], [1], [0, 0, 1, 1], [], []>} : vector<272x16xbf16>, vector<16x128xbf16>, vector<272x128xf32> -> vector<272x128xf32>
    %10 = arith.addf %4, %9 : vector<272x128xf32>
    %c0_11 = arith.constant 0 : index
    %c17 = arith.constant 17 : index
    %c0_12 = arith.constant 0 : index
    %11 = vector.load %arg3[%c0_11, %c17, %c0_12] : memref<1x296x16xbf16, #tpu.memory_space<vmem>>, vector<1x272x16xbf16>
    %12 = vector.shape_cast %11 : vector<1x272x16xbf16> to vector<272x16xbf16>
    %c2 = arith.constant 2 : index
    %c0_13 = arith.constant 0 : index
    %c0_14 = arith.constant 0 : index
    %13 = vector.load %arg4[%c2, %c0_13, %c0_14] : memref<4x16x128xbf16, #tpu.memory_space<vmem>>, vector<1x16x128xbf16>
    %14 = vector.shape_cast %13 : vector<1x16x128xbf16> to vector<16x128xbf16>
    %cst_15 = arith.constant dense<0.000000e+00> : vector<272x128xf32>
    %15 = tpu.matmul %12, %14, %cst_15 {dimension_numbers = #tpu.dot_dimension_numbers<[1], [0], [0], [1], [0, 0, 1, 1], [], []>} : vector<272x16xbf16>, vector<16x128xbf16>, vector<272x128xf32> -> vector<272x128xf32>
    %16 = arith.addf %10, %15 : vector<272x128xf32>
    %c0_16 = arith.constant 0 : index
    %c18 = arith.constant 18 : index
    %c0_17 = arith.constant 0 : index
    %17 = vector.load %arg3[%c0_16, %c18, %c0_17] : memref<1x296x16xbf16, #tpu.memory_space<vmem>>, vector<1x272x16xbf16>
    %18 = vector.shape_cast %17 : vector<1x272x16xbf16> to vector<272x16xbf16>
    %c3 = arith.constant 3 : index
    %c0_18 = arith.constant 0 : index
    %c0_19 = arith.constant 0 : index
    %19 = vector.load %arg4[%c3, %c0_18, %c0_19] : memref<4x16x128xbf16, #tpu.memory_space<vmem>>, vector<1x16x128xbf16>
    %20 = vector.shape_cast %19 : vector<1x16x128xbf16> to vector<16x128xbf16>
    %cst_20 = arith.constant dense<0.000000e+00> : vector<272x128xf32>
    %21 = tpu.matmul %18, %20, %cst_20 {dimension_numbers = #tpu.dot_dimension_numbers<[1], [0], [0], [1], [0, 0, 1, 1], [], []>} : vector<272x16xbf16>, vector<16x128xbf16>, vector<272x128xf32> -> vector<272x128xf32>
    %22 = arith.addf %16, %21 : vector<272x128xf32>
    %c0_21 = arith.constant 0 : index
    %c0_22 = arith.constant 0 : index
    %23 = vector.load %arg5[%c0_21, %c0_22] : memref<1x128xf32, #tpu.memory_space<vmem>>, vector<1x128xf32>
    %24 = vector.broadcast %23 : vector<1x128xf32> to vector<272x128xf32>
    %25 = arith.addf %22, %24 : vector<272x128xf32>
    %cst_23 = arith.constant 2.000000e-01 : f32
    %26 = vector.broadcast %cst_23 : f32 to vector<272x128xf32>
    %27 = arith.mulf %26, %25 : vector<272x128xf32>
    %28 = arith.maximumf %25, %27 : vector<272x128xf32>
    %29 = arith.truncf %28 : vector<272x128xf32> to vector<272x128xbf16>
    %c0_24 = arith.constant 0 : index
    %c0_25 = arith.constant 0 : index
    %c0_26 = arith.constant 0 : index
    %30 = vector.load %arg6[%c0_24, %c0_25, %c0_26] : memref<1x272x128xbf16, #tpu.memory_space<vmem>>, vector<1x272x128xbf16>
    %31 = vector.shape_cast %30 : vector<1x272x128xbf16> to vector<272x128xbf16>
    %32 = vector.shape_cast %29 : vector<272x128xbf16> to vector<1x272x128xbf16>
    tpu.vector_store %arg6[%c0_24, %c0_25, %c0_26], %32 {strides = array<i32>} : memref<1x272x128xbf16, #tpu.memory_space<vmem>>, vector<1x272x128xbf16>,
    return
  }
  func.func @transform_0(%arg0: i32) -> (i32, i32) {
    %c0_i32 = arith.constant 0 : i32
    %c0_i32_0 = arith.constant 0 : i32
    %c0_i32_1 = arith.constant 0 : i32
    return %c0_i32, %c0_i32_0 : i32, i32
  }
  func.func @transform_1(%arg0: i32) -> (i32, i32) {
    %c0_i32 = arith.constant 0 : i32
    %c0_i32_0 = arith.constant 0 : i32
    %c0_i32_1 = arith.constant 0 : i32
    return %c0_i32, %c0_i32_0 : i32, i32
  }
  func.func @transform_2(%arg0: i32) -> (i32, i32, i32) {
    %c0_i32 = arith.constant 0 : i32
    %c0_i32_0 = arith.constant 0 : i32
    %c0_i32_1 = arith.constant 0 : i32
    return %arg0, %c0_i32, %c0_i32_0 : i32, i32, i32
  }
  func.func @transform_3(%arg0: i32) -> (i32, i32, i32) {
    %c0_i32 = arith.constant 0 : i32
    %c0_i32_0 = arith.constant 0 : i32
    %c0_i32_1 = arith.constant 0 : i32
    %c0_i32_2 = arith.constant 0 : i32
    return %c0_i32, %c0_i32_0, %c0_i32_1 : i32, i32, i32
  }
  func.func @transform_4(%arg0: i32) -> (i32, i32) {
    %c0_i32 = arith.constant 0 : i32
    %c0_i32_0 = arith.constant 0 : i32
    %c0_i32_1 = arith.constant 0 : i32
    return %c0_i32, %c0_i32_0 : i32, i32
  }
  func.func @transform_5(%arg0: i32) -> (i32, i32, i32) {
    %c0_i32 = arith.constant 0 : i32
    %c0_i32_0 = arith.constant 0 : i32
    %c0_i32_1 = arith.constant 0 : i32
    return %arg0, %c0_i32, %c0_i32_0 : i32, i32, i32
  }
}

module attributes {stable_mosaic.version = 11 : i64} {
  func.func @_conv_kernel(%arg0: i32, %arg1: memref<1x512xf32, #tpu.memory_space<vmem>>, %arg2: memref<1x512xf32, #tpu.memory_space<vmem>>, %arg3: memref<1x88x512xbf16, #tpu.memory_space<vmem>>, %arg4: memref<4x512x128xbf16, #tpu.memory_space<vmem>>, %arg5: memref<1x128xf32, #tpu.memory_space<vmem>>, %arg6: memref<1x72x128xbf16, #tpu.memory_space<vmem>>, %arg7: memref<1x1x128xf32, #tpu.memory_space<vmem>>, %arg8: memref<1x1x128xf32, #tpu.memory_space<vmem>>) attributes {dimension_semantics = [#tpu.dimension_semantics<parallel>], iteration_bounds = array<i64: 2>, scalar_prefetch = 0 : i64, scratch_operands = 0 : i64, tpu.core_type = #tpu.core_type<tc>, window_params = [{pipeline_mode = #tpu.pipeline_mode<synchronous>, transform_indices = @transform_0, window_bounds = array<i64: 1, 512>}, {pipeline_mode = #tpu.pipeline_mode<synchronous>, transform_indices = @transform_1, window_bounds = array<i64: 1, 512>}, {transform_indices = @transform_2, window_bounds = array<i64: 1, 88, 512>}, {pipeline_mode = #tpu.pipeline_mode<synchronous>, transform_indices = @transform_3, window_bounds = array<i64: 4, 512, 128>}, {pipeline_mode = #tpu.pipeline_mode<synchronous>, transform_indices = @transform_4, window_bounds = array<i64: 1, 128>}, {transform_indices = @transform_5, window_bounds = array<i64: 1, 72, 128>}, {transform_indices = @transform_6, window_bounds = array<i64: 1, 1, 128>}, {transform_indices = @transform_7, window_bounds = array<i64: 1, 1, 128>}]} {
    %c0 = arith.constant 0 : index
    %c0_0 = arith.constant 0 : index
    %c0_1 = arith.constant 0 : index
    %0 = vector.load %arg3[%c0, %c0_0, %c0_1] : memref<1x88x512xbf16, #tpu.memory_space<vmem>>, vector<1x72x512xbf16>
    %1 = vector.shape_cast %0 : vector<1x72x512xbf16> to vector<72x512xbf16>
    %c0_2 = arith.constant 0 : index
    %c0_3 = arith.constant 0 : index
    %c0_4 = arith.constant 0 : index
    %2 = vector.load %arg4[%c0_2, %c0_3, %c0_4] : memref<4x512x128xbf16, #tpu.memory_space<vmem>>, vector<1x512x128xbf16>
    %3 = vector.shape_cast %2 : vector<1x512x128xbf16> to vector<512x128xbf16>
    %cst = arith.constant dense<0.000000e+00> : vector<72x128xf32>
    %4 = tpu.matmul %1, %3, %cst {dimension_numbers = #tpu.dot_dimension_numbers<[1], [0], [0], [1], [0, 0, 1, 1], [], []>} : vector<72x512xbf16>, vector<512x128xbf16>, vector<72x128xf32> -> vector<72x128xf32>
    %c0_5 = arith.constant 0 : index
    %c1 = arith.constant 1 : index
    %c0_6 = arith.constant 0 : index
    %5 = vector.load %arg3[%c0_5, %c1, %c0_6] : memref<1x88x512xbf16, #tpu.memory_space<vmem>>, vector<1x72x512xbf16>
    %6 = vector.shape_cast %5 : vector<1x72x512xbf16> to vector<72x512xbf16>
    %c1_7 = arith.constant 1 : index
    %c0_8 = arith.constant 0 : index
    %c0_9 = arith.constant 0 : index
    %7 = vector.load %arg4[%c1_7, %c0_8, %c0_9] : memref<4x512x128xbf16, #tpu.memory_space<vmem>>, vector<1x512x128xbf16>
    %8 = vector.shape_cast %7 : vector<1x512x128xbf16> to vector<512x128xbf16>
    %cst_10 = arith.constant dense<0.000000e+00> : vector<72x128xf32>
    %9 = tpu.matmul %6, %8, %cst_10 {dimension_numbers = #tpu.dot_dimension_numbers<[1], [0], [0], [1], [0, 0, 1, 1], [], []>} : vector<72x512xbf16>, vector<512x128xbf16>, vector<72x128xf32> -> vector<72x128xf32>
    %10 = arith.addf %4, %9 : vector<72x128xf32>
    %c0_11 = arith.constant 0 : index
    %c9 = arith.constant 9 : index
    %c0_12 = arith.constant 0 : index
    %11 = vector.load %arg3[%c0_11, %c9, %c0_12] : memref<1x88x512xbf16, #tpu.memory_space<vmem>>, vector<1x72x512xbf16>
    %12 = vector.shape_cast %11 : vector<1x72x512xbf16> to vector<72x512xbf16>
    %c2 = arith.constant 2 : index
    %c0_13 = arith.constant 0 : index
    %c0_14 = arith.constant 0 : index
    %13 = vector.load %arg4[%c2, %c0_13, %c0_14] : memref<4x512x128xbf16, #tpu.memory_space<vmem>>, vector<1x512x128xbf16>
    %14 = vector.shape_cast %13 : vector<1x512x128xbf16> to vector<512x128xbf16>
    %cst_15 = arith.constant dense<0.000000e+00> : vector<72x128xf32>
    %15 = tpu.matmul %12, %14, %cst_15 {dimension_numbers = #tpu.dot_dimension_numbers<[1], [0], [0], [1], [0, 0, 1, 1], [], []>} : vector<72x512xbf16>, vector<512x128xbf16>, vector<72x128xf32> -> vector<72x128xf32>
    %16 = arith.addf %10, %15 : vector<72x128xf32>
    %c0_16 = arith.constant 0 : index
    %c10 = arith.constant 10 : index
    %c0_17 = arith.constant 0 : index
    %17 = vector.load %arg3[%c0_16, %c10, %c0_17] : memref<1x88x512xbf16, #tpu.memory_space<vmem>>, vector<1x72x512xbf16>
    %18 = vector.shape_cast %17 : vector<1x72x512xbf16> to vector<72x512xbf16>
    %c3 = arith.constant 3 : index
    %c0_18 = arith.constant 0 : index
    %c0_19 = arith.constant 0 : index
    %19 = vector.load %arg4[%c3, %c0_18, %c0_19] : memref<4x512x128xbf16, #tpu.memory_space<vmem>>, vector<1x512x128xbf16>
    %20 = vector.shape_cast %19 : vector<1x512x128xbf16> to vector<512x128xbf16>
    %cst_20 = arith.constant dense<0.000000e+00> : vector<72x128xf32>
    %21 = tpu.matmul %18, %20, %cst_20 {dimension_numbers = #tpu.dot_dimension_numbers<[1], [0], [0], [1], [0, 0, 1, 1], [], []>} : vector<72x512xbf16>, vector<512x128xbf16>, vector<72x128xf32> -> vector<72x128xf32>
    %22 = arith.addf %16, %21 : vector<72x128xf32>
    %c0_21 = arith.constant 0 : index
    %c0_22 = arith.constant 0 : index
    %23 = vector.load %arg5[%c0_21, %c0_22] : memref<1x128xf32, #tpu.memory_space<vmem>>, vector<1x128xf32>
    %24 = vector.broadcast %23 : vector<1x128xf32> to vector<72x128xf32>
    %25 = arith.addf %22, %24 : vector<72x128xf32>
    %26 = tpu.iota {dimensions = array<i32: 0>} : vector<72x1xi32>
    %c9_i32 = arith.constant 9 : i32
    %c0_i32 = arith.constant 0 : i32
    %27 = arith.cmpi eq, %c9_i32, %c0_i32 : i32
    %c1_i32 = arith.constant 1 : i32
    %28 = arith.select %27, %c1_i32, %c9_i32 : i32
    %29 = vector.broadcast %28 : i32 to vector<72x1xi32>
    %30 = arith.remsi %26, %29 : vector<72x1xi32>
    %c0_i32_23 = arith.constant 0 : i32
    %31 = vector.broadcast %c0_i32_23 : i32 to vector<72x1xi32>
    %32 = arith.cmpi ne, %30, %31 : vector<72x1xi32>
    %c0_i32_24 = arith.constant 0 : i32
    %33 = vector.broadcast %c0_i32_24 : i32 to vector<72x1xi32>
    %34 = arith.cmpi slt, %30, %33 : vector<72x1xi32>
    %c0_i32_25 = arith.constant 0 : i32
    %35 = arith.cmpi slt, %28, %c0_i32_25 : i32
    %36 = vector.broadcast %35 : i1 to vector<72x1xi1>
    %37 = vector.broadcast %36 : vector<72x1xi1> to vector<72x1xi1>
    %38 = arith.xori %34, %37 : vector<72x1xi1>
    %39 = arith.andi %38, %32 : vector<72x1xi1>
    %40 = vector.broadcast %28 : i32 to vector<72x1xi32>
    %41 = arith.addi %30, %40 : vector<72x1xi32>
    %42 = arith.select %39, %41, %30 : vector<72x1xi1>, vector<72x1xi32>
    %c8_i32 = arith.constant 8 : i32
    %43 = vector.broadcast %c8_i32 : i32 to vector<72x1xi32>
    %44 = arith.cmpi slt, %42, %43 : vector<72x1xi32>
    %cst_26 = arith.constant 0.000000e+00 : f32
    %45 = vector.shape_cast %44 : vector<72x1xi1> to vector<72x1xi1>
    %46 = vector.broadcast %45 : vector<72x1xi1> to vector<72x128xi1>
    %47 = vector.broadcast %cst_26 : f32 to vector<72x128xf32>
    %48 = arith.select %46, %25, %47 : vector<72x128xi1>, vector<72x128xf32>
    %cst_27 = arith.constant dense<0.000000e+00> : vector<128xf32>
    %49 = vector.multi_reduction <add>, %48, %cst_27 [0] : vector<72x128xf32> to vector<128xf32>
    %50 = vector.shape_cast %49 : vector<128xf32> to vector<1x128xf32>
    %c0_28 = arith.constant 0 : index
    %c0_29 = arith.constant 0 : index
    %c0_30 = arith.constant 0 : index
    %51 = vector.load %arg7[%c0_28, %c0_29, %c0_30] : memref<1x1x128xf32, #tpu.memory_space<vmem>>, vector<1x1x128xf32>
    %52 = vector.shape_cast %51 : vector<1x1x128xf32> to vector<1x128xf32>
    %53 = vector.shape_cast %50 : vector<1x128xf32> to vector<1x1x128xf32>
    tpu.vector_store %arg7[%c0_28, %c0_29, %c0_30], %53 {strides = array<i32>} : memref<1x1x128xf32, #tpu.memory_space<vmem>>, vector<1x1x128xf32>,
    %54 = arith.mulf %48, %25 : vector<72x128xf32>
    %cst_31 = arith.constant dense<0.000000e+00> : vector<128xf32>
    %55 = vector.multi_reduction <add>, %54, %cst_31 [0] : vector<72x128xf32> to vector<128xf32>
    %56 = vector.shape_cast %55 : vector<128xf32> to vector<1x128xf32>
    %c0_32 = arith.constant 0 : index
    %c0_33 = arith.constant 0 : index
    %c0_34 = arith.constant 0 : index
    %57 = vector.load %arg8[%c0_32, %c0_33, %c0_34] : memref<1x1x128xf32, #tpu.memory_space<vmem>>, vector<1x1x128xf32>
    %58 = vector.shape_cast %57 : vector<1x1x128xf32> to vector<1x128xf32>
    %59 = vector.shape_cast %56 : vector<1x128xf32> to vector<1x1x128xf32>
    tpu.vector_store %arg8[%c0_32, %c0_33, %c0_34], %59 {strides = array<i32>} : memref<1x1x128xf32, #tpu.memory_space<vmem>>, vector<1x1x128xf32>,
    %60 = arith.truncf %25 : vector<72x128xf32> to vector<72x128xbf16>
    %c0_35 = arith.constant 0 : index
    %c0_36 = arith.constant 0 : index
    %c0_37 = arith.constant 0 : index
    %61 = vector.load %arg6[%c0_35, %c0_36, %c0_37] : memref<1x72x128xbf16, #tpu.memory_space<vmem>>, vector<1x72x128xbf16>
    %62 = vector.shape_cast %61 : vector<1x72x128xbf16> to vector<72x128xbf16>
    %63 = vector.shape_cast %60 : vector<72x128xbf16> to vector<1x72x128xbf16>
    tpu.vector_store %arg6[%c0_35, %c0_36, %c0_37], %63 {strides = array<i32>} : memref<1x72x128xbf16, #tpu.memory_space<vmem>>, vector<1x72x128xbf16>,
    return
  }
  func.func @transform_0(%arg0: i32) -> (i32, i32) {
    %c0_i32 = arith.constant 0 : i32
    %c0_i32_0 = arith.constant 0 : i32
    %c0_i32_1 = arith.constant 0 : i32
    return %c0_i32, %c0_i32_0 : i32, i32
  }
  func.func @transform_1(%arg0: i32) -> (i32, i32) {
    %c0_i32 = arith.constant 0 : i32
    %c0_i32_0 = arith.constant 0 : i32
    %c0_i32_1 = arith.constant 0 : i32
    return %c0_i32, %c0_i32_0 : i32, i32
  }
  func.func @transform_2(%arg0: i32) -> (i32, i32, i32) {
    %c0_i32 = arith.constant 0 : i32
    %c0_i32_0 = arith.constant 0 : i32
    %c0_i32_1 = arith.constant 0 : i32
    return %arg0, %c0_i32, %c0_i32_0 : i32, i32, i32
  }
  func.func @transform_3(%arg0: i32) -> (i32, i32, i32) {
    %c0_i32 = arith.constant 0 : i32
    %c0_i32_0 = arith.constant 0 : i32
    %c0_i32_1 = arith.constant 0 : i32
    %c0_i32_2 = arith.constant 0 : i32
    return %c0_i32, %c0_i32_0, %c0_i32_1 : i32, i32, i32
  }
  func.func @transform_4(%arg0: i32) -> (i32, i32) {
    %c0_i32 = arith.constant 0 : i32
    %c0_i32_0 = arith.constant 0 : i32
    %c0_i32_1 = arith.constant 0 : i32
    return %c0_i32, %c0_i32_0 : i32, i32
  }
  func.func @transform_5(%arg0: i32) -> (i32, i32, i32) {
    %c0_i32 = arith.constant 0 : i32
    %c0_i32_0 = arith.constant 0 : i32
    %c0_i32_1 = arith.constant 0 : i32
    return %arg0, %c0_i32, %c0_i32_0 : i32, i32, i32
  }
  func.func @transform_6(%arg0: i32) -> (i32, i32, i32) {
    %c0_i32 = arith.constant 0 : i32
    %c0_i32_0 = arith.constant 0 : i32
    %c0_i32_1 = arith.constant 0 : i32
    return %arg0, %c0_i32, %c0_i32_0 : i32, i32, i32
  }
  func.func @transform_7(%arg0: i32) -> (i32, i32, i32) {
    %c0_i32 = arith.constant 0 : i32
    %c0_i32_0 = arith.constant 0 : i32
    %c0_i32_1 = arith.constant 0 : i32
    return %arg0, %c0_i32, %c0_i32_0 : i32, i32, i32
  }
}

module attributes {stable_mosaic.version = 11 : i64} {
  func.func @_conv_kernel(%arg0: i32, %arg1: memref<1x512xf32, #tpu.memory_space<vmem>>, %arg2: memref<1x512xf32, #tpu.memory_space<vmem>>, %arg3: memref<1x32x512xbf16, #tpu.memory_space<vmem>>, %arg4: memref<4x512x128xbf16, #tpu.memory_space<vmem>>, %arg5: memref<1x128xf32, #tpu.memory_space<vmem>>, %arg6: memref<1x20x128xbf16, #tpu.memory_space<vmem>>, %arg7: memref<1x1x128xf32, #tpu.memory_space<vmem>>, %arg8: memref<1x1x128xf32, #tpu.memory_space<vmem>>, %arg9: memref<32x512xbf16, #tpu.memory_space<vmem>>) attributes {dimension_semantics = [#tpu.dimension_semantics<parallel>], iteration_bounds = array<i64: 2>, scalar_prefetch = 0 : i64, scratch_operands = 1 : i64, tpu.core_type = #tpu.core_type<tc>, window_params = [{pipeline_mode = #tpu.pipeline_mode<synchronous>, transform_indices = @transform_0, window_bounds = array<i64: 1, 512>}, {pipeline_mode = #tpu.pipeline_mode<synchronous>, transform_indices = @transform_1, window_bounds = array<i64: 1, 512>}, {transform_indices = @transform_2, window_bounds = array<i64: 1, 32, 512>}, {pipeline_mode = #tpu.pipeline_mode<synchronous>, transform_indices = @transform_3, window_bounds = array<i64: 4, 512, 128>}, {pipeline_mode = #tpu.pipeline_mode<synchronous>, transform_indices = @transform_4, window_bounds = array<i64: 1, 128>}, {transform_indices = @transform_5, window_bounds = array<i64: 1, 20, 128>}, {transform_indices = @transform_6, window_bounds = array<i64: 1, 1, 128>}, {transform_indices = @transform_7, window_bounds = array<i64: 1, 1, 128>}]} {
    %c0 = arith.constant 0 : index
    %c0_0 = arith.constant 0 : index
    %c0_1 = arith.constant 0 : index
    %0 = vector.load %arg3[%c0, %c0_0, %c0_1] : memref<1x32x512xbf16, #tpu.memory_space<vmem>>, vector<1x32x512xbf16>
    %1 = vector.shape_cast %0 : vector<1x32x512xbf16> to vector<32x512xbf16>
    %2 = arith.extf %1 : vector<32x512xbf16> to vector<32x512xf32>
    %c0_2 = arith.constant 0 : index
    %c0_3 = arith.constant 0 : index
    %3 = vector.load %arg1[%c0_2, %c0_3] : memref<1x512xf32, #tpu.memory_space<vmem>>, vector<1x512xf32>
    %4 = vector.broadcast %3 : vector<1x512xf32> to vector<32x512xf32>
    %5 = arith.mulf %2, %4 : vector<32x512xf32>
    %c0_4 = arith.constant 0 : index
    %c0_5 = arith.constant 0 : index
    %6 = vector.load %arg2[%c0_4, %c0_5] : memref<1x512xf32, #tpu.memory_space<vmem>>, vector<1x512xf32>
    %7 = vector.broadcast %6 : vector<1x512xf32> to vector<32x512xf32>
    %8 = arith.addf %5, %7 : vector<32x512xf32>
    %cst = arith.constant 2.000000e-01 : f32
    %9 = vector.broadcast %cst : f32 to vector<32x512xf32>
    %10 = arith.mulf %9, %8 : vector<32x512xf32>
    %11 = arith.maximumf %8, %10 : vector<32x512xf32>
    %12 = arith.truncf %11 : vector<32x512xf32> to vector<32x512xbf16>
    %c0_6 = arith.constant 0 : index
    %c0_7 = arith.constant 0 : index
    %13 = vector.load %arg9[%c0_6, %c0_7] : memref<32x512xbf16, #tpu.memory_space<vmem>>, vector<32x512xbf16>
    tpu.vector_store %arg9[%c0_6, %c0_7], %12 {strides = array<i32>} : memref<32x512xbf16, #tpu.memory_space<vmem>>, vector<32x512xbf16>,
    %c0_8 = arith.constant 0 : index
    %c0_9 = arith.constant 0 : index
    %14 = vector.load %arg9[%c0_8, %c0_9] : memref<32x512xbf16, #tpu.memory_space<vmem>>, vector<20x512xbf16>
    %c0_10 = arith.constant 0 : index
    %c0_11 = arith.constant 0 : index
    %c0_12 = arith.constant 0 : index
    %15 = vector.load %arg4[%c0_10, %c0_11, %c0_12] : memref<4x512x128xbf16, #tpu.memory_space<vmem>>, vector<1x512x128xbf16>
    %16 = vector.shape_cast %15 : vector<1x512x128xbf16> to vector<512x128xbf16>
    %cst_13 = arith.constant dense<0.000000e+00> : vector<20x128xf32>
    %17 = tpu.matmul %14, %16, %cst_13 {dimension_numbers = #tpu.dot_dimension_numbers<[1], [0], [0], [1], [0, 0, 1, 1], [], []>} : vector<20x512xbf16>, vector<512x128xbf16>, vector<20x128xf32> -> vector<20x128xf32>
    %c1 = arith.constant 1 : index
    %c0_14 = arith.constant 0 : index
    %18 = vector.load %arg9[%c1, %c0_14] : memref<32x512xbf16, #tpu.memory_space<vmem>>, vector<20x512xbf16>
    %c1_15 = arith.constant 1 : index
    %c0_16 = arith.constant 0 : index
    %c0_17 = arith.constant 0 : index
    %19 = vector.load %arg4[%c1_15, %c0_16, %c0_17] : memref<4x512x128xbf16, #tpu.memory_space<vmem>>, vector<1x512x128xbf16>
    %20 = vector.shape_cast %19 : vector<1x512x128xbf16> to vector<512x128xbf16>
    %cst_18 = arith.constant dense<0.000000e+00> : vector<20x128xf32>
    %21 = tpu.matmul %18, %20, %cst_18 {dimension_numbers = #tpu.dot_dimension_numbers<[1], [0], [0], [1], [0, 0, 1, 1], [], []>} : vector<20x512xbf16>, vector<512x128xbf16>, vector<20x128xf32> -> vector<20x128xf32>
    %22 = arith.addf %17, %21 : vector<20x128xf32>
    %c5 = arith.constant 5 : index
    %c0_19 = arith.constant 0 : index
    %23 = vector.load %arg9[%c5, %c0_19] : memref<32x512xbf16, #tpu.memory_space<vmem>>, vector<20x512xbf16>
    %c2 = arith.constant 2 : index
    %c0_20 = arith.constant 0 : index
    %c0_21 = arith.constant 0 : index
    %24 = vector.load %arg4[%c2, %c0_20, %c0_21] : memref<4x512x128xbf16, #tpu.memory_space<vmem>>, vector<1x512x128xbf16>
    %25 = vector.shape_cast %24 : vector<1x512x128xbf16> to vector<512x128xbf16>
    %cst_22 = arith.constant dense<0.000000e+00> : vector<20x128xf32>
    %26 = tpu.matmul %23, %25, %cst_22 {dimension_numbers = #tpu.dot_dimension_numbers<[1], [0], [0], [1], [0, 0, 1, 1], [], []>} : vector<20x512xbf16>, vector<512x128xbf16>, vector<20x128xf32> -> vector<20x128xf32>
    %27 = arith.addf %22, %26 : vector<20x128xf32>
    %c6 = arith.constant 6 : index
    %c0_23 = arith.constant 0 : index
    %28 = vector.load %arg9[%c6, %c0_23] : memref<32x512xbf16, #tpu.memory_space<vmem>>, vector<20x512xbf16>
    %c3 = arith.constant 3 : index
    %c0_24 = arith.constant 0 : index
    %c0_25 = arith.constant 0 : index
    %29 = vector.load %arg4[%c3, %c0_24, %c0_25] : memref<4x512x128xbf16, #tpu.memory_space<vmem>>, vector<1x512x128xbf16>
    %30 = vector.shape_cast %29 : vector<1x512x128xbf16> to vector<512x128xbf16>
    %cst_26 = arith.constant dense<0.000000e+00> : vector<20x128xf32>
    %31 = tpu.matmul %28, %30, %cst_26 {dimension_numbers = #tpu.dot_dimension_numbers<[1], [0], [0], [1], [0, 0, 1, 1], [], []>} : vector<20x512xbf16>, vector<512x128xbf16>, vector<20x128xf32> -> vector<20x128xf32>
    %32 = arith.addf %27, %31 : vector<20x128xf32>
    %c0_27 = arith.constant 0 : index
    %c0_28 = arith.constant 0 : index
    %33 = vector.load %arg5[%c0_27, %c0_28] : memref<1x128xf32, #tpu.memory_space<vmem>>, vector<1x128xf32>
    %34 = vector.broadcast %33 : vector<1x128xf32> to vector<20x128xf32>
    %35 = arith.addf %32, %34 : vector<20x128xf32>
    %36 = tpu.iota {dimensions = array<i32: 0>} : vector<20x1xi32>
    %c5_i32 = arith.constant 5 : i32
    %c0_i32 = arith.constant 0 : i32
    %37 = arith.cmpi eq, %c5_i32, %c0_i32 : i32
    %c1_i32 = arith.constant 1 : i32
    %38 = arith.select %37, %c1_i32, %c5_i32 : i32
    %39 = vector.broadcast %38 : i32 to vector<20x1xi32>
    %40 = arith.remsi %36, %39 : vector<20x1xi32>
    %c0_i32_29 = arith.constant 0 : i32
    %41 = vector.broadcast %c0_i32_29 : i32 to vector<20x1xi32>
    %42 = arith.cmpi ne, %40, %41 : vector<20x1xi32>
    %c0_i32_30 = arith.constant 0 : i32
    %43 = vector.broadcast %c0_i32_30 : i32 to vector<20x1xi32>
    %44 = arith.cmpi slt, %40, %43 : vector<20x1xi32>
    %c0_i32_31 = arith.constant 0 : i32
    %45 = arith.cmpi slt, %38, %c0_i32_31 : i32
    %46 = vector.broadcast %45 : i1 to vector<20x1xi1>
    %47 = vector.broadcast %46 : vector<20x1xi1> to vector<20x1xi1>
    %48 = arith.xori %44, %47 : vector<20x1xi1>
    %49 = arith.andi %48, %42 : vector<20x1xi1>
    %50 = vector.broadcast %38 : i32 to vector<20x1xi32>
    %51 = arith.addi %40, %50 : vector<20x1xi32>
    %52 = arith.select %49, %51, %40 : vector<20x1xi1>, vector<20x1xi32>
    %c4_i32 = arith.constant 4 : i32
    %53 = vector.broadcast %c4_i32 : i32 to vector<20x1xi32>
    %54 = arith.cmpi slt, %52, %53 : vector<20x1xi32>
    %cst_32 = arith.constant 0.000000e+00 : f32
    %55 = vector.shape_cast %54 : vector<20x1xi1> to vector<20x1xi1>
    %56 = vector.broadcast %55 : vector<20x1xi1> to vector<20x128xi1>
    %57 = vector.broadcast %cst_32 : f32 to vector<20x128xf32>
    %58 = arith.select %56, %35, %57 : vector<20x128xi1>, vector<20x128xf32>
    %cst_33 = arith.constant dense<0.000000e+00> : vector<128xf32>
    %59 = vector.multi_reduction <add>, %58, %cst_33 [0] : vector<20x128xf32> to vector<128xf32>
    %60 = vector.shape_cast %59 : vector<128xf32> to vector<1x128xf32>
    %c0_34 = arith.constant 0 : index
    %c0_35 = arith.constant 0 : index
    %c0_36 = arith.constant 0 : index
    %61 = vector.load %arg7[%c0_34, %c0_35, %c0_36] : memref<1x1x128xf32, #tpu.memory_space<vmem>>, vector<1x1x128xf32>
    %62 = vector.shape_cast %61 : vector<1x1x128xf32> to vector<1x128xf32>
    %63 = vector.shape_cast %60 : vector<1x128xf32> to vector<1x1x128xf32>
    tpu.vector_store %arg7[%c0_34, %c0_35, %c0_36], %63 {strides = array<i32>} : memref<1x1x128xf32, #tpu.memory_space<vmem>>, vector<1x1x128xf32>,
    %64 = arith.mulf %58, %35 : vector<20x128xf32>
    %cst_37 = arith.constant dense<0.000000e+00> : vector<128xf32>
    %65 = vector.multi_reduction <add>, %64, %cst_37 [0] : vector<20x128xf32> to vector<128xf32>
    %66 = vector.shape_cast %65 : vector<128xf32> to vector<1x128xf32>
    %c0_38 = arith.constant 0 : index
    %c0_39 = arith.constant 0 : index
    %c0_40 = arith.constant 0 : index
    %67 = vector.load %arg8[%c0_38, %c0_39, %c0_40] : memref<1x1x128xf32, #tpu.memory_space<vmem>>, vector<1x1x128xf32>
    %68 = vector.shape_cast %67 : vector<1x1x128xf32> to vector<1x128xf32>
    %69 = vector.shape_cast %66 : vector<1x128xf32> to vector<1x1x128xf32>
    tpu.vector_store %arg8[%c0_38, %c0_39, %c0_40], %69 {strides = array<i32>} : memref<1x1x128xf32, #tpu.memory_space<vmem>>, vector<1x1x128xf32>,
    %70 = arith.truncf %35 : vector<20x128xf32> to vector<20x128xbf16>
    %c0_41 = arith.constant 0 : index
    %c0_42 = arith.constant 0 : index
    %c0_43 = arith.constant 0 : index
    %71 = vector.load %arg6[%c0_41, %c0_42, %c0_43] : memref<1x20x128xbf16, #tpu.memory_space<vmem>>, vector<1x20x128xbf16>
    %72 = vector.shape_cast %71 : vector<1x20x128xbf16> to vector<20x128xbf16>
    %73 = vector.shape_cast %70 : vector<20x128xbf16> to vector<1x20x128xbf16>
    tpu.vector_store %arg6[%c0_41, %c0_42, %c0_43], %73 {strides = array<i32>} : memref<1x20x128xbf16, #tpu.memory_space<vmem>>, vector<1x20x128xbf16>,
    return
  }
  func.func @transform_0(%arg0: i32) -> (i32, i32) {
    %c0_i32 = arith.constant 0 : i32
    %c0_i32_0 = arith.constant 0 : i32
    %c0_i32_1 = arith.constant 0 : i32
    return %c0_i32, %c0_i32_0 : i32, i32
  }
  func.func @transform_1(%arg0: i32) -> (i32, i32) {
    %c0_i32 = arith.constant 0 : i32
    %c0_i32_0 = arith.constant 0 : i32
    %c0_i32_1 = arith.constant 0 : i32
    return %c0_i32, %c0_i32_0 : i32, i32
  }
  func.func @transform_2(%arg0: i32) -> (i32, i32, i32) {
    %c0_i32 = arith.constant 0 : i32
    %c0_i32_0 = arith.constant 0 : i32
    %c0_i32_1 = arith.constant 0 : i32
    return %arg0, %c0_i32, %c0_i32_0 : i32, i32, i32
  }
  func.func @transform_3(%arg0: i32) -> (i32, i32, i32) {
    %c0_i32 = arith.constant 0 : i32
    %c0_i32_0 = arith.constant 0 : i32
    %c0_i32_1 = arith.constant 0 : i32
    %c0_i32_2 = arith.constant 0 : i32
    return %c0_i32, %c0_i32_0, %c0_i32_1 : i32, i32, i32
  }
  func.func @transform_4(%arg0: i32) -> (i32, i32) {
    %c0_i32 = arith.constant 0 : i32
    %c0_i32_0 = arith.constant 0 : i32
    %c0_i32_1 = arith.constant 0 : i32
    return %c0_i32, %c0_i32_0 : i32, i32
  }
  func.func @transform_5(%arg0: i32) -> (i32, i32, i32) {
    %c0_i32 = arith.constant 0 : i32
    %c0_i32_0 = arith.constant 0 : i32
    %c0_i32_1 = arith.constant 0 : i32
    return %arg0, %c0_i32, %c0_i32_0 : i32, i32, i32
  }
  func.func @transform_6(%arg0: i32) -> (i32, i32, i32) {
    %c0_i32 = arith.constant 0 : i32
    %c0_i32_0 = arith.constant 0 : i32
    %c0_i32_1 = arith.constant 0 : i32
    return %arg0, %c0_i32, %c0_i32_0 : i32, i32, i32
  }
  func.func @transform_7(%arg0: i32) -> (i32, i32, i32) {
    %c0_i32 = arith.constant 0 : i32
    %c0_i32_0 = arith.constant 0 : i32
    %c0_i32_1 = arith.constant 0 : i32
    return %arg0, %c0_i32, %c0_i32_0 : i32, i32, i32
  }
}

module attributes {stable_mosaic.version = 11 : i64} {
  func.func @_conv_kernel(%arg0: i32, %arg1: memref<1x128xf32, #tpu.memory_space<vmem>>, %arg2: memref<1x128xf32, #tpu.memory_space<vmem>>, %arg3: memref<1x40x128xbf16, #tpu.memory_space<vmem>>, %arg4: memref<16x128x128xbf16, #tpu.memory_space<vmem>>, %arg5: memref<1x128xf32, #tpu.memory_space<vmem>>, %arg6: memref<1x18x128xbf16, #tpu.memory_space<vmem>>, %arg7: memref<1x1x128xf32, #tpu.memory_space<vmem>>, %arg8: memref<1x1x128xf32, #tpu.memory_space<vmem>>, %arg9: memref<40x128xbf16, #tpu.memory_space<vmem>>) attributes {dimension_semantics = [#tpu.dimension_semantics<parallel>], iteration_bounds = array<i64: 2>, scalar_prefetch = 0 : i64, scratch_operands = 1 : i64, tpu.core_type = #tpu.core_type<tc>, window_params = [{pipeline_mode = #tpu.pipeline_mode<synchronous>, transform_indices = @transform_0, window_bounds = array<i64: 1, 128>}, {pipeline_mode = #tpu.pipeline_mode<synchronous>, transform_indices = @transform_1, window_bounds = array<i64: 1, 128>}, {transform_indices = @transform_2, window_bounds = array<i64: 1, 40, 128>}, {pipeline_mode = #tpu.pipeline_mode<synchronous>, transform_indices = @transform_3, window_bounds = array<i64: 16, 128, 128>}, {pipeline_mode = #tpu.pipeline_mode<synchronous>, transform_indices = @transform_4, window_bounds = array<i64: 1, 128>}, {transform_indices = @transform_5, window_bounds = array<i64: 1, 18, 128>}, {transform_indices = @transform_6, window_bounds = array<i64: 1, 1, 128>}, {transform_indices = @transform_7, window_bounds = array<i64: 1, 1, 128>}]} {
    %c0 = arith.constant 0 : index
    %c0_0 = arith.constant 0 : index
    %c0_1 = arith.constant 0 : index
    %0 = vector.load %arg3[%c0, %c0_0, %c0_1] : memref<1x40x128xbf16, #tpu.memory_space<vmem>>, vector<1x40x128xbf16>
    %1 = vector.shape_cast %0 : vector<1x40x128xbf16> to vector<40x128xbf16>
    %2 = arith.extf %1 : vector<40x128xbf16> to vector<40x128xf32>
    %c0_2 = arith.constant 0 : index
    %c0_3 = arith.constant 0 : index
    %3 = vector.load %arg1[%c0_2, %c0_3] : memref<1x128xf32, #tpu.memory_space<vmem>>, vector<1x128xf32>
    %4 = vector.broadcast %3 : vector<1x128xf32> to vector<40x128xf32>
    %5 = arith.mulf %2, %4 : vector<40x128xf32>
    %c0_4 = arith.constant 0 : index
    %c0_5 = arith.constant 0 : index
    %6 = vector.load %arg2[%c0_4, %c0_5] : memref<1x128xf32, #tpu.memory_space<vmem>>, vector<1x128xf32>
    %7 = vector.broadcast %6 : vector<1x128xf32> to vector<40x128xf32>
    %8 = arith.addf %5, %7 : vector<40x128xf32>
    %cst = arith.constant 2.000000e-01 : f32
    %9 = vector.broadcast %cst : f32 to vector<40x128xf32>
    %10 = arith.mulf %9, %8 : vector<40x128xf32>
    %11 = arith.maximumf %8, %10 : vector<40x128xf32>
    %12 = arith.truncf %11 : vector<40x128xf32> to vector<40x128xbf16>
    %c0_6 = arith.constant 0 : index
    %c0_7 = arith.constant 0 : index
    %13 = vector.load %arg9[%c0_6, %c0_7] : memref<40x128xbf16, #tpu.memory_space<vmem>>, vector<40x128xbf16>
    tpu.vector_store %arg9[%c0_6, %c0_7], %12 {strides = array<i32>} : memref<40x128xbf16, #tpu.memory_space<vmem>>, vector<40x128xbf16>,
    %c0_8 = arith.constant 0 : index
    %c0_9 = arith.constant 0 : index
    %14 = vector.load %arg9[%c0_8, %c0_9] : memref<40x128xbf16, #tpu.memory_space<vmem>>, vector<18x128xbf16>
    %c0_10 = arith.constant 0 : index
    %c0_11 = arith.constant 0 : index
    %c0_12 = arith.constant 0 : index
    %15 = vector.load %arg4[%c0_10, %c0_11, %c0_12] : memref<16x128x128xbf16, #tpu.memory_space<vmem>>, vector<1x128x128xbf16>
    %16 = vector.shape_cast %15 : vector<1x128x128xbf16> to vector<128x128xbf16>
    %cst_13 = arith.constant dense<0.000000e+00> : vector<18x128xf32>
    %17 = tpu.matmul %14, %16, %cst_13 {dimension_numbers = #tpu.dot_dimension_numbers<[1], [0], [0], [1], [0, 0, 1, 1], [], []>} : vector<18x128xbf16>, vector<128x128xbf16>, vector<18x128xf32> -> vector<18x128xf32>
    %c1 = arith.constant 1 : index
    %c0_14 = arith.constant 0 : index
    %18 = vector.load %arg9[%c1, %c0_14] : memref<40x128xbf16, #tpu.memory_space<vmem>>, vector<18x128xbf16>
    %c1_15 = arith.constant 1 : index
    %c0_16 = arith.constant 0 : index
    %c0_17 = arith.constant 0 : index
    %19 = vector.load %arg4[%c1_15, %c0_16, %c0_17] : memref<16x128x128xbf16, #tpu.memory_space<vmem>>, vector<1x128x128xbf16>
    %20 = vector.shape_cast %19 : vector<1x128x128xbf16> to vector<128x128xbf16>
    %cst_18 = arith.constant dense<0.000000e+00> : vector<18x128xf32>
    %21 = tpu.matmul %18, %20, %cst_18 {dimension_numbers = #tpu.dot_dimension_numbers<[1], [0], [0], [1], [0, 0, 1, 1], [], []>} : vector<18x128xbf16>, vector<128x128xbf16>, vector<18x128xf32> -> vector<18x128xf32>
    %22 = arith.addf %17, %21 : vector<18x128xf32>
    %c2 = arith.constant 2 : index
    %c0_19 = arith.constant 0 : index
    %23 = vector.load %arg9[%c2, %c0_19] : memref<40x128xbf16, #tpu.memory_space<vmem>>, vector<18x128xbf16>
    %c2_20 = arith.constant 2 : index
    %c0_21 = arith.constant 0 : index
    %c0_22 = arith.constant 0 : index
    %24 = vector.load %arg4[%c2_20, %c0_21, %c0_22] : memref<16x128x128xbf16, #tpu.memory_space<vmem>>, vector<1x128x128xbf16>
    %25 = vector.shape_cast %24 : vector<1x128x128xbf16> to vector<128x128xbf16>
    %cst_23 = arith.constant dense<0.000000e+00> : vector<18x128xf32>
    %26 = tpu.matmul %23, %25, %cst_23 {dimension_numbers = #tpu.dot_dimension_numbers<[1], [0], [0], [1], [0, 0, 1, 1], [], []>} : vector<18x128xbf16>, vector<128x128xbf16>, vector<18x128xf32> -> vector<18x128xf32>
    %27 = arith.addf %22, %26 : vector<18x128xf32>
    %c3 = arith.constant 3 : index
    %c0_24 = arith.constant 0 : index
    %28 = vector.load %arg9[%c3, %c0_24] : memref<40x128xbf16, #tpu.memory_space<vmem>>, vector<18x128xbf16>
    %c3_25 = arith.constant 3 : index
    %c0_26 = arith.constant 0 : index
    %c0_27 = arith.constant 0 : index
    %29 = vector.load %arg4[%c3_25, %c0_26, %c0_27] : memref<16x128x128xbf16, #tpu.memory_space<vmem>>, vector<1x128x128xbf16>
    %30 = vector.shape_cast %29 : vector<1x128x128xbf16> to vector<128x128xbf16>
    %cst_28 = arith.constant dense<0.000000e+00> : vector<18x128xf32>
    %31 = tpu.matmul %28, %30, %cst_28 {dimension_numbers = #tpu.dot_dimension_numbers<[1], [0], [0], [1], [0, 0, 1, 1], [], []>} : vector<18x128xbf16>, vector<128x128xbf16>, vector<18x128xf32> -> vector<18x128xf32>
    %32 = arith.addf %27, %31 : vector<18x128xf32>
    %c6 = arith.constant 6 : index
    %c0_29 = arith.constant 0 : index
    %33 = vector.load %arg9[%c6, %c0_29] : memref<40x128xbf16, #tpu.memory_space<vmem>>, vector<18x128xbf16>
    %c4 = arith.constant 4 : index
    %c0_30 = arith.constant 0 : index
    %c0_31 = arith.constant 0 : index
    %34 = vector.load %arg4[%c4, %c0_30, %c0_31] : memref<16x128x128xbf16, #tpu.memory_space<vmem>>, vector<1x128x128xbf16>
    %35 = vector.shape_cast %34 : vector<1x128x128xbf16> to vector<128x128xbf16>
    %cst_32 = arith.constant dense<0.000000e+00> : vector<18x128xf32>
    %36 = tpu.matmul %33, %35, %cst_32 {dimension_numbers = #tpu.dot_dimension_numbers<[1], [0], [0], [1], [0, 0, 1, 1], [], []>} : vector<18x128xbf16>, vector<128x128xbf16>, vector<18x128xf32> -> vector<18x128xf32>
    %37 = arith.addf %32, %36 : vector<18x128xf32>
    %c7 = arith.constant 7 : index
    %c0_33 = arith.constant 0 : index
    %38 = vector.load %arg9[%c7, %c0_33] : memref<40x128xbf16, #tpu.memory_space<vmem>>, vector<18x128xbf16>
    %c5 = arith.constant 5 : index
    %c0_34 = arith.constant 0 : index
    %c0_35 = arith.constant 0 : index
    %39 = vector.load %arg4[%c5, %c0_34, %c0_35] : memref<16x128x128xbf16, #tpu.memory_space<vmem>>, vector<1x128x128xbf16>
    %40 = vector.shape_cast %39 : vector<1x128x128xbf16> to vector<128x128xbf16>
    %cst_36 = arith.constant dense<0.000000e+00> : vector<18x128xf32>
    %41 = tpu.matmul %38, %40, %cst_36 {dimension_numbers = #tpu.dot_dimension_numbers<[1], [0], [0], [1], [0, 0, 1, 1], [], []>} : vector<18x128xbf16>, vector<128x128xbf16>, vector<18x128xf32> -> vector<18x128xf32>
    %42 = arith.addf %37, %41 : vector<18x128xf32>
    %c8 = arith.constant 8 : index
    %c0_37 = arith.constant 0 : index
    %43 = vector.load %arg9[%c8, %c0_37] : memref<40x128xbf16, #tpu.memory_space<vmem>>, vector<18x128xbf16>
    %c6_38 = arith.constant 6 : index
    %c0_39 = arith.constant 0 : index
    %c0_40 = arith.constant 0 : index
    %44 = vector.load %arg4[%c6_38, %c0_39, %c0_40] : memref<16x128x128xbf16, #tpu.memory_space<vmem>>, vector<1x128x128xbf16>
    %45 = vector.shape_cast %44 : vector<1x128x128xbf16> to vector<128x128xbf16>
    %cst_41 = arith.constant dense<0.000000e+00> : vector<18x128xf32>
    %46 = tpu.matmul %43, %45, %cst_41 {dimension_numbers = #tpu.dot_dimension_numbers<[1], [0], [0], [1], [0, 0, 1, 1], [], []>} : vector<18x128xbf16>, vector<128x128xbf16>, vector<18x128xf32> -> vector<18x128xf32>
    %47 = arith.addf %42, %46 : vector<18x128xf32>
    %c9 = arith.constant 9 : index
    %c0_42 = arith.constant 0 : index
    %48 = vector.load %arg9[%c9, %c0_42] : memref<40x128xbf16, #tpu.memory_space<vmem>>, vector<18x128xbf16>
    %c7_43 = arith.constant 7 : index
    %c0_44 = arith.constant 0 : index
    %c0_45 = arith.constant 0 : index
    %49 = vector.load %arg4[%c7_43, %c0_44, %c0_45] : memref<16x128x128xbf16, #tpu.memory_space<vmem>>, vector<1x128x128xbf16>
    %50 = vector.shape_cast %49 : vector<1x128x128xbf16> to vector<128x128xbf16>
    %cst_46 = arith.constant dense<0.000000e+00> : vector<18x128xf32>
    %51 = tpu.matmul %48, %50, %cst_46 {dimension_numbers = #tpu.dot_dimension_numbers<[1], [0], [0], [1], [0, 0, 1, 1], [], []>} : vector<18x128xbf16>, vector<128x128xbf16>, vector<18x128xf32> -> vector<18x128xf32>
    %52 = arith.addf %47, %51 : vector<18x128xf32>
    %c12 = arith.constant 12 : index
    %c0_47 = arith.constant 0 : index
    %53 = vector.load %arg9[%c12, %c0_47] : memref<40x128xbf16, #tpu.memory_space<vmem>>, vector<18x128xbf16>
    %c8_48 = arith.constant 8 : index
    %c0_49 = arith.constant 0 : index
    %c0_50 = arith.constant 0 : index
    %54 = vector.load %arg4[%c8_48, %c0_49, %c0_50] : memref<16x128x128xbf16, #tpu.memory_space<vmem>>, vector<1x128x128xbf16>
    %55 = vector.shape_cast %54 : vector<1x128x128xbf16> to vector<128x128xbf16>
    %cst_51 = arith.constant dense<0.000000e+00> : vector<18x128xf32>
    %56 = tpu.matmul %53, %55, %cst_51 {dimension_numbers = #tpu.dot_dimension_numbers<[1], [0], [0], [1], [0, 0, 1, 1], [], []>} : vector<18x128xbf16>, vector<128x128xbf16>, vector<18x128xf32> -> vector<18x128xf32>
    %57 = arith.addf %52, %56 : vector<18x128xf32>
    %c13 = arith.constant 13 : index
    %c0_52 = arith.constant 0 : index
    %58 = vector.load %arg9[%c13, %c0_52] : memref<40x128xbf16, #tpu.memory_space<vmem>>, vector<18x128xbf16>
    %c9_53 = arith.constant 9 : index
    %c0_54 = arith.constant 0 : index
    %c0_55 = arith.constant 0 : index
    %59 = vector.load %arg4[%c9_53, %c0_54, %c0_55] : memref<16x128x128xbf16, #tpu.memory_space<vmem>>, vector<1x128x128xbf16>
    %60 = vector.shape_cast %59 : vector<1x128x128xbf16> to vector<128x128xbf16>
    %cst_56 = arith.constant dense<0.000000e+00> : vector<18x128xf32>
    %61 = tpu.matmul %58, %60, %cst_56 {dimension_numbers = #tpu.dot_dimension_numbers<[1], [0], [0], [1], [0, 0, 1, 1], [], []>} : vector<18x128xbf16>, vector<128x128xbf16>, vector<18x128xf32> -> vector<18x128xf32>
    %62 = arith.addf %57, %61 : vector<18x128xf32>
    %c14 = arith.constant 14 : index
    %c0_57 = arith.constant 0 : index
    %63 = vector.load %arg9[%c14, %c0_57] : memref<40x128xbf16, #tpu.memory_space<vmem>>, vector<18x128xbf16>
    %c10 = arith.constant 10 : index
    %c0_58 = arith.constant 0 : index
    %c0_59 = arith.constant 0 : index
    %64 = vector.load %arg4[%c10, %c0_58, %c0_59] : memref<16x128x128xbf16, #tpu.memory_space<vmem>>, vector<1x128x128xbf16>
    %65 = vector.shape_cast %64 : vector<1x128x128xbf16> to vector<128x128xbf16>
    %cst_60 = arith.constant dense<0.000000e+00> : vector<18x128xf32>
    %66 = tpu.matmul %63, %65, %cst_60 {dimension_numbers = #tpu.dot_dimension_numbers<[1], [0], [0], [1], [0, 0, 1, 1], [], []>} : vector<18x128xbf16>, vector<128x128xbf16>, vector<18x128xf32> -> vector<18x128xf32>
    %67 = arith.addf %62, %66 : vector<18x128xf32>
    %c15 = arith.constant 15 : index
    %c0_61 = arith.constant 0 : index
    %68 = vector.load %arg9[%c15, %c0_61] : memref<40x128xbf16, #tpu.memory_space<vmem>>, vector<18x128xbf16>
    %c11 = arith.constant 11 : index
    %c0_62 = arith.constant 0 : index
    %c0_63 = arith.constant 0 : index
    %69 = vector.load %arg4[%c11, %c0_62, %c0_63] : memref<16x128x128xbf16, #tpu.memory_space<vmem>>, vector<1x128x128xbf16>
    %70 = vector.shape_cast %69 : vector<1x128x128xbf16> to vector<128x128xbf16>
    %cst_64 = arith.constant dense<0.000000e+00> : vector<18x128xf32>
    %71 = tpu.matmul %68, %70, %cst_64 {dimension_numbers = #tpu.dot_dimension_numbers<[1], [0], [0], [1], [0, 0, 1, 1], [], []>} : vector<18x128xbf16>, vector<128x128xbf16>, vector<18x128xf32> -> vector<18x128xf32>
    %72 = arith.addf %67, %71 : vector<18x128xf32>
    %c18 = arith.constant 18 : index
    %c0_65 = arith.constant 0 : index
    %73 = vector.load %arg9[%c18, %c0_65] : memref<40x128xbf16, #tpu.memory_space<vmem>>, vector<18x128xbf16>
    %c12_66 = arith.constant 12 : index
    %c0_67 = arith.constant 0 : index
    %c0_68 = arith.constant 0 : index
    %74 = vector.load %arg4[%c12_66, %c0_67, %c0_68] : memref<16x128x128xbf16, #tpu.memory_space<vmem>>, vector<1x128x128xbf16>
    %75 = vector.shape_cast %74 : vector<1x128x128xbf16> to vector<128x128xbf16>
    %cst_69 = arith.constant dense<0.000000e+00> : vector<18x128xf32>
    %76 = tpu.matmul %73, %75, %cst_69 {dimension_numbers = #tpu.dot_dimension_numbers<[1], [0], [0], [1], [0, 0, 1, 1], [], []>} : vector<18x128xbf16>, vector<128x128xbf16>, vector<18x128xf32> -> vector<18x128xf32>
    %77 = arith.addf %72, %76 : vector<18x128xf32>
    %c19 = arith.constant 19 : index
    %c0_70 = arith.constant 0 : index
    %78 = vector.load %arg9[%c19, %c0_70] : memref<40x128xbf16, #tpu.memory_space<vmem>>, vector<18x128xbf16>
    %c13_71 = arith.constant 13 : index
    %c0_72 = arith.constant 0 : index
    %c0_73 = arith.constant 0 : index
    %79 = vector.load %arg4[%c13_71, %c0_72, %c0_73] : memref<16x128x128xbf16, #tpu.memory_space<vmem>>, vector<1x128x128xbf16>
    %80 = vector.shape_cast %79 : vector<1x128x128xbf16> to vector<128x128xbf16>
    %cst_74 = arith.constant dense<0.000000e+00> : vector<18x128xf32>
    %81 = tpu.matmul %78, %80, %cst_74 {dimension_numbers = #tpu.dot_dimension_numbers<[1], [0], [0], [1], [0, 0, 1, 1], [], []>} : vector<18x128xbf16>, vector<128x128xbf16>, vector<18x128xf32> -> vector<18x128xf32>
    %82 = arith.addf %77, %81 : vector<18x128xf32>
    %c20 = arith.constant 20 : index
    %c0_75 = arith.constant 0 : index
    %83 = vector.load %arg9[%c20, %c0_75] : memref<40x128xbf16, #tpu.memory_space<vmem>>, vector<18x128xbf16>
    %c14_76 = arith.constant 14 : index
    %c0_77 = arith.constant 0 : index
    %c0_78 = arith.constant 0 : index
    %84 = vector.load %arg4[%c14_76, %c0_77, %c0_78] : memref<16x128x128xbf16, #tpu.memory_space<vmem>>, vector<1x128x128xbf16>
    %85 = vector.shape_cast %84 : vector<1x128x128xbf16> to vector<128x128xbf16>
    %cst_79 = arith.constant dense<0.000000e+00> : vector<18x128xf32>
    %86 = tpu.matmul %83, %85, %cst_79 {dimension_numbers = #tpu.dot_dimension_numbers<[1], [0], [0], [1], [0, 0, 1, 1], [], []>} : vector<18x128xbf16>, vector<128x128xbf16>, vector<18x128xf32> -> vector<18x128xf32>
    %87 = arith.addf %82, %86 : vector<18x128xf32>
    %c21 = arith.constant 21 : index
    %c0_80 = arith.constant 0 : index
    %88 = vector.load %arg9[%c21, %c0_80] : memref<40x128xbf16, #tpu.memory_space<vmem>>, vector<18x128xbf16>
    %c15_81 = arith.constant 15 : index
    %c0_82 = arith.constant 0 : index
    %c0_83 = arith.constant 0 : index
    %89 = vector.load %arg4[%c15_81, %c0_82, %c0_83] : memref<16x128x128xbf16, #tpu.memory_space<vmem>>, vector<1x128x128xbf16>
    %90 = vector.shape_cast %89 : vector<1x128x128xbf16> to vector<128x128xbf16>
    %cst_84 = arith.constant dense<0.000000e+00> : vector<18x128xf32>
    %91 = tpu.matmul %88, %90, %cst_84 {dimension_numbers = #tpu.dot_dimension_numbers<[1], [0], [0], [1], [0, 0, 1, 1], [], []>} : vector<18x128xbf16>, vector<128x128xbf16>, vector<18x128xf32> -> vector<18x128xf32>
    %92 = arith.addf %87, %91 : vector<18x128xf32>
    %c0_85 = arith.constant 0 : index
    %c0_86 = arith.constant 0 : index
    %93 = vector.load %arg5[%c0_85, %c0_86] : memref<1x128xf32, #tpu.memory_space<vmem>>, vector<1x128xf32>
    %94 = vector.broadcast %93 : vector<1x128xf32> to vector<18x128xf32>
    %95 = arith.addf %92, %94 : vector<18x128xf32>
    %96 = tpu.iota {dimensions = array<i32: 0>} : vector<18x1xi32>
    %c6_i32 = arith.constant 6 : i32
    %c0_i32 = arith.constant 0 : i32
    %97 = arith.cmpi eq, %c6_i32, %c0_i32 : i32
    %c1_i32 = arith.constant 1 : i32
    %98 = arith.select %97, %c1_i32, %c6_i32 : i32
    %99 = vector.broadcast %98 : i32 to vector<18x1xi32>
    %100 = arith.remsi %96, %99 : vector<18x1xi32>
    %c0_i32_87 = arith.constant 0 : i32
    %101 = vector.broadcast %c0_i32_87 : i32 to vector<18x1xi32>
    %102 = arith.cmpi ne, %100, %101 : vector<18x1xi32>
    %c0_i32_88 = arith.constant 0 : i32
    %103 = vector.broadcast %c0_i32_88 : i32 to vector<18x1xi32>
    %104 = arith.cmpi slt, %100, %103 : vector<18x1xi32>
    %c0_i32_89 = arith.constant 0 : i32
    %105 = arith.cmpi slt, %98, %c0_i32_89 : i32
    %106 = vector.broadcast %105 : i1 to vector<18x1xi1>
    %107 = vector.broadcast %106 : vector<18x1xi1> to vector<18x1xi1>
    %108 = arith.xori %104, %107 : vector<18x1xi1>
    %109 = arith.andi %108, %102 : vector<18x1xi1>
    %110 = vector.broadcast %98 : i32 to vector<18x1xi32>
    %111 = arith.addi %100, %110 : vector<18x1xi32>
    %112 = arith.select %109, %111, %100 : vector<18x1xi1>, vector<18x1xi32>
    %c3_i32 = arith.constant 3 : i32
    %113 = vector.broadcast %c3_i32 : i32 to vector<18x1xi32>
    %114 = arith.cmpi slt, %112, %113 : vector<18x1xi32>
    %cst_90 = arith.constant 0.000000e+00 : f32
    %115 = vector.shape_cast %114 : vector<18x1xi1> to vector<18x1xi1>
    %116 = vector.broadcast %115 : vector<18x1xi1> to vector<18x128xi1>
    %117 = vector.broadcast %cst_90 : f32 to vector<18x128xf32>
    %118 = arith.select %116, %95, %117 : vector<18x128xi1>, vector<18x128xf32>
    %cst_91 = arith.constant dense<0.000000e+00> : vector<128xf32>
    %119 = vector.multi_reduction <add>, %118, %cst_91 [0] : vector<18x128xf32> to vector<128xf32>
    %120 = vector.shape_cast %119 : vector<128xf32> to vector<1x128xf32>
    %c0_92 = arith.constant 0 : index
    %c0_93 = arith.constant 0 : index
    %c0_94 = arith.constant 0 : index
    %121 = vector.load %arg7[%c0_92, %c0_93, %c0_94] : memref<1x1x128xf32, #tpu.memory_space<vmem>>, vector<1x1x128xf32>
    %122 = vector.shape_cast %121 : vector<1x1x128xf32> to vector<1x128xf32>
    %123 = vector.shape_cast %120 : vector<1x128xf32> to vector<1x1x128xf32>
    tpu.vector_store %arg7[%c0_92, %c0_93, %c0_94], %123 {strides = array<i32>} : memref<1x1x128xf32, #tpu.memory_space<vmem>>, vector<1x1x128xf32>,
    %124 = arith.mulf %118, %95 : vector<18x128xf32>
    %cst_95 = arith.constant dense<0.000000e+00> : vector<128xf32>
    %125 = vector.multi_reduction <add>, %124, %cst_95 [0] : vector<18x128xf32> to vector<128xf32>
    %126 = vector.shape_cast %125 : vector<128xf32> to vector<1x128xf32>
    %c0_96 = arith.constant 0 : index
    %c0_97 = arith.constant 0 : index
    %c0_98 = arith.constant 0 : index
    %127 = vector.load %arg8[%c0_96, %c0_97, %c0_98] : memref<1x1x128xf32, #tpu.memory_space<vmem>>, vector<1x1x128xf32>
    %128 = vector.shape_cast %127 : vector<1x1x128xf32> to vector<1x128xf32>
    %129 = vector.shape_cast %126 : vector<1x128xf32> to vector<1x1x128xf32>
    tpu.vector_store %arg8[%c0_96, %c0_97, %c0_98], %129 {strides = array<i32>} : memref<1x1x128xf32, #tpu.memory_space<vmem>>, vector<1x1x128xf32>,
    %130 = arith.truncf %95 : vector<18x128xf32> to vector<18x128xbf16>
    %c0_99 = arith.constant 0 : index
    %c0_100 = arith.constant 0 : index
    %c0_101 = arith.constant 0 : index
    %131 = vector.load %arg6[%c0_99, %c0_100, %c0_101] : memref<1x18x128xbf16, #tpu.memory_space<vmem>>, vector<1x18x128xbf16>
    %132 = vector.shape_cast %131 : vector<1x18x128xbf16> to vector<18x128xbf16>
    %133 = vector.shape_cast %130 : vector<18x128xbf16> to vector<1x18x128xbf16>
    tpu.vector_store %arg6[%c0_99, %c0_100, %c0_101], %133 {strides = array<i32>} : memref<1x18x128xbf16, #tpu.memory_space<vmem>>, vector<1x18x128xbf16>,
    return
  }
  func.func @transform_0(%arg0: i32) -> (i32, i32) {
    %c0_i32 = arith.constant 0 : i32
    %c0_i32_0 = arith.constant 0 : i32
    %c0_i32_1 = arith.constant 0 : i32
    return %c0_i32, %c0_i32_0 : i32, i32
  }
  func.func @transform_1(%arg0: i32) -> (i32, i32) {
    %c0_i32 = arith.constant 0 : i32
    %c0_i32_0 = arith.constant 0 : i32
    %c0_i32_1 = arith.constant 0 : i32
    return %c0_i32, %c0_i32_0 : i32, i32
  }
  func.func @transform_2(%arg0: i32) -> (i32, i32, i32) {
    %c0_i32 = arith.constant 0 : i32
    %c0_i32_0 = arith.constant 0 : i32
    %c0_i32_1 = arith.constant 0 : i32
    return %arg0, %c0_i32, %c0_i32_0 : i32, i32, i32
  }
  func.func @transform_3(%arg0: i32) -> (i32, i32, i32) {
    %c0_i32 = arith.constant 0 : i32
    %c0_i32_0 = arith.constant 0 : i32
    %c0_i32_1 = arith.constant 0 : i32
    %c0_i32_2 = arith.constant 0 : i32
    return %c0_i32, %c0_i32_0, %c0_i32_1 : i32, i32, i32
  }
  func.func @transform_4(%arg0: i32) -> (i32, i32) {
    %c0_i32 = arith.constant 0 : i32
    %c0_i32_0 = arith.constant 0 : i32
    %c0_i32_1 = arith.constant 0 : i32
    return %c0_i32, %c0_i32_0 : i32, i32
  }
  func.func @transform_5(%arg0: i32) -> (i32, i32, i32) {
    %c0_i32 = arith.constant 0 : i32
    %c0_i32_0 = arith.constant 0 : i32
    %c0_i32_1 = arith.constant 0 : i32
    return %arg0, %c0_i32, %c0_i32_0 : i32, i32, i32
  }
  func.func @transform_6(%arg0: i32) -> (i32, i32, i32) {
    %c0_i32 = arith.constant 0 : i32
    %c0_i32_0 = arith.constant 0 : i32
    %c0_i32_1 = arith.constant 0 : i32
    return %arg0, %c0_i32, %c0_i32_0 : i32, i32, i32
  }
  func.func @transform_7(%arg0: i32) -> (i32, i32, i32) {
    %c0_i32 = arith.constant 0 : i32
    %c0_i32_0 = arith.constant 0 : i32
    %c0_i32_1 = arith.constant 0 : i32
    return %arg0, %c0_i32, %c0_i32_0 : i32, i32, i32
  }
}

module attributes {stable_mosaic.version = 11 : i64} {
  func.func @_conv_kernel(%arg0: i32, %arg1: memref<1x128xf32, #tpu.memory_space<vmem>>, %arg2: memref<1x128xf32, #tpu.memory_space<vmem>>, %arg3: memref<1x32x128xbf16, #tpu.memory_space<vmem>>, %arg4: memref<16x128x128xbf16, #tpu.memory_space<vmem>>, %arg5: memref<1x128xf32, #tpu.memory_space<vmem>>, %arg6: memref<1x10x128xf32, #tpu.memory_space<vmem>>, %arg7: memref<32x128xbf16, #tpu.memory_space<vmem>>) attributes {dimension_semantics = [#tpu.dimension_semantics<parallel>], iteration_bounds = array<i64: 2>, scalar_prefetch = 0 : i64, scratch_operands = 1 : i64, tpu.core_type = #tpu.core_type<tc>, window_params = [{pipeline_mode = #tpu.pipeline_mode<synchronous>, transform_indices = @transform_0, window_bounds = array<i64: 1, 128>}, {pipeline_mode = #tpu.pipeline_mode<synchronous>, transform_indices = @transform_1, window_bounds = array<i64: 1, 128>}, {transform_indices = @transform_2, window_bounds = array<i64: 1, 32, 128>}, {pipeline_mode = #tpu.pipeline_mode<synchronous>, transform_indices = @transform_3, window_bounds = array<i64: 16, 128, 128>}, {pipeline_mode = #tpu.pipeline_mode<synchronous>, transform_indices = @transform_4, window_bounds = array<i64: 1, 128>}, {transform_indices = @transform_5, window_bounds = array<i64: 1, 10, 128>}]} {
    %c0 = arith.constant 0 : index
    %c0_0 = arith.constant 0 : index
    %c0_1 = arith.constant 0 : index
    %0 = vector.load %arg3[%c0, %c0_0, %c0_1] : memref<1x32x128xbf16, #tpu.memory_space<vmem>>, vector<1x32x128xbf16>
    %1 = vector.shape_cast %0 : vector<1x32x128xbf16> to vector<32x128xbf16>
    %2 = arith.extf %1 : vector<32x128xbf16> to vector<32x128xf32>
    %c0_2 = arith.constant 0 : index
    %c0_3 = arith.constant 0 : index
    %3 = vector.load %arg1[%c0_2, %c0_3] : memref<1x128xf32, #tpu.memory_space<vmem>>, vector<1x128xf32>
    %4 = vector.broadcast %3 : vector<1x128xf32> to vector<32x128xf32>
    %5 = arith.mulf %2, %4 : vector<32x128xf32>
    %c0_4 = arith.constant 0 : index
    %c0_5 = arith.constant 0 : index
    %6 = vector.load %arg2[%c0_4, %c0_5] : memref<1x128xf32, #tpu.memory_space<vmem>>, vector<1x128xf32>
    %7 = vector.broadcast %6 : vector<1x128xf32> to vector<32x128xf32>
    %8 = arith.addf %5, %7 : vector<32x128xf32>
    %cst = arith.constant 2.000000e-01 : f32
    %9 = vector.broadcast %cst : f32 to vector<32x128xf32>
    %10 = arith.mulf %9, %8 : vector<32x128xf32>
    %11 = arith.maximumf %8, %10 : vector<32x128xf32>
    %12 = arith.truncf %11 : vector<32x128xf32> to vector<32x128xbf16>
    %c0_6 = arith.constant 0 : index
    %c0_7 = arith.constant 0 : index
    %13 = vector.load %arg7[%c0_6, %c0_7] : memref<32x128xbf16, #tpu.memory_space<vmem>>, vector<32x128xbf16>
    tpu.vector_store %arg7[%c0_6, %c0_7], %12 {strides = array<i32>} : memref<32x128xbf16, #tpu.memory_space<vmem>>, vector<32x128xbf16>,
    %c0_8 = arith.constant 0 : index
    %c0_9 = arith.constant 0 : index
    %14 = vector.load %arg7[%c0_8, %c0_9] : memref<32x128xbf16, #tpu.memory_space<vmem>>, vector<10x128xbf16>
    %c0_10 = arith.constant 0 : index
    %c0_11 = arith.constant 0 : index
    %c0_12 = arith.constant 0 : index
    %15 = vector.load %arg4[%c0_10, %c0_11, %c0_12] : memref<16x128x128xbf16, #tpu.memory_space<vmem>>, vector<1x128x128xbf16>
    %16 = vector.shape_cast %15 : vector<1x128x128xbf16> to vector<128x128xbf16>
    %cst_13 = arith.constant dense<0.000000e+00> : vector<10x128xf32>
    %17 = tpu.matmul %14, %16, %cst_13 {dimension_numbers = #tpu.dot_dimension_numbers<[1], [0], [0], [1], [0, 0, 1, 1], [], []>} : vector<10x128xbf16>, vector<128x128xbf16>, vector<10x128xf32> -> vector<10x128xf32>
    %c1 = arith.constant 1 : index
    %c0_14 = arith.constant 0 : index
    %18 = vector.load %arg7[%c1, %c0_14] : memref<32x128xbf16, #tpu.memory_space<vmem>>, vector<10x128xbf16>
    %c1_15 = arith.constant 1 : index
    %c0_16 = arith.constant 0 : index
    %c0_17 = arith.constant 0 : index
    %19 = vector.load %arg4[%c1_15, %c0_16, %c0_17] : memref<16x128x128xbf16, #tpu.memory_space<vmem>>, vector<1x128x128xbf16>
    %20 = vector.shape_cast %19 : vector<1x128x128xbf16> to vector<128x128xbf16>
    %cst_18 = arith.constant dense<0.000000e+00> : vector<10x128xf32>
    %21 = tpu.matmul %18, %20, %cst_18 {dimension_numbers = #tpu.dot_dimension_numbers<[1], [0], [0], [1], [0, 0, 1, 1], [], []>} : vector<10x128xbf16>, vector<128x128xbf16>, vector<10x128xf32> -> vector<10x128xf32>
    %22 = arith.addf %17, %21 : vector<10x128xf32>
    %c2 = arith.constant 2 : index
    %c0_19 = arith.constant 0 : index
    %23 = vector.load %arg7[%c2, %c0_19] : memref<32x128xbf16, #tpu.memory_space<vmem>>, vector<10x128xbf16>
    %c2_20 = arith.constant 2 : index
    %c0_21 = arith.constant 0 : index
    %c0_22 = arith.constant 0 : index
    %24 = vector.load %arg4[%c2_20, %c0_21, %c0_22] : memref<16x128x128xbf16, #tpu.memory_space<vmem>>, vector<1x128x128xbf16>
    %25 = vector.shape_cast %24 : vector<1x128x128xbf16> to vector<128x128xbf16>
    %cst_23 = arith.constant dense<0.000000e+00> : vector<10x128xf32>
    %26 = tpu.matmul %23, %25, %cst_23 {dimension_numbers = #tpu.dot_dimension_numbers<[1], [0], [0], [1], [0, 0, 1, 1], [], []>} : vector<10x128xbf16>, vector<128x128xbf16>, vector<10x128xf32> -> vector<10x128xf32>
    %27 = arith.addf %22, %26 : vector<10x128xf32>
    %c3 = arith.constant 3 : index
    %c0_24 = arith.constant 0 : index
    %28 = vector.load %arg7[%c3, %c0_24] : memref<32x128xbf16, #tpu.memory_space<vmem>>, vector<10x128xbf16>
    %c3_25 = arith.constant 3 : index
    %c0_26 = arith.constant 0 : index
    %c0_27 = arith.constant 0 : index
    %29 = vector.load %arg4[%c3_25, %c0_26, %c0_27] : memref<16x128x128xbf16, #tpu.memory_space<vmem>>, vector<1x128x128xbf16>
    %30 = vector.shape_cast %29 : vector<1x128x128xbf16> to vector<128x128xbf16>
    %cst_28 = arith.constant dense<0.000000e+00> : vector<10x128xf32>
    %31 = tpu.matmul %28, %30, %cst_28 {dimension_numbers = #tpu.dot_dimension_numbers<[1], [0], [0], [1], [0, 0, 1, 1], [], []>} : vector<10x128xbf16>, vector<128x128xbf16>, vector<10x128xf32> -> vector<10x128xf32>
    %32 = arith.addf %27, %31 : vector<10x128xf32>
    %c5 = arith.constant 5 : index
    %c0_29 = arith.constant 0 : index
    %33 = vector.load %arg7[%c5, %c0_29] : memref<32x128xbf16, #tpu.memory_space<vmem>>, vector<10x128xbf16>
    %c4 = arith.constant 4 : index
    %c0_30 = arith.constant 0 : index
    %c0_31 = arith.constant 0 : index
    %34 = vector.load %arg4[%c4, %c0_30, %c0_31] : memref<16x128x128xbf16, #tpu.memory_space<vmem>>, vector<1x128x128xbf16>
    %35 = vector.shape_cast %34 : vector<1x128x128xbf16> to vector<128x128xbf16>
    %cst_32 = arith.constant dense<0.000000e+00> : vector<10x128xf32>
    %36 = tpu.matmul %33, %35, %cst_32 {dimension_numbers = #tpu.dot_dimension_numbers<[1], [0], [0], [1], [0, 0, 1, 1], [], []>} : vector<10x128xbf16>, vector<128x128xbf16>, vector<10x128xf32> -> vector<10x128xf32>
    %37 = arith.addf %32, %36 : vector<10x128xf32>
    %c6 = arith.constant 6 : index
    %c0_33 = arith.constant 0 : index
    %38 = vector.load %arg7[%c6, %c0_33] : memref<32x128xbf16, #tpu.memory_space<vmem>>, vector<10x128xbf16>
    %c5_34 = arith.constant 5 : index
    %c0_35 = arith.constant 0 : index
    %c0_36 = arith.constant 0 : index
    %39 = vector.load %arg4[%c5_34, %c0_35, %c0_36] : memref<16x128x128xbf16, #tpu.memory_space<vmem>>, vector<1x128x128xbf16>
    %40 = vector.shape_cast %39 : vector<1x128x128xbf16> to vector<128x128xbf16>
    %cst_37 = arith.constant dense<0.000000e+00> : vector<10x128xf32>
    %41 = tpu.matmul %38, %40, %cst_37 {dimension_numbers = #tpu.dot_dimension_numbers<[1], [0], [0], [1], [0, 0, 1, 1], [], []>} : vector<10x128xbf16>, vector<128x128xbf16>, vector<10x128xf32> -> vector<10x128xf32>
    %42 = arith.addf %37, %41 : vector<10x128xf32>
    %c7 = arith.constant 7 : index
    %c0_38 = arith.constant 0 : index
    %43 = vector.load %arg7[%c7, %c0_38] : memref<32x128xbf16, #tpu.memory_space<vmem>>, vector<10x128xbf16>
    %c6_39 = arith.constant 6 : index
    %c0_40 = arith.constant 0 : index
    %c0_41 = arith.constant 0 : index
    %44 = vector.load %arg4[%c6_39, %c0_40, %c0_41] : memref<16x128x128xbf16, #tpu.memory_space<vmem>>, vector<1x128x128xbf16>
    %45 = vector.shape_cast %44 : vector<1x128x128xbf16> to vector<128x128xbf16>
    %cst_42 = arith.constant dense<0.000000e+00> : vector<10x128xf32>
    %46 = tpu.matmul %43, %45, %cst_42 {dimension_numbers = #tpu.dot_dimension_numbers<[1], [0], [0], [1], [0, 0, 1, 1], [], []>} : vector<10x128xbf16>, vector<128x128xbf16>, vector<10x128xf32> -> vector<10x128xf32>
    %47 = arith.addf %42, %46 : vector<10x128xf32>
    %c8 = arith.constant 8 : index
    %c0_43 = arith.constant 0 : index
    %48 = vector.load %arg7[%c8, %c0_43] : memref<32x128xbf16, #tpu.memory_space<vmem>>, vector<10x128xbf16>
    %c7_44 = arith.constant 7 : index
    %c0_45 = arith.constant 0 : index
    %c0_46 = arith.constant 0 : index
    %49 = vector.load %arg4[%c7_44, %c0_45, %c0_46] : memref<16x128x128xbf16, #tpu.memory_space<vmem>>, vector<1x128x128xbf16>
    %50 = vector.shape_cast %49 : vector<1x128x128xbf16> to vector<128x128xbf16>
    %cst_47 = arith.constant dense<0.000000e+00> : vector<10x128xf32>
    %51 = tpu.matmul %48, %50, %cst_47 {dimension_numbers = #tpu.dot_dimension_numbers<[1], [0], [0], [1], [0, 0, 1, 1], [], []>} : vector<10x128xbf16>, vector<128x128xbf16>, vector<10x128xf32> -> vector<10x128xf32>
    %52 = arith.addf %47, %51 : vector<10x128xf32>
    %c10 = arith.constant 10 : index
    %c0_48 = arith.constant 0 : index
    %53 = vector.load %arg7[%c10, %c0_48] : memref<32x128xbf16, #tpu.memory_space<vmem>>, vector<10x128xbf16>
    %c8_49 = arith.constant 8 : index
    %c0_50 = arith.constant 0 : index
    %c0_51 = arith.constant 0 : index
    %54 = vector.load %arg4[%c8_49, %c0_50, %c0_51] : memref<16x128x128xbf16, #tpu.memory_space<vmem>>, vector<1x128x128xbf16>
    %55 = vector.shape_cast %54 : vector<1x128x128xbf16> to vector<128x128xbf16>
    %cst_52 = arith.constant dense<0.000000e+00> : vector<10x128xf32>
    %56 = tpu.matmul %53, %55, %cst_52 {dimension_numbers = #tpu.dot_dimension_numbers<[1], [0], [0], [1], [0, 0, 1, 1], [], []>} : vector<10x128xbf16>, vector<128x128xbf16>, vector<10x128xf32> -> vector<10x128xf32>
    %57 = arith.addf %52, %56 : vector<10x128xf32>
    %c11 = arith.constant 11 : index
    %c0_53 = arith.constant 0 : index
    %58 = vector.load %arg7[%c11, %c0_53] : memref<32x128xbf16, #tpu.memory_space<vmem>>, vector<10x128xbf16>
    %c9 = arith.constant 9 : index
    %c0_54 = arith.constant 0 : index
    %c0_55 = arith.constant 0 : index
    %59 = vector.load %arg4[%c9, %c0_54, %c0_55] : memref<16x128x128xbf16, #tpu.memory_space<vmem>>, vector<1x128x128xbf16>
    %60 = vector.shape_cast %59 : vector<1x128x128xbf16> to vector<128x128xbf16>
    %cst_56 = arith.constant dense<0.000000e+00> : vector<10x128xf32>
    %61 = tpu.matmul %58, %60, %cst_56 {dimension_numbers = #tpu.dot_dimension_numbers<[1], [0], [0], [1], [0, 0, 1, 1], [], []>} : vector<10x128xbf16>, vector<128x128xbf16>, vector<10x128xf32> -> vector<10x128xf32>
    %62 = arith.addf %57, %61 : vector<10x128xf32>
    %c12 = arith.constant 12 : index
    %c0_57 = arith.constant 0 : index
    %63 = vector.load %arg7[%c12, %c0_57] : memref<32x128xbf16, #tpu.memory_space<vmem>>, vector<10x128xbf16>
    %c10_58 = arith.constant 10 : index
    %c0_59 = arith.constant 0 : index
    %c0_60 = arith.constant 0 : index
    %64 = vector.load %arg4[%c10_58, %c0_59, %c0_60] : memref<16x128x128xbf16, #tpu.memory_space<vmem>>, vector<1x128x128xbf16>
    %65 = vector.shape_cast %64 : vector<1x128x128xbf16> to vector<128x128xbf16>
    %cst_61 = arith.constant dense<0.000000e+00> : vector<10x128xf32>
    %66 = tpu.matmul %63, %65, %cst_61 {dimension_numbers = #tpu.dot_dimension_numbers<[1], [0], [0], [1], [0, 0, 1, 1], [], []>} : vector<10x128xbf16>, vector<128x128xbf16>, vector<10x128xf32> -> vector<10x128xf32>
    %67 = arith.addf %62, %66 : vector<10x128xf32>
    %c13 = arith.constant 13 : index
    %c0_62 = arith.constant 0 : index
    %68 = vector.load %arg7[%c13, %c0_62] : memref<32x128xbf16, #tpu.memory_space<vmem>>, vector<10x128xbf16>
    %c11_63 = arith.constant 11 : index
    %c0_64 = arith.constant 0 : index
    %c0_65 = arith.constant 0 : index
    %69 = vector.load %arg4[%c11_63, %c0_64, %c0_65] : memref<16x128x128xbf16, #tpu.memory_space<vmem>>, vector<1x128x128xbf16>
    %70 = vector.shape_cast %69 : vector<1x128x128xbf16> to vector<128x128xbf16>
    %cst_66 = arith.constant dense<0.000000e+00> : vector<10x128xf32>
    %71 = tpu.matmul %68, %70, %cst_66 {dimension_numbers = #tpu.dot_dimension_numbers<[1], [0], [0], [1], [0, 0, 1, 1], [], []>} : vector<10x128xbf16>, vector<128x128xbf16>, vector<10x128xf32> -> vector<10x128xf32>
    %72 = arith.addf %67, %71 : vector<10x128xf32>
    %c15 = arith.constant 15 : index
    %c0_67 = arith.constant 0 : index
    %73 = vector.load %arg7[%c15, %c0_67] : memref<32x128xbf16, #tpu.memory_space<vmem>>, vector<10x128xbf16>
    %c12_68 = arith.constant 12 : index
    %c0_69 = arith.constant 0 : index
    %c0_70 = arith.constant 0 : index
    %74 = vector.load %arg4[%c12_68, %c0_69, %c0_70] : memref<16x128x128xbf16, #tpu.memory_space<vmem>>, vector<1x128x128xbf16>
    %75 = vector.shape_cast %74 : vector<1x128x128xbf16> to vector<128x128xbf16>
    %cst_71 = arith.constant dense<0.000000e+00> : vector<10x128xf32>
    %76 = tpu.matmul %73, %75, %cst_71 {dimension_numbers = #tpu.dot_dimension_numbers<[1], [0], [0], [1], [0, 0, 1, 1], [], []>} : vector<10x128xbf16>, vector<128x128xbf16>, vector<10x128xf32> -> vector<10x128xf32>
    %77 = arith.addf %72, %76 : vector<10x128xf32>
    %c16 = arith.constant 16 : index
    %c0_72 = arith.constant 0 : index
    %78 = vector.load %arg7[%c16, %c0_72] : memref<32x128xbf16, #tpu.memory_space<vmem>>, vector<10x128xbf16>
    %c13_73 = arith.constant 13 : index
    %c0_74 = arith.constant 0 : index
    %c0_75 = arith.constant 0 : index
    %79 = vector.load %arg4[%c13_73, %c0_74, %c0_75] : memref<16x128x128xbf16, #tpu.memory_space<vmem>>, vector<1x128x128xbf16>
    %80 = vector.shape_cast %79 : vector<1x128x128xbf16> to vector<128x128xbf16>
    %cst_76 = arith.constant dense<0.000000e+00> : vector<10x128xf32>
    %81 = tpu.matmul %78, %80, %cst_76 {dimension_numbers = #tpu.dot_dimension_numbers<[1], [0], [0], [1], [0, 0, 1, 1], [], []>} : vector<10x128xbf16>, vector<128x128xbf16>, vector<10x128xf32> -> vector<10x128xf32>
    %82 = arith.addf %77, %81 : vector<10x128xf32>
    %c17 = arith.constant 17 : index
    %c0_77 = arith.constant 0 : index
    %83 = vector.load %arg7[%c17, %c0_77] : memref<32x128xbf16, #tpu.memory_space<vmem>>, vector<10x128xbf16>
    %c14 = arith.constant 14 : index
    %c0_78 = arith.constant 0 : index
    %c0_79 = arith.constant 0 : index
    %84 = vector.load %arg4[%c14, %c0_78, %c0_79] : memref<16x128x128xbf16, #tpu.memory_space<vmem>>, vector<1x128x128xbf16>
    %85 = vector.shape_cast %84 : vector<1x128x128xbf16> to vector<128x128xbf16>
    %cst_80 = arith.constant dense<0.000000e+00> : vector<10x128xf32>
    %86 = tpu.matmul %83, %85, %cst_80 {dimension_numbers = #tpu.dot_dimension_numbers<[1], [0], [0], [1], [0, 0, 1, 1], [], []>} : vector<10x128xbf16>, vector<128x128xbf16>, vector<10x128xf32> -> vector<10x128xf32>
    %87 = arith.addf %82, %86 : vector<10x128xf32>
    %c18 = arith.constant 18 : index
    %c0_81 = arith.constant 0 : index
    %88 = vector.load %arg7[%c18, %c0_81] : memref<32x128xbf16, #tpu.memory_space<vmem>>, vector<10x128xbf16>
    %c15_82 = arith.constant 15 : index
    %c0_83 = arith.constant 0 : index
    %c0_84 = arith.constant 0 : index
    %89 = vector.load %arg4[%c15_82, %c0_83, %c0_84] : memref<16x128x128xbf16, #tpu.memory_space<vmem>>, vector<1x128x128xbf16>
    %90 = vector.shape_cast %89 : vector<1x128x128xbf16> to vector<128x128xbf16>
    %cst_85 = arith.constant dense<0.000000e+00> : vector<10x128xf32>
    %91 = tpu.matmul %88, %90, %cst_85 {dimension_numbers = #tpu.dot_dimension_numbers<[1], [0], [0], [1], [0, 0, 1, 1], [], []>} : vector<10x128xbf16>, vector<128x128xbf16>, vector<10x128xf32> -> vector<10x128xf32>
    %92 = arith.addf %87, %91 : vector<10x128xf32>
    %c0_86 = arith.constant 0 : index
    %c0_87 = arith.constant 0 : index
    %93 = vector.load %arg5[%c0_86, %c0_87] : memref<1x128xf32, #tpu.memory_space<vmem>>, vector<1x128xf32>
    %94 = vector.broadcast %93 : vector<1x128xf32> to vector<10x128xf32>
    %95 = arith.addf %92, %94 : vector<10x128xf32>
    %c0_88 = arith.constant 0 : index
    %c0_89 = arith.constant 0 : index
    %c0_90 = arith.constant 0 : index
    %96 = vector.load %arg6[%c0_88, %c0_89, %c0_90] : memref<1x10x128xf32, #tpu.memory_space<vmem>>, vector<1x10x128xf32>
    %97 = vector.shape_cast %96 : vector<1x10x128xf32> to vector<10x128xf32>
    %98 = vector.shape_cast %95 : vector<10x128xf32> to vector<1x10x128xf32>
    tpu.vector_store %arg6[%c0_88, %c0_89, %c0_90], %98 {strides = array<i32>} : memref<1x10x128xf32, #tpu.memory_space<vmem>>, vector<1x10x128xf32>,
    return
  }
  func.func @transform_0(%arg0: i32) -> (i32, i32) {
    %c0_i32 = arith.constant 0 : i32
    %c0_i32_0 = arith.constant 0 : i32
    %c0_i32_1 = arith.constant 0 : i32
    return %c0_i32, %c0_i32_0 : i32, i32
  }
  func.func @transform_1(%arg0: i32) -> (i32, i32) {
    %c0_i32 = arith.constant 0 : i32
    %c0_i32_0 = arith.constant 0 : i32
    %c0_i32_1 = arith.constant 0 : i32
    return %c0_i32, %c0_i32_0 : i32, i32
  }
  func.func @transform_2(%arg0: i32) -> (i32, i32, i32) {
    %c0_i32 = arith.constant 0 : i32
    %c0_i32_0 = arith.constant 0 : i32
    %c0_i32_1 = arith.constant 0 : i32
    return %arg0, %c0_i32, %c0_i32_0 : i32, i32, i32
  }
  func.func @transform_3(%arg0: i32) -> (i32, i32, i32) {
    %c0_i32 = arith.constant 0 : i32
    %c0_i32_0 = arith.constant 0 : i32
    %c0_i32_1 = arith.constant 0 : i32
    %c0_i32_2 = arith.constant 0 : i32
    return %c0_i32, %c0_i32_0, %c0_i32_1 : i32, i32, i32
  }
  func.func @transform_4(%arg0: i32) -> (i32, i32) {
    %c0_i32 = arith.constant 0 : i32
    %c0_i32_0 = arith.constant 0 : i32
    %c0_i32_1 = arith.constant 0 : i32
    return %c0_i32, %c0_i32_0 : i32, i32
  }
  func.func @transform_5(%arg0: i32) -> (i32, i32, i32) {
    %c0_i32 = arith.constant 0 : i32
    %c0_i32_0 = arith.constant 0 : i32
    %c0_i32_1 = arith.constant 0 : i32
    return %arg0, %c0_i32, %c0_i32_0 : i32, i32, i32
  }
}

</mosaic_0001>

<llo_original>
// kernel: _lambda_.5
$region0: #{_lambda_.5}
  #allocation0 [shape = 'u32[]', space=smem, size = 0x4, offset = 0x4, fixed_abs, tag = 'smem constant byte address 0x4 - core index']
  #allocation1 [shape = 'u32[144,128]{1,0:T(1,128)}', space=vmem, size = 0x12000, scoped, tag = 'internal scratch']
  %s0 = inlined_call_operand.vmem [shape: f32[1,16], index: 0, kind: input, shape index: {}]
  %s1 = inlined_call_operand.vmem [shape: f32[1,16], index: 1, kind: input, shape index: {}]
  %s2 = inlined_call_operand.vmem [shape: bf16[2,296,16], index: 2, kind: input, shape index: {}]
  %s3 = inlined_call_operand.vmem [shape: bf16[4,16,128], index: 3, kind: input, shape index: {}]
  %s4 = inlined_call_operand.vmem [shape: f32[1,128], index: 4, kind: input, shape index: {}]
  %s5 = inlined_call_operand.vmem [shape: bf16[2,272,128], index: 5, kind: output, shape index: {}]
  %s6 = sld [smem:[#allocation0]]
  $region53: #{_lambda_.5} parent=0
    _
  %s8 = ssub.s32 1, %s6
  %s9 = scalar_select 0, %s8, %s6
  loop: start=0, step=1, limit=4
  $region2: #{_lambda_.5} parent=0 // loop_pre_header
    _
  $region3: #{_lambda_.5} parent=0 // loop_header
    %s11 = sphi 0, %s15
    %p12 = scmp.ge.s32.totalorder %s11, 4
    %s19 = sphi 0, %s19
    %s21 = sphi 0, %s19
    %s22 = sphi 0, %s21
    %s36 = sphi 0, %s22
    %s40 = sphi 0, %s40
    %s42 = sphi 0, %s40
    %s43 = sphi 0, %s42
    %s57 = sphi 0, %s43
    %s63 = sphi 0, %s65
    %s66 = sphi 0, %s63
    %s67 = sphi 0, %s66
    %s83 = sphi 0, %s67
    %s87 = sphi 0, %s87
    %s89 = sphi 0, %s87
    %s90 = sphi 0, %s89
    %s104 = sphi 0, %s90
    %s108 = sphi 0, %s108
    %s110 = sphi 0, %s108
    %s111 = sphi 0, %s110
    %s125 = sphi 0, %s111
    %s131 = sphi 0, %s133
    %s134 = sphi 0, %s131
    %s135 = sphi 0, %s134
    %s151 = sphi 0, %s135
  $region4: #{_lambda_.5} parent=0 // loop_header_branch
    %14 = sbr.rel (%p12) target = $region8
  $region5: #{_lambda_.5} parent=0 // loop_body
    %s16 = ssub.s32 %s11, 1
    %s17 = ssub.s32 %s11, 2
    %s18 = sadd.s32 %s11, 1
    %s20 = sadd.s32 %s19, 1
    %p23 = scmp.eq.s32.totalorder %s11, 1
    %p24 = scmp.ne.s32.totalorder %s19, %s21
    %p25 = scmp.eq.s32.totalorder %s11, 0
    %p26 = por %p24, %p25
    %p27 = scmp.ne.s32.totalorder %s19, %s21
    %p28 = scmp.eq.s32.totalorder %s16, 1
    %p29 = por %p27, %p28
    %p30 = scmp.ne.s32.totalorder %s21, %s22
    %p31 = scmp.eq.s32.totalorder %s16, 0
    %p32 = por %p30, %p31
    %p33 = scmp.ne.s32.totalorder %s21, %s22
    %p34 = scmp.eq.s32.totalorder %s17, 1
    %p35 = por %p33, %p34
    %p37 = scmp.ne.s32.totalorder %s22, %s36
    %p38 = scmp.eq.s32.totalorder %s17, 0
    %p39 = por %p37, %p38
    %s41 = sadd.s32 %s40, 1
    %p44 = scmp.eq.s32.totalorder %s11, 1
    %p45 = scmp.ne.s32.totalorder %s40, %s42
    %p46 = scmp.eq.s32.totalorder %s11, 0
    %p47 = por %p45, %p46
    %p48 = scmp.ne.s32.totalorder %s40, %s42
    %p49 = scmp.eq.s32.totalorder %s16, 1
    %p50 = por %p48, %p49
    %p51 = scmp.ne.s32.totalorder %s42, %s43
    %p52 = scmp.eq.s32.totalorder %s16, 0
    %p53 = por %p51, %p52
    %p54 = scmp.ne.s32.totalorder %s42, %s43
    %p55 = scmp.eq.s32.totalorder %s17, 1
    %p56 = por %p54, %p55
    %p58 = scmp.ne.s32.totalorder %s43, %s57
    %p59 = scmp.eq.s32.totalorder %s17, 0
    %p60 = por %p58, %p59
    %s61 = ssub.s32 %s11, %s18
    %p62 = scmp.eq.s32.totalorder %s61, 0
    %s64 = sadd.s32 %s63, 1
    %s65 = scalar_select %p62, %s63, %s64
    %p68 = pneg %p62
    %p69 = scmp.eq.s32.totalorder %s11, 1
    %p70 = por %p68, %p69
    %p71 = scmp.ne.s32.totalorder %s63, %s66
    %p72 = scmp.eq.s32.totalorder %s11, 0
    %p73 = por %p71, %p72
    %p74 = scmp.ne.s32.totalorder %s63, %s66
    %p75 = scmp.eq.s32.totalorder %s16, 1
    %p76 = por %p74, %p75
    %p77 = scmp.ne.s32.totalorder %s66, %s67
    %p78 = scmp.eq.s32.totalorder %s16, 0
    %p79 = por %p77, %p78
    %p80 = scmp.ne.s32.totalorder %s66, %s67
    %p81 = scmp.eq.s32.totalorder %s17, 1
    %p82 = por %p80, %p81
    %p84 = scmp.ne.s32.totalorder %s67, %s83
    %p85 = scmp.eq.s32.totalorder %s17, 0
    %p86 = por %p84, %p85
    %s88 = sadd.s32 %s87, 1
    %p91 = scmp.eq.s32.totalorder %s11, 1
    %p92 = scmp.ne.s32.totalorder %s87, %s89
    %p93 = scmp.eq.s32.totalorder %s11, 0
    %p94 = por %p92, %p93
    %p95 = scmp.ne.s32.totalorder %s87, %s89
    %p96 = scmp.eq.s32.totalorder %s16, 1
    %p97 = por %p95, %p96
    %p98 = scmp.ne.s32.totalorder %s89, %s90
    %p99 = scmp.eq.s32.totalorder %s16, 0
    %p100 = por %p98, %p99
    %p101 = scmp.ne.s32.totalorder %s89, %s90
    %p102 = scmp.eq.s32.totalorder %s17, 1
    %p103 = por %p101, %p102
    %p105 = scmp.ne.s32.totalorder %s90, %s104
    %p106 = scmp.eq.s32.totalorder %s17, 0
    %p107 = por %p105, %p106
    %s109 = sadd.s32 %s108, 1
    %p112 = scmp.eq.s32.totalorder %s11, 1
    %p113 = scmp.ne.s32.totalorder %s108, %s110
    %p114 = scmp.eq.s32.totalorder %s11, 0
    %p115 = por %p113, %p114
    %p116 = scmp.ne.s32.totalorder %s108, %s110
    %p117 = scmp.eq.s32.totalorder %s16, 1
    %p118 = por %p116, %p117
    %p119 = scmp.ne.s32.totalorder %s110, %s111
    %p120 = scmp.eq.s32.totalorder %s16, 0
    %p121 = por %p119, %p120
    %p122 = scmp.ne.s32.totalorder %s110, %s111
    %p123 = scmp.eq.s32.totalorder %s17, 1
    %p124 = por %p122, %p123
    %p126 = scmp.ne.s32.totalorder %s111, %s125
    %p127 = scmp.eq.s32.totalorder %s17, 0
    %p128 = por %p126, %p127
    %s129 = ssub.s32 %s11, %s18
    %p130 = scmp.eq.s32.totalorder %s129, 0
    %s132 = sadd.s32 %s131, 1
    %s133 = scalar_select %p130, %s131, %s132
    %p136 = pneg %p130
    %p137 = scmp.eq.s32.totalorder %s11, 1
    %p138 = por %p136, %p137
    %p139 = scmp.ne.s32.totalorder %s131, %s134
    %p140 = scmp.eq.s32.totalorder %s11, 0
    %p141 = por %p139, %p140
    %p142 = scmp.ne.s32.totalorder %s131, %s134
    %p143 = scmp.eq.s32.totalorder %s16, 1
    %p144 = por %p142, %p143
    %p145 = scmp.ne.s32.totalorder %s134, %s135
    %p146 = scmp.eq.s32.totalorder %s16, 0
    %p147 = por %p145, %p146
    %p148 = scmp.ne.s32.totalorder %s134, %s135
    %p149 = scmp.eq.s32.totalorder %s17, 1
    %p150 = por %p148, %p149
    %p152 = scmp.ne.s32.totalorder %s135, %s151
    %p153 = scmp.eq.s32.totalorder %s17, 0
    %p154 = por %p152, %p153
    %p155 = scmp.le.s32.totalorder 1, %s11
    %p156 = scmp.lt.s32.totalorder %s11, 3
    %p157 = pnand %p155, %p156
    %p158 = pneg %p157
    // Predicated region
    $region9: #{_lambda_.5} parent=5 // pred_check
      _
    $region10: #{_lambda_.5} parent=5 // pred_check_branch
      %160 = sbr.rel (%p157) target = $region12
    $region11: #{_lambda_.5} parent=5 // pred_region
      %s161 = ssub.s32 %s11, 1
      // Predicated region
      $region13: #{_lambda_.5} parent=11 // pred_check
        %p162 = pneg %p32
      $region14: #{_lambda_.5} parent=11 // pred_check_branch
        %164 = sbr.rel (%p162) target = $region16
      $region15: #{_lambda_.5} parent=11 // pred_region
        _
      $region16: #{_lambda_.5} parent=11 // pred_fallthru
        _
      // Predicated region
      $region17: #{_lambda_.5} parent=11 // pred_check
        %p165 = pneg %p53
      $region18: #{_lambda_.5} parent=11 // pred_check_branch
        %167 = sbr.rel (%p165) target = $region20
      $region19: #{_lambda_.5} parent=11 // pred_region
        _
      $region20: #{_lambda_.5} parent=11 // pred_fallthru
        _
      // Predicated region
      $region21: #{_lambda_.5} parent=11 // pred_check
        %p168 = pneg %p100
      $region22: #{_lambda_.5} parent=11 // pred_check_branch
        %170 = sbr.rel (%p168) target = $region24
      $region23: #{_lambda_.5} parent=11 // pred_region
        _
      $region24: #{_lambda_.5} parent=11 // pred_fallthru
        _
      // Predicated region
      $region25: #{_lambda_.5} parent=11 // pred_check
        %p171 = pneg %p121
      $region26: #{_lambda_.5} parent=11 // pred_check_branch
        %173 = sbr.rel (%p171) target = $region28
      $region27: #{_lambda_.5} parent=11 // pred_region
        _
      $region28: #{_lambda_.5} parent=11 // pred_fallthru
        _
    $region12: #{_lambda_.5} parent=5 // pred_fallthru
      _
    %p174 = scmp.lt.s32.totalorder %s11, 2
    // Predicated region
    $region29: #{_lambda_.5} parent=5 // pred_check
      %p175 = pneg %p174
    $region30: #{_lambda_.5} parent=5 // pred_check_branch
      %177 = sbr.rel (%p175) target = $region32
    $region31: #{_lambda_.5} parent=5 // pred_region
      // Predicated region
      $region33: #{_lambda_.5} parent=31 // pred_check
        %p178 = pneg %p73
      $region34: #{_lambda_.5} parent=31 // pred_check_branch
        %180 = sbr.rel (%p178) target = $region36
      $region35: #{_lambda_.5} parent=31 // pred_region
        %p181 = scmp.lt.s32.totalorder %s11, 1
        %s182 = scalar_select %p181, %s11, 1
        %s183 = smul.addr %s182, 37
        %s184 = smul.addr %s183, 4
        %s185 = scalar_lea.vmem %s2, %s184
      $region36: #{_lambda_.5} parent=31 // pred_fallthru
        _
    $region32: #{_lambda_.5} parent=5 // pred_fallthru
      _
    %p186 = scmp.le.s32.totalorder 1, %s11
    %p187 = scmp.lt.s32.totalorder %s11, 3
    %p188 = pnand %p186, %p187
    %p189 = pneg %p188
    // Predicated region
    $region37: #{_lambda_.5} parent=5 // pred_check
      _
    $region38: #{_lambda_.5} parent=5 // pred_check_branch
      %191 = sbr.rel (%p188) target = $region40
    $region39: #{_lambda_.5} parent=5 // pred_region
      %s192 = ssub.s32 %s11, 1
      %p193 = pneg %p32
      %p194 = pneg %p29
      %p195 = pneg %p53
      %p196 = pneg %p50
      %p197 = scmp.lt.s32.totalorder %s16, 1
      %s198 = scalar_select %p197, %s16, 1
      %s199 = smul.addr %s198, 37
      %s200 = smul.addr %s199, 4
      %s201 = scalar_lea.vmem %s2, %s200
      %p202 = pneg %p79
      %p203 = pneg %p76
      %p204 = pneg %p100
      %p205 = pneg %p97
      %p206 = pneg %p121
      %p207 = pneg %p118
      %p208 = pneg %p147
      %p209 = pneg %p144
      %p210 = scmp.lt.s32.totalorder %s16, 1
      %s211 = scalar_select %p210, %s16, 1
      %s212 = smul.addr %s211, 34
      %s213 = smul.addr %s212, 4
      %s214 = scalar_lea.vmem %s5, %s213
      %p215 = scmp.lt.s32.totalorder %s16, 1
      %s216 = scalar_select %p215, %s16, 1
      %s217 = smul.addr %s216, 37
      %s218 = smul.addr %s217, 4
      %s219 = scalar_lea.vmem %s2, %s218
      %p220 = scmp.lt.s32.totalorder %s16, 1
      %s221 = scalar_select %p220, %s16, 1
      %s222 = smul.addr %s221, 34
      %s223 = smul.addr %s222, 4
      %s224 = scalar_lea.vmem %s5, %s223
      %v226 = vld [vmem:[%s219] sm:$0xf]
      %v227 = vld [vmem:[%s219 + $0x4] sm:$0xf]
      %v228 = vld [vmem:[%s219 + $0x8] sm:$0xf]
      %v229 = vld [vmem:[%s219 + $0xc] sm:$0xf]
      %v230 = vld [vmem:[%s219 + $0x10] sm:$0xf]
      %v231 = vld [vmem:[%s219 + $0x14] sm:$0xf]
      %v232 = vld [vmem:[%s219 + $0x18] sm:$0xf]
      %v233 = vld [vmem:[%s219 + $0x1c] sm:$0xf]
      %v234 = vld [vmem:[%s219 + $0x20] sm:$0xf]
      %v235 = vld [vmem:[%s219 + $0x24] sm:$0xf]
      %v236 = vld [vmem:[%s219 + $0x28] sm:$0xf]
      %v237 = vld [vmem:[%s219 + $0x2c] sm:$0xf]
      %v238 = vld [vmem:[%s219 + $0x30] sm:$0xf]
      %v239 = vld [vmem:[%s219 + $0x34] sm:$0xf]
      %v240 = vld [vmem:[%s219 + $0x38] sm:$0xf]
      %v241 = vld [vmem:[%s219 + $0x3c] sm:$0xf]
      %v242 = vld [vmem:[%s219 + $0x40] sm:$0xf]
      %v243 = vld [vmem:[%s219 + $0x44] sm:$0xf]
      %v244 = vld [vmem:[%s219 + $0x48] sm:$0xf]
      %v245 = vld [vmem:[%s219 + $0x4c] sm:$0xf]
      %v246 = vld [vmem:[%s219 + $0x50] sm:$0xf]
      %v247 = vld [vmem:[%s219 + $0x54] sm:$0xf]
      %v248 = vld [vmem:[%s219 + $0x58] sm:$0xf]
      %v249 = vld [vmem:[%s219 + $0x5c] sm:$0xf]
      %v250 = vld [vmem:[%s219 + $0x60] sm:$0xf]
      %v251 = vld [vmem:[%s219 + $0x64] sm:$0xf]
      %v252 = vld [vmem:[%s219 + $0x68] sm:$0xf]
      %v253 = vld [vmem:[%s219 + $0x6c] sm:$0xf]
      %v254 = vld [vmem:[%s219 + $0x70] sm:$0xf]
      %v255 = vld [vmem:[%s219 + $0x74] sm:$0xf]
      %v256 = vld [vmem:[%s219 + $0x78] sm:$0xf]
      %v257 = vld [vmem:[%s219 + $0x7c] sm:$0xf]
      %v258 = vld [vmem:[%s219 + $0x80] sm:$0xf]
      %v259 = vld [vmem:[%s219 + $0x84] sm:$0xf]
      %v260 = vld [vmem:[%s3] sm:$0xf]
      %v261 = vld [vmem:[%s3 + $0x4] sm:$0xf]
      %v262 = vld [vmem:[%s219 + $0x88] sm:$0x1]
      %s263 = scalar_lea.vmem %s3, 8
      %v264 = vld [vmem:[%s263] sm:$0xf]
      %v265 = vld [vmem:[%s263 + $0x4] sm:$0xf]
      %v301 = vunpack.c.l.b16 %v226
      %v302 = vunpack.c.l.b16 %v227
      %v303 = vunpack.c.l.b16 %v228
      %v304 = vunpack.c.l.b16 %v229
      %v305 = vunpack.c.l.b16 %v230
      %v306 = vunpack.c.l.b16 %v231
      %v307 = vunpack.c.l.b16 %v232
      %v308 = vunpack.c.l.b16 %v233
      %v309 = vunpack.c.l.b16 %v234
      %v310 = vunpack.c.l.b16 %v235
      %v311 = vunpack.c.l.b16 %v236
      %v312 = vunpack.c.l.b16 %v237
      %v313 = vunpack.c.l.b16 %v238
      %v314 = vunpack.c.l.b16 %v239
      %v315 = vunpack.c.l.b16 %v240
      %v316 = vunpack.c.l.b16 %v241
      %v317 = vunpack.c.l.b16 %v242
      %v318 = vunpack.c.l.b16 %v243
      %v319 = vunpack.c.l.b16 %v244
      %v320 = vunpack.c.l.b16 %v245
      %v321 = vunpack.c.l.b16 %v246
      %v322 = vunpack.c.l.b16 %v247
      %v323 = vunpack.c.l.b16 %v248
      %v324 = vunpack.c.l.b16 %v249
      %v325 = vunpack.c.l.b16 %v250
      %v326 = vunpack.c.l.b16 %v251
      %v327 = vunpack.c.l.b16 %v252
      %v328 = vunpack.c.l.b16 %v253
      %v329 = vunpack.c.l.b16 %v254
      %v330 = vunpack.c.l.b16 %v255
      %v331 = vunpack.c.l.b16 %v256
      %v332 = vunpack.c.l.b16 %v257
      %v333 = vunpack.c.l.b16 %v258
      %v334 = vunpack.c.l.b16 %v259
      %v335 = vunpack.c.l.b16 %v262
      %v336 = vpack.c.b16 %v302, %v301
      %v337 = vpack.c.b16 %v304, %v303
      %v338 = vpack.c.b16 %v306, %v305
      %v339 = vpack.c.b16 %v308, %v307
      %v340 = vpack.c.b16 %v310, %v309
      %v341 = vpack.c.b16 %v312, %v311
      %v342 = vpack.c.b16 %v314, %v313
      %v343 = vpack.c.b16 %v316, %v315
      %v344 = vpack.c.b16 %v318, %v317
      %v345 = vpack.c.b16 %v320, %v319
      %v346 = vpack.c.b16 %v322, %v321
      %v347 = vpack.c.b16 %v324, %v323
      %v348 = vpack.c.b16 %v326, %v325
      %v349 = vpack.c.b16 %v328, %v327
      %v350 = vpack.c.b16 %v330, %v329
      %v351 = vpack.c.b16 %v332, %v331
      %v352 = vpack.c.b16 %v334, %v333
      %v353 = vpack.c.b16 %v335, %v335
      %vm354 = vsmask.f32 7424
      %v356 = vshrl.u32 %v336, 16
      %v358 = vshll.u32 %v336, 16
      %v360 = vrot.slane %v358, 1
      %v361 = vor.u32 %v356, %v360
      %v363 = vshll.u32 %v337, 16
      %v365 = vrot.slane %v363, 1
      %v366 = vsel %vm354, %v361, %v365
      %v367 = vshrl.u32 %v337, 16
      %v369 = vor.u32 %v367, %v365
      %v371 = vshll.u32 %v338, 16
      %v373 = vrot.slane %v371, 1
      %v374 = vsel %vm354, %v369, %v373
      %v375 = vshrl.u32 %v338, 16
      %v377 = vor.u32 %v375, %v373
      %v379 = vshll.u32 %v339, 16
      %v381 = vrot.slane %v379, 1
      %v382 = vsel %vm354, %v377, %v381
      %v383 = vshrl.u32 %v339, 16
      %v385 = vor.u32 %v383, %v381
      %v387 = vshll.u32 %v340, 16
      %v389 = vrot.slane %v387, 1
      %v390 = vsel %vm354, %v385, %v389
      %v391 = vshrl.u32 %v340, 16
      %v393 = vor.u32 %v391, %v389
      %v395 = vshll.u32 %v341, 16
      %v397 = vrot.slane %v395, 1
      %v398 = vsel %vm354, %v393, %v397
      %v399 = vshrl.u32 %v341, 16
      %v401 = vor.u32 %v399, %v397
      %v403 = vshll.u32 %v342, 16
      %v405 = vrot.slane %v403, 1
      %v406 = vsel %vm354, %v401, %v405
      %v407 = vshrl.u32 %v342, 16
      %v409 = vor.u32 %v407, %v405
      %v411 = vshll.u32 %v343, 16
      %v413 = vrot.slane %v411, 1
      %v414 = vsel %vm354, %v409, %v413
      %v415 = vshrl.u32 %v343, 16
      %v417 = vor.u32 %v415, %v413
      %v419 = vshll.u32 %v344, 16
      %v421 = vrot.slane %v419, 1
      %v422 = vsel %vm354, %v417, %v421
      %v423 = vshrl.u32 %v344, 16
      %v425 = vor.u32 %v423, %v421
      %v427 = vshll.u32 %v345, 16
      %v429 = vrot.slane %v427, 1
      %v430 = vsel %vm354, %v425, %v429
      %v431 = vshrl.u32 %v345, 16
      %v433 = vor.u32 %v431, %v429
      %v435 = vshll.u32 %v346, 16
      %v437 = vrot.slane %v435, 1
      %v438 = vsel %vm354, %v433, %v437
      %v439 = vshrl.u32 %v346, 16
      %v441 = vor.u32 %v439, %v437
      %v443 = vshll.u32 %v347, 16
      %v445 = vrot.slane %v443, 1
      %v446 = vsel %vm354, %v441, %v445
      %v447 = vshrl.u32 %v347, 16
      %v449 = vor.u32 %v447, %v445
      %v451 = vshll.u32 %v348, 16
      %v453 = vrot.slane %v451, 1
      %v454 = vsel %vm354, %v449, %v453
      %v455 = vshrl.u32 %v348, 16
      %v457 = vor.u32 %v455, %v453
      %v459 = vshll.u32 %v349, 16
      %v461 = vrot.slane %v459, 1
      %v462 = vsel %vm354, %v457, %v461
      %v463 = vshrl.u32 %v349, 16
      %v465 = vor.u32 %v463, %v461
      %v467 = vshll.u32 %v350, 16
      %v469 = vrot.slane %v467, 1
      %v470 = vsel %vm354, %v465, %v469
      %v471 = vshrl.u32 %v350, 16
      %v473 = vor.u32 %v471, %v469
      %v475 = vshll.u32 %v351, 16
      %v477 = vrot.slane %v475, 1
      %v478 = vsel %vm354, %v473, %v477
      %v479 = vshrl.u32 %v351, 16
      %v481 = vor.u32 %v479, %v477
      %v483 = vshll.u32 %v352, 16
      %v485 = vrot.slane %v483, 1
      %v486 = vsel %vm354, %v481, %v485
      %v487 = vshrl.u32 %v352, 16
      %v489 = vor.u32 %v487, %v485
      %v491 = vshll.u32 %v353, 16
      %v493 = vrot.slane %v491, 1
      %v494 = vsel %vm354, %v489, %v493
      %v497 = vunpack.c.l.b16 %v264
      %v498 = vunpack.c.l.b16 %v265
      %v499 = vpack.c.b16 %v498, %v497
      %vm501 = vcmask 130048
      %v503 = vsel %vm501, %v366, 0
      %v506 = vsel %vm501, %v374, 0
      %v509 = vsel %vm501, %v382, 0
      %v512 = vsel %vm501, %v390, 0
      %v515 = vsel %vm501, %v398, 0
      %v518 = vsel %vm501, %v406, 0
      %v521 = vsel %vm501, %v414, 0
      %v524 = vsel %vm501, %v422, 0
      %v527 = vsel %vm501, %v430, 0
      %v530 = vsel %vm501, %v438, 0
      %v533 = vsel %vm501, %v446, 0
      %v536 = vsel %vm501, %v454, 0
      %v539 = vsel %vm501, %v462, 0
      %v542 = vsel %vm501, %v470, 0
      %v545 = vsel %vm501, %v478, 0
      %v548 = vsel %vm501, %v486, 0
      %v551 = vsel %vm501, %v494, 0
      %553 = vmatprep.subr.bf16.mxu0 0
      %554 = vmatpush1.bf16.msra.mxu0 %v499
      %555 = vmatprep.subr.bf16.mxu0 0
      %556 = vmatpush1.bf16.msra.mxu0 0
      %557 = vmatprep.subr.bf16.mxu0 0
      %558 = vmatpush1.bf16.msra.mxu0 0
      %559 = vmatprep.subr.bf16.mxu0 0
      %560 = vmatpush1.bf16.msra.mxu0 0
      %561 = vmatprep.subr.bf16.mxu0 0
      %562 = vmatpush1.bf16.msra.mxu0 0
      %563 = vmatprep.subr.bf16.mxu0 0
      %564 = vmatpush1.bf16.msra.mxu0 0
      %565 = vmatprep.subr.bf16.mxu0 0
      %566 = vmatpush1.bf16.msra.mxu0 0
      %567 = vmatprep.subr.bf16.mxu0 0
      %568 = vmatpush1.bf16.msra.mxu0 0
      %569 = vmatprep.subr.bf16.mxu0 0
      %570 = vmatpush1.bf16.msra.mxu0 0
      %571 = vmatprep.subr.bf16.mxu0 0
      %572 = vmatpush1.bf16.msra.mxu0 0
      %573 = vmatprep.subr.bf16.mxu0 0
      %574 = vmatpush1.bf16.msra.mxu0 0
      %575 = vmatprep.subr.bf16.mxu0 0
      %576 = vmatpush1.bf16.msra.mxu0 0
      %577 = vmatprep.subr.bf16.mxu0 0
      %578 = vmatpush1.bf16.msra.mxu0 0
      %579 = vmatprep.subr.bf16.mxu0 0
      %580 = vmatpush1.bf16.msra.mxu0 0
      %581 = vmatprep.subr.bf16.mxu0 0
      %582 = vmatpush1.bf16.msra.mxu0 0
      %583 = vmatprep.subr.bf16.mxu0 0
      %584 = vmatpush1.bf16.msra.mxu0 0
      %585 = vmatprep.mubr.bf16.mxu0 0
      %586 = vmatmul.mubr.bf16.gmra.mrb[0].mxu0 %v503
      %v587 = vpop.f32.mrb[0].mxu0
      %v588 = vadd.f32 0.0, %v587
      %v589 = vpop.f32.mrb[0].mxu0
      %v590 = vpop.f32.mrb[0].mxu0
      %v591 = vadd.f32 0.0, %v590
      %v592 = vpop.f32.mrb[0].mxu0
      %593 = vmatprep.mubr.bf16.mxu0 0
      %594 = vmatmul.mubr.bf16.gmra.mrb[0].mxu0 %v506
      %v595 = vpop.f32.mrb[0].mxu0
      %v596 = vadd.f32 0.0, %v595
      %v597 = vpop.f32.mrb[0].mxu0
      %v598 = vpop.f32.mrb[0].mxu0
      %v599 = vadd.f32 0.0, %v598
      %v600 = vpop.f32.mrb[0].mxu0
      %601 = vmatprep.mubr.bf16.mxu0 0
      %602 = vmatmul.mubr.bf16.gmra.mrb[0].mxu0 %v509
      %v603 = vpop.f32.mrb[0].mxu0
      %v604 = vadd.f32 0.0, %v603
      %v605 = vpop.f32.mrb[0].mxu0
      %v606 = vpop.f32.mrb[0].mxu0
      %v607 = vadd.f32 0.0, %v606
      %v608 = vpop.f32.mrb[0].mxu0
      %609 = vmatprep.mubr.bf16.mxu0 0
      %610 = vmatmul.mubr.bf16.gmra.mrb[0].mxu0 %v512
      %v611 = vpop.f32.mrb[0].mxu0
      %v612 = vadd.f32 0.0, %v611
      %v613 = vpop.f32.mrb[0].mxu0
      %v614 = vpop.f32.mrb[0].mxu0
      %v615 = vadd.f32 0.0, %v614
      %v616 = vpop.f32.mrb[0].mxu0
      %617 = vmatprep.mubr.bf16.mxu0 0
      %618 = vmatmul.mubr.bf16.gmra.mrb[0].mxu0 %v515
      %v619 = vpop.f32.mrb[0].mxu0
      %v620 = vadd.f32 0.0, %v619
      %v621 = vpop.f32.mrb[0].mxu0
      %v622 = vpop.f32.mrb[0].mxu0
      %v623 = vadd.f32 0.0, %v622
      %v624 = vpop.f32.mrb[0].mxu0
      %625 = vmatprep.mubr.bf16.mxu0 0
      %626 = vmatmul.mubr.bf16.gmra.mrb[0].mxu0 %v518
      %v627 = vpop.f32.mrb[0].mxu0
      %v628 = vadd.f32 0.0, %v627
      %v629 = vpop.f32.mrb[0].mxu0
      %v630 = vpop.f32.mrb[0].mxu0
      %v631 = vadd.f32 0.0, %v630
      %v632 = vpop.f32.mrb[0].mxu0
      %633 = vmatprep.mubr.bf16.mxu0 0
      %634 = vmatmul.mubr.bf16.gmra.mrb[0].mxu0 %v521
      %v635 = vpop.f32.mrb[0].mxu0
      %v636 = vadd.f32 0.0, %v635
      %v637 = vpop.f32.mrb[0].mxu0
      %v638 = vpop.f32.mrb[0].mxu0
      %v639 = vadd.f32 0.0, %v638
      %v640 = vpop.f32.mrb[0].mxu0
      %641 = vmatprep.mubr.bf16.mxu0 0
      %642 = vmatmul.mubr.bf16.gmra.mrb[0].mxu0 %v524
      %v643 = vpop.f32.mrb[0].mxu0
      %v644 = vadd.f32 0.0, %v643
      %v645 = vpop.f32.mrb[0].mxu0
      %v646 = vpop.f32.mrb[0].mxu0
      %v647 = vadd.f32 0.0, %v646
      %v648 = vpop.f32.mrb[0].mxu0
      %649 = vmatprep.mubr.bf16.mxu0 0
      %650 = vmatmul.mubr.bf16.gmra.mrb[0].mxu0 %v527
      %v651 = vpop.f32.mrb[0].mxu0
      %v652 = vadd.f32 0.0, %v651
      %v653 = vpop.f32.mrb[0].mxu0
      %v654 = vpop.f32.mrb[0].mxu0
      %v655 = vadd.f32 0.0, %v654
      %v656 = vpop.f32.mrb[0].mxu0
      %657 = vmatprep.mubr.bf16.mxu0 0
      %658 = vmatmul.mubr.bf16.gmra.mrb[0].mxu0 %v530
      %v659 = vpop.f32.mrb[0].mxu0
      %v660 = vadd.f32 0.0, %v659
      %v661 = vpop.f32.mrb[0].mxu0
      %v662 = vpop.f32.mrb[0].mxu0
      %v663 = vadd.f32 0.0, %v662
      %v664 = vpop.f32.mrb[0].mxu0
      %665 = vmatprep.mubr.bf16.mxu0 0
      %666 = vmatmul.mubr.bf16.gmra.mrb[0].mxu0 %v533
      %v667 = vpop.f32.mrb[0].mxu0
      %v668 = vadd.f32 0.0, %v667
      %v669 = vpop.f32.mrb[0].mxu0
      %v670 = vpop.f32.mrb[0].mxu0
      %v671 = vadd.f32 0.0, %v670
      %v672 = vpop.f32.mrb[0].mxu0
      %673 = vmatprep.mubr.bf16.mxu0 0
      %674 = vmatmul.mubr.bf16.gmra.mrb[0].mxu0 %v536
      %v675 = vpop.f32.mrb[0].mxu0
      %v676 = vadd.f32 0.0, %v675
      %v677 = vpop.f32.mrb[0].mxu0
      %v678 = vpop.f32.mrb[0].mxu0
      %v679 = vadd.f32 0.0, %v678
      %v680 = vpop.f32.mrb[0].mxu0
      %681 = vmatprep.mubr.bf16.mxu0 0
      %682 = vmatmul.mubr.bf16.gmra.mrb[0].mxu0 %v539
      %v683 = vpop.f32.mrb[0].mxu0
      %v684 = vadd.f32 0.0, %v683
      %v685 = vpop.f32.mrb[0].mxu0
      %v686 = vpop.f32.mrb[0].mxu0
      %v687 = vadd.f32 0.0, %v686
      %v688 = vpop.f32.mrb[0].mxu0
      %689 = vmatprep.mubr.bf16.mxu0 0
      %690 = vmatmul.mubr.bf16.gmra.mrb[0].mxu0 %v542
      %v691 = vpop.f32.mrb[0].mxu0
      %v692 = vadd.f32 0.0, %v691
      %v693 = vpop.f32.mrb[0].mxu0
      %v694 = vpop.f32.mrb[0].mxu0
      %v695 = vadd.f32 0.0, %v694
      %v696 = vpop.f32.mrb[0].mxu0
      %697 = vmatprep.mubr.bf16.mxu0 0
      %698 = vmatmul.mubr.bf16.gmra.mrb[0].mxu0 %v545
      %v699 = vpop.f32.mrb[0].mxu0
      %v700 = vadd.f32 0.0, %v699
      %v701 = vpop.f32.mrb[0].mxu0
      %v702 = vpop.f32.mrb[0].mxu0
      %v703 = vadd.f32 0.0, %v702
      %v704 = vpop.f32.mrb[0].mxu0
      %705 = vmatprep.mubr.bf16.mxu0 0
      %706 = vmatmul.mubr.bf16.gmra.mrb[0].mxu0 %v548
      %v707 = vpop.f32.mrb[0].mxu0
      %v708 = vadd.f32 0.0, %v707
      %v709 = vpop.f32.mrb[0].mxu0
      %v710 = vpop.f32.mrb[0].mxu0
      %v711 = vadd.f32 0.0, %v710
      %v712 = vpop.f32.mrb[0].mxu0
      %713 = vmatprep.mubr.bf16.mxu0 0
      %714 = vmatmul.mubr.bf16.gmra.mrb[0].mxu0 %v551
      %v715 = vpop.f32.mrb[0].mxu0
      %v716 = vadd.f32 0.0, %v715
      %v717 = vpop.f32.mrb[0].mxu0
      %v718 = vpop.f32.mrb[0].mxu0
      %v719 = vadd.f32 0.0, %v718
      %v720 = vpop.f32.mrb[0].mxu0
      %721 = vdwg.mxu0
      %v724 = vunpack.c.l.b16 %v260
      %v725 = vunpack.c.l.b16 %v261
      %v726 = vpack.c.b16 %v725, %v724
      %v728 = vsel %vm501, %v336, 0
      %v730 = vsel %vm501, %v337, 0
      %v732 = vsel %vm501, %v338, 0
      %v734 = vsel %vm501, %v339, 0
      %v736 = vsel %vm501, %v340, 0
      %v738 = vsel %vm501, %v341, 0
      %v740 = vsel %vm501, %v342, 0
      %v742 = vsel %vm501, %v343, 0
      %v744 = vsel %vm501, %v344, 0
      %v746 = vsel %vm501, %v345, 0
      %v748 = vsel %vm501, %v346, 0
      %v750 = vsel %vm501, %v347, 0
      %v752 = vsel %vm501, %v348, 0
      %v754 = vsel %vm501, %v349, 0
      %v756 = vsel %vm501, %v350, 0
      %v758 = vsel %vm501, %v351, 0
      %v760 = vsel %vm501, %v352, 0
      %762 = vmatprep.subr.bf16.mxu0 0
      %763 = vmatpush1.bf16.msra.mxu0 %v726
      %764 = vmatprep.subr.bf16.mxu0 0
      %765 = vmatpush1.bf16.msra.mxu0 0
      %766 = vmatprep.subr.bf16.mxu0 0
      %767 = vmatpush1.bf16.msra.mxu0 0
      %768 = vmatprep.subr.bf16.mxu0 0
      %769 = vmatpush1.bf16.msra.mxu0 0
      %770 = vmatprep.subr.bf16.mxu0 0
      %771 = vmatpush1.bf16.msra.mxu0 0
      %772 = vmatprep.subr.bf16.mxu0 0
      %773 = vmatpush1.bf16.msra.mxu0 0
      %774 = vmatprep.subr.bf16.mxu0 0
      %775 = vmatpush1.bf16.msra.mxu0 0
      %776 = vmatprep.subr.bf16.mxu0 0
      %777 = vmatpush1.bf16.msra.mxu0 0
      %778 = vmatprep.subr.bf16.mxu0 0
      %779 = vmatpush1.bf16.msra.mxu0 0
      %780 = vmatprep.subr.bf16.mxu0 0
      %781 = vmatpush1.bf16.msra.mxu0 0
      %782 = vmatprep.subr.bf16.mxu0 0
      %783 = vmatpush1.bf16.msra.mxu0 0
      %784 = vmatprep.subr.bf16.mxu0 0
      %785 = vmatpush1.bf16.msra.mxu0 0
      %786 = vmatprep.subr.bf16.mxu0 0
      %787 = vmatpush1.bf16.msra.mxu0 0
      %788 = vmatprep.subr.bf16.mxu0 0
      %789 = vmatpush1.bf16.msra.mxu0 0
      %790 = vmatprep.subr.bf16.mxu0 0
      %791 = vmatpush1.bf16.msra.mxu0 0
      %792 = vmatprep.subr.bf16.mxu0 0
      %793 = vmatpush1.bf16.msra.mxu0 0
      %794 = vmatprep.mubr.bf16.mxu0 0
      %795 = vmatmul.mubr.bf16.gmra.mrb[0].mxu0 %v728
      %v796 = vpop.f32.mrb[0].mxu0
      %v797 = vadd.f32 %v588, %v796
      %v798 = vpop.f32.mrb[0].mxu0
      %v799 = vpop.f32.mrb[0].mxu0
      %v800 = vadd.f32 %v591, %v799
      %v801 = vpop.f32.mrb[0].mxu0
      %802 = vmatprep.mubr.bf16.mxu0 0
      %803 = vmatmul.mubr.bf16.gmra.mrb[0].mxu0 %v730
      %v804 = vpop.f32.mrb[0].mxu0
      %v805 = vadd.f32 %v596, %v804
      %v806 = vpop.f32.mrb[0].mxu0
      %v807 = vpop.f32.mrb[0].mxu0
      %v808 = vadd.f32 %v599, %v807
      %v809 = vpop.f32.mrb[0].mxu0
      %810 = vmatprep.mubr.bf16.mxu0 0
      %811 = vmatmul.mubr.bf16.gmra.mrb[0].mxu0 %v732
      %v812 = vpop.f32.mrb[0].mxu0
      %v813 = vadd.f32 %v604, %v812
      %v814 = vpop.f32.mrb[0].mxu0
      %v815 = vpop.f32.mrb[0].mxu0
      %v816 = vadd.f32 %v607, %v815
      %v817 = vpop.f32.mrb[0].mxu0
      %818 = vmatprep.mubr.bf16.mxu0 0
      %819 = vmatmul.mubr.bf16.gmra.mrb[0].mxu0 %v734
      %v820 = vpop.f32.mrb[0].mxu0
      %v821 = vadd.f32 %v612, %v820
      %v822 = vpop.f32.mrb[0].mxu0
      %v823 = vpop.f32.mrb[0].mxu0
      %v824 = vadd.f32 %v615, %v823
      %v825 = vpop.f32.mrb[0].mxu0
      %826 = vmatprep.mubr.bf16.mxu0 0
      %827 = vmatmul.mubr.bf16.gmra.mrb[0].mxu0 %v736
      %v828 = vpop.f32.mrb[0].mxu0
      %v829 = vadd.f32 %v620, %v828
      %v830 = vpop.f32.mrb[0].mxu0
      %v831 = vpop.f32.mrb[0].mxu0
      %v832 = vadd.f32 %v623, %v831
      %v833 = vpop.f32.mrb[0].mxu0
      %834 = vmatprep.mubr.bf16.mxu0 0
      %835 = vmatmul.mubr.bf16.gmra.mrb[0].mxu0 %v738
      %v836 = vpop.f32.mrb[0].mxu0
      %v837 = vadd.f32 %v628, %v836
      %v838 = vpop.f32.mrb[0].mxu0
      %v839 = vpop.f32.mrb[0].mxu0
      %v840 = vadd.f32 %v631, %v839
      %v841 = vpop.f32.mrb[0].mxu0
      %842 = vmatprep.mubr.bf16.mxu0 0
      %843 = vmatmul.mubr.bf16.gmra.mrb[0].mxu0 %v740
      %v844 = vpop.f32.mrb[0].mxu0
      %v845 = vadd.f32 %v636, %v844
      %v846 = vpop.f32.mrb[0].mxu0
      %v847 = vpop.f32.mrb[0].mxu0
      %v848 = vadd.f32 %v639, %v847
      %v849 = vpop.f32.mrb[0].mxu0
      %850 = vmatprep.mubr.bf16.mxu0 0
      %851 = vmatmul.mubr.bf16.gmra.mrb[0].mxu0 %v742
      %v852 = vpop.f32.mrb[0].mxu0
      %v853 = vadd.f32 %v644, %v852
      %v854 = vpop.f32.mrb[0].mxu0
      %v855 = vpop.f32.mrb[0].mxu0
      %v856 = vadd.f32 %v647, %v855
      %v857 = vpop.f32.mrb[0].mxu0
      %858 = vmatprep.mubr.bf16.mxu0 0
      %859 = vmatmul.mubr.bf16.gmra.mrb[0].mxu0 %v744
      %v860 = vpop.f32.mrb[0].mxu0
      %v861 = vadd.f32 %v652, %v860
      %v862 = vpop.f32.mrb[0].mxu0
      %v863 = vpop.f32.mrb[0].mxu0
      %v864 = vadd.f32 %v655, %v863
      %v865 = vpop.f32.mrb[0].mxu0
      %866 = vmatprep.mubr.bf16.mxu0 0
      %867 = vmatmul.mubr.bf16.gmra.mrb[0].mxu0 %v746
      %v868 = vpop.f32.mrb[0].mxu0
      %v869 = vadd.f32 %v660, %v868
      %v870 = vpop.f32.mrb[0].mxu0
      %v871 = vpop.f32.mrb[0].mxu0
      %v872 = vadd.f32 %v663, %v871
      %v873 = vpop.f32.mrb[0].mxu0
      %874 = vmatprep.mubr.bf16.mxu0 0
      %875 = vmatmul.mubr.bf16.gmra.mrb[0].mxu0 %v748
      %v876 = vpop.f32.mrb[0].mxu0
      %v877 = vadd.f32 %v668, %v876
      %v878 = vpop.f32.mrb[0].mxu0
      %v879 = vpop.f32.mrb[0].mxu0
      %v880 = vadd.f32 %v671, %v879
      %v881 = vpop.f32.mrb[0].mxu0
      %882 = vmatprep.mubr.bf16.mxu0 0
      %883 = vmatmul.mubr.bf16.gmra.mrb[0].mxu0 %v750
      %v884 = vpop.f32.mrb[0].mxu0
      %v885 = vadd.f32 %v676, %v884
      %v886 = vpop.f32.mrb[0].mxu0
      %v887 = vpop.f32.mrb[0].mxu0
      %v888 = vadd.f32 %v679, %v887
      %v889 = vpop.f32.mrb[0].mxu0
      %890 = vmatprep.mubr.bf16.mxu0 0
      %891 = vmatmul.mubr.bf16.gmra.mrb[0].mxu0 %v752
      %v892 = vpop.f32.mrb[0].mxu0
      %v893 = vadd.f32 %v684, %v892
      %v894 = vpop.f32.mrb[0].mxu0
      %v895 = vpop.f32.mrb[0].mxu0
      %v896 = vadd.f32 %v687, %v895
      %v897 = vpop.f32.mrb[0].mxu0
      %898 = vmatprep.mubr.bf16.mxu0 0
      %899 = vmatmul.mubr.bf16.gmra.mrb[0].mxu0 %v754
      %v900 = vpop.f32.mrb[0].mxu0
      %v901 = vadd.f32 %v692, %v900
      %v902 = vpop.f32.mrb[0].mxu0
      %v903 = vpop.f32.mrb[0].mxu0
      %v904 = vadd.f32 %v695, %v903
      %v905 = vpop.f32.mrb[0].mxu0
      %906 = vmatprep.mubr.bf16.mxu0 0
      %907 = vmatmul.mubr.bf16.gmra.mrb[0].mxu0 %v756
      %v908 = vpop.f32.mrb[0].mxu0
      %v909 = vadd.f32 %v700, %v908
      %v910 = vpop.f32.mrb[0].mxu0
      %v911 = vpop.f32.mrb[0].mxu0
      %v912 = vadd.f32 %v703, %v911
      %v913 = vpop.f32.mrb[0].mxu0
      %914 = vmatprep.mubr.bf16.mxu0 0
      %915 = vmatmul.mubr.bf16.gmra.mrb[0].mxu0 %v758
      %v916 = vpop.f32.mrb[0].mxu0
      %v917 = vadd.f32 %v708, %v916
      %v918 = vpop.f32.mrb[0].mxu0
      %v919 = vpop.f32.mrb[0].mxu0
      %v920 = vadd.f32 %v711, %v919
      %v921 = vpop.f32.mrb[0].mxu0
      %922 = vmatprep.mubr.bf16.mxu0 0
      %923 = vmatmul.mubr.bf16.gmra.mrb[0].mxu0 %v760
      %v924 = vpop.f32.mrb[0].mxu0
      %v925 = vadd.f32 %v716, %v924
      %v926 = vpop.f32.mrb[0].mxu0
      %v927 = vpop.f32.mrb[0].mxu0
      %v928 = vadd.f32 %v719, %v927
      %v929 = vpop.f32.mrb[0].mxu0
      %930 = vdwg.mxu0
      %v931 = vld [vmem:[%s219 + $0x8] sm:$0xf]
      %v932 = vld [vmem:[%s219 + $0xc] sm:$0xf]
      %v933 = vld [vmem:[%s219 + $0x10] sm:$0xf]
      %v934 = vld [vmem:[%s219 + $0x14] sm:$0xf]
      %v935 = vld [vmem:[%s219 + $0x18] sm:$0xf]
      %v936 = vld [vmem:[%s219 + $0x1c] sm:$0xf]
      %v937 = vld [vmem:[%s219 + $0x20] sm:$0xf]
      %v938 = vld [vmem:[%s219 + $0x24] sm:$0xf]
      %v939 = vld [vmem:[%s219 + $0x28] sm:$0xf]
      %v940 = vld [vmem:[%s219 + $0x2c] sm:$0xf]
      %v941 = vld [vmem:[%s219 + $0x30] sm:$0xf]
      %v942 = vld [vmem:[%s219 + $0x34] sm:$0xf]
      %v943 = vld [vmem:[%s219 + $0x38] sm:$0xf]
      %v944 = vld [vmem:[%s219 + $0x3c] sm:$0xf]
      %v945 = vld [vmem:[%s219 + $0x40] sm:$0xf]
      %v946 = vld [vmem:[%s219 + $0x44] sm:$0xf]
      %v947 = vld [vmem:[%s219 + $0x48] sm:$0xf]
      %v948 = vld [vmem:[%s219 + $0x4c] sm:$0xf]
      %v949 = vld [vmem:[%s219 + $0x50] sm:$0xf]
      %v950 = vld [vmem:[%s219 + $0x54] sm:$0xf]
      %v951 = vld [vmem:[%s219 + $0x58] sm:$0xf]
      %v952 = vld [vmem:[%s219 + $0x5c] sm:$0xf]
      %v953 = vld [vmem:[%s219 + $0x60] sm:$0xf]
      %v954 = vld [vmem:[%s219 + $0x64] sm:$0xf]
      %v955 = vld [vmem:[%s219 + $0x68] sm:$0xf]
      %v956 = vld [vmem:[%s219 + $0x6c] sm:$0xf]
      %v957 = vld [vmem:[%s219 + $0x70] sm:$0xf]
      %v958 = vld [vmem:[%s219 + $0x74] sm:$0xf]
      %v959 = vld [vmem:[%s219 + $0x78] sm:$0xf]
      %v960 = vld [vmem:[%s219 + $0x7c] sm:$0xf]
      %v961 = vld [vmem:[%s219 + $0x80] sm:$0xf]
      %v962 = vld [vmem:[%s219 + $0x84] sm:$0xf]
      %v963 = vld [vmem:[%s219 + $0x88] sm:$0xf]
      %v964 = vld [vmem:[%s219 + $0x8c] sm:$0xf]
      %v965 = vld [vmem:[%s219 + $0x90] sm:$0x1]
      %s966 = scalar_lea.vmem %s3, 16
      %v967 = vld [vmem:[%s966] sm:$0xf]
      %v968 = vld [vmem:[%s966 + $0x4] sm:$0xf]
      %v1004 = vunpack.c.l.b16 %v931
      %v1005 = vunpack.c.l.b16 %v932
      %v1006 = vunpack.c.l.b16 %v933
      %v1007 = vunpack.c.l.b16 %v934
      %v1008 = vunpack.c.l.b16 %v935
      %v1009 = vunpack.c.l.b16 %v936
      %v1010 = vunpack.c.l.b16 %v937
      %v1011 = vunpack.c.l.b16 %v938
      %v1012 = vunpack.c.l.b16 %v939
      %v1013 = vunpack.c.l.b16 %v940
      %v1014 = vunpack.c.l.b16 %v941
      %v1015 = vunpack.c.l.b16 %v942
      %v1016 = vunpack.c.l.b16 %v943
      %v1017 = vunpack.c.l.b16 %v944
      %v1018 = vunpack.c.l.b16 %v945
      %v1019 = vunpack.c.l.b16 %v946
      %v1020 = vunpack.c.l.b16 %v947
      %v1021 = vunpack.c.l.b16 %v948
      %v1022 = vunpack.c.l.b16 %v949
      %v1023 = vunpack.c.l.b16 %v950
      %v1024 = vunpack.c.l.b16 %v951
      %v1025 = vunpack.c.l.b16 %v952
      %v1026 = vunpack.c.l.b16 %v953
      %v1027 = vunpack.c.l.b16 %v954
      %v1028 = vunpack.c.l.b16 %v955
      %v1029 = vunpack.c.l.b16 %v956
      %v1030 = vunpack.c.l.b16 %v957
      %v1031 = vunpack.c.l.b16 %v958
      %v1032 = vunpack.c.l.b16 %v959
      %v1033 = vunpack.c.l.b16 %v960
      %v1034 = vunpack.c.l.b16 %v961
      %v1035 = vunpack.c.l.b16 %v962
      %v1036 = vunpack.c.l.b16 %v963
      %v1037 = vunpack.c.l.b16 %v964
      %v1038 = vunpack.c.l.b16 %v965
      %v1039 = vpack.c.b16 %v1005, %v1004
      %v1040 = vpack.c.b16 %v1007, %v1006
      %v1041 = vpack.c.b16 %v1009, %v1008
      %v1042 = vpack.c.b16 %v1011, %v1010
      %v1043 = vpack.c.b16 %v1013, %v1012
      %v1044 = vpack.c.b16 %v1015, %v1014
      %v1045 = vpack.c.b16 %v1017, %v1016
      %v1046 = vpack.c.b16 %v1019, %v1018
      %v1047 = vpack.c.b16 %v1021, %v1020
      %v1048 = vpack.c.b16 %v1023, %v1022
      %v1049 = vpack.c.b16 %v1025, %v1024
      %v1050 = vpack.c.b16 %v1027, %v1026
      %v1051 = vpack.c.b16 %v1029, %v1028
      %v1052 = vpack.c.b16 %v1031, %v1030
      %v1053 = vpack.c.b16 %v1033, %v1032
      %v1054 = vpack.c.b16 %v1035, %v1034
      %v1055 = vpack.c.b16 %v1037, %v1036
      %v1056 = vpack.c.b16 %v1038, %v1038
      %v1058 = vshrl.u32 %v1039, 16
      %v1060 = vshll.u32 %v1039, 16
      %v1062 = vrot.slane %v1060, 1
      %v1063 = vor.u32 %v1058, %v1062
      %v1065 = vshll.u32 %v1040, 16
      %v1067 = vrot.slane %v1065, 1
      %v1068 = vsel %vm354, %v1063, %v1067
      %v1069 = vshrl.u32 %v1040, 16
      %v1071 = vor.u32 %v1069, %v1067
      %v1073 = vshll.u32 %v1041, 16
      %v1075 = vrot.slane %v1073, 1
      %v1076 = vsel %vm354, %v1071, %v1075
      %v1077 = vshrl.u32 %v1041, 16
      %v1079 = vor.u32 %v1077, %v1075
      %v1081 = vshll.u32 %v1042, 16
      %v1083 = vrot.slane %v1081, 1
      %v1084 = vsel %vm354, %v1079, %v1083
      %v1085 = vshrl.u32 %v1042, 16
      %v1087 = vor.u32 %v1085, %v1083
      %v1089 = vshll.u32 %v1043, 16
      %v1091 = vrot.slane %v1089, 1
      %v1092 = vsel %vm354, %v1087, %v1091
      %v1093 = vshrl.u32 %v1043, 16
      %v1095 = vor.u32 %v1093, %v1091
      %v1097 = vshll.u32 %v1044, 16
      %v1099 = vrot.slane %v1097, 1
      %v1100 = vsel %vm354, %v1095, %v1099
      %v1101 = vshrl.u32 %v1044, 16
      %v1103 = vor.u32 %v1101, %v1099
      %v1105 = vshll.u32 %v1045, 16
      %v1107 = vrot.slane %v1105, 1
      %v1108 = vsel %vm354, %v1103, %v1107
      %v1109 = vshrl.u32 %v1045, 16
      %v1111 = vor.u32 %v1109, %v1107
      %v1113 = vshll.u32 %v1046, 16
      %v1115 = vrot.slane %v1113, 1
      %v1116 = vsel %vm354, %v1111, %v1115
      %v1117 = vshrl.u32 %v1046, 16
      %v1119 = vor.u32 %v1117, %v1115
      %v1121 = vshll.u32 %v1047, 16
      %v1123 = vrot.slane %v1121, 1
      %v1124 = vsel %vm354, %v1119, %v1123
      %v1125 = vshrl.u32 %v1047, 16
      %v1127 = vor.u32 %v1125, %v1123
      %v1129 = vshll.u32 %v1048, 16
      %v1131 = vrot.slane %v1129, 1
      %v1132 = vsel %vm354, %v1127, %v1131
      %v1133 = vshrl.u32 %v1048, 16
      %v1135 = vor.u32 %v1133, %v1131
      %v1137 = vshll.u32 %v1049, 16
      %v1139 = vrot.slane %v1137, 1
      %v1140 = vsel %vm354, %v1135, %v1139
      %v1141 = vshrl.u32 %v1049, 16
      %v1143 = vor.u32 %v1141, %v1139
      %v1145 = vshll.u32 %v1050, 16
      %v1147 = vrot.slane %v1145, 1
      %v1148 = vsel %vm354, %v1143, %v1147
      %v1149 = vshrl.u32 %v1050, 16
      %v1151 = vor.u32 %v1149, %v1147
      %v1153 = vshll.u32 %v1051, 16
      %v1155 = vrot.slane %v1153, 1
      %v1156 = vsel %vm354, %v1151, %v1155
      %v1157 = vshrl.u32 %v1051, 16
      %v1159 = vor.u32 %v1157, %v1155
      %v1161 = vshll.u32 %v1052, 16
      %v1163 = vrot.slane %v1161, 1
      %v1164 = vsel %vm354, %v1159, %v1163
      %v1165 = vshrl.u32 %v1052, 16
      %v1167 = vor.u32 %v1165, %v1163
      %v1169 = vshll.u32 %v1053, 16
      %v1171 = vrot.slane %v1169, 1
      %v1172 = vsel %vm354, %v1167, %v1171
      %v1173 = vshrl.u32 %v1053, 16
      %v1175 = vor.u32 %v1173, %v1171
      %v1177 = vshll.u32 %v1054, 16
      %v1179 = vrot.slane %v1177, 1
      %v1180 = vsel %vm354, %v1175, %v1179
      %v1181 = vshrl.u32 %v1054, 16
      %v1183 = vor.u32 %v1181, %v1179
      %v1185 = vshll.u32 %v1055, 16
      %v1187 = vrot.slane %v1185, 1
      %v1188 = vsel %vm354, %v1183, %v1187
      %v1189 = vshrl.u32 %v1055, 16
      %v1191 = vor.u32 %v1189, %v1187
      %v1193 = vshll.u32 %v1056, 16
      %v1195 = vrot.slane %v1193, 1
      %v1196 = vsel %vm354, %v1191, %v1195
      %v1199 = vunpack.c.l.b16 %v967
      %v1200 = vunpack.c.l.b16 %v968
      %v1201 = vpack.c.b16 %v1200, %v1199
      %v1204 = vsel %vm501, %v1068, 0
      %v1207 = vsel %vm501, %v1076, 0
      %v1210 = vsel %vm501, %v1084, 0
      %v1213 = vsel %vm501, %v1092, 0
      %v1216 = vsel %vm501, %v1100, 0
      %v1219 = vsel %vm501, %v1108, 0
      %v1222 = vsel %vm501, %v1116, 0
      %v1225 = vsel %vm501, %v1124, 0
      %v1228 = vsel %vm501, %v1132, 0
      %v1231 = vsel %vm501, %v1140, 0
      %v1234 = vsel %vm501, %v1148, 0
      %v1237 = vsel %vm501, %v1156, 0
      %v1240 = vsel %vm501, %v1164, 0
      %v1243 = vsel %vm501, %v1172, 0
      %v1246 = vsel %vm501, %v1180, 0
      %v1249 = vsel %vm501, %v1188, 0
      %v1252 = vsel %vm501, %v1196, 0
      %1254 = vmatprep.subr.bf16.mxu0 0
      %1255 = vmatpush1.bf16.msra.mxu0 %v1201
      %1256 = vmatprep.subr.bf16.mxu0 0
      %1257 = vmatpush1.bf16.msra.mxu0 0
      %1258 = vmatprep.subr.bf16.mxu0 0
      %1259 = vmatpush1.bf16.msra.mxu0 0
      %1260 = vmatprep.subr.bf16.mxu0 0
      %1261 = vmatpush1.bf16.msra.mxu0 0
      %1262 = vmatprep.subr.bf16.mxu0 0
      %1263 = vmatpush1.bf16.msra.mxu0 0
      %1264 = vmatprep.subr.bf16.mxu0 0
      %1265 = vmatpush1.bf16.msra.mxu0 0
      %1266 = vmatprep.subr.bf16.mxu0 0
      %1267 = vmatpush1.bf16.msra.mxu0 0
      %1268 = vmatprep.subr.bf16.mxu0 0
      %1269 = vmatpush1.bf16.msra.mxu0 0
      %1270 = vmatprep.subr.bf16.mxu0 0
      %1271 = vmatpush1.bf16.msra.mxu0 0
      %1272 = vmatprep.subr.bf16.mxu0 0
      %1273 = vmatpush1.bf16.msra.mxu0 0
      %1274 = vmatprep.subr.bf16.mxu0 0
      %1275 = vmatpush1.bf16.msra.mxu0 0
      %1276 = vmatprep.subr.bf16.mxu0 0
      %1277 = vmatpush1.bf16.msra.mxu0 0
      %1278 = vmatprep.subr.bf16.mxu0 0
      %1279 = vmatpush1.bf16.msra.mxu0 0
      %1280 = vmatprep.subr.bf16.mxu0 0
      %1281 = vmatpush1.bf16.msra.mxu0 0
      %1282 = vmatprep.subr.bf16.mxu0 0
      %1283 = vmatpush1.bf16.msra.mxu0 0
      %1284 = vmatprep.subr.bf16.mxu0 0
      %1285 = vmatpush1.bf16.msra.mxu0 0
      %1286 = vmatprep.mubr.bf16.mxu0 0
      %1287 = vmatmul.mubr.bf16.gmra.mrb[0].mxu0 %v1204
      %v1288 = vpop.f32.mrb[0].mxu0
      %v1289 = vadd.f32 0.0, %v1288
      %v1290 = vpop.f32.mrb[0].mxu0
      %v1291 = vpop.f32.mrb[0].mxu0
      %v1292 = vadd.f32 0.0, %v1291
      %v1293 = vpop.f32.mrb[0].mxu0
      %1294 = vmatprep.mubr.bf16.mxu0 0
      %1295 = vmatmul.mubr.bf16.gmra.mrb[0].mxu0 %v1207
      %v1296 = vpop.f32.mrb[0].mxu0
      %v1297 = vadd.f32 0.0, %v1296
      %v1298 = vpop.f32.mrb[0].mxu0
      %v1299 = vpop.f32.mrb[0].mxu0
      %v1300 = vadd.f32 0.0, %v1299
      %v1301 = vpop.f32.mrb[0].mxu0
      %1302 = vmatprep.mubr.bf16.mxu0 0
      %1303 = vmatmul.mubr.bf16.gmra.mrb[0].mxu0 %v1210
      %v1304 = vpop.f32.mrb[0].mxu0
      %v1305 = vadd.f32 0.0, %v1304
      %v1306 = vpop.f32.mrb[0].mxu0
      %v1307 = vpop.f32.mrb[0].mxu0
      %v1308 = vadd.f32 0.0, %v1307
      %v1309 = vpop.f32.mrb[0].mxu0
      %1310 = vmatprep.mubr.bf16.mxu0 0
      %1311 = vmatmul.mubr.bf16.gmra.mrb[0].mxu0 %v1213
      %v1312 = vpop.f32.mrb[0].mxu0
      %v1313 = vadd.f32 0.0, %v1312
      %v1314 = vpop.f32.mrb[0].mxu0
      %v1315 = vpop.f32.mrb[0].mxu0
      %v1316 = vadd.f32 0.0, %v1315
      %v1317 = vpop.f32.mrb[0].mxu0
      %1318 = vmatprep.mubr.bf16.mxu0 0
      %1319 = vmatmul.mubr.bf16.gmra.mrb[0].mxu0 %v1216
      %v1320 = vpop.f32.mrb[0].mxu0
      %v1321 = vadd.f32 0.0, %v1320
      %v1322 = vpop.f32.mrb[0].mxu0
      %v1323 = vpop.f32.mrb[0].mxu0
      %v1324 = vadd.f32 0.0, %v1323
      %v1325 = vpop.f32.mrb[0].mxu0
      %1326 = vmatprep.mubr.bf16.mxu0 0
      %1327 = vmatmul.mubr.bf16.gmra.mrb[0].mxu0 %v1219
      %v1328 = vpop.f32.mrb[0].mxu0
      %v1329 = vadd.f32 0.0, %v1328
      %v1330 = vpop.f32.mrb[0].mxu0
      %v1331 = vpop.f32.mrb[0].mxu0
      %v1332 = vadd.f32 0.0, %v1331
      %v1333 = vpop.f32.mrb[0].mxu0
      %1334 = vmatprep.mubr.bf16.mxu0 0
      %1335 = vmatmul.mubr.bf16.gmra.mrb[0].mxu0 %v1222
      %v1336 = vpop.f32.mrb[0].mxu0
      %v1337 = vadd.f32 0.0, %v1336
      %v1338 = vpop.f32.mrb[0].mxu0
      %v1339 = vpop.f32.mrb[0].mxu0
      %v1340 = vadd.f32 0.0, %v1339
      %v1341 = vpop.f32.mrb[0].mxu0
      %1342 = vmatprep.mubr.bf16.mxu0 0
      %1343 = vmatmul.mubr.bf16.gmra.mrb[0].mxu0 %v1225
      %v1344 = vpop.f32.mrb[0].mxu0
      %v1345 = vadd.f32 0.0, %v1344
      %v1346 = vpop.f32.mrb[0].mxu0
      %v1347 = vpop.f32.mrb[0].mxu0
      %v1348 = vadd.f32 0.0, %v1347
      %v1349 = vpop.f32.mrb[0].mxu0
      %1350 = vmatprep.mubr.bf16.mxu0 0
      %1351 = vmatmul.mubr.bf16.gmra.mrb[0].mxu0 %v1228
      %v1352 = vpop.f32.mrb[0].mxu0
      %v1353 = vadd.f32 0.0, %v1352
      %v1354 = vpop.f32.mrb[0].mxu0
      %v1355 = vpop.f32.mrb[0].mxu0
      %v1356 = vadd.f32 0.0, %v1355
      %v1357 = vpop.f32.mrb[0].mxu0
      %1358 = vmatprep.mubr.bf16.mxu0 0
      %1359 = vmatmul.mubr.bf16.gmra.mrb[0].mxu0 %v1231
      %v1360 = vpop.f32.mrb[0].mxu0
      %v1361 = vadd.f32 0.0, %v1360
      %v1362 = vpop.f32.mrb[0].mxu0
      %v1363 = vpop.f32.mrb[0].mxu0
      %v1364 = vadd.f32 0.0, %v1363
      %v1365 = vpop.f32.mrb[0].mxu0
      %1366 = vmatprep.mubr.bf16.mxu0 0
      %1367 = vmatmul.mubr.bf16.gmra.mrb[0].mxu0 %v1234
      %v1368 = vpop.f32.mrb[0].mxu0
      %v1369 = vadd.f32 0.0, %v1368
      %v1370 = vpop.f32.mrb[0].mxu0
      %v1371 = vpop.f32.mrb[0].mxu0
      %v1372 = vadd.f32 0.0, %v1371
      %v1373 = vpop.f32.mrb[0].mxu0
      %1374 = vmatprep.mubr.bf16.mxu0 0
      %1375 = vmatmul.mubr.bf16.gmra.mrb[0].mxu0 %v1237
      %v1376 = vpop.f32.mrb[0].mxu0
      %v1377 = vadd.f32 0.0, %v1376
      %v1378 = vpop.f32.mrb[0].mxu0
      %v1379 = vpop.f32.mrb[0].mxu0
      %v1380 = vadd.f32 0.0, %v1379
      %v1381 = vpop.f32.mrb[0].mxu0
      %1382 = vmatprep.mubr.bf16.mxu0 0
      %1383 = vmatmul.mubr.bf16.gmra.mrb[0].mxu0 %v1240
      %v1384 = vpop.f32.mrb[0].mxu0
      %v1385 = vadd.f32 0.0, %v1384
      %v1386 = vpop.f32.mrb[0].mxu0
      %v1387 = vpop.f32.mrb[0].mxu0
      %v1388 = vadd.f32 0.0, %v1387
      %v1389 = vpop.f32.mrb[0].mxu0
      %1390 = vmatprep.mubr.bf16.mxu0 0
      %1391 = vmatmul.mubr.bf16.gmra.mrb[0].mxu0 %v1243
      %v1392 = vpop.f32.mrb[0].mxu0
      %v1393 = vadd.f32 0.0, %v1392
      %v1394 = vpop.f32.mrb[0].mxu0
      %v1395 = vpop.f32.mrb[0].mxu0
      %v1396 = vadd.f32 0.0, %v1395
      %v1397 = vpop.f32.mrb[0].mxu0
      %1398 = vmatprep.mubr.bf16.mxu0 0
      %1399 = vmatmul.mubr.bf16.gmra.mrb[0].mxu0 %v1246
      %v1400 = vpop.f32.mrb[0].mxu0
      %v1401 = vadd.f32 0.0, %v1400
      %v1402 = vpop.f32.mrb[0].mxu0
      %v1403 = vpop.f32.mrb[0].mxu0
      %v1404 = vadd.f32 0.0, %v1403
      %v1405 = vpop.f32.mrb[0].mxu0
      %1406 = vmatprep.mubr.bf16.mxu0 0
      %1407 = vmatmul.mubr.bf16.gmra.mrb[0].mxu0 %v1249
      %v1408 = vpop.f32.mrb[0].mxu0
      %v1409 = vadd.f32 0.0, %v1408
      %v1410 = vpop.f32.mrb[0].mxu0
      %v1411 = vpop.f32.mrb[0].mxu0
      %v1412 = vadd.f32 0.0, %v1411
      %v1413 = vpop.f32.mrb[0].mxu0
      %1414 = vmatprep.mubr.bf16.mxu0 0
      %1415 = vmatmul.mubr.bf16.gmra.mrb[0].mxu0 %v1252
      %v1416 = vpop.f32.mrb[0].mxu0
      %v1417 = vadd.f32 0.0, %v1416
      %v1418 = vpop.f32.mrb[0].mxu0
      %v1419 = vpop.f32.mrb[0].mxu0
      %v1420 = vadd.f32 0.0, %v1419
      %v1421 = vpop.f32.mrb[0].mxu0
      %1422 = vdwg.mxu0
      %v1423 = vadd.f32 %v797, %v1289
      %v1424 = vadd.f32 %v800, %v1292
      %v1425 = vadd.f32 %v805, %v1297
      %v1426 = vadd.f32 %v808, %v1300
      %v1427 = vadd.f32 %v813, %v1305
      %v1428 = vadd.f32 %v816, %v1308
      %v1429 = vadd.f32 %v821, %v1313
      %v1430 = vadd.f32 %v824, %v1316
      %v1431 = vadd.f32 %v829, %v1321
      %v1432 = vadd.f32 %v832, %v1324
      %v1433 = vadd.f32 %v837, %v1329
      %v1434 = vadd.f32 %v840, %v1332
      %v1435 = vadd.f32 %v845, %v1337
      %v1436 = vadd.f32 %v848, %v1340
      %v1437 = vadd.f32 %v853, %v1345
      %v1438 = vadd.f32 %v856, %v1348
      %v1439 = vadd.f32 %v861, %v1353
      %v1440 = vadd.f32 %v864, %v1356
      %v1441 = vadd.f32 %v869, %v1361
      %v1442 = vadd.f32 %v872, %v1364
      %v1443 = vadd.f32 %v877, %v1369
      %v1444 = vadd.f32 %v880, %v1372
      %v1445 = vadd.f32 %v885, %v1377
      %v1446 = vadd.f32 %v888, %v1380
      %v1447 = vadd.f32 %v893, %v1385
      %v1448 = vadd.f32 %v896, %v1388
      %v1449 = vadd.f32 %v901, %v1393
      %v1450 = vadd.f32 %v904, %v1396
      %v1451 = vadd.f32 %v909, %v1401
      %v1452 = vadd.f32 %v912, %v1404
      %v1453 = vadd.f32 %v917, %v1409
      %v1454 = vadd.f32 %v920, %v1412
      %v1455 = vadd.f32 %v925, %v1417
      %v1456 = vadd.f32 %v928, %v1420
      %v1457 = vld [vmem:[%s219 + $0x8] sm:$0xe]
      %s1458 = scalar_lea.vmem %s3, 24
      %v1459 = vld [vmem:[%s1458] sm:$0xf]
      %v1460 = vld [vmem:[%s1458 + $0x4] sm:$0xf]
      %v1462 = vunpack.c.l.b16 %v1457
      %v1463 = vpack.c.b16 %v1005, %v1462
      %vm1464 = vcmask 1046528
      %v1465 = vrot.slane %v1463, 1
      %v1466 = vrot.slane %v1040, 1
      %v1467 = vsel %vm1464, %v1465, %v1466
      %v1468 = vrot.slane %v1041, 1
      %v1469 = vsel %vm1464, %v1466, %v1468
      %v1470 = vrot.slane %v1042, 1
      %v1471 = vsel %vm1464, %v1468, %v1470
      %v1472 = vrot.slane %v1043, 1
      %v1473 = vsel %vm1464, %v1470, %v1472
      %v1474 = vrot.slane %v1044, 1
      %v1475 = vsel %vm1464, %v1472, %v1474
      %v1476 = vrot.slane %v1045, 1
      %v1477 = vsel %vm1464, %v1474, %v1476
      %v1478 = vrot.slane %v1046, 1
      %v1479 = vsel %vm1464, %v1476, %v1478
      %v1480 = vrot.slane %v1047, 1
      %v1481 = vsel %vm1464, %v1478, %v1480
      %v1482 = vrot.slane %v1048, 1
      %v1483 = vsel %vm1464, %v1480, %v1482
      %v1484 = vrot.slane %v1049, 1
      %v1485 = vsel %vm1464, %v1482, %v1484
      %v1486 = vrot.slane %v1050, 1
      %v1487 = vsel %vm1464, %v1484, %v1486
      %v1488 = vrot.slane %v1051, 1
      %v1489 = vsel %vm1464, %v1486, %v1488
      %v1490 = vrot.slane %v1052, 1
      %v1491 = vsel %vm1464, %v1488, %v1490
      %v1492 = vrot.slane %v1053, 1
      %v1493 = vsel %vm1464, %v1490, %v1492
      %v1494 = vrot.slane %v1054, 1
      %v1495 = vsel %vm1464, %v1492, %v1494
      %v1496 = vrot.slane %v1055, 1
      %v1497 = vsel %vm1464, %v1494, %v1496
      %v1498 = vrot.slane %v1056, 1
      %v1499 = vsel %vm1464, %v1496, %v1498
      %v1502 = vunpack.c.l.b16 %v1459
      %v1503 = vunpack.c.l.b16 %v1460
      %v1504 = vpack.c.b16 %v1503, %v1502
      %v1507 = vsel %vm501, %v1467, 0
      %v1510 = vsel %vm501, %v1469, 0
      %v1513 = vsel %vm501, %v1471, 0
      %v1516 = vsel %vm501, %v1473, 0
      %v1519 = vsel %vm501, %v1475, 0
      %v1522 = vsel %vm501, %v1477, 0
      %v1525 = vsel %vm501, %v1479, 0
      %v1528 = vsel %vm501, %v1481, 0
      %v1531 = vsel %vm501, %v1483, 0
      %v1534 = vsel %vm501, %v1485, 0
      %v1537 = vsel %vm501, %v1487, 0
      %v1540 = vsel %vm501, %v1489, 0
      %v1543 = vsel %vm501, %v1491, 0
      %v1546 = vsel %vm501, %v1493, 0
      %v1549 = vsel %vm501, %v1495, 0
      %v1552 = vsel %vm501, %v1497, 0
      %v1555 = vsel %vm501, %v1499, 0
      %1557 = vmatprep.subr.bf16.mxu0 0
      %1558 = vmatpush1.bf16.msra.mxu0 %v1504
      %1559 = vmatprep.subr.bf16.mxu0 0
      %1560 = vmatpush1.bf16.msra.mxu0 0
      %1561 = vmatprep.subr.bf16.mxu0 0
      %1562 = vmatpush1.bf16.msra.mxu0 0
      %1563 = vmatprep.subr.bf16.mxu0 0
      %1564 = vmatpush1.bf16.msra.mxu0 0
      %1565 = vmatprep.subr.bf16.mxu0 0
      %1566 = vmatpush1.bf16.msra.mxu0 0
      %1567 = vmatprep.subr.bf16.mxu0 0
      %1568 = vmatpush1.bf16.msra.mxu0 0
      %1569 = vmatprep.subr.bf16.mxu0 0
      %1570 = vmatpush1.bf16.msra.mxu0 0
      %1571 = vmatprep.subr.bf16.mxu0 0
      %1572 = vmatpush1.bf16.msra.mxu0 0
      %1573 = vmatprep.subr.bf16.mxu0 0
      %1574 = vmatpush1.bf16.msra.mxu0 0
      %1575 = vmatprep.subr.bf16.mxu0 0
      %1576 = vmatpush1.bf16.msra.mxu0 0
      %1577 = vmatprep.subr.bf16.mxu0 0
      %1578 = vmatpush1.bf16.msra.mxu0 0
      %1579 = vmatprep.subr.bf16.mxu0 0
      %1580 = vmatpush1.bf16.msra.mxu0 0
      %1581 = vmatprep.subr.bf16.mxu0 0
      %1582 = vmatpush1.bf16.msra.mxu0 0
      %1583 = vmatprep.subr.bf16.mxu0 0
      %1584 = vmatpush1.bf16.msra.mxu0 0
      %1585 = vmatprep.subr.bf16.mxu0 0
      %1586 = vmatpush1.bf16.msra.mxu0 0
      %1587 = vmatprep.subr.bf16.mxu0 0
      %1588 = vmatpush1.bf16.msra.mxu0 0
      %1589 = vmatprep.mubr.bf16.mxu0 0
      %1590 = vmatmul.mubr.bf16.gmra.mrb[0].mxu0 %v1507
      %v1591 = vpop.f32.mrb[0].mxu0
      %v1592 = vadd.f32 0.0, %v1591
      %v1593 = vpop.f32.mrb[0].mxu0
      %v1594 = vpop.f32.mrb[0].mxu0
      %v1595 = vadd.f32 0.0, %v1594
      %v1596 = vpop.f32.mrb[0].mxu0
      %1597 = vmatprep.mubr.bf16.mxu0 0
      %1598 = vmatmul.mubr.bf16.gmra.mrb[0].mxu0 %v1510
      %v1599 = vpop.f32.mrb[0].mxu0
      %v1600 = vadd.f32 0.0, %v1599
      %v1601 = vpop.f32.mrb[0].mxu0
      %v1602 = vpop.f32.mrb[0].mxu0
      %v1603 = vadd.f32 0.0, %v1602
      %v1604 = vpop.f32.mrb[0].mxu0
      %1605 = vmatprep.mubr.bf16.mxu0 0
      %1606 = vmatmul.mubr.bf16.gmra.mrb[0].mxu0 %v1513
      %v1607 = vpop.f32.mrb[0].mxu0
      %v1608 = vadd.f32 0.0, %v1607
      %v1609 = vpop.f32.mrb[0].mxu0
      %v1610 = vpop.f32.mrb[0].mxu0
      %v1611 = vadd.f32 0.0, %v1610
      %v1612 = vpop.f32.mrb[0].mxu0
      %1613 = vmatprep.mubr.bf16.mxu0 0
      %1614 = vmatmul.mubr.bf16.gmra.mrb[0].mxu0 %v1516
      %v1615 = vpop.f32.mrb[0].mxu0
      %v1616 = vadd.f32 0.0, %v1615
      %v1617 = vpop.f32.mrb[0].mxu0
      %v1618 = vpop.f32.mrb[0].mxu0
      %v1619 = vadd.f32 0.0, %v1618
      %v1620 = vpop.f32.mrb[0].mxu0
      %1621 = vmatprep.mubr.bf16.mxu0 0
      %1622 = vmatmul.mubr.bf16.gmra.mrb[0].mxu0 %v1519
      %v1623 = vpop.f32.mrb[0].mxu0
      %v1624 = vadd.f32 0.0, %v1623
      %v1625 = vpop.f32.mrb[0].mxu0
      %v1626 = vpop.f32.mrb[0].mxu0
      %v1627 = vadd.f32 0.0, %v1626
      %v1628 = vpop.f32.mrb[0].mxu0
      %1629 = vmatprep.mubr.bf16.mxu0 0
      %1630 = vmatmul.mubr.bf16.gmra.mrb[0].mxu0 %v1522
      %v1631 = vpop.f32.mrb[0].mxu0
      %v1632 = vadd.f32 0.0, %v1631
      %v1633 = vpop.f32.mrb[0].mxu0
      %v1634 = vpop.f32.mrb[0].mxu0
      %v1635 = vadd.f32 0.0, %v1634
      %v1636 = vpop.f32.mrb[0].mxu0
      %1637 = vmatprep.mubr.bf16.mxu0 0
      %1638 = vmatmul.mubr.bf16.gmra.mrb[0].mxu0 %v1525
      %v1639 = vpop.f32.mrb[0].mxu0
      %v1640 = vadd.f32 0.0, %v1639
      %v1641 = vpop.f32.mrb[0].mxu0
      %v1642 = vpop.f32.mrb[0].mxu0
      %v1643 = vadd.f32 0.0, %v1642
      %v1644 = vpop.f32.mrb[0].mxu0
      %1645 = vmatprep.mubr.bf16.mxu0 0
      %1646 = vmatmul.mubr.bf16.gmra.mrb[0].mxu0 %v1528
      %v1647 = vpop.f32.mrb[0].mxu0
      %v1648 = vadd.f32 0.0, %v1647
      %v1649 = vpop.f32.mrb[0].mxu0
      %v1650 = vpop.f32.mrb[0].mxu0
      %v1651 = vadd.f32 0.0, %v1650
      %v1652 = vpop.f32.mrb[0].mxu0
      %1653 = vmatprep.mubr.bf16.mxu0 0
      %1654 = vmatmul.mubr.bf16.gmra.mrb[0].mxu0 %v1531
      %v1655 = vpop.f32.mrb[0].mxu0
      %v1656 = vadd.f32 0.0, %v1655
      %v1657 = vpop.f32.mrb[0].mxu0
      %v1658 = vpop.f32.mrb[0].mxu0
      %v1659 = vadd.f32 0.0, %v1658
      %v1660 = vpop.f32.mrb[0].mxu0
      %1661 = vmatprep.mubr.bf16.mxu0 0
      %1662 = vmatmul.mubr.bf16.gmra.mrb[0].mxu0 %v1534
      %v1663 = vpop.f32.mrb[0].mxu0
      %v1664 = vadd.f32 0.0, %v1663
      %v1665 = vpop.f32.mrb[0].mxu0
      %v1666 = vpop.f32.mrb[0].mxu0
      %v1667 = vadd.f32 0.0, %v1666
      %v1668 = vpop.f32.mrb[0].mxu0
      %1669 = vmatprep.mubr.bf16.mxu0 0
      %1670 = vmatmul.mubr.bf16.gmra.mrb[0].mxu0 %v1537
      %v1671 = vpop.f32.mrb[0].mxu0
      %v1672 = vadd.f32 0.0, %v1671
      %v1673 = vpop.f32.mrb[0].mxu0
      %v1674 = vpop.f32.mrb[0].mxu0
      %v1675 = vadd.f32 0.0, %v1674
      %v1676 = vpop.f32.mrb[0].mxu0
      %1677 = vmatprep.mubr.bf16.mxu0 0
      %1678 = vmatmul.mubr.bf16.gmra.mrb[0].mxu0 %v1540
      %v1679 = vpop.f32.mrb[0].mxu0
      %v1680 = vadd.f32 0.0, %v1679
      %v1681 = vpop.f32.mrb[0].mxu0
      %v1682 = vpop.f32.mrb[0].mxu0
      %v1683 = vadd.f32 0.0, %v1682
      %v1684 = vpop.f32.mrb[0].mxu0
      %1685 = vmatprep.mubr.bf16.mxu0 0
      %1686 = vmatmul.mubr.bf16.gmra.mrb[0].mxu0 %v1543
      %v1687 = vpop.f32.mrb[0].mxu0
      %v1688 = vadd.f32 0.0, %v1687
      %v1689 = vpop.f32.mrb[0].mxu0
      %v1690 = vpop.f32.mrb[0].mxu0
      %v1691 = vadd.f32 0.0, %v1690
      %v1692 = vpop.f32.mrb[0].mxu0
      %1693 = vmatprep.mubr.bf16.mxu0 0
      %1694 = vmatmul.mubr.bf16.gmra.mrb[0].mxu0 %v1546
      %v1695 = vpop.f32.mrb[0].mxu0
      %v1696 = vadd.f32 0.0, %v1695
      %v1697 = vpop.f32.mrb[0].mxu0
      %v1698 = vpop.f32.mrb[0].mxu0
      %v1699 = vadd.f32 0.0, %v1698
      %v1700 = vpop.f32.mrb[0].mxu0
      %1701 = vmatprep.mubr.bf16.mxu0 0
      %1702 = vmatmul.mubr.bf16.gmra.mrb[0].mxu0 %v1549
      %v1703 = vpop.f32.mrb[0].mxu0
      %v1704 = vadd.f32 0.0, %v1703
      %v1705 = vpop.f32.mrb[0].mxu0
      %v1706 = vpop.f32.mrb[0].mxu0
      %v1707 = vadd.f32 0.0, %v1706
      %v1708 = vpop.f32.mrb[0].mxu0
      %1709 = vmatprep.mubr.bf16.mxu0 0
      %1710 = vmatmul.mubr.bf16.gmra.mrb[0].mxu0 %v1552
      %v1711 = vpop.f32.mrb[0].mxu0
      %v1712 = vadd.f32 0.0, %v1711
      %v1713 = vpop.f32.mrb[0].mxu0
      %v1714 = vpop.f32.mrb[0].mxu0
      %v1715 = vadd.f32 0.0, %v1714
      %v1716 = vpop.f32.mrb[0].mxu0
      %1717 = vmatprep.mubr.bf16.mxu0 0
      %1718 = vmatmul.mubr.bf16.gmra.mrb[0].mxu0 %v1555
      %v1719 = vpop.f32.mrb[0].mxu0
      %v1720 = vadd.f32 0.0, %v1719
      %v1721 = vpop.f32.mrb[0].mxu0
      %v1722 = vpop.f32.mrb[0].mxu0
      %v1723 = vadd.f32 0.0, %v1722
      %v1724 = vpop.f32.mrb[0].mxu0
      %1725 = vdwg.mxu0
      %v1726 = vadd.f32 %v1423, %v1592
      %v1727 = vadd.f32 %v1424, %v1595
      %v1728 = vadd.f32 %v1425, %v1600
      %v1729 = vadd.f32 %v1426, %v1603
      %v1730 = vadd.f32 %v1427, %v1608
      %v1731 = vadd.f32 %v1428, %v1611
      %v1732 = vadd.f32 %v1429, %v1616
      %v1733 = vadd.f32 %v1430, %v1619
      %v1734 = vadd.f32 %v1431, %v1624
      %v1735 = vadd.f32 %v1432, %v1627
      %v1736 = vadd.f32 %v1433, %v1632
      %v1737 = vadd.f32 %v1434, %v1635
      %v1738 = vadd.f32 %v1435, %v1640
      %v1739 = vadd.f32 %v1436, %v1643
      %v1740 = vadd.f32 %v1437, %v1648
      %v1741 = vadd.f32 %v1438, %v1651
      %v1742 = vadd.f32 %v1439, %v1656
      %v1743 = vadd.f32 %v1440, %v1659
      %v1744 = vadd.f32 %v1441, %v1664
      %v1745 = vadd.f32 %v1442, %v1667
      %v1746 = vadd.f32 %v1443, %v1672
      %v1747 = vadd.f32 %v1444, %v1675
      %v1748 = vadd.f32 %v1445, %v1680
      %v1749 = vadd.f32 %v1446, %v1683
      %v1750 = vadd.f32 %v1447, %v1688
      %v1751 = vadd.f32 %v1448, %v1691
      %v1752 = vadd.f32 %v1449, %v1696
      %v1753 = vadd.f32 %v1450, %v1699
      %v1754 = vadd.f32 %v1451, %v1704
      %v1755 = vadd.f32 %v1452, %v1707
      %v1756 = vadd.f32 %v1453, %v1712
      %v1757 = vadd.f32 %v1454, %v1715
      %v1758 = vadd.f32 %v1455, %v1720
      %v1759 = vadd.f32 %v1456, %v1723
      %v1760 = vld [vmem:[%s4] sm:$0x1]
      %v1762 = vlaneseq
      %v1763 = vshrl.u32 %v1762, 7
      %v1764 = vsub.s32 0, %v1763
      %v1765 = vrot.slane %v1760, %v1764
      %v1767 = vadd.f32 %v1726, %v1765
      %v1768 = vadd.f32 %v1727, %v1765
      %v1769 = vadd.f32 %v1728, %v1765
      %v1770 = vadd.f32 %v1729, %v1765
      %v1771 = vadd.f32 %v1730, %v1765
      %v1772 = vadd.f32 %v1731, %v1765
      %v1773 = vadd.f32 %v1732, %v1765
      %v1774 = vadd.f32 %v1733, %v1765
      %v1775 = vadd.f32 %v1734, %v1765
      %v1776 = vadd.f32 %v1735, %v1765
      %v1777 = vadd.f32 %v1736, %v1765
      %v1778 = vadd.f32 %v1737, %v1765
      %v1779 = vadd.f32 %v1738, %v1765
      %v1780 = vadd.f32 %v1739, %v1765
      %v1781 = vadd.f32 %v1740, %v1765
      %v1782 = vadd.f32 %v1741, %v1765
      %v1783 = vadd.f32 %v1742, %v1765
      %v1784 = vadd.f32 %v1743, %v1765
      %v1785 = vadd.f32 %v1744, %v1765
      %v1786 = vadd.f32 %v1745, %v1765
      %v1787 = vadd.f32 %v1746, %v1765
      %v1788 = vadd.f32 %v1747, %v1765
      %v1789 = vadd.f32 %v1748, %v1765
      %v1790 = vadd.f32 %v1749, %v1765
      %v1791 = vadd.f32 %v1750, %v1765
      %v1792 = vadd.f32 %v1751, %v1765
      %v1793 = vadd.f32 %v1752, %v1765
      %v1794 = vadd.f32 %v1753, %v1765
      %v1795 = vadd.f32 %v1754, %v1765
      %v1796 = vadd.f32 %v1755, %v1765
      %v1797 = vadd.f32 %v1756, %v1765
      %v1798 = vadd.f32 %v1757, %v1765
      %v1799 = vadd.f32 %v1758, %v1765
      %v1800 = vadd.f32 %v1759, %v1765
      %v1801 = vmul.f32 %v1767, 0.2
      %v1802 = vmul.f32 %v1768, 0.2
      %v1803 = vmul.f32 %v1769, 0.2
      %v1804 = vmul.f32 %v1770, 0.2
      %v1805 = vmul.f32 %v1771, 0.2
      %v1806 = vmul.f32 %v1772, 0.2
      %v1807 = vmul.f32 %v1773, 0.2
      %v1808 = vmul.f32 %v1774, 0.2
      %v1809 = vmul.f32 %v1775, 0.2
      %v1810 = vmul.f32 %v1776, 0.2
      %v1811 = vmul.f32 %v1777, 0.2
      %v1812 = vmul.f32 %v1778, 0.2
      %v1813 = vmul.f32 %v1779, 0.2
      %v1814 = vmul.f32 %v1780, 0.2
      %v1815 = vmul.f32 %v1781, 0.2
      %v1816 = vmul.f32 %v1782, 0.2
      %v1817 = vmul.f32 %v1783, 0.2
      %v1818 = vmul.f32 %v1784, 0.2
      %v1819 = vmul.f32 %v1785, 0.2
      %v1820 = vmul.f32 %v1786, 0.2
      %v1821 = vmul.f32 %v1787, 0.2
      %v1822 = vmul.f32 %v1788, 0.2
      %v1823 = vmul.f32 %v1789, 0.2
      %v1824 = vmul.f32 %v1790, 0.2
      %v1825 = vmul.f32 %v1791, 0.2
      %v1826 = vmul.f32 %v1792, 0.2
      %v1827 = vmul.f32 %v1793, 0.2
      %v1828 = vmul.f32 %v1794, 0.2
      %v1829 = vmul.f32 %v1795, 0.2
      %v1830 = vmul.f32 %v1796, 0.2
      %v1831 = vmul.f32 %v1797, 0.2
      %v1832 = vmul.f32 %v1798, 0.2
      %v1833 = vmul.f32 %v1799, 0.2
      %v1834 = vmul.f32 %v1800, 0.2
      %v1835 = vmax.f32 %v1767, %v1801
      %v1836 = vmax.f32 %v1768, %v1802
      %v1837 = vmax.f32 %v1769, %v1803
      %v1838 = vmax.f32 %v1770, %v1804
      %v1839 = vmax.f32 %v1771, %v1805
      %v1840 = vmax.f32 %v1772, %v1806
      %v1841 = vmax.f32 %v1773, %v1807
      %v1842 = vmax.f32 %v1774, %v1808
      %v1843 = vmax.f32 %v1775, %v1809
      %v1844 = vmax.f32 %v1776, %v1810
      %v1845 = vmax.f32 %v1777, %v1811
      %v1846 = vmax.f32 %v1778, %v1812
      %v1847 = vmax.f32 %v1779, %v1813
      %v1848 = vmax.f32 %v1780, %v1814
      %v1849 = vmax.f32 %v1781, %v1815
      %v1850 = vmax.f32 %v1782, %v1816
      %v1851 = vmax.f32 %v1783, %v1817
      %v1852 = vmax.f32 %v1784, %v1818
      %v1853 = vmax.f32 %v1785, %v1819
      %v1854 = vmax.f32 %v1786, %v1820
      %v1855 = vmax.f32 %v1787, %v1821
      %v1856 = vmax.f32 %v1788, %v1822
      %v1857 = vmax.f32 %v1789, %v1823
      %v1858 = vmax.f32 %v1790, %v1824
      %v1859 = vmax.f32 %v1791, %v1825
      %v1860 = vmax.f32 %v1792, %v1826
      %v1861 = vmax.f32 %v1793, %v1827
      %v1862 = vmax.f32 %v1794, %v1828
      %v1863 = vmax.f32 %v1795, %v1829
      %v1864 = vmax.f32 %v1796, %v1830
      %v1865 = vmax.f32 %v1797, %v1831
      %v1866 = vmax.f32 %v1798, %v1832
      %v1867 = vmax.f32 %v1799, %v1833
      %v1868 = vmax.f32 %v1800, %v1834
      %v1869 = vpack.c.bf16 %v1836, %v1835
      %v1870 = vpack.c.bf16 %v1838, %v1837
      %v1871 = vpack.c.bf16 %v1840, %v1839
      %v1872 = vpack.c.bf16 %v1842, %v1841
      %v1873 = vpack.c.bf16 %v1844, %v1843
      %v1874 = vpack.c.bf16 %v1846, %v1845
      %v1875 = vpack.c.bf16 %v1848, %v1847
      %v1876 = vpack.c.bf16 %v1850, %v1849
      %v1877 = vpack.c.bf16 %v1852, %v1851
      %v1878 = vpack.c.bf16 %v1854, %v1853
      %v1879 = vpack.c.bf16 %v1856, %v1855
      %v1880 = vpack.c.bf16 %v1858, %v1857
      %v1881 = vpack.c.bf16 %v1860, %v1859
      %v1882 = vpack.c.bf16 %v1862, %v1861
      %v1883 = vpack.c.bf16 %v1864, %v1863
      %v1884 = vpack.c.bf16 %v1866, %v1865
      %v1885 = vpack.c.bf16 %v1868, %v1867
      %v1903 = vunpack.c.l.b16 %v1869
      %v1904 = vunpack.c.h.b16 %v1869
      %v1905 = vunpack.c.l.b16 %v1870
      %v1906 = vunpack.c.h.b16 %v1870
      %v1907 = vunpack.c.l.b16 %v1871
      %v1908 = vunpack.c.h.b16 %v1871
      %v1909 = vunpack.c.l.b16 %v1872
      %v1910 = vunpack.c.h.b16 %v1872
      %v1911 = vunpack.c.l.b16 %v1873
      %v1912 = vunpack.c.h.b16 %v1873
      %v1913 = vunpack.c.l.b16 %v1874
      %v1914 = vunpack.c.h.b16 %v1874
      %v1915 = vunpack.c.l.b16 %v1875
      %v1916 = vunpack.c.h.b16 %v1875
      %v1917 = vunpack.c.l.b16 %v1876
      %v1918 = vunpack.c.h.b16 %v1876
      %v1919 = vunpack.c.l.b16 %v1877
      %v1920 = vunpack.c.h.b16 %v1877
      %v1921 = vunpack.c.l.b16 %v1878
      %v1922 = vunpack.c.h.b16 %v1878
      %v1923 = vunpack.c.l.b16 %v1879
      %v1924 = vunpack.c.h.b16 %v1879
      %v1925 = vunpack.c.l.b16 %v1880
      %v1926 = vunpack.c.h.b16 %v1880
      %v1927 = vunpack.c.l.b16 %v1881
      %v1928 = vunpack.c.h.b16 %v1881
      %v1929 = vunpack.c.l.b16 %v1882
      %v1930 = vunpack.c.h.b16 %v1882
      %v1931 = vunpack.c.l.b16 %v1883
      %v1932 = vunpack.c.h.b16 %v1883
      %v1933 = vunpack.c.l.b16 %v1884
      %v1934 = vunpack.c.h.b16 %v1884
      %v1935 = vunpack.c.l.b16 %v1885
      %v1936 = vunpack.c.h.b16 %v1885
      %v1937 = vpack.c.b16 %v1903, %v1903
      %v1938 = vpack.c.b16 %v1904, %v1904
      %v1939 = vpack.c.b16 %v1905, %v1905
      %v1940 = vpack.c.b16 %v1906, %v1906
      %v1941 = vpack.c.b16 %v1907, %v1907
      %v1942 = vpack.c.b16 %v1908, %v1908
      %v1943 = vpack.c.b16 %v1909, %v1909
      %v1944 = vpack.c.b16 %v1910, %v1910
      %v1945 = vpack.c.b16 %v1911, %v1911
      %v1946 = vpack.c.b16 %v1912, %v1912
      %v1947 = vpack.c.b16 %v1913, %v1913
      %v1948 = vpack.c.b16 %v1914, %v1914
      %v1949 = vpack.c.b16 %v1915, %v1915
      %v1950 = vpack.c.b16 %v1916, %v1916
      %v1951 = vpack.c.b16 %v1917, %v1917
      %v1952 = vpack.c.b16 %v1918, %v1918
      %v1953 = vpack.c.b16 %v1919, %v1919
      %v1954 = vpack.c.b16 %v1920, %v1920
      %v1955 = vpack.c.b16 %v1921, %v1921
      %v1956 = vpack.c.b16 %v1922, %v1922
      %v1957 = vpack.c.b16 %v1923, %v1923
      %v1958 = vpack.c.b16 %v1924, %v1924
      %v1959 = vpack.c.b16 %v1925, %v1925
      %v1960 = vpack.c.b16 %v1926, %v1926
      %v1961 = vpack.c.b16 %v1927, %v1927
      %v1962 = vpack.c.b16 %v1928, %v1928
      %v1963 = vpack.c.b16 %v1929, %v1929
      %v1964 = vpack.c.b16 %v1930, %v1930
      %v1965 = vpack.c.b16 %v1931, %v1931
      %v1966 = vpack.c.b16 %v1932, %v1932
      %v1967 = vpack.c.b16 %v1933, %v1933
      %v1968 = vpack.c.b16 %v1934, %v1934
      %v1969 = vpack.c.b16 %v1935, %v1935
      %v1970 = vpack.c.b16 %v1936, %v1936
      %2005 = vst [vmem:[%s224] sm:$0xf] %v1937
      %2006 = vst [vmem:[%s224 + $0x4] sm:$0xf] %v1938
      %2007 = vst [vmem:[%s224 + $0x8] sm:$0xf] %v1939
      %2008 = vst [vmem:[%s224 + $0xc] sm:$0xf] %v1940
      %2009 = vst [vmem:[%s224 + $0x10] sm:$0xf] %v1941
      %2010 = vst [vmem:[%s224 + $0x14] sm:$0xf] %v1942
      %2011 = vst [vmem:[%s224 + $0x18] sm:$0xf] %v1943
      %2012 = vst [vmem:[%s224 + $0x1c] sm:$0xf] %v1944
      %2013 = vst [vmem:[%s224 + $0x20] sm:$0xf] %v1945
      %2014 = vst [vmem:[%s224 + $0x24] sm:$0xf] %v1946
      %2015 = vst [vmem:[%s224 + $0x28] sm:$0xf] %v1947
      %2016 = vst [vmem:[%s224 + $0x2c] sm:$0xf] %v1948
      %2017 = vst [vmem:[%s224 + $0x30] sm:$0xf] %v1949
      %2018 = vst [vmem:[%s224 + $0x34] sm:$0xf] %v1950
      %2019 = vst [vmem:[%s224 + $0x38] sm:$0xf] %v1951
      %2020 = vst [vmem:[%s224 + $0x3c] sm:$0xf] %v1952
      %2021 = vst [vmem:[%s224 + $0x40] sm:$0xf] %v1953
      %2022 = vst [vmem:[%s224 + $0x44] sm:$0xf] %v1954
      %2023 = vst [vmem:[%s224 + $0x48] sm:$0xf] %v1955
      %2024 = vst [vmem:[%s224 + $0x4c] sm:$0xf] %v1956
      %2025 = vst [vmem:[%s224 + $0x50] sm:$0xf] %v1957
      %2026 = vst [vmem:[%s224 + $0x54] sm:$0xf] %v1958
      %2027 = vst [vmem:[%s224 + $0x58] sm:$0xf] %v1959
      %2028 = vst [vmem:[%s224 + $0x5c] sm:$0xf] %v1960
      %2029 = vst [vmem:[%s224 + $0x60] sm:$0xf] %v1961
      %2030 = vst [vmem:[%s224 + $0x64] sm:$0xf] %v1962
      %2031 = vst [vmem:[%s224 + $0x68] sm:$0xf] %v1963
      %2032 = vst [vmem:[%s224 + $0x6c] sm:$0xf] %v1964
      %2033 = vst [vmem:[%s224 + $0x70] sm:$0xf] %v1965
      %2034 = vst [vmem:[%s224 + $0x74] sm:$0xf] %v1966
      %2035 = vst [vmem:[%s224 + $0x78] sm:$0xf] %v1967
      %2036 = vst [vmem:[%s224 + $0x7c] sm:$0xf] %v1968
      %2037 = vst [vmem:[%s224 + $0x80] sm:$0xf] %v1969
      %2038 = vst [vmem:[%s224 + $0x84] sm:$0xf] %v1970
      %p2039 = scmp.lt.s32.totalorder %s16, 1
      %s2040 = scalar_select %p2039, %s16, 1
      %s2041 = smul.addr %s2040, 34
      %s2042 = smul.addr %s2041, 4
      %s2043 = scalar_lea.vmem %s5, %s2042
      // Predicated region
      $region41: #{_lambda_.5} parent=39 // pred_check
        %p2044 = pneg %p144
      $region42: #{_lambda_.5} parent=39 // pred_check_branch
        %2046 = sbr.rel (%p2044) target = $region44
      $region43: #{_lambda_.5} parent=39 // pred_region
        _
      $region44: #{_lambda_.5} parent=39 // pred_fallthru
        _
    $region40: #{_lambda_.5} parent=5 // pred_fallthru
      _
    %p2047 = scmp.le.s32.totalorder 2, %s11
    // Predicated region
    $region45: #{_lambda_.5} parent=5 // pred_check
      %p2048 = pneg %p2047
    $region46: #{_lambda_.5} parent=5 // pred_check_branch
      %2050 = sbr.rel (%p2048) target = $region48
    $region47: #{_lambda_.5} parent=5 // pred_region
      %s2051 = ssub.s32 %s11, 2
      // Predicated region
      $region49: #{_lambda_.5} parent=47 // pred_check
        %p2052 = pneg %p150
      $region50: #{_lambda_.5} parent=47 // pred_check_branch
        %2054 = sbr.rel (%p2052) target = $region52
      $region51: #{_lambda_.5} parent=47 // pred_region
        %p2055 = scmp.lt.s32.totalorder %s17, 1
        %s2056 = scalar_select %p2055, %s17, 1
        %s2057 = smul.addr %s2056, 34
        %s2058 = smul.addr %s2057, 4
        %s2059 = scalar_lea.vmem %s5, %s2058
      $region52: #{_lambda_.5} parent=47 // pred_fallthru
        _
    $region48: #{_lambda_.5} parent=5 // pred_fallthru
      _
  $region6: #{_lambda_.5} parent=0 // loop_footer
    %s15 = sadd.s32 1, %s11
  $region7: #{_lambda_.5} parent=0 // loop_footer_branch
    %10 = sbr.rel target = $region3
  $region8: #{_lambda_.5} parent=0 // loop_exit
    _

// kernel: tile.12
$region0: #{tile.12}
  #allocation0 [shape = 's32[1]{0}', space=sflag, size = 0x4, scoped, tag = 'scoped memory for tile.12']
  %s0 = inlined_call_operand.<no memory space> [shape: f32[], index: 0, kind: input, shape index: {}]
  %s1 = inlined_call_operand.vmem [shape: f32[1,512], index: 1, kind: output, shape index: {}]
  %v2 = vstv %s0
  %3 = vst [vmem:[%s1] sm:$0x1] %v2
  %s4 = scalar_lea.vmem %s1, 1
  %5 = vst [vmem:[%s4] sm:$0x1] %v2
  %s6 = scalar_lea.vmem %s1, 2
  %7 = vst [vmem:[%s6] sm:$0x1] %v2
  %s8 = scalar_lea.vmem %s1, 3
  %9 = vst [vmem:[%s8] sm:$0x1] %v2

// kernel: tile.21
$region0: #{tile.21}
  #allocation0 [shape = 's32[1]{0}', space=sflag, size = 0x4, scoped, tag = 'scoped memory for tile.21']
  %s0 = inlined_call_operand.vmem [shape: f32[128], index: 0, kind: input, shape index: {}]
  %s1 = inlined_call_operand.vmem [shape: f32[4,128], index: 1, kind: output, shape index: {}]
  // Predicated region
  $region2: #{tile.21} parent=0 // pred_check
    _
  $region3: #{tile.21} parent=0 // pred_check_branch
    %3 = sbr.rel (0) target = $region5
  $region4: #{tile.21} parent=0 // pred_region
    _
  $region5: #{tile.21} parent=0 // pred_fallthru
    _
  %v4 = vld [vmem:[%s0] ss:$0 sm:$0xff]
  %5 = vst [vmem:[%s1] sm:$0xf] %v4

// kernel: _lambda_.6
$region0: #{_lambda_.6}
  #allocation0 [shape = 'u32[]', space=smem, size = 0x4, offset = 0x4, fixed_abs, tag = 'smem constant byte address 0x4 - core index']
  #allocation1 [shape = 'u32[144,128]{1,0:T(1,128)}', space=vmem, size = 0x12000, scoped, tag = 'internal scratch']
  %s0 = inlined_call_operand.vmem [shape: f32[1,512], index: 0, kind: input, shape index: {}]
  %s1 = inlined_call_operand.vmem [shape: f32[1,512], index: 1, kind: input, shape index: {}]
  %s2 = inlined_call_operand.vmem [shape: bf16[2,88,512], index: 2, kind: input, shape index: {}]
  %s3 = inlined_call_operand.vmem [shape: bf16[4,512,128], index: 3, kind: input, shape index: {}]
  %s4 = inlined_call_operand.vmem [shape: f32[1,128], index: 4, kind: input, shape index: {}]
  %s5 = inlined_call_operand.vmem [shape: bf16[2,72,128], index: 5, kind: output, shape index: {0}]
  %s6 = inlined_call_operand.vmem [shape: f32[2,1,128], index: 6, kind: output, shape index: {1}]
  %s7 = inlined_call_operand.vmem [shape: f32[2,1,128], index: 7, kind: output, shape index: {2}]
  %8 = xla_tuple %s5, %s6, %s7
  %s9 = sld [smem:[#allocation0]]
  $region69: #{_lambda_.6} parent=0
    _
  %s11 = ssub.s32 1, %s9
  %s12 = scalar_select 0, %s11, %s9
  loop: start=0, step=1, limit=4
  $region2: #{_lambda_.6} parent=0 // loop_pre_header
    _
  $region3: #{_lambda_.6} parent=0 // loop_header
    %s14 = sphi 0, %s18
    %p15 = scmp.ge.s32.totalorder %s14, 4
    %s22 = sphi 0, %s22
    %s24 = sphi 0, %s22
    %s25 = sphi 0, %s24
    %s39 = sphi 0, %s25
    %s43 = sphi 0, %s43
    %s45 = sphi 0, %s43
    %s46 = sphi 0, %s45
    %s60 = sphi 0, %s46
    %s66 = sphi 0, %s68
    %s69 = sphi 0, %s66
    %s70 = sphi 0, %s69
    %s86 = sphi 0, %s70
    %s90 = sphi 0, %s90
    %s92 = sphi 0, %s90
    %s93 = sphi 0, %s92
    %s107 = sphi 0, %s93
    %s111 = sphi 0, %s111
    %s113 = sphi 0, %s111
    %s114 = sphi 0, %s113
    %s128 = sphi 0, %s114
    %s134 = sphi 0, %s136
    %s137 = sphi 0, %s134
    %s138 = sphi 0, %s137
    %s154 = sphi 0, %s138
    %s160 = sphi 0, %s162
    %s163 = sphi 0, %s160
    %s164 = sphi 0, %s163
    %s180 = sphi 0, %s164
    %s186 = sphi 0, %s188
    %s189 = sphi 0, %s186
    %s190 = sphi 0, %s189
    %s206 = sphi 0, %s190
  $region4: #{_lambda_.6} parent=0 // loop_header_branch
    %17 = sbr.rel (%p15) target = $region8
  $region5: #{_lambda_.6} parent=0 // loop_body
    %s19 = ssub.s32 %s14, 1
    %s20 = ssub.s32 %s14, 2
    %s21 = sadd.s32 %s14, 1
    %s23 = sadd.s32 %s22, 1
    %p26 = scmp.eq.s32.totalorder %s14, 1
    %p27 = scmp.ne.s32.totalorder %s22, %s24
    %p28 = scmp.eq.s32.totalorder %s14, 0
    %p29 = por %p27, %p28
    %p30 = scmp.ne.s32.totalorder %s22, %s24
    %p31 = scmp.eq.s32.totalorder %s19, 1
    %p32 = por %p30, %p31
    %p33 = scmp.ne.s32.totalorder %s24, %s25
    %p34 = scmp.eq.s32.totalorder %s19, 0
    %p35 = por %p33, %p34
    %p36 = scmp.ne.s32.totalorder %s24, %s25
    %p37 = scmp.eq.s32.totalorder %s20, 1
    %p38 = por %p36, %p37
    %p40 = scmp.ne.s32.totalorder %s25, %s39
    %p41 = scmp.eq.s32.totalorder %s20, 0
    %p42 = por %p40, %p41
    %s44 = sadd.s32 %s43, 1
    %p47 = scmp.eq.s32.totalorder %s14, 1
    %p48 = scmp.ne.s32.totalorder %s43, %s45
    %p49 = scmp.eq.s32.totalorder %s14, 0
    %p50 = por %p48, %p49
    %p51 = scmp.ne.s32.totalorder %s43, %s45
    %p52 = scmp.eq.s32.totalorder %s19, 1
    %p53 = por %p51, %p52
    %p54 = scmp.ne.s32.totalorder %s45, %s46
    %p55 = scmp.eq.s32.totalorder %s19, 0
    %p56 = por %p54, %p55
    %p57 = scmp.ne.s32.totalorder %s45, %s46
    %p58 = scmp.eq.s32.totalorder %s20, 1
    %p59 = por %p57, %p58
    %p61 = scmp.ne.s32.totalorder %s46, %s60
    %p62 = scmp.eq.s32.totalorder %s20, 0
    %p63 = por %p61, %p62
    %s64 = ssub.s32 %s14, %s21
    %p65 = scmp.eq.s32.totalorder %s64, 0
    %s67 = sadd.s32 %s66, 1
    %s68 = scalar_select %p65, %s66, %s67
    %p71 = pneg %p65
    %p72 = scmp.eq.s32.totalorder %s14, 1
    %p73 = por %p71, %p72
    %p74 = scmp.ne.s32.totalorder %s66, %s69
    %p75 = scmp.eq.s32.totalorder %s14, 0
    %p76 = por %p74, %p75
    %p77 = scmp.ne.s32.totalorder %s66, %s69
    %p78 = scmp.eq.s32.totalorder %s19, 1
    %p79 = por %p77, %p78
    %p80 = scmp.ne.s32.totalorder %s69, %s70
    %p81 = scmp.eq.s32.totalorder %s19, 0
    %p82 = por %p80, %p81
    %p83 = scmp.ne.s32.totalorder %s69, %s70
    %p84 = scmp.eq.s32.totalorder %s20, 1
    %p85 = por %p83, %p84
    %p87 = scmp.ne.s32.totalorder %s70, %s86
    %p88 = scmp.eq.s32.totalorder %s20, 0
    %p89 = por %p87, %p88
    %s91 = sadd.s32 %s90, 1
    %p94 = scmp.eq.s32.totalorder %s14, 1
    %p95 = scmp.ne.s32.totalorder %s90, %s92
    %p96 = scmp.eq.s32.totalorder %s14, 0
    %p97 = por %p95, %p96
    %p98 = scmp.ne.s32.totalorder %s90, %s92
    %p99 = scmp.eq.s32.totalorder %s19, 1
    %p100 = por %p98, %p99
    %p101 = scmp.ne.s32.totalorder %s92, %s93
    %p102 = scmp.eq.s32.totalorder %s19, 0
    %p103 = por %p101, %p102
    %p104 = scmp.ne.s32.totalorder %s92, %s93
    %p105 = scmp.eq.s32.totalorder %s20, 1
    %p106 = por %p104, %p105
    %p108 = scmp.ne.s32.totalorder %s93, %s107
    %p109 = scmp.eq.s32.totalorder %s20, 0
    %p110 = por %p108, %p109
    %s112 = sadd.s32 %s111, 1
    %p115 = scmp.eq.s32.totalorder %s14, 1
    %p116 = scmp.ne.s32.totalorder %s111, %s113
    %p117 = scmp.eq.s32.totalorder %s14, 0
    %p118 = por %p116, %p117
    %p119 = scmp.ne.s32.totalorder %s111, %s113
    %p120 = scmp.eq.s32.totalorder %s19, 1
    %p121 = por %p119, %p120
    %p122 = scmp.ne.s32.totalorder %s113, %s114
    %p123 = scmp.eq.s32.totalorder %s19, 0
    %p124 = por %p122, %p123
    %p125 = scmp.ne.s32.totalorder %s113, %s114
    %p126 = scmp.eq.s32.totalorder %s20, 1
    %p127 = por %p125, %p126
    %p129 = scmp.ne.s32.totalorder %s114, %s128
    %p130 = scmp.eq.s32.totalorder %s20, 0
    %p131 = por %p129, %p130
    %s132 = ssub.s32 %s14, %s21
    %p133 = scmp.eq.s32.totalorder %s132, 0
    %s135 = sadd.s32 %s134, 1
    %s136 = scalar_select %p133, %s134, %s135
    %p139 = pneg %p133
    %p140 = scmp.eq.s32.totalorder %s14, 1
    %p141 = por %p139, %p140
    %p142 = scmp.ne.s32.totalorder %s134, %s137
    %p143 = scmp.eq.s32.totalorder %s14, 0
    %p144 = por %p142, %p143
    %p145 = scmp.ne.s32.totalorder %s134, %s137
    %p146 = scmp.eq.s32.totalorder %s19, 1
    %p147 = por %p145, %p146
    %p148 = scmp.ne.s32.totalorder %s137, %s138
    %p149 = scmp.eq.s32.totalorder %s19, 0
    %p150 = por %p148, %p149
    %p151 = scmp.ne.s32.totalorder %s137, %s138
    %p152 = scmp.eq.s32.totalorder %s20, 1
    %p153 = por %p151, %p152
    %p155 = scmp.ne.s32.totalorder %s138, %s154
    %p156 = scmp.eq.s32.totalorder %s20, 0
    %p157 = por %p155, %p156
    %s158 = ssub.s32 %s14, %s21
    %p159 = scmp.eq.s32.totalorder %s158, 0
    %s161 = sadd.s32 %s160, 1
    %s162 = scalar_select %p159, %s160, %s161
    %p165 = pneg %p159
    %p166 = scmp.eq.s32.totalorder %s14, 1
    %p167 = por %p165, %p166
    %p168 = scmp.ne.s32.totalorder %s160, %s163
    %p169 = scmp.eq.s32.totalorder %s14, 0
    %p170 = por %p168, %p169
    %p171 = scmp.ne.s32.totalorder %s160, %s163
    %p172 = scmp.eq.s32.totalorder %s19, 1
    %p173 = por %p171, %p172
    %p174 = scmp.ne.s32.totalorder %s163, %s164
    %p175 = scmp.eq.s32.totalorder %s19, 0
    %p176 = por %p174, %p175
    %p177 = scmp.ne.s32.totalorder %s163, %s164
    %p178 = scmp.eq.s32.totalorder %s20, 1
    %p179 = por %p177, %p178
    %p181 = scmp.ne.s32.totalorder %s164, %s180
    %p182 = scmp.eq.s32.totalorder %s20, 0
    %p183 = por %p181, %p182
    %s184 = ssub.s32 %s14, %s21
    %p185 = scmp.eq.s32.totalorder %s184, 0
    %s187 = sadd.s32 %s186, 1
    %s188 = scalar_select %p185, %s186, %s187
    %p191 = pneg %p185
    %p192 = scmp.eq.s32.totalorder %s14, 1
    %p193 = por %p191, %p192
    %p194 = scmp.ne.s32.totalorder %s186, %s189
    %p195 = scmp.eq.s32.totalorder %s14, 0
    %p196 = por %p194, %p195
    %p197 = scmp.ne.s32.totalorder %s186, %s189
    %p198 = scmp.eq.s32.totalorder %s19, 1
    %p199 = por %p197, %p198
    %p200 = scmp.ne.s32.totalorder %s189, %s190
    %p201 = scmp.eq.s32.totalorder %s19, 0
    %p202 = por %p200, %p201
    %p203 = scmp.ne.s32.totalorder %s189, %s190
    %p204 = scmp.eq.s32.totalorder %s20, 1
    %p205 = por %p203, %p204
    %p207 = scmp.ne.s32.totalorder %s190, %s206
    %p208 = scmp.eq.s32.totalorder %s20, 0
    %p209 = por %p207, %p208
    %p210 = scmp.le.s32.totalorder 1, %s14
    %p211 = scmp.lt.s32.totalorder %s14, 3
    %p212 = pnand %p210, %p211
    %p213 = pneg %p212
    // Predicated region
    $region9: #{_lambda_.6} parent=5 // pred_check
      _
    $region10: #{_lambda_.6} parent=5 // pred_check_branch
      %215 = sbr.rel (%p212) target = $region12
    $region11: #{_lambda_.6} parent=5 // pred_region
      %s216 = ssub.s32 %s14, 1
      // Predicated region
      $region13: #{_lambda_.6} parent=11 // pred_check
        %p217 = pneg %p35
      $region14: #{_lambda_.6} parent=11 // pred_check_branch
        %219 = sbr.rel (%p217) target = $region16
      $region15: #{_lambda_.6} parent=11 // pred_region
        _
      $region16: #{_lambda_.6} parent=11 // pred_fallthru
        _
      // Predicated region
      $region17: #{_lambda_.6} parent=11 // pred_check
        %p220 = pneg %p56
      $region18: #{_lambda_.6} parent=11 // pred_check_branch
        %222 = sbr.rel (%p220) target = $region20
      $region19: #{_lambda_.6} parent=11 // pred_region
        _
      $region20: #{_lambda_.6} parent=11 // pred_fallthru
        _
      // Predicated region
      $region21: #{_lambda_.6} parent=11 // pred_check
        %p223 = pneg %p103
      $region22: #{_lambda_.6} parent=11 // pred_check_branch
        %225 = sbr.rel (%p223) target = $region24
      $region23: #{_lambda_.6} parent=11 // pred_region
        _
      $region24: #{_lambda_.6} parent=11 // pred_fallthru
        _
      // Predicated region
      $region25: #{_lambda_.6} parent=11 // pred_check
        %p226 = pneg %p124
      $region26: #{_lambda_.6} parent=11 // pred_check_branch
        %228 = sbr.rel (%p226) target = $region28
      $region27: #{_lambda_.6} parent=11 // pred_region
        _
      $region28: #{_lambda_.6} parent=11 // pred_fallthru
        _
    $region12: #{_lambda_.6} parent=5 // pred_fallthru
      _
    %p229 = scmp.lt.s32.totalorder %s14, 2
    // Predicated region
    $region29: #{_lambda_.6} parent=5 // pred_check
      %p230 = pneg %p229
    $region30: #{_lambda_.6} parent=5 // pred_check_branch
      %232 = sbr.rel (%p230) target = $region32
    $region31: #{_lambda_.6} parent=5 // pred_region
      // Predicated region
      $region33: #{_lambda_.6} parent=31 // pred_check
        %p233 = pneg %p76
      $region34: #{_lambda_.6} parent=31 // pred_check_branch
        %235 = sbr.rel (%p233) target = $region36
      $region35: #{_lambda_.6} parent=31 // pred_region
        %p236 = scmp.lt.s32.totalorder %s14, 1
        %s237 = scalar_select %p236, %s14, 1
        %s238 = smul.addr %s237, 44
        %s239 = smul.addr %s238, 4
        %s240 = scalar_lea.vmem %s2, %s239
      $region36: #{_lambda_.6} parent=31 // pred_fallthru
        _
    $region32: #{_lambda_.6} parent=5 // pred_fallthru
      _
    %p241 = scmp.le.s32.totalorder 1, %s14
    %p242 = scmp.lt.s32.totalorder %s14, 3
    %p243 = pnand %p241, %p242
    %p244 = pneg %p243
    // Predicated region
    $region37: #{_lambda_.6} parent=5 // pred_check
      _
    $region38: #{_lambda_.6} parent=5 // pred_check_branch
      %246 = sbr.rel (%p243) target = $region40
    $region39: #{_lambda_.6} parent=5 // pred_region
      %s247 = ssub.s32 %s14, 1
      %p248 = pneg %p35
      %p249 = pneg %p32
      %p250 = pneg %p56
      %p251 = pneg %p53
      %p252 = scmp.lt.s32.totalorder %s19, 1
      %s253 = scalar_select %p252, %s19, 1
      %s254 = smul.addr %s253, 44
      %s255 = smul.addr %s254, 4
      %s256 = scalar_lea.vmem %s2, %s255
      %p257 = pneg %p82
      %p258 = pneg %p79
      %p259 = pneg %p103
      %p260 = pneg %p100
      %p261 = pneg %p124
      %p262 = pneg %p121
      %p263 = pneg %p150
      %p264 = pneg %p147
      %p265 = scmp.lt.s32.totalorder %s19, 1
      %s266 = scalar_select %p265, %s19, 1
      %s267 = smul.addr %s266, 9
      %s268 = smul.addr %s267, 4
      %s269 = scalar_lea.vmem %s5, %s268
      %p270 = pneg %p176
      %p271 = pneg %p173
      %p272 = scmp.lt.s32.totalorder %s19, 1
      %s273 = scalar_select %p272, %s19, 1
      %s274 = scalar_lea.vmem %s6, %s273
      %p275 = pneg %p202
      %p276 = pneg %p199
      %p277 = scmp.lt.s32.totalorder %s19, 1
      %s278 = scalar_select %p277, %s19, 1
      %s279 = scalar_lea.vmem %s7, %s278
      %p280 = scmp.lt.s32.totalorder %s19, 1
      %s281 = scalar_select %p280, %s19, 1
      %s282 = smul.addr %s281, 44
      %s283 = smul.addr %s282, 4
      %s284 = scalar_lea.vmem %s2, %s283
      %p285 = scmp.lt.s32.totalorder %s19, 1
      %s286 = scalar_select %p285, %s19, 1
      %s287 = smul.addr %s286, 9
      %s288 = smul.addr %s287, 4
      %s289 = scalar_lea.vmem %s5, %s288
      %p290 = scmp.lt.s32.totalorder %s19, 1
      %s291 = scalar_select %p290, %s19, 1
      %s292 = scalar_lea.vmem %s6, %s291
      %p293 = scmp.lt.s32.totalorder %s19, 1
      %s294 = scalar_select %p293, %s19, 1
      %s295 = scalar_lea.vmem %s7, %s294
      %v297 = vld [vmem:[%s284] sm:$0xff]
      %v298 = vld [vmem:[%s284 + $0x8] sm:$0xff]
      %v299 = vld [vmem:[%s284 + $0x10] sm:$0xff]
      %v300 = vld [vmem:[%s284 + $0x18] sm:$0xff]
      %v301 = vld [vmem:[%s284 + $0x20] sm:$0xff]
      %v302 = vld [vmem:[%s284 + $0x28] sm:$0xff]
      %v303 = vld [vmem:[%s284 + $0x30] sm:$0xff]
      %v304 = vld [vmem:[%s284 + $0x38] sm:$0xff]
      %v305 = vld [vmem:[%s284 + $0x40] sm:$0xff]
      %v306 = vld [vmem:[%s284 + $0x48] sm:$0xff]
      %v307 = vld [vmem:[%s284 + $0x50] sm:$0xff]
      %v308 = vld [vmem:[%s284 + $0x58] sm:$0xff]
      %v309 = vld [vmem:[%s284 + $0x60] sm:$0xff]
      %v310 = vld [vmem:[%s284 + $0x68] sm:$0xff]
      %v311 = vld [vmem:[%s284 + $0x70] sm:$0xff]
      %v312 = vld [vmem:[%s284 + $0x78] sm:$0xff]
      %v313 = vld [vmem:[%s284 + $0x80] sm:$0xff]
      %v314 = vld [vmem:[%s284 + $0x88] sm:$0xff]
      %v315 = vld [vmem:[%s3] sm:$0xf]
      %v316 = vld [vmem:[%s3 + $0x4] sm:$0xf]
      %v317 = vld [vmem:[%s3 + $0x8] sm:$0xf]
      %v318 = vld [vmem:[%s3 + $0xc] sm:$0xf]
      %v319 = vld [vmem:[%s3 + $0x10] sm:$0xf]
      %v320 = vld [vmem:[%s3 + $0x14] sm:$0xf]
      %v321 = vld [vmem:[%s3 + $0x18] sm:$0xf]
      %v322 = vld [vmem:[%s3 + $0x1c] sm:$0xf]
      %v323 = vld [vmem:[%s3 + $0x20] sm:$0xf]
      %v324 = vld [vmem:[%s3 + $0x24] sm:$0xf]
      %v325 = vld [vmem:[%s3 + $0x28] sm:$0xf]
      %v326 = vld [vmem:[%s3 + $0x2c] sm:$0xf]
      %v327 = vld [vmem:[%s3 + $0x30] sm:$0xf]
      %v328 = vld [vmem:[%s3 + $0x34] sm:$0xf]
      %v329 = vld [vmem:[%s3 + $0x38] sm:$0xf]
      %v330 = vld [vmem:[%s3 + $0x3c] sm:$0xf]
      %v331 = vld [vmem:[%s3 + $0x40] sm:$0xf]
      %v332 = vld [vmem:[%s3 + $0x44] sm:$0xf]
      %v333 = vld [vmem:[%s3 + $0x48] sm:$0xf]
      %v334 = vld [vmem:[%s3 + $0x4c] sm:$0xf]
      %v335 = vld [vmem:[%s3 + $0x50] sm:$0xf]
      %v336 = vld [vmem:[%s3 + $0x54] sm:$0xf]
      %v337 = vld [vmem:[%s3 + $0x58] sm:$0xf]
      %v338 = vld [vmem:[%s3 + $0x5c] sm:$0xf]
      %v339 = vld [vmem:[%s3 + $0x60] sm:$0xf]
      %v340 = vld [vmem:[%s3 + $0x64] sm:$0xf]
      %v341 = vld [vmem:[%s3 + $0x68] sm:$0xf]
      %v342 = vld [vmem:[%s3 + $0x6c] sm:$0xf]
      %v343 = vld [vmem:[%s3 + $0x70] sm:$0xf]
      %v344 = vld [vmem:[%s3 + $0x74] sm:$0xf]
      %v345 = vld [vmem:[%s3 + $0x78] sm:$0xf]
      %v346 = vld [vmem:[%s3 + $0x7c] sm:$0xf]
      %v347 = vld [vmem:[%s3 + $0x80] sm:$0xf]
      %v348 = vld [vmem:[%s3 + $0x84] sm:$0xf]
      %v349 = vld [vmem:[%s3 + $0x88] sm:$0xf]
      %v350 = vld [vmem:[%s3 + $0x8c] sm:$0xf]
      %v351 = vld [vmem:[%s3 + $0x90] sm:$0xf]
      %v352 = vld [vmem:[%s3 + $0x94] sm:$0xf]
      %v353 = vld [vmem:[%s3 + $0x98] sm:$0xf]
      %v354 = vld [vmem:[%s3 + $0x9c] sm:$0xf]
      %v355 = vld [vmem:[%s3 + $0xa0] sm:$0xf]
      %v356 = vld [vmem:[%s3 + $0xa4] sm:$0xf]
      %v357 = vld [vmem:[%s3 + $0xa8] sm:$0xf]
      %v358 = vld [vmem:[%s3 + $0xac] sm:$0xf]
      %v359 = vld [vmem:[%s3 + $0xb0] sm:$0xf]
      %v360 = vld [vmem:[%s3 + $0xb4] sm:$0xf]
      %v361 = vld [vmem:[%s3 + $0xb8] sm:$0xf]
      %v362 = vld [vmem:[%s3 + $0xbc] sm:$0xf]
      %v363 = vld [vmem:[%s3 + $0xc0] sm:$0xf]
      %v364 = vld [vmem:[%s3 + $0xc4] sm:$0xf]
      %v365 = vld [vmem:[%s3 + $0xc8] sm:$0xf]
      %v366 = vld [vmem:[%s3 + $0xcc] sm:$0xf]
      %v367 = vld [vmem:[%s3 + $0xd0] sm:$0xf]
      %v368 = vld [vmem:[%s3 + $0xd4] sm:$0xf]
      %v369 = vld [vmem:[%s3 + $0xd8] sm:$0xf]
      %v370 = vld [vmem:[%s3 + $0xdc] sm:$0xf]
      %v371 = vld [vmem:[%s3 + $0xe0] sm:$0xf]
      %v372 = vld [vmem:[%s3 + $0xe4] sm:$0xf]
      %v373 = vld [vmem:[%s3 + $0xe8] sm:$0xf]
      %v374 = vld [vmem:[%s3 + $0xec] sm:$0xf]
      %v375 = vld [vmem:[%s3 + $0xf0] sm:$0xf]
      %v376 = vld [vmem:[%s3 + $0xf4] sm:$0xf]
      %v377 = vld [vmem:[%s3 + $0xf8] sm:$0xf]
      %v378 = vld [vmem:[%s3 + $0xfc] sm:$0xf]
      %v379 = vld [vmem:[%s284 + $0x90] sm:$0x11]
      %v380 = vld [vmem:[%s284 + $0x98] sm:$0x11]
      %s381 = scalar_lea.vmem %s3, 256
      %v382 = vld [vmem:[%s381] sm:$0xf]
      %v383 = vld [vmem:[%s381 + $0x4] sm:$0xf]
      %v384 = vld [vmem:[%s381 + $0x8] sm:$0xf]
      %v385 = vld [vmem:[%s381 + $0xc] sm:$0xf]
      %v386 = vld [vmem:[%s381 + $0x10] sm:$0xf]
      %v387 = vld [vmem:[%s381 + $0x14] sm:$0xf]
      %v388 = vld [vmem:[%s381 + $0x18] sm:$0xf]
      %v389 = vld [vmem:[%s381 + $0x1c] sm:$0xf]
      %v390 = vld [vmem:[%s381 + $0x20] sm:$0xf]
      %v391 = vld [vmem:[%s381 + $0x24] sm:$0xf]
      %v392 = vld [vmem:[%s381 + $0x28] sm:$0xf]
      %v393 = vld [vmem:[%s381 + $0x2c] sm:$0xf]
      %v394 = vld [vmem:[%s381 + $0x30] sm:$0xf]
      %v395 = vld [vmem:[%s381 + $0x34] sm:$0xf]
      %v396 = vld [vmem:[%s381 + $0x38] sm:$0xf]
      %v397 = vld [vmem:[%s381 + $0x3c] sm:$0xf]
      %v398 = vld [vmem:[%s381 + $0x40] sm:$0xf]
      %v399 = vld [vmem:[%s381 + $0x44] sm:$0xf]
      %v400 = vld [vmem:[%s381 + $0x48] sm:$0xf]
      %v401 = vld [vmem:[%s381 + $0x4c] sm:$0xf]
      %v402 = vld [vmem:[%s381 + $0x50] sm:$0xf]
      %v403 = vld [vmem:[%s381 + $0x54] sm:$0xf]
      %v404 = vld [vmem:[%s381 + $0x58] sm:$0xf]
      %v405 = vld [vmem:[%s381 + $0x5c] sm:$0xf]
      %v406 = vld [vmem:[%s381 + $0x60] sm:$0xf]
      %v407 = vld [vmem:[%s381 + $0x64] sm:$0xf]
      %v408 = vld [vmem:[%s381 + $0x68] sm:$0xf]
      %v409 = vld [vmem:[%s381 + $0x6c] sm:$0xf]
      %v410 = vld [vmem:[%s381 + $0x70] sm:$0xf]
      %v411 = vld [vmem:[%s381 + $0x74] sm:$0xf]
      %v412 = vld [vmem:[%s381 + $0x78] sm:$0xf]
      %v413 = vld [vmem:[%s381 + $0x7c] sm:$0xf]
      %v414 = vld [vmem:[%s381 + $0x80] sm:$0xf]
      %v415 = vld [vmem:[%s381 + $0x84] sm:$0xf]
      %v416 = vld [vmem:[%s381 + $0x88] sm:$0xf]
      %v417 = vld [vmem:[%s381 + $0x8c] sm:$0xf]
      %v418 = vld [vmem:[%s381 + $0x90] sm:$0xf]
      %v419 = vld [vmem:[%s381 + $0x94] sm:$0xf]
      %v420 = vld [vmem:[%s381 + $0x98] sm:$0xf]
      %v421 = vld [vmem:[%s381 + $0x9c] sm:$0xf]
      %v422 = vld [vmem:[%s381 + $0xa0] sm:$0xf]
      %v423 = vld [vmem:[%s381 + $0xa4] sm:$0xf]
      %v424 = vld [vmem:[%s381 + $0xa8] sm:$0xf]
      %v425 = vld [vmem:[%s381 + $0xac] sm:$0xf]
      %v426 = vld [vmem:[%s381 + $0xb0] sm:$0xf]
      %v427 = vld [vmem:[%s381 + $0xb4] sm:$0xf]
      %v428 = vld [vmem:[%s381 + $0xb8] sm:$0xf]
      %v429 = vld [vmem:[%s381 + $0xbc] sm:$0xf]
      %v430 = vld [vmem:[%s381 + $0xc0] sm:$0xf]
      %v431 = vld [vmem:[%s381 + $0xc4] sm:$0xf]
      %v432 = vld [vmem:[%s381 + $0xc8] sm:$0xf]
      %v433 = vld [vmem:[%s381 + $0xcc] sm:$0xf]
      %v434 = vld [vmem:[%s381 + $0xd0] sm:$0xf]
      %v435 = vld [vmem:[%s381 + $0xd4] sm:$0xf]
      %v436 = vld [vmem:[%s381 + $0xd8] sm:$0xf]
      %v437 = vld [vmem:[%s381 + $0xdc] sm:$0xf]
      %v438 = vld [vmem:[%s381 + $0xe0] sm:$0xf]
      %v439 = vld [vmem:[%s381 + $0xe4] sm:$0xf]
      %v440 = vld [vmem:[%s381 + $0xe8] sm:$0xf]
      %v441 = vld [vmem:[%s381 + $0xec] sm:$0xf]
      %v442 = vld [vmem:[%s381 + $0xf0] sm:$0xf]
      %v443 = vld [vmem:[%s381 + $0xf4] sm:$0xf]
      %v444 = vld [vmem:[%s381 + $0xf8] sm:$0xf]
      %v445 = vld [vmem:[%s381 + $0xfc] sm:$0xf]
      %v466 = vunpack.c.l.b16 %v297
      %v467 = vunpack.c.h.b16 %v297
      %v468 = vunpack.c.l.b16 %v298
      %v469 = vunpack.c.h.b16 %v298
      %v470 = vunpack.c.l.b16 %v299
      %v471 = vunpack.c.h.b16 %v299
      %v472 = vunpack.c.l.b16 %v300
      %v473 = vunpack.c.h.b16 %v300
      %v474 = vunpack.c.l.b16 %v301
      %v475 = vunpack.c.h.b16 %v301
      %v476 = vunpack.c.l.b16 %v302
      %v477 = vunpack.c.h.b16 %v302
      %v478 = vunpack.c.l.b16 %v303
      %v479 = vunpack.c.h.b16 %v303
      %v480 = vunpack.c.l.b16 %v304
      %v481 = vunpack.c.h.b16 %v304
      %v482 = vunpack.c.l.b16 %v305
      %v483 = vunpack.c.h.b16 %v305
      %v484 = vunpack.c.l.b16 %v306
      %v485 = vunpack.c.h.b16 %v306
      %v486 = vunpack.c.l.b16 %v307
      %v487 = vunpack.c.h.b16 %v307
      %v488 = vunpack.c.l.b16 %v308
      %v489 = vunpack.c.h.b16 %v308
      %v490 = vunpack.c.l.b16 %v309
      %v491 = vunpack.c.h.b16 %v309
      %v492 = vunpack.c.l.b16 %v310
      %v493 = vunpack.c.h.b16 %v310
      %v494 = vunpack.c.l.b16 %v311
      %v495 = vunpack.c.h.b16 %v311
      %v496 = vunpack.c.l.b16 %v312
      %v497 = vunpack.c.h.b16 %v312
      %v498 = vunpack.c.l.b16 %v313
      %v499 = vunpack.c.h.b16 %v313
      %v500 = vunpack.c.l.b16 %v314
      %v501 = vunpack.c.h.b16 %v314
      %v502 = vunpack.c.l.b16 %v379
      %v503 = vunpack.c.h.b16 %v379
      %v504 = vunpack.c.l.b16 %v380
      %v505 = vunpack.c.h.b16 %v380
      %v506 = vpack.c.b16 %v470, %v466
      %v507 = vpack.c.b16 %v471, %v467
      %v508 = vpack.c.b16 %v472, %v468
      %v509 = vpack.c.b16 %v473, %v469
      %v510 = vpack.c.b16 %v478, %v474
      %v511 = vpack.c.b16 %v479, %v475
      %v512 = vpack.c.b16 %v480, %v476
      %v513 = vpack.c.b16 %v481, %v477
      %v514 = vpack.c.b16 %v486, %v482
      %v515 = vpack.c.b16 %v487, %v483
      %v516 = vpack.c.b16 %v488, %v484
      %v517 = vpack.c.b16 %v489, %v485
      %v518 = vpack.c.b16 %v494, %v490
      %v519 = vpack.c.b16 %v495, %v491
      %v520 = vpack.c.b16 %v496, %v492
      %v521 = vpack.c.b16 %v497, %v493
      %v522 = vpack.c.b16 %v502, %v498
      %v523 = vpack.c.b16 %v503, %v499
      %v524 = vpack.c.b16 %v504, %v500
      %v525 = vpack.c.b16 %v505, %v501
      %vm526 = vsmask.f32 7424
      %v528 = vshrl.u32 %v506, 16
      %v530 = vshll.u32 %v506, 16
      %v532 = vrot.slane %v530, 1
      %v533 = vor.u32 %v528, %v532
      %v535 = vshll.u32 %v510, 16
      %v537 = vrot.slane %v535, 1
      %v538 = vsel %vm526, %v533, %v537
      %v540 = vshrl.u32 %v507, 16
      %v542 = vshll.u32 %v507, 16
      %v544 = vrot.slane %v542, 1
      %v545 = vor.u32 %v540, %v544
      %v547 = vshll.u32 %v511, 16
      %v549 = vrot.slane %v547, 1
      %v550 = vsel %vm526, %v545, %v549
      %v552 = vshrl.u32 %v508, 16
      %v554 = vshll.u32 %v508, 16
      %v556 = vrot.slane %v554, 1
      %v557 = vor.u32 %v552, %v556
      %v559 = vshll.u32 %v512, 16
      %v561 = vrot.slane %v559, 1
      %v562 = vsel %vm526, %v557, %v561
      %v564 = vshrl.u32 %v509, 16
      %v566 = vshll.u32 %v509, 16
      %v568 = vrot.slane %v566, 1
      %v569 = vor.u32 %v564, %v568
      %v571 = vshll.u32 %v513, 16
      %v573 = vrot.slane %v571, 1
      %v574 = vsel %vm526, %v569, %v573
      %v575 = vshrl.u32 %v510, 16
      %v577 = vor.u32 %v575, %v537
      %v579 = vshll.u32 %v514, 16
      %v581 = vrot.slane %v579, 1
      %v582 = vsel %vm526, %v577, %v581
      %v583 = vshrl.u32 %v511, 16
      %v585 = vor.u32 %v583, %v549
      %v587 = vshll.u32 %v515, 16
      %v589 = vrot.slane %v587, 1
      %v590 = vsel %vm526, %v585, %v589
      %v591 = vshrl.u32 %v512, 16
      %v593 = vor.u32 %v591, %v561
      %v595 = vshll.u32 %v516, 16
      %v597 = vrot.slane %v595, 1
      %v598 = vsel %vm526, %v593, %v597
      %v599 = vshrl.u32 %v513, 16
      %v601 = vor.u32 %v599, %v573
      %v603 = vshll.u32 %v517, 16
      %v605 = vrot.slane %v603, 1
      %v606 = vsel %vm526, %v601, %v605
      %v607 = vshrl.u32 %v514, 16
      %v609 = vor.u32 %v607, %v581
      %v611 = vshll.u32 %v518, 16
      %v613 = vrot.slane %v611, 1
      %v614 = vsel %vm526, %v609, %v613
      %v615 = vshrl.u32 %v515, 16
      %v617 = vor.u32 %v615, %v589
      %v619 = vshll.u32 %v519, 16
      %v621 = vrot.slane %v619, 1
      %v622 = vsel %vm526, %v617, %v621
      %v623 = vshrl.u32 %v516, 16
      %v625 = vor.u32 %v623, %v597
      %v627 = vshll.u32 %v520, 16
      %v629 = vrot.slane %v627, 1
      %v630 = vsel %vm526, %v625, %v629
      %v631 = vshrl.u32 %v517, 16
      %v633 = vor.u32 %v631, %v605
      %v635 = vshll.u32 %v521, 16
      %v637 = vrot.slane %v635, 1
      %v638 = vsel %vm526, %v633, %v637
      %v639 = vshrl.u32 %v518, 16
      %v641 = vor.u32 %v639, %v613
      %v643 = vshll.u32 %v522, 16
      %v645 = vrot.slane %v643, 1
      %v646 = vsel %vm526, %v641, %v645
      %v647 = vshrl.u32 %v519, 16
      %v649 = vor.u32 %v647, %v621
      %v651 = vshll.u32 %v523, 16
      %v653 = vrot.slane %v651, 1
      %v654 = vsel %vm526, %v649, %v653
      %v655 = vshrl.u32 %v520, 16
      %v657 = vor.u32 %v655, %v629
      %v659 = vshll.u32 %v524, 16
      %v661 = vrot.slane %v659, 1
      %v662 = vsel %vm526, %v657, %v661
      %v663 = vshrl.u32 %v521, 16
      %v665 = vor.u32 %v663, %v637
      %v667 = vshll.u32 %v525, 16
      %v669 = vrot.slane %v667, 1
      %v670 = vsel %vm526, %v665, %v669
      %v671 = vshrl.u32 %v522, 16
      %v673 = vor.u32 %v671, %v645
      %v674 = vshrl.u32 %v523, 16
      %v676 = vor.u32 %v674, %v653
      %v677 = vshrl.u32 %v524, 16
      %v679 = vor.u32 %v677, %v661
      %v680 = vshrl.u32 %v525, 16
      %v682 = vor.u32 %v680, %v669
      %v767 = vunpack.c.l.b16 %v382
      %v768 = vunpack.c.l.b16 %v383
      %v769 = vunpack.c.l.b16 %v384
      %v770 = vunpack.c.l.b16 %v385
      %v771 = vunpack.c.l.b16 %v386
      %v772 = vunpack.c.l.b16 %v387
      %v773 = vunpack.c.l.b16 %v388
      %v774 = vunpack.c.l.b16 %v389
      %v775 = vunpack.c.l.b16 %v390
      %v776 = vunpack.c.l.b16 %v391
      %v777 = vunpack.c.l.b16 %v392
      %v778 = vunpack.c.l.b16 %v393
      %v779 = vunpack.c.l.b16 %v394
      %v780 = vunpack.c.l.b16 %v395
      %v781 = vunpack.c.l.b16 %v396
      %v782 = vunpack.c.l.b16 %v397
      %v783 = vunpack.c.l.b16 %v398
      %v784 = vunpack.c.l.b16 %v399
      %v785 = vunpack.c.l.b16 %v400
      %v786 = vunpack.c.l.b16 %v401
      %v787 = vunpack.c.l.b16 %v402
      %v788 = vunpack.c.l.b16 %v403
      %v789 = vunpack.c.l.b16 %v404
      %v790 = vunpack.c.l.b16 %v405
      %v791 = vunpack.c.l.b16 %v406
      %v792 = vunpack.c.l.b16 %v407
      %v793 = vunpack.c.l.b16 %v408
      %v794 = vunpack.c.l.b16 %v409
      %v795 = vunpack.c.l.b16 %v410
      %v796 = vunpack.c.l.b16 %v411
      %v797 = vunpack.c.l.b16 %v412
      %v798 = vunpack.c.l.b16 %v413
      %v799 = vunpack.c.l.b16 %v414
      %v800 = vunpack.c.l.b16 %v415
      %v801 = vunpack.c.l.b16 %v416
      %v802 = vunpack.c.l.b16 %v417
      %v803 = vunpack.c.l.b16 %v418
      %v804 = vunpack.c.l.b16 %v419
      %v805 = vunpack.c.l.b16 %v420
      %v806 = vunpack.c.l.b16 %v421
      %v807 = vunpack.c.l.b16 %v422
      %v808 = vunpack.c.l.b16 %v423
      %v809 = vunpack.c.l.b16 %v424
      %v810 = vunpack.c.l.b16 %v425
      %v811 = vunpack.c.l.b16 %v426
      %v812 = vunpack.c.l.b16 %v427
      %v813 = vunpack.c.l.b16 %v428
      %v814 = vunpack.c.l.b16 %v429
      %v815 = vunpack.c.l.b16 %v430
      %v816 = vunpack.c.l.b16 %v431
      %v817 = vunpack.c.l.b16 %v432
      %v818 = vunpack.c.l.b16 %v433
      %v819 = vunpack.c.l.b16 %v434
      %v820 = vunpack.c.l.b16 %v435
      %v821 = vunpack.c.l.b16 %v436
      %v822 = vunpack.c.l.b16 %v437
      %v823 = vunpack.c.l.b16 %v438
      %v824 = vunpack.c.l.b16 %v439
      %v825 = vunpack.c.l.b16 %v440
      %v826 = vunpack.c.l.b16 %v441
      %v827 = vunpack.c.l.b16 %v442
      %v828 = vunpack.c.l.b16 %v443
      %v829 = vunpack.c.l.b16 %v444
      %v830 = vunpack.c.l.b16 %v445
      %v831 = vpack.c.b16 %v768, %v767
      %v832 = vpack.c.b16 %v770, %v769
      %v833 = vpack.c.b16 %v772, %v771
      %v834 = vpack.c.b16 %v774, %v773
      %v835 = vpack.c.b16 %v776, %v775
      %v836 = vpack.c.b16 %v778, %v777
      %v837 = vpack.c.b16 %v780, %v779
      %v838 = vpack.c.b16 %v782, %v781
      %v839 = vpack.c.b16 %v784, %v783
      %v840 = vpack.c.b16 %v786, %v785
      %v841 = vpack.c.b16 %v788, %v787
      %v842 = vpack.c.b16 %v790, %v789
      %v843 = vpack.c.b16 %v792, %v791
      %v844 = vpack.c.b16 %v794, %v793
      %v845 = vpack.c.b16 %v796, %v795
      %v846 = vpack.c.b16 %v798, %v797
      %v847 = vpack.c.b16 %v800, %v799
      %v848 = vpack.c.b16 %v802, %v801
      %v849 = vpack.c.b16 %v804, %v803
      %v850 = vpack.c.b16 %v806, %v805
      %v851 = vpack.c.b16 %v808, %v807
      %v852 = vpack.c.b16 %v810, %v809
      %v853 = vpack.c.b16 %v812, %v811
      %v854 = vpack.c.b16 %v814, %v813
      %v855 = vpack.c.b16 %v816, %v815
      %v856 = vpack.c.b16 %v818, %v817
      %v857 = vpack.c.b16 %v820, %v819
      %v858 = vpack.c.b16 %v822, %v821
      %v859 = vpack.c.b16 %v824, %v823
      %v860 = vpack.c.b16 %v826, %v825
      %v861 = vpack.c.b16 %v828, %v827
      %v862 = vpack.c.b16 %v830, %v829
      %895 = vmatprep.subr.bf16.mxu0 0
      %896 = vmatpush1.bf16.msra.mxu0 %v831
      %897 = vmatprep.subr.bf16.mxu0 0
      %898 = vmatpush1.bf16.msra.mxu0 %v832
      %899 = vmatprep.subr.bf16.mxu0 0
      %900 = vmatpush1.bf16.msra.mxu0 %v833
      %901 = vmatprep.subr.bf16.mxu0 0
      %902 = vmatpush1.bf16.msra.mxu0 %v834
      %903 = vmatprep.subr.bf16.mxu0 0
      %904 = vmatpush1.bf16.msra.mxu0 %v835
      %905 = vmatprep.subr.bf16.mxu0 0
      %906 = vmatpush1.bf16.msra.mxu0 %v836
      %907 = vmatprep.subr.bf16.mxu0 0
      %908 = vmatpush1.bf16.msra.mxu0 %v837
      %909 = vmatprep.subr.bf16.mxu0 0
      %910 = vmatpush1.bf16.msra.mxu0 %v838
      %911 = vmatprep.subr.bf16.mxu0 0
      %912 = vmatpush1.bf16.msra.mxu0 %v839
      %913 = vmatprep.subr.bf16.mxu0 0
      %914 = vmatpush1.bf16.msra.mxu0 %v840
      %915 = vmatprep.subr.bf16.mxu0 0
      %916 = vmatpush1.bf16.msra.mxu0 %v841
      %917 = vmatprep.subr.bf16.mxu0 0
      %918 = vmatpush1.bf16.msra.mxu0 %v842
      %919 = vmatprep.subr.bf16.mxu0 0
      %920 = vmatpush1.bf16.msra.mxu0 %v843
      %921 = vmatprep.subr.bf16.mxu0 0
      %922 = vmatpush1.bf16.msra.mxu0 %v844
      %923 = vmatprep.subr.bf16.mxu0 0
      %924 = vmatpush1.bf16.msra.mxu0 %v845
      %925 = vmatprep.subr.bf16.mxu0 0
      %926 = vmatpush1.bf16.msra.mxu0 %v846
      %927 = vmatprep.mubr.bf16.mxu0 %v550
      %928 = vmatmul.mubr.bf16.gmra.mrb[0].mxu0 %v538
      %v929 = vpop.f32.mrb[0].mxu0
      %v930 = vadd.f32 0.0, %v929
      %v931 = vpop.f32.mrb[0].mxu0
      %v932 = vpop.f32.mrb[0].mxu0
      %v933 = vadd.f32 0.0, %v932
      %v934 = vpop.f32.mrb[0].mxu0
      %935 = vmatprep.mubr.bf16.mxu0 %v590
      %936 = vmatmul.mubr.bf16.gmra.mrb[0].mxu0 %v582
      %v937 = vpop.f32.mrb[0].mxu0
      %v938 = vadd.f32 0.0, %v937
      %v939 = vpop.f32.mrb[0].mxu0
      %v940 = vpop.f32.mrb[0].mxu0
      %v941 = vadd.f32 0.0, %v940
      %v942 = vpop.f32.mrb[0].mxu0
      %943 = vmatprep.mubr.bf16.mxu0 %v622
      %944 = vmatmul.mubr.bf16.gmra.mrb[0].mxu0 %v614
      %v945 = vpop.f32.mrb[0].mxu0
      %v946 = vadd.f32 0.0, %v945
      %v947 = vpop.f32.mrb[0].mxu0
      %v948 = vpop.f32.mrb[0].mxu0
      %v949 = vadd.f32 0.0, %v948
      %v950 = vpop.f32.mrb[0].mxu0
      %951 = vmatprep.mubr.bf16.mxu0 %v654
      %952 = vmatmul.mubr.bf16.gmra.mrb[0].mxu0 %v646
      %v953 = vpop.f32.mrb[0].mxu0
      %v954 = vadd.f32 0.0, %v953
      %v955 = vpop.f32.mrb[0].mxu0
      %v956 = vpop.f32.mrb[0].mxu0
      %v957 = vadd.f32 0.0, %v956
      %v958 = vpop.f32.mrb[0].mxu0
      %959 = vmatprep.mubr.bf16.mxu0 %v676
      %960 = vmatmul.mubr.bf16.gmra.mrb[0].mxu0 %v673
      %v961 = vpop.f32.mrb[0].mxu0
      %v962 = vadd.f32 0.0, %v961
      %v963 = vpop.f32.mrb[0].mxu0
      %v964 = vpop.f32.mrb[0].mxu0
      %v965 = vpop.f32.mrb[0].mxu0
      %966 = vdwg.mxu0
      %967 = vmatprep.subr.bf16.mxu0 0
      %968 = vmatpush1.bf16.msra.mxu0 %v847
      %969 = vmatprep.subr.bf16.mxu0 0
      %970 = vmatpush1.bf16.msra.mxu0 %v848
      %971 = vmatprep.subr.bf16.mxu0 0
      %972 = vmatpush1.bf16.msra.mxu0 %v849
      %973 = vmatprep.subr.bf16.mxu0 0
      %974 = vmatpush1.bf16.msra.mxu0 %v850
      %975 = vmatprep.subr.bf16.mxu0 0
      %976 = vmatpush1.bf16.msra.mxu0 %v851
      %977 = vmatprep.subr.bf16.mxu0 0
      %978 = vmatpush1.bf16.msra.mxu0 %v852
      %979 = vmatprep.subr.bf16.mxu0 0
      %980 = vmatpush1.bf16.msra.mxu0 %v853
      %981 = vmatprep.subr.bf16.mxu0 0
      %982 = vmatpush1.bf16.msra.mxu0 %v854
      %983 = vmatprep.subr.bf16.mxu0 0
      %984 = vmatpush1.bf16.msra.mxu0 %v855
      %985 = vmatprep.subr.bf16.mxu0 0
      %986 = vmatpush1.bf16.msra.mxu0 %v856
      %987 = vmatprep.subr.bf16.mxu0 0
      %988 = vmatpush1.bf16.msra.mxu0 %v857
      %989 = vmatprep.subr.bf16.mxu0 0
      %990 = vmatpush1.bf16.msra.mxu0 %v858
      %991 = vmatprep.subr.bf16.mxu0 0
      %992 = vmatpush1.bf16.msra.mxu0 %v859
      %993 = vmatprep.subr.bf16.mxu0 0
      %994 = vmatpush1.bf16.msra.mxu0 %v860
      %995 = vmatprep.subr.bf16.mxu0 0
      %996 = vmatpush1.bf16.msra.mxu0 %v861
      %997 = vmatprep.subr.bf16.mxu0 0
      %998 = vmatpush1.bf16.msra.mxu0 %v862
      %999 = vmatprep.mubr.bf16.mxu0 %v574
      %1000 = vmatmul.mubr.bf16.gmra.mrb[0].mxu0 %v562
      %v1001 = vpop.f32.mrb[0].mxu0
      %v1002 = vadd.f32 %v930, %v1001
      %v1003 = vpop.f32.mrb[0].mxu0
      %v1004 = vpop.f32.mrb[0].mxu0
      %v1005 = vadd.f32 %v933, %v1004
      %v1006 = vpop.f32.mrb[0].mxu0
      %1007 = vmatprep.mubr.bf16.mxu0 %v606
      %1008 = vmatmul.mubr.bf16.gmra.mrb[0].mxu0 %v598
      %v1009 = vpop.f32.mrb[0].mxu0
      %v1010 = vadd.f32 %v938, %v1009
      %v1011 = vpop.f32.mrb[0].mxu0
      %v1012 = vpop.f32.mrb[0].mxu0
      %v1013 = vadd.f32 %v941, %v1012
      %v1014 = vpop.f32.mrb[0].mxu0
      %1015 = vmatprep.mubr.bf16.mxu0 %v638
      %1016 = vmatmul.mubr.bf16.gmra.mrb[0].mxu0 %v630
      %v1017 = vpop.f32.mrb[0].mxu0
      %v1018 = vadd.f32 %v946, %v1017
      %v1019 = vpop.f32.mrb[0].mxu0
      %v1020 = vpop.f32.mrb[0].mxu0
      %v1021 = vadd.f32 %v949, %v1020
      %v1022 = vpop.f32.mrb[0].mxu0
      %1023 = vmatprep.mubr.bf16.mxu0 %v670
      %1024 = vmatmul.mubr.bf16.gmra.mrb[0].mxu0 %v662
      %v1025 = vpop.f32.mrb[0].mxu0
      %v1026 = vadd.f32 %v954, %v1025
      %v1027 = vpop.f32.mrb[0].mxu0
      %v1028 = vpop.f32.mrb[0].mxu0
      %v1029 = vadd.f32 %v957, %v1028
      %v1030 = vpop.f32.mrb[0].mxu0
      %1031 = vmatprep.mubr.bf16.mxu0 %v682
      %1032 = vmatmul.mubr.bf16.gmra.mrb[0].mxu0 %v679
      %v1033 = vpop.f32.mrb[0].mxu0
      %v1034 = vadd.f32 %v962, %v1033
      %v1035 = vpop.f32.mrb[0].mxu0
      %v1036 = vpop.f32.mrb[0].mxu0
      %v1037 = vpop.f32.mrb[0].mxu0
      %1038 = vdwg.mxu0
      %v1039 = vpack.c.b16 %v498, %v498
      %v1040 = vpack.c.b16 %v499, %v499
      %v1041 = vpack.c.b16 %v500, %v500
      %v1042 = vpack.c.b16 %v501, %v501
      %v1127 = vunpack.c.l.b16 %v315
      %v1128 = vunpack.c.l.b16 %v316
      %v1129 = vunpack.c.l.b16 %v317
      %v1130 = vunpack.c.l.b16 %v318
      %v1131 = vunpack.c.l.b16 %v319
      %v1132 = vunpack.c.l.b16 %v320
      %v1133 = vunpack.c.l.b16 %v321
      %v1134 = vunpack.c.l.b16 %v322
      %v1135 = vunpack.c.l.b16 %v323
      %v1136 = vunpack.c.l.b16 %v324
      %v1137 = vunpack.c.l.b16 %v325
      %v1138 = vunpack.c.l.b16 %v326
      %v1139 = vunpack.c.l.b16 %v327
      %v1140 = vunpack.c.l.b16 %v328
      %v1141 = vunpack.c.l.b16 %v329
      %v1142 = vunpack.c.l.b16 %v330
      %v1143 = vunpack.c.l.b16 %v331
      %v1144 = vunpack.c.l.b16 %v332
      %v1145 = vunpack.c.l.b16 %v333
      %v1146 = vunpack.c.l.b16 %v334
      %v1147 = vunpack.c.l.b16 %v335
      %v1148 = vunpack.c.l.b16 %v336
      %v1149 = vunpack.c.l.b16 %v337
      %v1150 = vunpack.c.l.b16 %v338
      %v1151 = vunpack.c.l.b16 %v339
      %v1152 = vunpack.c.l.b16 %v340
      %v1153 = vunpack.c.l.b16 %v341
      %v1154 = vunpack.c.l.b16 %v342
      %v1155 = vunpack.c.l.b16 %v343
      %v1156 = vunpack.c.l.b16 %v344
      %v1157 = vunpack.c.l.b16 %v345
      %v1158 = vunpack.c.l.b16 %v346
      %v1159 = vunpack.c.l.b16 %v347
      %v1160 = vunpack.c.l.b16 %v348
      %v1161 = vunpack.c.l.b16 %v349
      %v1162 = vunpack.c.l.b16 %v350
      %v1163 = vunpack.c.l.b16 %v351
      %v1164 = vunpack.c.l.b16 %v352
      %v1165 = vunpack.c.l.b16 %v353
      %v1166 = vunpack.c.l.b16 %v354
      %v1167 = vunpack.c.l.b16 %v355
      %v1168 = vunpack.c.l.b16 %v356
      %v1169 = vunpack.c.l.b16 %v357
      %v1170 = vunpack.c.l.b16 %v358
      %v1171 = vunpack.c.l.b16 %v359
      %v1172 = vunpack.c.l.b16 %v360
      %v1173 = vunpack.c.l.b16 %v361
      %v1174 = vunpack.c.l.b16 %v362
      %v1175 = vunpack.c.l.b16 %v363
      %v1176 = vunpack.c.l.b16 %v364
      %v1177 = vunpack.c.l.b16 %v365
      %v1178 = vunpack.c.l.b16 %v366
      %v1179 = vunpack.c.l.b16 %v367
      %v1180 = vunpack.c.l.b16 %v368
      %v1181 = vunpack.c.l.b16 %v369
      %v1182 = vunpack.c.l.b16 %v370
      %v1183 = vunpack.c.l.b16 %v371
      %v1184 = vunpack.c.l.b16 %v372
      %v1185 = vunpack.c.l.b16 %v373
      %v1186 = vunpack.c.l.b16 %v374
      %v1187 = vunpack.c.l.b16 %v375
      %v1188 = vunpack.c.l.b16 %v376
      %v1189 = vunpack.c.l.b16 %v377
      %v1190 = vunpack.c.l.b16 %v378
      %v1191 = vpack.c.b16 %v1128, %v1127
      %v1192 = vpack.c.b16 %v1130, %v1129
      %v1193 = vpack.c.b16 %v1132, %v1131
      %v1194 = vpack.c.b16 %v1134, %v1133
      %v1195 = vpack.c.b16 %v1136, %v1135
      %v1196 = vpack.c.b16 %v1138, %v1137
      %v1197 = vpack.c.b16 %v1140, %v1139
      %v1198 = vpack.c.b16 %v1142, %v1141
      %v1199 = vpack.c.b16 %v1144, %v1143
      %v1200 = vpack.c.b16 %v1146, %v1145
      %v1201 = vpack.c.b16 %v1148, %v1147
      %v1202 = vpack.c.b16 %v1150, %v1149
      %v1203 = vpack.c.b16 %v1152, %v1151
      %v1204 = vpack.c.b16 %v1154, %v1153
      %v1205 = vpack.c.b16 %v1156, %v1155
      %v1206 = vpack.c.b16 %v1158, %v1157
      %v1207 = vpack.c.b16 %v1160, %v1159
      %v1208 = vpack.c.b16 %v1162, %v1161
      %v1209 = vpack.c.b16 %v1164, %v1163
      %v1210 = vpack.c.b16 %v1166, %v1165
      %v1211 = vpack.c.b16 %v1168, %v1167
      %v1212 = vpack.c.b16 %v1170, %v1169
      %v1213 = vpack.c.b16 %v1172, %v1171
      %v1214 = vpack.c.b16 %v1174, %v1173
      %v1215 = vpack.c.b16 %v1176, %v1175
      %v1216 = vpack.c.b16 %v1178, %v1177
      %v1217 = vpack.c.b16 %v1180, %v1179
      %v1218 = vpack.c.b16 %v1182, %v1181
      %v1219 = vpack.c.b16 %v1184, %v1183
      %v1220 = vpack.c.b16 %v1186, %v1185
      %v1221 = vpack.c.b16 %v1188, %v1187
      %v1222 = vpack.c.b16 %v1190, %v1189
      %1255 = vmatprep.subr.bf16.mxu0 0
      %1256 = vmatpush1.bf16.msra.mxu0 %v1191
      %1257 = vmatprep.subr.bf16.mxu0 0
      %1258 = vmatpush1.bf16.msra.mxu0 %v1192
      %1259 = vmatprep.subr.bf16.mxu0 0
      %1260 = vmatpush1.bf16.msra.mxu0 %v1193
      %1261 = vmatprep.subr.bf16.mxu0 0
      %1262 = vmatpush1.bf16.msra.mxu0 %v1194
      %1263 = vmatprep.subr.bf16.mxu0 0
      %1264 = vmatpush1.bf16.msra.mxu0 %v1195
      %1265 = vmatprep.subr.bf16.mxu0 0
      %1266 = vmatpush1.bf16.msra.mxu0 %v1196
      %1267 = vmatprep.subr.bf16.mxu0 0
      %1268 = vmatpush1.bf16.msra.mxu0 %v1197
      %1269 = vmatprep.subr.bf16.mxu0 0
      %1270 = vmatpush1.bf16.msra.mxu0 %v1198
      %1271 = vmatprep.subr.bf16.mxu0 0
      %1272 = vmatpush1.bf16.msra.mxu0 %v1199
      %1273 = vmatprep.subr.bf16.mxu0 0
      %1274 = vmatpush1.bf16.msra.mxu0 %v1200
      %1275 = vmatprep.subr.bf16.mxu0 0
      %1276 = vmatpush1.bf16.msra.mxu0 %v1201
      %1277 = vmatprep.subr.bf16.mxu0 0
      %1278 = vmatpush1.bf16.msra.mxu0 %v1202
      %1279 = vmatprep.subr.bf16.mxu0 0
      %1280 = vmatpush1.bf16.msra.mxu0 %v1203
      %1281 = vmatprep.subr.bf16.mxu0 0
      %1282 = vmatpush1.bf16.msra.mxu0 %v1204
      %1283 = vmatprep.subr.bf16.mxu0 0
      %1284 = vmatpush1.bf16.msra.mxu0 %v1205
      %1285 = vmatprep.subr.bf16.mxu0 0
      %1286 = vmatpush1.bf16.msra.mxu0 %v1206
      %1287 = vmatprep.mubr.bf16.mxu0 %v507
      %1288 = vmatmul.mubr.bf16.gmra.mrb[0].mxu0 %v506
      %v1289 = vpop.f32.mrb[0].mxu0
      %v1290 = vadd.f32 %v1002, %v1289
      %v1291 = vpop.f32.mrb[0].mxu0
      %v1292 = vpop.f32.mrb[0].mxu0
      %v1293 = vadd.f32 %v1005, %v1292
      %v1294 = vpop.f32.mrb[0].mxu0
      %1295 = vmatprep.mubr.bf16.mxu0 %v511
      %1296 = vmatmul.mubr.bf16.gmra.mrb[0].mxu0 %v510
      %v1297 = vpop.f32.mrb[0].mxu0
      %v1298 = vadd.f32 %v1010, %v1297
      %v1299 = vpop.f32.mrb[0].mxu0
      %v1300 = vpop.f32.mrb[0].mxu0
      %v1301 = vadd.f32 %v1013, %v1300
      %v1302 = vpop.f32.mrb[0].mxu0
      %1303 = vmatprep.mubr.bf16.mxu0 %v515
      %1304 = vmatmul.mubr.bf16.gmra.mrb[0].mxu0 %v514
      %v1305 = vpop.f32.mrb[0].mxu0
      %v1306 = vadd.f32 %v1018, %v1305
      %v1307 = vpop.f32.mrb[0].mxu0
      %v1308 = vpop.f32.mrb[0].mxu0
      %v1309 = vadd.f32 %v1021, %v1308
      %v1310 = vpop.f32.mrb[0].mxu0
      %1311 = vmatprep.mubr.bf16.mxu0 %v519
      %1312 = vmatmul.mubr.bf16.gmra.mrb[0].mxu0 %v518
      %v1313 = vpop.f32.mrb[0].mxu0
      %v1314 = vadd.f32 %v1026, %v1313
      %v1315 = vpop.f32.mrb[0].mxu0
      %v1316 = vpop.f32.mrb[0].mxu0
      %v1317 = vadd.f32 %v1029, %v1316
      %v1318 = vpop.f32.mrb[0].mxu0
      %1319 = vmatprep.mubr.bf16.mxu0 %v1040
      %1320 = vmatmul.mubr.bf16.gmra.mrb[0].mxu0 %v1039
      %v1321 = vpop.f32.mrb[0].mxu0
      %v1322 = vadd.f32 %v1034, %v1321
      %v1323 = vpop.f32.mrb[0].mxu0
      %v1324 = vpop.f32.mrb[0].mxu0
      %v1325 = vpop.f32.mrb[0].mxu0
      %1326 = vdwg.mxu0
      %1327 = vmatprep.subr.bf16.mxu0 0
      %1328 = vmatpush1.bf16.msra.mxu0 %v1207
      %1329 = vmatprep.subr.bf16.mxu0 0
      %1330 = vmatpush1.bf16.msra.mxu0 %v1208
      %1331 = vmatprep.subr.bf16.mxu0 0
      %1332 = vmatpush1.bf16.msra.mxu0 %v1209
      %1333 = vmatprep.subr.bf16.mxu0 0
      %1334 = vmatpush1.bf16.msra.mxu0 %v1210
      %1335 = vmatprep.subr.bf16.mxu0 0
      %1336 = vmatpush1.bf16.msra.mxu0 %v1211
      %1337 = vmatprep.subr.bf16.mxu0 0
      %1338 = vmatpush1.bf16.msra.mxu0 %v1212
      %1339 = vmatprep.subr.bf16.mxu0 0
      %1340 = vmatpush1.bf16.msra.mxu0 %v1213
      %1341 = vmatprep.subr.bf16.mxu0 0
      %1342 = vmatpush1.bf16.msra.mxu0 %v1214
      %1343 = vmatprep.subr.bf16.mxu0 0
      %1344 = vmatpush1.bf16.msra.mxu0 %v1215
      %1345 = vmatprep.subr.bf16.mxu0 0
      %1346 = vmatpush1.bf16.msra.mxu0 %v1216
      %1347 = vmatprep.subr.bf16.mxu0 0
      %1348 = vmatpush1.bf16.msra.mxu0 %v1217
      %1349 = vmatprep.subr.bf16.mxu0 0
      %1350 = vmatpush1.bf16.msra.mxu0 %v1218
      %1351 = vmatprep.subr.bf16.mxu0 0
      %1352 = vmatpush1.bf16.msra.mxu0 %v1219
      %1353 = vmatprep.subr.bf16.mxu0 0
      %1354 = vmatpush1.bf16.msra.mxu0 %v1220
      %1355 = vmatprep.subr.bf16.mxu0 0
      %1356 = vmatpush1.bf16.msra.mxu0 %v1221
      %1357 = vmatprep.subr.bf16.mxu0 0
      %1358 = vmatpush1.bf16.msra.mxu0 %v1222
      %1359 = vmatprep.mubr.bf16.mxu0 %v509
      %1360 = vmatmul.mubr.bf16.gmra.mrb[0].mxu0 %v508
      %v1361 = vpop.f32.mrb[0].mxu0
      %v1362 = vadd.f32 %v1290, %v1361
      %v1363 = vpop.f32.mrb[0].mxu0
      %v1364 = vpop.f32.mrb[0].mxu0
      %v1365 = vadd.f32 %v1293, %v1364
      %v1366 = vpop.f32.mrb[0].mxu0
      %1367 = vmatprep.mubr.bf16.mxu0 %v513
      %1368 = vmatmul.mubr.bf16.gmra.mrb[0].mxu0 %v512
      %v1369 = vpop.f32.mrb[0].mxu0
      %v1370 = vadd.f32 %v1298, %v1369
      %v1371 = vpop.f32.mrb[0].mxu0
      %v1372 = vpop.f32.mrb[0].mxu0
      %v1373 = vadd.f32 %v1301, %v1372
      %v1374 = vpop.f32.mrb[0].mxu0
      %1375 = vmatprep.mubr.bf16.mxu0 %v517
      %1376 = vmatmul.mubr.bf16.gmra.mrb[0].mxu0 %v516
      %v1377 = vpop.f32.mrb[0].mxu0
      %v1378 = vadd.f32 %v1306, %v1377
      %v1379 = vpop.f32.mrb[0].mxu0
      %v1380 = vpop.f32.mrb[0].mxu0
      %v1381 = vadd.f32 %v1309, %v1380
      %v1382 = vpop.f32.mrb[0].mxu0
      %1383 = vmatprep.mubr.bf16.mxu0 %v521
      %1384 = vmatmul.mubr.bf16.gmra.mrb[0].mxu0 %v520
      %v1385 = vpop.f32.mrb[0].mxu0
      %v1386 = vadd.f32 %v1314, %v1385
      %v1387 = vpop.f32.mrb[0].mxu0
      %v1388 = vpop.f32.mrb[0].mxu0
      %v1389 = vadd.f32 %v1317, %v1388
      %v1390 = vpop.f32.mrb[0].mxu0
      %1391 = vmatprep.mubr.bf16.mxu0 %v1042
      %1392 = vmatmul.mubr.bf16.gmra.mrb[0].mxu0 %v1041
      %v1393 = vpop.f32.mrb[0].mxu0
      %v1394 = vadd.f32 %v1322, %v1393
      %v1395 = vpop.f32.mrb[0].mxu0
      %v1396 = vpop.f32.mrb[0].mxu0
      %v1397 = vpop.f32.mrb[0].mxu0
      %1398 = vdwg.mxu0
      %v1399 = vld [vmem:[%s284 + $0x10] sm:$0xff]
      %v1400 = vld [vmem:[%s284 + $0x18] sm:$0xff]
      %v1401 = vld [vmem:[%s284 + $0x20] sm:$0xff]
      %v1402 = vld [vmem:[%s284 + $0x28] sm:$0xff]
      %v1403 = vld [vmem:[%s284 + $0x30] sm:$0xff]
      %v1404 = vld [vmem:[%s284 + $0x38] sm:$0xff]
      %v1405 = vld [vmem:[%s284 + $0x40] sm:$0xff]
      %v1406 = vld [vmem:[%s284 + $0x48] sm:$0xff]
      %v1407 = vld [vmem:[%s284 + $0x50] sm:$0xff]
      %v1408 = vld [vmem:[%s284 + $0x58] sm:$0xff]
      %v1409 = vld [vmem:[%s284 + $0x60] sm:$0xff]
      %v1410 = vld [vmem:[%s284 + $0x68] sm:$0xff]
      %v1411 = vld [vmem:[%s284 + $0x70] sm:$0xff]
      %v1412 = vld [vmem:[%s284 + $0x78] sm:$0xff]
      %v1413 = vld [vmem:[%s284 + $0x80] sm:$0xff]
      %v1414 = vld [vmem:[%s284 + $0x88] sm:$0xff]
      %v1415 = vld [vmem:[%s284 + $0x90] sm:$0xff]
      %v1416 = vld [vmem:[%s284 + $0x98] sm:$0xff]
      %v1417 = vld [vmem:[%s284 + $0xa0] sm:$0x11]
      %v1418 = vld [vmem:[%s284 + $0xa8] sm:$0x11]
      %s1419 = scalar_lea.vmem %s3, 512
      %v1420 = vld [vmem:[%s1419] sm:$0xf]
      %v1421 = vld [vmem:[%s1419 + $0x4] sm:$0xf]
      %v1422 = vld [vmem:[%s1419 + $0x8] sm:$0xf]
      %v1423 = vld [vmem:[%s1419 + $0xc] sm:$0xf]
      %v1424 = vld [vmem:[%s1419 + $0x10] sm:$0xf]
      %v1425 = vld [vmem:[%s1419 + $0x14] sm:$0xf]
      %v1426 = vld [vmem:[%s1419 + $0x18] sm:$0xf]
      %v1427 = vld [vmem:[%s1419 + $0x1c] sm:$0xf]
      %v1428 = vld [vmem:[%s1419 + $0x20] sm:$0xf]
      %v1429 = vld [vmem:[%s1419 + $0x24] sm:$0xf]
      %v1430 = vld [vmem:[%s1419 + $0x28] sm:$0xf]
      %v1431 = vld [vmem:[%s1419 + $0x2c] sm:$0xf]
      %v1432 = vld [vmem:[%s1419 + $0x30] sm:$0xf]
      %v1433 = vld [vmem:[%s1419 + $0x34] sm:$0xf]
      %v1434 = vld [vmem:[%s1419 + $0x38] sm:$0xf]
      %v1435 = vld [vmem:[%s1419 + $0x3c] sm:$0xf]
      %v1436 = vld [vmem:[%s1419 + $0x40] sm:$0xf]
      %v1437 = vld [vmem:[%s1419 + $0x44] sm:$0xf]
      %v1438 = vld [vmem:[%s1419 + $0x48] sm:$0xf]
      %v1439 = vld [vmem:[%s1419 + $0x4c] sm:$0xf]
      %v1440 = vld [vmem:[%s1419 + $0x50] sm:$0xf]
      %v1441 = vld [vmem:[%s1419 + $0x54] sm:$0xf]
      %v1442 = vld [vmem:[%s1419 + $0x58] sm:$0xf]
      %v1443 = vld [vmem:[%s1419 + $0x5c] sm:$0xf]
      %v1444 = vld [vmem:[%s1419 + $0x60] sm:$0xf]
      %v1445 = vld [vmem:[%s1419 + $0x64] sm:$0xf]
      %v1446 = vld [vmem:[%s1419 + $0x68] sm:$0xf]
      %v1447 = vld [vmem:[%s1419 + $0x6c] sm:$0xf]
      %v1448 = vld [vmem:[%s1419 + $0x70] sm:$0xf]
      %v1449 = vld [vmem:[%s1419 + $0x74] sm:$0xf]
      %v1450 = vld [vmem:[%s1419 + $0x78] sm:$0xf]
      %v1451 = vld [vmem:[%s1419 + $0x7c] sm:$0xf]
      %v1452 = vld [vmem:[%s1419 + $0x80] sm:$0xf]
      %v1453 = vld [vmem:[%s1419 + $0x84] sm:$0xf]
      %v1454 = vld [vmem:[%s1419 + $0x88] sm:$0xf]
      %v1455 = vld [vmem:[%s1419 + $0x8c] sm:$0xf]
      %v1456 = vld [vmem:[%s1419 + $0x90] sm:$0xf]
      %v1457 = vld [vmem:[%s1419 + $0x94] sm:$0xf]
      %v1458 = vld [vmem:[%s1419 + $0x98] sm:$0xf]
      %v1459 = vld [vmem:[%s1419 + $0x9c] sm:$0xf]
      %v1460 = vld [vmem:[%s1419 + $0xa0] sm:$0xf]
      %v1461 = vld [vmem:[%s1419 + $0xa4] sm:$0xf]
      %v1462 = vld [vmem:[%s1419 + $0xa8] sm:$0xf]
      %v1463 = vld [vmem:[%s1419 + $0xac] sm:$0xf]
      %v1464 = vld [vmem:[%s1419 + $0xb0] sm:$0xf]
      %v1465 = vld [vmem:[%s1419 + $0xb4] sm:$0xf]
      %v1466 = vld [vmem:[%s1419 + $0xb8] sm:$0xf]
      %v1467 = vld [vmem:[%s1419 + $0xbc] sm:$0xf]
      %v1468 = vld [vmem:[%s1419 + $0xc0] sm:$0xf]
      %v1469 = vld [vmem:[%s1419 + $0xc4] sm:$0xf]
      %v1470 = vld [vmem:[%s1419 + $0xc8] sm:$0xf]
      %v1471 = vld [vmem:[%s1419 + $0xcc] sm:$0xf]
      %v1472 = vld [vmem:[%s1419 + $0xd0] sm:$0xf]
      %v1473 = vld [vmem:[%s1419 + $0xd4] sm:$0xf]
      %v1474 = vld [vmem:[%s1419 + $0xd8] sm:$0xf]
      %v1475 = vld [vmem:[%s1419 + $0xdc] sm:$0xf]
      %v1476 = vld [vmem:[%s1419 + $0xe0] sm:$0xf]
      %v1477 = vld [vmem:[%s1419 + $0xe4] sm:$0xf]
      %v1478 = vld [vmem:[%s1419 + $0xe8] sm:$0xf]
      %v1479 = vld [vmem:[%s1419 + $0xec] sm:$0xf]
      %v1480 = vld [vmem:[%s1419 + $0xf0] sm:$0xf]
      %v1481 = vld [vmem:[%s1419 + $0xf4] sm:$0xf]
      %v1482 = vld [vmem:[%s1419 + $0xf8] sm:$0xf]
      %v1483 = vld [vmem:[%s1419 + $0xfc] sm:$0xf]
      %v1504 = vunpack.c.l.b16 %v1399
      %v1505 = vunpack.c.h.b16 %v1399
      %v1506 = vunpack.c.l.b16 %v1400
      %v1507 = vunpack.c.h.b16 %v1400
      %v1508 = vunpack.c.l.b16 %v1401
      %v1509 = vunpack.c.h.b16 %v1401
      %v1510 = vunpack.c.l.b16 %v1402
      %v1511 = vunpack.c.h.b16 %v1402
      %v1512 = vunpack.c.l.b16 %v1403
      %v1513 = vunpack.c.h.b16 %v1403
      %v1514 = vunpack.c.l.b16 %v1404
      %v1515 = vunpack.c.h.b16 %v1404
      %v1516 = vunpack.c.l.b16 %v1405
      %v1517 = vunpack.c.h.b16 %v1405
      %v1518 = vunpack.c.l.b16 %v1406
      %v1519 = vunpack.c.h.b16 %v1406
      %v1520 = vunpack.c.l.b16 %v1407
      %v1521 = vunpack.c.h.b16 %v1407
      %v1522 = vunpack.c.l.b16 %v1408
      %v1523 = vunpack.c.h.b16 %v1408
      %v1524 = vunpack.c.l.b16 %v1409
      %v1525 = vunpack.c.h.b16 %v1409
      %v1526 = vunpack.c.l.b16 %v1410
      %v1527 = vunpack.c.h.b16 %v1410
      %v1528 = vunpack.c.l.b16 %v1411
      %v1529 = vunpack.c.h.b16 %v1411
      %v1530 = vunpack.c.l.b16 %v1412
      %v1531 = vunpack.c.h.b16 %v1412
      %v1532 = vunpack.c.l.b16 %v1413
      %v1533 = vunpack.c.h.b16 %v1413
      %v1534 = vunpack.c.l.b16 %v1414
      %v1535 = vunpack.c.h.b16 %v1414
      %v1536 = vunpack.c.l.b16 %v1415
      %v1537 = vunpack.c.h.b16 %v1415
      %v1538 = vunpack.c.l.b16 %v1416
      %v1539 = vunpack.c.h.b16 %v1416
      %v1540 = vunpack.c.l.b16 %v1417
      %v1541 = vunpack.c.h.b16 %v1417
      %v1542 = vunpack.c.l.b16 %v1418
      %v1543 = vunpack.c.h.b16 %v1418
      %v1544 = vpack.c.b16 %v1508, %v1504
      %v1545 = vpack.c.b16 %v1509, %v1505
      %v1546 = vpack.c.b16 %v1510, %v1506
      %v1547 = vpack.c.b16 %v1511, %v1507
      %v1548 = vpack.c.b16 %v1516, %v1512
      %v1549 = vpack.c.b16 %v1517, %v1513
      %v1550 = vpack.c.b16 %v1518, %v1514
      %v1551 = vpack.c.b16 %v1519, %v1515
      %v1552 = vpack.c.b16 %v1524, %v1520
      %v1553 = vpack.c.b16 %v1525, %v1521
      %v1554 = vpack.c.b16 %v1526, %v1522
      %v1555 = vpack.c.b16 %v1527, %v1523
      %v1556 = vpack.c.b16 %v1532, %v1528
      %v1557 = vpack.c.b16 %v1533, %v1529
      %v1558 = vpack.c.b16 %v1534, %v1530
      %v1559 = vpack.c.b16 %v1535, %v1531
      %v1560 = vpack.c.b16 %v1540, %v1536
      %v1561 = vpack.c.b16 %v1541, %v1537
      %v1562 = vpack.c.b16 %v1542, %v1538
      %v1563 = vpack.c.b16 %v1543, %v1539
      %v1565 = vshrl.u32 %v1544, 16
      %v1567 = vshll.u32 %v1544, 16
      %v1569 = vrot.slane %v1567, 1
      %v1570 = vor.u32 %v1565, %v1569
      %v1572 = vshll.u32 %v1548, 16
      %v1574 = vrot.slane %v1572, 1
      %v1575 = vsel %vm526, %v1570, %v1574
      %v1577 = vshrl.u32 %v1545, 16
      %v1579 = vshll.u32 %v1545, 16
      %v1581 = vrot.slane %v1579, 1
      %v1582 = vor.u32 %v1577, %v1581
      %v1584 = vshll.u32 %v1549, 16
      %v1586 = vrot.slane %v1584, 1
      %v1587 = vsel %vm526, %v1582, %v1586
      %v1589 = vshrl.u32 %v1546, 16
      %v1591 = vshll.u32 %v1546, 16
      %v1593 = vrot.slane %v1591, 1
      %v1594 = vor.u32 %v1589, %v1593
      %v1596 = vshll.u32 %v1550, 16
      %v1598 = vrot.slane %v1596, 1
      %v1599 = vsel %vm526, %v1594, %v1598
      %v1601 = vshrl.u32 %v1547, 16
      %v1603 = vshll.u32 %v1547, 16
      %v1605 = vrot.slane %v1603, 1
      %v1606 = vor.u32 %v1601, %v1605
      %v1608 = vshll.u32 %v1551, 16
      %v1610 = vrot.slane %v1608, 1
      %v1611 = vsel %vm526, %v1606, %v1610
      %v1612 = vshrl.u32 %v1548, 16
      %v1614 = vor.u32 %v1612, %v1574
      %v1616 = vshll.u32 %v1552, 16
      %v1618 = vrot.slane %v1616, 1
      %v1619 = vsel %vm526, %v1614, %v1618
      %v1620 = vshrl.u32 %v1549, 16
      %v1622 = vor.u32 %v1620, %v1586
      %v1624 = vshll.u32 %v1553, 16
      %v1626 = vrot.slane %v1624, 1
      %v1627 = vsel %vm526, %v1622, %v1626
      %v1628 = vshrl.u32 %v1550, 16
      %v1630 = vor.u32 %v1628, %v1598
      %v1632 = vshll.u32 %v1554, 16
      %v1634 = vrot.slane %v1632, 1
      %v1635 = vsel %vm526, %v1630, %v1634
      %v1636 = vshrl.u32 %v1551, 16
      %v1638 = vor.u32 %v1636, %v1610
      %v1640 = vshll.u32 %v1555, 16
      %v1642 = vrot.slane %v1640, 1
      %v1643 = vsel %vm526, %v1638, %v1642
      %v1644 = vshrl.u32 %v1552, 16
      %v1646 = vor.u32 %v1644, %v1618
      %v1648 = vshll.u32 %v1556, 16
      %v1650 = vrot.slane %v1648, 1
      %v1651 = vsel %vm526, %v1646, %v1650
      %v1652 = vshrl.u32 %v1553, 16
      %v1654 = vor.u32 %v1652, %v1626
      %v1656 = vshll.u32 %v1557, 16
      %v1658 = vrot.slane %v1656, 1
      %v1659 = vsel %vm526, %v1654, %v1658
      %v1660 = vshrl.u32 %v1554, 16
      %v1662 = vor.u32 %v1660, %v1634
      %v1664 = vshll.u32 %v1558, 16
      %v1666 = vrot.slane %v1664, 1
      %v1667 = vsel %vm526, %v1662, %v1666
      %v1668 = vshrl.u32 %v1555, 16
      %v1670 = vor.u32 %v1668, %v1642
      %v1672 = vshll.u32 %v1559, 16
      %v1674 = vrot.slane %v1672, 1
      %v1675 = vsel %vm526, %v1670, %v1674
      %v1676 = vshrl.u32 %v1556, 16
      %v1678 = vor.u32 %v1676, %v1650
      %v1680 = vshll.u32 %v1560, 16
      %v1682 = vrot.slane %v1680, 1
      %v1683 = vsel %vm526, %v1678, %v1682
      %v1684 = vshrl.u32 %v1557, 16
      %v1686 = vor.u32 %v1684, %v1658
      %v1688 = vshll.u32 %v1561, 16
      %v1690 = vrot.slane %v1688, 1
      %v1691 = vsel %vm526, %v1686, %v1690
      %v1692 = vshrl.u32 %v1558, 16
      %v1694 = vor.u32 %v1692, %v1666
      %v1696 = vshll.u32 %v1562, 16
      %v1698 = vrot.slane %v1696, 1
      %v1699 = vsel %vm526, %v1694, %v1698
      %v1700 = vshrl.u32 %v1559, 16
      %v1702 = vor.u32 %v1700, %v1674
      %v1704 = vshll.u32 %v1563, 16
      %v1706 = vrot.slane %v1704, 1
      %v1707 = vsel %vm526, %v1702, %v1706
      %v1708 = vshrl.u32 %v1560, 16
      %v1710 = vor.u32 %v1708, %v1682
      %v1711 = vshrl.u32 %v1561, 16
      %v1713 = vor.u32 %v1711, %v1690
      %v1714 = vshrl.u32 %v1562, 16
      %v1716 = vor.u32 %v1714, %v1698
      %v1717 = vshrl.u32 %v1563, 16
      %v1719 = vor.u32 %v1717, %v1706
      %v1804 = vunpack.c.l.b16 %v1420
      %v1805 = vunpack.c.l.b16 %v1421
      %v1806 = vunpack.c.l.b16 %v1422
      %v1807 = vunpack.c.l.b16 %v1423
      %v1808 = vunpack.c.l.b16 %v1424
      %v1809 = vunpack.c.l.b16 %v1425
      %v1810 = vunpack.c.l.b16 %v1426
      %v1811 = vunpack.c.l.b16 %v1427
      %v1812 = vunpack.c.l.b16 %v1428
      %v1813 = vunpack.c.l.b16 %v1429
      %v1814 = vunpack.c.l.b16 %v1430
      %v1815 = vunpack.c.l.b16 %v1431
      %v1816 = vunpack.c.l.b16 %v1432
      %v1817 = vunpack.c.l.b16 %v1433
      %v1818 = vunpack.c.l.b16 %v1434
      %v1819 = vunpack.c.l.b16 %v1435
      %v1820 = vunpack.c.l.b16 %v1436
      %v1821 = vunpack.c.l.b16 %v1437
      %v1822 = vunpack.c.l.b16 %v1438
      %v1823 = vunpack.c.l.b16 %v1439
      %v1824 = vunpack.c.l.b16 %v1440
      %v1825 = vunpack.c.l.b16 %v1441
      %v1826 = vunpack.c.l.b16 %v1442
      %v1827 = vunpack.c.l.b16 %v1443
      %v1828 = vunpack.c.l.b16 %v1444
      %v1829 = vunpack.c.l.b16 %v1445
      %v1830 = vunpack.c.l.b16 %v1446
      %v1831 = vunpack.c.l.b16 %v1447
      %v1832 = vunpack.c.l.b16 %v1448
      %v1833 = vunpack.c.l.b16 %v1449
      %v1834 = vunpack.c.l.b16 %v1450
      %v1835 = vunpack.c.l.b16 %v1451
      %v1836 = vunpack.c.l.b16 %v1452
      %v1837 = vunpack.c.l.b16 %v1453
      %v1838 = vunpack.c.l.b16 %v1454
      %v1839 = vunpack.c.l.b16 %v1455
      %v1840 = vunpack.c.l.b16 %v1456
      %v1841 = vunpack.c.l.b16 %v1457
      %v1842 = vunpack.c.l.b16 %v1458
      %v1843 = vunpack.c.l.b16 %v1459
      %v1844 = vunpack.c.l.b16 %v1460
      %v1845 = vunpack.c.l.b16 %v1461
      %v1846 = vunpack.c.l.b16 %v1462
      %v1847 = vunpack.c.l.b16 %v1463
      %v1848 = vunpack.c.l.b16 %v1464
      %v1849 = vunpack.c.l.b16 %v1465
      %v1850 = vunpack.c.l.b16 %v1466
      %v1851 = vunpack.c.l.b16 %v1467
      %v1852 = vunpack.c.l.b16 %v1468
      %v1853 = vunpack.c.l.b16 %v1469
      %v1854 = vunpack.c.l.b16 %v1470
      %v1855 = vunpack.c.l.b16 %v1471
      %v1856 = vunpack.c.l.b16 %v1472
      %v1857 = vunpack.c.l.b16 %v1473
      %v1858 = vunpack.c.l.b16 %v1474
      %v1859 = vunpack.c.l.b16 %v1475
      %v1860 = vunpack.c.l.b16 %v1476
      %v1861 = vunpack.c.l.b16 %v1477
      %v1862 = vunpack.c.l.b16 %v1478
      %v1863 = vunpack.c.l.b16 %v1479
      %v1864 = vunpack.c.l.b16 %v1480
      %v1865 = vunpack.c.l.b16 %v1481
      %v1866 = vunpack.c.l.b16 %v1482
      %v1867 = vunpack.c.l.b16 %v1483
      %v1868 = vpack.c.b16 %v1805, %v1804
      %v1869 = vpack.c.b16 %v1807, %v1806
      %v1870 = vpack.c.b16 %v1809, %v1808
      %v1871 = vpack.c.b16 %v1811, %v1810
      %v1872 = vpack.c.b16 %v1813, %v1812
      %v1873 = vpack.c.b16 %v1815, %v1814
      %v1874 = vpack.c.b16 %v1817, %v1816
      %v1875 = vpack.c.b16 %v1819, %v1818
      %v1876 = vpack.c.b16 %v1821, %v1820
      %v1877 = vpack.c.b16 %v1823, %v1822
      %v1878 = vpack.c.b16 %v1825, %v1824
      %v1879 = vpack.c.b16 %v1827, %v1826
      %v1880 = vpack.c.b16 %v1829, %v1828
      %v1881 = vpack.c.b16 %v1831, %v1830
      %v1882 = vpack.c.b16 %v1833, %v1832
      %v1883 = vpack.c.b16 %v1835, %v1834
      %v1884 = vpack.c.b16 %v1837, %v1836
      %v1885 = vpack.c.b16 %v1839, %v1838
      %v1886 = vpack.c.b16 %v1841, %v1840
      %v1887 = vpack.c.b16 %v1843, %v1842
      %v1888 = vpack.c.b16 %v1845, %v1844
      %v1889 = vpack.c.b16 %v1847, %v1846
      %v1890 = vpack.c.b16 %v1849, %v1848
      %v1891 = vpack.c.b16 %v1851, %v1850
      %v1892 = vpack.c.b16 %v1853, %v1852
      %v1893 = vpack.c.b16 %v1855, %v1854
      %v1894 = vpack.c.b16 %v1857, %v1856
      %v1895 = vpack.c.b16 %v1859, %v1858
      %v1896 = vpack.c.b16 %v1861, %v1860
      %v1897 = vpack.c.b16 %v1863, %v1862
      %v1898 = vpack.c.b16 %v1865, %v1864
      %v1899 = vpack.c.b16 %v1867, %v1866
      %1932 = vmatprep.subr.bf16.mxu0 0
      %1933 = vmatpush1.bf16.msra.mxu0 %v1868
      %1934 = vmatprep.subr.bf16.mxu0 0
      %1935 = vmatpush1.bf16.msra.mxu0 %v1869
      %1936 = vmatprep.subr.bf16.mxu0 0
      %1937 = vmatpush1.bf16.msra.mxu0 %v1870
      %1938 = vmatprep.subr.bf16.mxu0 0
      %1939 = vmatpush1.bf16.msra.mxu0 %v1871
      %1940 = vmatprep.subr.bf16.mxu0 0
      %1941 = vmatpush1.bf16.msra.mxu0 %v1872
      %1942 = vmatprep.subr.bf16.mxu0 0
      %1943 = vmatpush1.bf16.msra.mxu0 %v1873
      %1944 = vmatprep.subr.bf16.mxu0 0
      %1945 = vmatpush1.bf16.msra.mxu0 %v1874
      %1946 = vmatprep.subr.bf16.mxu0 0
      %1947 = vmatpush1.bf16.msra.mxu0 %v1875
      %1948 = vmatprep.subr.bf16.mxu0 0
      %1949 = vmatpush1.bf16.msra.mxu0 %v1876
      %1950 = vmatprep.subr.bf16.mxu0 0
      %1951 = vmatpush1.bf16.msra.mxu0 %v1877
      %1952 = vmatprep.subr.bf16.mxu0 0
      %1953 = vmatpush1.bf16.msra.mxu0 %v1878
      %1954 = vmatprep.subr.bf16.mxu0 0
      %1955 = vmatpush1.bf16.msra.mxu0 %v1879
      %1956 = vmatprep.subr.bf16.mxu0 0
      %1957 = vmatpush1.bf16.msra.mxu0 %v1880
      %1958 = vmatprep.subr.bf16.mxu0 0
      %1959 = vmatpush1.bf16.msra.mxu0 %v1881
      %1960 = vmatprep.subr.bf16.mxu0 0
      %1961 = vmatpush1.bf16.msra.mxu0 %v1882
      %1962 = vmatprep.subr.bf16.mxu0 0
      %1963 = vmatpush1.bf16.msra.mxu0 %v1883
      %1964 = vmatprep.mubr.bf16.mxu0 %v1587
      %1965 = vmatmul.mubr.bf16.gmra.mrb[0].mxu0 %v1575
      %v1966 = vpop.f32.mrb[0].mxu0
      %v1967 = vadd.f32 0.0, %v1966
      %v1968 = vpop.f32.mrb[0].mxu0
      %v1969 = vpop.f32.mrb[0].mxu0
      %v1970 = vadd.f32 0.0, %v1969
      %v1971 = vpop.f32.mrb[0].mxu0
      %1972 = vmatprep.mubr.bf16.mxu0 %v1627
      %1973 = vmatmul.mubr.bf16.gmra.mrb[0].mxu0 %v1619
      %v1974 = vpop.f32.mrb[0].mxu0
      %v1975 = vadd.f32 0.0, %v1974
      %v1976 = vpop.f32.mrb[0].mxu0
      %v1977 = vpop.f32.mrb[0].mxu0
      %v1978 = vadd.f32 0.0, %v1977
      %v1979 = vpop.f32.mrb[0].mxu0
      %1980 = vmatprep.mubr.bf16.mxu0 %v1659
      %1981 = vmatmul.mubr.bf16.gmra.mrb[0].mxu0 %v1651
      %v1982 = vpop.f32.mrb[0].mxu0
      %v1983 = vadd.f32 0.0, %v1982
      %v1984 = vpop.f32.mrb[0].mxu0
      %v1985 = vpop.f32.mrb[0].mxu0
      %v1986 = vadd.f32 0.0, %v1985
      %v1987 = vpop.f32.mrb[0].mxu0
      %1988 = vmatprep.mubr.bf16.mxu0 %v1691
      %1989 = vmatmul.mubr.bf16.gmra.mrb[0].mxu0 %v1683
      %v1990 = vpop.f32.mrb[0].mxu0
      %v1991 = vadd.f32 0.0, %v1990
      %v1992 = vpop.f32.mrb[0].mxu0
      %v1993 = vpop.f32.mrb[0].mxu0
      %v1994 = vadd.f32 0.0, %v1993
      %v1995 = vpop.f32.mrb[0].mxu0
      %1996 = vmatprep.mubr.bf16.mxu0 %v1713
      %1997 = vmatmul.mubr.bf16.gmra.mrb[0].mxu0 %v1710
      %v1998 = vpop.f32.mrb[0].mxu0
      %v1999 = vadd.f32 0.0, %v1998
      %v2000 = vpop.f32.mrb[0].mxu0
      %v2001 = vpop.f32.mrb[0].mxu0
      %v2002 = vpop.f32.mrb[0].mxu0
      %2003 = vdwg.mxu0
      %2004 = vmatprep.subr.bf16.mxu0 0
      %2005 = vmatpush1.bf16.msra.mxu0 %v1884
      %2006 = vmatprep.subr.bf16.mxu0 0
      %2007 = vmatpush1.bf16.msra.mxu0 %v1885
      %2008 = vmatprep.subr.bf16.mxu0 0
      %2009 = vmatpush1.bf16.msra.mxu0 %v1886
      %2010 = vmatprep.subr.bf16.mxu0 0
      %2011 = vmatpush1.bf16.msra.mxu0 %v1887
      %2012 = vmatprep.subr.bf16.mxu0 0
      %2013 = vmatpush1.bf16.msra.mxu0 %v1888
      %2014 = vmatprep.subr.bf16.mxu0 0
      %2015 = vmatpush1.bf16.msra.mxu0 %v1889
      %2016 = vmatprep.subr.bf16.mxu0 0
      %2017 = vmatpush1.bf16.msra.mxu0 %v1890
      %2018 = vmatprep.subr.bf16.mxu0 0
      %2019 = vmatpush1.bf16.msra.mxu0 %v1891
      %2020 = vmatprep.subr.bf16.mxu0 0
      %2021 = vmatpush1.bf16.msra.mxu0 %v1892
      %2022 = vmatprep.subr.bf16.mxu0 0
      %2023 = vmatpush1.bf16.msra.mxu0 %v1893
      %2024 = vmatprep.subr.bf16.mxu0 0
      %2025 = vmatpush1.bf16.msra.mxu0 %v1894
      %2026 = vmatprep.subr.bf16.mxu0 0
      %2027 = vmatpush1.bf16.msra.mxu0 %v1895
      %2028 = vmatprep.subr.bf16.mxu0 0
      %2029 = vmatpush1.bf16.msra.mxu0 %v1896
      %2030 = vmatprep.subr.bf16.mxu0 0
      %2031 = vmatpush1.bf16.msra.mxu0 %v1897
      %2032 = vmatprep.subr.bf16.mxu0 0
      %2033 = vmatpush1.bf16.msra.mxu0 %v1898
      %2034 = vmatprep.subr.bf16.mxu0 0
      %2035 = vmatpush1.bf16.msra.mxu0 %v1899
      %2036 = vmatprep.mubr.bf16.mxu0 %v1611
      %2037 = vmatmul.mubr.bf16.gmra.mrb[0].mxu0 %v1599
      %v2038 = vpop.f32.mrb[0].mxu0
      %v2039 = vadd.f32 %v1967, %v2038
      %v2040 = vpop.f32.mrb[0].mxu0
      %v2041 = vpop.f32.mrb[0].mxu0
      %v2042 = vadd.f32 %v1970, %v2041
      %v2043 = vpop.f32.mrb[0].mxu0
      %2044 = vmatprep.mubr.bf16.mxu0 %v1643
      %2045 = vmatmul.mubr.bf16.gmra.mrb[0].mxu0 %v1635
      %v2046 = vpop.f32.mrb[0].mxu0
      %v2047 = vadd.f32 %v1975, %v2046
      %v2048 = vpop.f32.mrb[0].mxu0
      %v2049 = vpop.f32.mrb[0].mxu0
      %v2050 = vadd.f32 %v1978, %v2049
      %v2051 = vpop.f32.mrb[0].mxu0
      %2052 = vmatprep.mubr.bf16.mxu0 %v1675
      %2053 = vmatmul.mubr.bf16.gmra.mrb[0].mxu0 %v1667
      %v2054 = vpop.f32.mrb[0].mxu0
      %v2055 = vadd.f32 %v1983, %v2054
      %v2056 = vpop.f32.mrb[0].mxu0
      %v2057 = vpop.f32.mrb[0].mxu0
      %v2058 = vadd.f32 %v1986, %v2057
      %v2059 = vpop.f32.mrb[0].mxu0
      %2060 = vmatprep.mubr.bf16.mxu0 %v1707
      %2061 = vmatmul.mubr.bf16.gmra.mrb[0].mxu0 %v1699
      %v2062 = vpop.f32.mrb[0].mxu0
      %v2063 = vadd.f32 %v1991, %v2062
      %v2064 = vpop.f32.mrb[0].mxu0
      %v2065 = vpop.f32.mrb[0].mxu0
      %v2066 = vadd.f32 %v1994, %v2065
      %v2067 = vpop.f32.mrb[0].mxu0
      %2068 = vmatprep.mubr.bf16.mxu0 %v1719
      %2069 = vmatmul.mubr.bf16.gmra.mrb[0].mxu0 %v1716
      %v2070 = vpop.f32.mrb[0].mxu0
      %v2071 = vadd.f32 %v1999, %v2070
      %v2072 = vpop.f32.mrb[0].mxu0
      %v2073 = vpop.f32.mrb[0].mxu0
      %v2074 = vpop.f32.mrb[0].mxu0
      %2075 = vdwg.mxu0
      %v2076 = vadd.f32 %v1362, %v2039
      %v2077 = vadd.f32 %v1365, %v2042
      %v2078 = vadd.f32 %v1370, %v2047
      %v2079 = vadd.f32 %v1373, %v2050
      %v2080 = vadd.f32 %v1378, %v2055
      %v2081 = vadd.f32 %v1381, %v2058
      %v2082 = vadd.f32 %v1386, %v2063
      %v2083 = vadd.f32 %v1389, %v2066
      %v2084 = vadd.f32 %v1394, %v2071
      %v2085 = vld [vmem:[%s284 + $0x10] sm:$0xee]
      %v2086 = vld [vmem:[%s284 + $0x18] sm:$0xee]
      %s2087 = scalar_lea.vmem %s3, 768
      %v2088 = vld [vmem:[%s2087] sm:$0xf]
      %v2089 = vld [vmem:[%s2087 + $0x4] sm:$0xf]
      %v2090 = vld [vmem:[%s2087 + $0x8] sm:$0xf]
      %v2091 = vld [vmem:[%s2087 + $0xc] sm:$0xf]
      %v2092 = vld [vmem:[%s2087 + $0x10] sm:$0xf]
      %v2093 = vld [vmem:[%s2087 + $0x14] sm:$0xf]
      %v2094 = vld [vmem:[%s2087 + $0x18] sm:$0xf]
      %v2095 = vld [vmem:[%s2087 + $0x1c] sm:$0xf]
      %v2096 = vld [vmem:[%s2087 + $0x20] sm:$0xf]
      %v2097 = vld [vmem:[%s2087 + $0x24] sm:$0xf]
      %v2098 = vld [vmem:[%s2087 + $0x28] sm:$0xf]
      %v2099 = vld [vmem:[%s2087 + $0x2c] sm:$0xf]
      %v2100 = vld [vmem:[%s2087 + $0x30] sm:$0xf]
      %v2101 = vld [vmem:[%s2087 + $0x34] sm:$0xf]
      %v2102 = vld [vmem:[%s2087 + $0x38] sm:$0xf]
      %v2103 = vld [vmem:[%s2087 + $0x3c] sm:$0xf]
      %v2104 = vld [vmem:[%s2087 + $0x40] sm:$0xf]
      %v2105 = vld [vmem:[%s2087 + $0x44] sm:$0xf]
      %v2106 = vld [vmem:[%s2087 + $0x48] sm:$0xf]
      %v2107 = vld [vmem:[%s2087 + $0x4c] sm:$0xf]
      %v2108 = vld [vmem:[%s2087 + $0x50] sm:$0xf]
      %v2109 = vld [vmem:[%s2087 + $0x54] sm:$0xf]
      %v2110 = vld [vmem:[%s2087 + $0x58] sm:$0xf]
      %v2111 = vld [vmem:[%s2087 + $0x5c] sm:$0xf]
      %v2112 = vld [vmem:[%s2087 + $0x60] sm:$0xf]
      %v2113 = vld [vmem:[%s2087 + $0x64] sm:$0xf]
      %v2114 = vld [vmem:[%s2087 + $0x68] sm:$0xf]
      %v2115 = vld [vmem:[%s2087 + $0x6c] sm:$0xf]
      %v2116 = vld [vmem:[%s2087 + $0x70] sm:$0xf]
      %v2117 = vld [vmem:[%s2087 + $0x74] sm:$0xf]
      %v2118 = vld [vmem:[%s2087 + $0x78] sm:$0xf]
      %v2119 = vld [vmem:[%s2087 + $0x7c] sm:$0xf]
      %v2120 = vld [vmem:[%s2087 + $0x80] sm:$0xf]
      %v2121 = vld [vmem:[%s2087 + $0x84] sm:$0xf]
      %v2122 = vld [vmem:[%s2087 + $0x88] sm:$0xf]
      %v2123 = vld [vmem:[%s2087 + $0x8c] sm:$0xf]
      %v2124 = vld [vmem:[%s2087 + $0x90] sm:$0xf]
      %v2125 = vld [vmem:[%s2087 + $0x94] sm:$0xf]
      %v2126 = vld [vmem:[%s2087 + $0x98] sm:$0xf]
      %v2127 = vld [vmem:[%s2087 + $0x9c] sm:$0xf]
      %v2128 = vld [vmem:[%s2087 + $0xa0] sm:$0xf]
      %v2129 = vld [vmem:[%s2087 + $0xa4] sm:$0xf]
      %v2130 = vld [vmem:[%s2087 + $0xa8] sm:$0xf]
      %v2131 = vld [vmem:[%s2087 + $0xac] sm:$0xf]
      %v2132 = vld [vmem:[%s2087 + $0xb0] sm:$0xf]
      %v2133 = vld [vmem:[%s2087 + $0xb4] sm:$0xf]
      %v2134 = vld [vmem:[%s2087 + $0xb8] sm:$0xf]
      %v2135 = vld [vmem:[%s2087 + $0xbc] sm:$0xf]
      %v2136 = vld [vmem:[%s2087 + $0xc0] sm:$0xf]
      %v2137 = vld [vmem:[%s2087 + $0xc4] sm:$0xf]
      %v2138 = vld [vmem:[%s2087 + $0xc8] sm:$0xf]
      %v2139 = vld [vmem:[%s2087 + $0xcc] sm:$0xf]
      %v2140 = vld [vmem:[%s2087 + $0xd0] sm:$0xf]
      %v2141 = vld [vmem:[%s2087 + $0xd4] sm:$0xf]
      %v2142 = vld [vmem:[%s2087 + $0xd8] sm:$0xf]
      %v2143 = vld [vmem:[%s2087 + $0xdc] sm:$0xf]
      %v2144 = vld [vmem:[%s2087 + $0xe0] sm:$0xf]
      %v2145 = vld [vmem:[%s2087 + $0xe4] sm:$0xf]
      %v2146 = vld [vmem:[%s2087 + $0xe8] sm:$0xf]
      %v2147 = vld [vmem:[%s2087 + $0xec] sm:$0xf]
      %v2148 = vld [vmem:[%s2087 + $0xf0] sm:$0xf]
      %v2149 = vld [vmem:[%s2087 + $0xf4] sm:$0xf]
      %v2150 = vld [vmem:[%s2087 + $0xf8] sm:$0xf]
      %v2151 = vld [vmem:[%s2087 + $0xfc] sm:$0xf]
      %v2154 = vunpack.c.l.b16 %v2085
      %v2155 = vunpack.c.h.b16 %v2085
      %v2156 = vunpack.c.l.b16 %v2086
      %v2157 = vunpack.c.h.b16 %v2086
      %v2158 = vpack.c.b16 %v1508, %v2154
      %v2159 = vpack.c.b16 %v1509, %v2155
      %v2160 = vpack.c.b16 %v1510, %v2156
      %v2161 = vpack.c.b16 %v1511, %v2157
      %vm2162 = vcmask 1046528
      %v2163 = vrot.slane %v2158, 1
      %v2164 = vrot.slane %v1548, 1
      %v2165 = vsel %vm2162, %v2163, %v2164
      %v2166 = vrot.slane %v2159, 1
      %v2167 = vrot.slane %v1549, 1
      %v2168 = vsel %vm2162, %v2166, %v2167
      %v2169 = vrot.slane %v2160, 1
      %v2170 = vrot.slane %v1550, 1
      %v2171 = vsel %vm2162, %v2169, %v2170
      %v2172 = vrot.slane %v2161, 1
      %v2173 = vrot.slane %v1551, 1
      %v2174 = vsel %vm2162, %v2172, %v2173
      %v2175 = vrot.slane %v1552, 1
      %v2176 = vsel %vm2162, %v2164, %v2175
      %v2177 = vrot.slane %v1553, 1
      %v2178 = vsel %vm2162, %v2167, %v2177
      %v2179 = vrot.slane %v1554, 1
      %v2180 = vsel %vm2162, %v2170, %v2179
      %v2181 = vrot.slane %v1555, 1
      %v2182 = vsel %vm2162, %v2173, %v2181
      %v2183 = vrot.slane %v1556, 1
      %v2184 = vsel %vm2162, %v2175, %v2183
      %v2185 = vrot.slane %v1557, 1
      %v2186 = vsel %vm2162, %v2177, %v2185
      %v2187 = vrot.slane %v1558, 1
      %v2188 = vsel %vm2162, %v2179, %v2187
      %v2189 = vrot.slane %v1559, 1
      %v2190 = vsel %vm2162, %v2181, %v2189
      %v2191 = vrot.slane %v1560, 1
      %v2192 = vsel %vm2162, %v2183, %v2191
      %v2193 = vrot.slane %v1561, 1
      %v2194 = vsel %vm2162, %v2185, %v2193
      %v2195 = vrot.slane %v1562, 1
      %v2196 = vsel %vm2162, %v2187, %v2195
      %v2197 = vrot.slane %v1563, 1
      %v2198 = vsel %vm2162, %v2189, %v2197
      %v2283 = vunpack.c.l.b16 %v2088
      %v2284 = vunpack.c.l.b16 %v2089
      %v2285 = vunpack.c.l.b16 %v2090
      %v2286 = vunpack.c.l.b16 %v2091
      %v2287 = vunpack.c.l.b16 %v2092
      %v2288 = vunpack.c.l.b16 %v2093
      %v2289 = vunpack.c.l.b16 %v2094
      %v2290 = vunpack.c.l.b16 %v2095
      %v2291 = vunpack.c.l.b16 %v2096
      %v2292 = vunpack.c.l.b16 %v2097
      %v2293 = vunpack.c.l.b16 %v2098
      %v2294 = vunpack.c.l.b16 %v2099
      %v2295 = vunpack.c.l.b16 %v2100
      %v2296 = vunpack.c.l.b16 %v2101
      %v2297 = vunpack.c.l.b16 %v2102
      %v2298 = vunpack.c.l.b16 %v2103
      %v2299 = vunpack.c.l.b16 %v2104
      %v2300 = vunpack.c.l.b16 %v2105
      %v2301 = vunpack.c.l.b16 %v2106
      %v2302 = vunpack.c.l.b16 %v2107
      %v2303 = vunpack.c.l.b16 %v2108
      %v2304 = vunpack.c.l.b16 %v2109
      %v2305 = vunpack.c.l.b16 %v2110
      %v2306 = vunpack.c.l.b16 %v2111
      %v2307 = vunpack.c.l.b16 %v2112
      %v2308 = vunpack.c.l.b16 %v2113
      %v2309 = vunpack.c.l.b16 %v2114
      %v2310 = vunpack.c.l.b16 %v2115
      %v2311 = vunpack.c.l.b16 %v2116
      %v2312 = vunpack.c.l.b16 %v2117
      %v2313 = vunpack.c.l.b16 %v2118
      %v2314 = vunpack.c.l.b16 %v2119
      %v2315 = vunpack.c.l.b16 %v2120
      %v2316 = vunpack.c.l.b16 %v2121
      %v2317 = vunpack.c.l.b16 %v2122
      %v2318 = vunpack.c.l.b16 %v2123
      %v2319 = vunpack.c.l.b16 %v2124
      %v2320 = vunpack.c.l.b16 %v2125
      %v2321 = vunpack.c.l.b16 %v2126
      %v2322 = vunpack.c.l.b16 %v2127
      %v2323 = vunpack.c.l.b16 %v2128
      %v2324 = vunpack.c.l.b16 %v2129
      %v2325 = vunpack.c.l.b16 %v2130
      %v2326 = vunpack.c.l.b16 %v2131
      %v2327 = vunpack.c.l.b16 %v2132
      %v2328 = vunpack.c.l.b16 %v2133
      %v2329 = vunpack.c.l.b16 %v2134
      %v2330 = vunpack.c.l.b16 %v2135
      %v2331 = vunpack.c.l.b16 %v2136
      %v2332 = vunpack.c.l.b16 %v2137
      %v2333 = vunpack.c.l.b16 %v2138
      %v2334 = vunpack.c.l.b16 %v2139
      %v2335 = vunpack.c.l.b16 %v2140
      %v2336 = vunpack.c.l.b16 %v2141
      %v2337 = vunpack.c.l.b16 %v2142
      %v2338 = vunpack.c.l.b16 %v2143
      %v2339 = vunpack.c.l.b16 %v2144
      %v2340 = vunpack.c.l.b16 %v2145
      %v2341 = vunpack.c.l.b16 %v2146
      %v2342 = vunpack.c.l.b16 %v2147
      %v2343 = vunpack.c.l.b16 %v2148
      %v2344 = vunpack.c.l.b16 %v2149
      %v2345 = vunpack.c.l.b16 %v2150
      %v2346 = vunpack.c.l.b16 %v2151
      %v2347 = vpack.c.b16 %v2284, %v2283
      %v2348 = vpack.c.b16 %v2286, %v2285
      %v2349 = vpack.c.b16 %v2288, %v2287
      %v2350 = vpack.c.b16 %v2290, %v2289
      %v2351 = vpack.c.b16 %v2292, %v2291
      %v2352 = vpack.c.b16 %v2294, %v2293
      %v2353 = vpack.c.b16 %v2296, %v2295
      %v2354 = vpack.c.b16 %v2298, %v2297
      %v2355 = vpack.c.b16 %v2300, %v2299
      %v2356 = vpack.c.b16 %v2302, %v2301
      %v2357 = vpack.c.b16 %v2304, %v2303
      %v2358 = vpack.c.b16 %v2306, %v2305
      %v2359 = vpack.c.b16 %v2308, %v2307
      %v2360 = vpack.c.b16 %v2310, %v2309
      %v2361 = vpack.c.b16 %v2312, %v2311
      %v2362 = vpack.c.b16 %v2314, %v2313
      %v2363 = vpack.c.b16 %v2316, %v2315
      %v2364 = vpack.c.b16 %v2318, %v2317
      %v2365 = vpack.c.b16 %v2320, %v2319
      %v2366 = vpack.c.b16 %v2322, %v2321
      %v2367 = vpack.c.b16 %v2324, %v2323
      %v2368 = vpack.c.b16 %v2326, %v2325
      %v2369 = vpack.c.b16 %v2328, %v2327
      %v2370 = vpack.c.b16 %v2330, %v2329
      %v2371 = vpack.c.b16 %v2332, %v2331
      %v2372 = vpack.c.b16 %v2334, %v2333
      %v2373 = vpack.c.b16 %v2336, %v2335
      %v2374 = vpack.c.b16 %v2338, %v2337
      %v2375 = vpack.c.b16 %v2340, %v2339
      %v2376 = vpack.c.b16 %v2342, %v2341
      %v2377 = vpack.c.b16 %v2344, %v2343
      %v2378 = vpack.c.b16 %v2346, %v2345
      %2411 = vmatprep.subr.bf16.mxu0 0
      %2412 = vmatpush1.bf16.msra.mxu0 %v2347
      %2413 = vmatprep.subr.bf16.mxu0 0
      %2414 = vmatpush1.bf16.msra.mxu0 %v2348
      %2415 = vmatprep.subr.bf16.mxu0 0
      %2416 = vmatpush1.bf16.msra.mxu0 %v2349
      %2417 = vmatprep.subr.bf16.mxu0 0
      %2418 = vmatpush1.bf16.msra.mxu0 %v2350
      %2419 = vmatprep.subr.bf16.mxu0 0
      %2420 = vmatpush1.bf16.msra.mxu0 %v2351
      %2421 = vmatprep.subr.bf16.mxu0 0
      %2422 = vmatpush1.bf16.msra.mxu0 %v2352
      %2423 = vmatprep.subr.bf16.mxu0 0
      %2424 = vmatpush1.bf16.msra.mxu0 %v2353
      %2425 = vmatprep.subr.bf16.mxu0 0
      %2426 = vmatpush1.bf16.msra.mxu0 %v2354
      %2427 = vmatprep.subr.bf16.mxu0 0
      %2428 = vmatpush1.bf16.msra.mxu0 %v2355
      %2429 = vmatprep.subr.bf16.mxu0 0
      %2430 = vmatpush1.bf16.msra.mxu0 %v2356
      %2431 = vmatprep.subr.bf16.mxu0 0
      %2432 = vmatpush1.bf16.msra.mxu0 %v2357
      %2433 = vmatprep.subr.bf16.mxu0 0
      %2434 = vmatpush1.bf16.msra.mxu0 %v2358
      %2435 = vmatprep.subr.bf16.mxu0 0
      %2436 = vmatpush1.bf16.msra.mxu0 %v2359
      %2437 = vmatprep.subr.bf16.mxu0 0
      %2438 = vmatpush1.bf16.msra.mxu0 %v2360
      %2439 = vmatprep.subr.bf16.mxu0 0
      %2440 = vmatpush1.bf16.msra.mxu0 %v2361
      %2441 = vmatprep.subr.bf16.mxu0 0
      %2442 = vmatpush1.bf16.msra.mxu0 %v2362
      %2443 = vmatprep.mubr.bf16.mxu0 %v2168
      %2444 = vmatmul.mubr.bf16.gmra.mrb[0].mxu0 %v2165
      %v2445 = vpop.f32.mrb[0].mxu0
      %v2446 = vadd.f32 0.0, %v2445
      %v2447 = vpop.f32.mrb[0].mxu0
      %v2448 = vpop.f32.mrb[0].mxu0
      %v2449 = vadd.f32 0.0, %v2448
      %v2450 = vpop.f32.mrb[0].mxu0
      %2451 = vmatprep.mubr.bf16.mxu0 %v2178
      %2452 = vmatmul.mubr.bf16.gmra.mrb[0].mxu0 %v2176
      %v2453 = vpop.f32.mrb[0].mxu0
      %v2454 = vadd.f32 0.0, %v2453
      %v2455 = vpop.f32.mrb[0].mxu0
      %v2456 = vpop.f32.mrb[0].mxu0
      %v2457 = vadd.f32 0.0, %v2456
      %v2458 = vpop.f32.mrb[0].mxu0
      %2459 = vmatprep.mubr.bf16.mxu0 %v2186
      %2460 = vmatmul.mubr.bf16.gmra.mrb[0].mxu0 %v2184
      %v2461 = vpop.f32.mrb[0].mxu0
      %v2462 = vadd.f32 0.0, %v2461
      %v2463 = vpop.f32.mrb[0].mxu0
      %v2464 = vpop.f32.mrb[0].mxu0
      %v2465 = vadd.f32 0.0, %v2464
      %v2466 = vpop.f32.mrb[0].mxu0
      %2467 = vmatprep.mubr.bf16.mxu0 %v2194
      %2468 = vmatmul.mubr.bf16.gmra.mrb[0].mxu0 %v2192
      %v2469 = vpop.f32.mrb[0].mxu0
      %v2470 = vadd.f32 0.0, %v2469
      %v2471 = vpop.f32.mrb[0].mxu0
      %v2472 = vpop.f32.mrb[0].mxu0
      %v2473 = vadd.f32 0.0, %v2472
      %v2474 = vpop.f32.mrb[0].mxu0
      %2475 = vmatprep.mubr.bf16.mxu0 %v2193
      %2476 = vmatmul.mubr.bf16.gmra.mrb[0].mxu0 %v2191
      %v2477 = vpop.f32.mrb[0].mxu0
      %v2478 = vadd.f32 0.0, %v2477
      %v2479 = vpop.f32.mrb[0].mxu0
      %v2480 = vpop.f32.mrb[0].mxu0
      %v2481 = vpop.f32.mrb[0].mxu0
      %2482 = vdwg.mxu0
      %2483 = vmatprep.subr.bf16.mxu0 0
      %2484 = vmatpush1.bf16.msra.mxu0 %v2363
      %2485 = vmatprep.subr.bf16.mxu0 0
      %2486 = vmatpush1.bf16.msra.mxu0 %v2364
      %2487 = vmatprep.subr.bf16.mxu0 0
      %2488 = vmatpush1.bf16.msra.mxu0 %v2365
      %2489 = vmatprep.subr.bf16.mxu0 0
      %2490 = vmatpush1.bf16.msra.mxu0 %v2366
      %2491 = vmatprep.subr.bf16.mxu0 0
      %2492 = vmatpush1.bf16.msra.mxu0 %v2367
      %2493 = vmatprep.subr.bf16.mxu0 0
      %2494 = vmatpush1.bf16.msra.mxu0 %v2368
      %2495 = vmatprep.subr.bf16.mxu0 0
      %2496 = vmatpush1.bf16.msra.mxu0 %v2369
      %2497 = vmatprep.subr.bf16.mxu0 0
      %2498 = vmatpush1.bf16.msra.mxu0 %v2370
      %2499 = vmatprep.subr.bf16.mxu0 0
      %2500 = vmatpush1.bf16.msra.mxu0 %v2371
      %2501 = vmatprep.subr.bf16.mxu0 0
      %2502 = vmatpush1.bf16.msra.mxu0 %v2372
      %2503 = vmatprep.subr.bf16.mxu0 0
      %2504 = vmatpush1.bf16.msra.mxu0 %v2373
      %2505 = vmatprep.subr.bf16.mxu0 0
      %2506 = vmatpush1.bf16.msra.mxu0 %v2374
      %2507 = vmatprep.subr.bf16.mxu0 0
      %2508 = vmatpush1.bf16.msra.mxu0 %v2375
      %2509 = vmatprep.subr.bf16.mxu0 0
      %2510 = vmatpush1.bf16.msra.mxu0 %v2376
      %2511 = vmatprep.subr.bf16.mxu0 0
      %2512 = vmatpush1.bf16.msra.mxu0 %v2377
      %2513 = vmatprep.subr.bf16.mxu0 0
      %2514 = vmatpush1.bf16.msra.mxu0 %v2378
      %2515 = vmatprep.mubr.bf16.mxu0 %v2174
      %2516 = vmatmul.mubr.bf16.gmra.mrb[0].mxu0 %v2171
      %v2517 = vpop.f32.mrb[0].mxu0
      %v2518 = vadd.f32 %v2446, %v2517
      %v2519 = vpop.f32.mrb[0].mxu0
      %v2520 = vpop.f32.mrb[0].mxu0
      %v2521 = vadd.f32 %v2449, %v2520
      %v2522 = vpop.f32.mrb[0].mxu0
      %2523 = vmatprep.mubr.bf16.mxu0 %v2182
      %2524 = vmatmul.mubr.bf16.gmra.mrb[0].mxu0 %v2180
      %v2525 = vpop.f32.mrb[0].mxu0
      %v2526 = vadd.f32 %v2454, %v2525
      %v2527 = vpop.f32.mrb[0].mxu0
      %v2528 = vpop.f32.mrb[0].mxu0
      %v2529 = vadd.f32 %v2457, %v2528
      %v2530 = vpop.f32.mrb[0].mxu0
      %2531 = vmatprep.mubr.bf16.mxu0 %v2190
      %2532 = vmatmul.mubr.bf16.gmra.mrb[0].mxu0 %v2188
      %v2533 = vpop.f32.mrb[0].mxu0
      %v2534 = vadd.f32 %v2462, %v2533
      %v2535 = vpop.f32.mrb[0].mxu0
      %v2536 = vpop.f32.mrb[0].mxu0
      %v2537 = vadd.f32 %v2465, %v2536
      %v2538 = vpop.f32.mrb[0].mxu0
      %2539 = vmatprep.mubr.bf16.mxu0 %v2198
      %2540 = vmatmul.mubr.bf16.gmra.mrb[0].mxu0 %v2196
      %v2541 = vpop.f32.mrb[0].mxu0
      %v2542 = vadd.f32 %v2470, %v2541
      %v2543 = vpop.f32.mrb[0].mxu0
      %v2544 = vpop.f32.mrb[0].mxu0
      %v2545 = vadd.f32 %v2473, %v2544
      %v2546 = vpop.f32.mrb[0].mxu0
      %2547 = vmatprep.mubr.bf16.mxu0 %v2197
      %2548 = vmatmul.mubr.bf16.gmra.mrb[0].mxu0 %v2195
      %v2549 = vpop.f32.mrb[0].mxu0
      %v2550 = vadd.f32 %v2478, %v2549
      %v2551 = vpop.f32.mrb[0].mxu0
      %v2552 = vpop.f32.mrb[0].mxu0
      %v2553 = vpop.f32.mrb[0].mxu0
      %2554 = vdwg.mxu0
      %v2555 = vadd.f32 %v2076, %v2518
      %v2556 = vadd.f32 %v2077, %v2521
      %v2557 = vadd.f32 %v2078, %v2526
      %v2558 = vadd.f32 %v2079, %v2529
      %v2559 = vadd.f32 %v2080, %v2534
      %v2560 = vadd.f32 %v2081, %v2537
      %v2561 = vadd.f32 %v2082, %v2542
      %v2562 = vadd.f32 %v2083, %v2545
      %v2563 = vadd.f32 %v2084, %v2550
      %v2564 = vld [vmem:[%s4] sm:$0x1]
      %v2566 = vlaneseq
      %v2567 = vshrl.u32 %v2566, 7
      %v2568 = vsub.s32 0, %v2567
      %v2569 = vrot.slane %v2564, %v2568
      %v2571 = vadd.f32 %v2555, %v2569
      %v2572 = vadd.f32 %v2556, %v2569
      %v2573 = vadd.f32 %v2557, %v2569
      %v2574 = vadd.f32 %v2558, %v2569
      %v2575 = vadd.f32 %v2559, %v2569
      %v2576 = vadd.f32 %v2560, %v2569
      %v2577 = vadd.f32 %v2561, %v2569
      %v2578 = vadd.f32 %v2562, %v2569
      %v2579 = vadd.f32 %v2563, %v2569
      %v2580 = vlaneseq
      %v2581 = vshrl.u32 %v2580, 7
      %v2582 = vadd.s32 %v2581, 8
      %v2583 = vadd.s32 %v2581, 16
      %v2584 = vadd.s32 %v2581, 24
      %v2585 = vadd.s32 %v2581, 32
      %v2586 = vadd.s32 %v2581, 40
      %v2587 = vadd.s32 %v2581, 48
      %v2588 = vadd.s32 %v2581, 56
      %v2589 = vadd.s32 %v2581, 64
      %vm2590 = vcmp.lt.s32.totalorder %v2581, 0
      %v2591 = vsub.s32 0, %v2581
      %v2592 = vsel %vm2590, %v2591, %v2581
      %v2593 = vmul.u32.u64.compose %v2592, 3817748708
      %v2594 = vextract.low.u32 %v2593
      %v2595 = vextract.high.u32 %v2593
      %v2596 = vshrl.u32 %v2595, 3
      %v2597 = vmul.u32 %v2596, 9
      %v2598 = vsub.s32 %v2592, %v2597
      %v2599 = vsub.s32 0, %v2598
      %v2600 = vsel %vm2590, %v2599, %v2598
      %vm2601 = vcmp.lt.s32.totalorder %v2582, 0
      %v2602 = vsub.s32 0, %v2582
      %v2603 = vsel %vm2601, %v2602, %v2582
      %v2604 = vmul.u32.u64.compose %v2603, 3817748708
      %v2605 = vextract.low.u32 %v2604
      %v2606 = vextract.high.u32 %v2604
      %v2607 = vshrl.u32 %v2606, 3
      %v2608 = vmul.u32 %v2607, 9
      %v2609 = vsub.s32 %v2603, %v2608
      %v2610 = vsub.s32 0, %v2609
      %v2611 = vsel %vm2601, %v2610, %v2609
      %vm2612 = vcmp.lt.s32.totalorder %v2583, 0
      %v2613 = vsub.s32 0, %v2583
      %v2614 = vsel %vm2612, %v2613, %v2583
      %v2615 = vmul.u32.u64.compose %v2614, 3817748708
      %v2616 = vextract.low.u32 %v2615
      %v2617 = vextract.high.u32 %v2615
      %v2618 = vshrl.u32 %v2617, 3
      %v2619 = vmul.u32 %v2618, 9
      %v2620 = vsub.s32 %v2614, %v2619
      %v2621 = vsub.s32 0, %v2620
      %v2622 = vsel %vm2612, %v2621, %v2620
      %vm2623 = vcmp.lt.s32.totalorder %v2584, 0
      %v2624 = vsub.s32 0, %v2584
      %v2625 = vsel %vm2623, %v2624, %v2584
      %v2626 = vmul.u32.u64.compose %v2625, 3817748708
      %v2627 = vextract.low.u32 %v2626
      %v2628 = vextract.high.u32 %v2626
      %v2629 = vshrl.u32 %v2628, 3
      %v2630 = vmul.u32 %v2629, 9
      %v2631 = vsub.s32 %v2625, %v2630
      %v2632 = vsub.s32 0, %v2631
      %v2633 = vsel %vm2623, %v2632, %v2631
      %vm2634 = vcmp.lt.s32.totalorder %v2585, 0
      %v2635 = vsub.s32 0, %v2585
      %v2636 = vsel %vm2634, %v2635, %v2585
      %v2637 = vmul.u32.u64.compose %v2636, 3817748708
      %v2638 = vextract.low.u32 %v2637
      %v2639 = vextract.high.u32 %v2637
      %v2640 = vshrl.u32 %v2639, 3
      %v2641 = vmul.u32 %v2640, 9
      %v2642 = vsub.s32 %v2636, %v2641
      %v2643 = vsub.s32 0, %v2642
      %v2644 = vsel %vm2634, %v2643, %v2642
      %vm2645 = vcmp.lt.s32.totalorder %v2586, 0
      %v2646 = vsub.s32 0, %v2586
      %v2647 = vsel %vm2645, %v2646, %v2586
      %v2648 = vmul.u32.u64.compose %v2647, 3817748708
      %v2649 = vextract.low.u32 %v2648
      %v2650 = vextract.high.u32 %v2648
      %v2651 = vshrl.u32 %v2650, 3
      %v2652 = vmul.u32 %v2651, 9
      %v2653 = vsub.s32 %v2647, %v2652
      %v2654 = vsub.s32 0, %v2653
      %v2655 = vsel %vm2645, %v2654, %v2653
      %vm2656 = vcmp.lt.s32.totalorder %v2587, 0
      %v2657 = vsub.s32 0, %v2587
      %v2658 = vsel %vm2656, %v2657, %v2587
      %v2659 = vmul.u32.u64.compose %v2658, 3817748708
      %v2660 = vextract.low.u32 %v2659
      %v2661 = vextract.high.u32 %v2659
      %v2662 = vshrl.u32 %v2661, 3
      %v2663 = vmul.u32 %v2662, 9
      %v2664 = vsub.s32 %v2658, %v2663
      %v2665 = vsub.s32 0, %v2664
      %v2666 = vsel %vm2656, %v2665, %v2664
      %vm2667 = vcmp.lt.s32.totalorder %v2588, 0
      %v2668 = vsub.s32 0, %v2588
      %v2669 = vsel %vm2667, %v2668, %v2588
      %v2670 = vmul.u32.u64.compose %v2669, 3817748708
      %v2671 = vextract.low.u32 %v2670
      %v2672 = vextract.high.u32 %v2670
      %v2673 = vshrl.u32 %v2672, 3
      %v2674 = vmul.u32 %v2673, 9
      %v2675 = vsub.s32 %v2669, %v2674
      %v2676 = vsub.s32 0, %v2675
      %v2677 = vsel %vm2667, %v2676, %v2675
      %vm2678 = vcmp.lt.s32.totalorder %v2589, 0
      %v2679 = vsub.s32 0, %v2589
      %v2680 = vsel %vm2678, %v2679, %v2589
      %v2681 = vmul.u32.u64.compose %v2680, 3817748708
      %v2682 = vextract.low.u32 %v2681
      %v2683 = vextract.high.u32 %v2681
      %v2684 = vshrl.u32 %v2683, 3
      %v2685 = vmul.u32 %v2684, 9
      %v2686 = vsub.s32 %v2680, %v2685
      %v2687 = vsub.s32 0, %v2686
      %v2688 = vsel %vm2678, %v2687, %v2686
      %vm2689 = vcmp.ne.s32.totalorder %v2600, 0
      %vm2690 = vcmp.ne.s32.totalorder %v2611, 0
      %vm2691 = vcmp.ne.s32.totalorder %v2622, 0
      %vm2692 = vcmp.ne.s32.totalorder %v2633, 0
      %vm2693 = vcmp.ne.s32.totalorder %v2644, 0
      %vm2694 = vcmp.ne.s32.totalorder %v2655, 0
      %vm2695 = vcmp.ne.s32.totalorder %v2666, 0
      %vm2696 = vcmp.ne.s32.totalorder %v2677, 0
      %vm2697 = vcmp.ne.s32.totalorder %v2688, 0
      %vm2698 = vcmp.lt.s32.totalorder %v2600, 0
      %vm2699 = vcmp.lt.s32.totalorder %v2611, 0
      %vm2700 = vcmp.lt.s32.totalorder %v2622, 0
      %vm2701 = vcmp.lt.s32.totalorder %v2633, 0
      %vm2702 = vcmp.lt.s32.totalorder %v2644, 0
      %vm2703 = vcmp.lt.s32.totalorder %v2655, 0
      %vm2704 = vcmp.lt.s32.totalorder %v2666, 0
      %vm2705 = vcmp.lt.s32.totalorder %v2677, 0
      %vm2706 = vcmp.lt.s32.totalorder %v2688, 0
      %vm2707 = vmand %vm2698, %vm2689
      %vm2708 = vmand %vm2699, %vm2690
      %vm2709 = vmand %vm2700, %vm2691
      %vm2710 = vmand %vm2701, %vm2692
      %vm2711 = vmand %vm2702, %vm2693
      %vm2712 = vmand %vm2703, %vm2694
      %vm2713 = vmand %vm2704, %vm2695
      %vm2714 = vmand %vm2705, %vm2696
      %vm2715 = vmand %vm2706, %vm2697
      %v2716 = vadd.s32 %v2600, 9
      %v2717 = vadd.s32 %v2611, 9
      %v2718 = vadd.s32 %v2622, 9
      %v2719 = vadd.s32 %v2633, 9
      %v2720 = vadd.s32 %v2644, 9
      %v2721 = vadd.s32 %v2655, 9
      %v2722 = vadd.s32 %v2666, 9
      %v2723 = vadd.s32 %v2677, 9
      %v2724 = vadd.s32 %v2688, 9
      %v2725 = vsel %vm2707, %v2716, %v2600
      %v2726 = vsel %vm2708, %v2717, %v2611
      %v2727 = vsel %vm2709, %v2718, %v2622
      %v2728 = vsel %vm2710, %v2719, %v2633
      %v2729 = vsel %vm2711, %v2720, %v2644
      %v2730 = vsel %vm2712, %v2721, %v2655
      %v2731 = vsel %vm2713, %v2722, %v2666
      %v2732 = vsel %vm2714, %v2723, %v2677
      %v2733 = vsel %vm2715, %v2724, %v2688
      %vm2734 = vcmp.lt.s32.totalorder %v2725, 8
      %vm2735 = vcmp.lt.s32.totalorder %v2726, 8
      %vm2736 = vcmp.lt.s32.totalorder %v2727, 8
      %vm2737 = vcmp.lt.s32.totalorder %v2728, 8
      %vm2738 = vcmp.lt.s32.totalorder %v2729, 8
      %vm2739 = vcmp.lt.s32.totalorder %v2730, 8
      %vm2740 = vcmp.lt.s32.totalorder %v2731, 8
      %vm2741 = vcmp.lt.s32.totalorder %v2732, 8
      %vm2742 = vcmp.lt.s32.totalorder %v2733, 8
      %v2743 = vsel %vm2734, 1, 0
      %v2744 = vsel %vm2735, 1, 0
      %v2745 = vsel %vm2736, 1, 0
      %v2746 = vsel %vm2737, 1, 0
      %v2747 = vsel %vm2738, 1, 0
      %v2748 = vsel %vm2739, 1, 0
      %v2749 = vsel %vm2740, 1, 0
      %v2750 = vsel %vm2741, 1, 0
      %v2751 = vsel %vm2742, 1, 0
      %vm2752 = vcmp.eq.s32.totalorder %v2743, 1
      %vm2753 = vcmp.eq.s32.totalorder %v2744, 1
      %vm2754 = vcmp.eq.s32.totalorder %v2745, 1
      %vm2755 = vcmp.eq.s32.totalorder %v2746, 1
      %vm2756 = vcmp.eq.s32.totalorder %v2747, 1
      %vm2757 = vcmp.eq.s32.totalorder %v2748, 1
      %vm2758 = vcmp.eq.s32.totalorder %v2749, 1
      %vm2759 = vcmp.eq.s32.totalorder %v2750, 1
      %vm2760 = vcmp.eq.s32.totalorder %v2751, 1
      %v2761 = vsel %vm2752, %v2571, 0.0
      %v2762 = vsel %vm2753, %v2572, 0.0
      %v2763 = vsel %vm2754, %v2573, 0.0
      %v2764 = vsel %vm2755, %v2574, 0.0
      %v2765 = vsel %vm2756, %v2575, 0.0
      %v2766 = vsel %vm2757, %v2576, 0.0
      %v2767 = vsel %vm2758, %v2577, 0.0
      %v2768 = vsel %vm2759, %v2578, 0.0
      %v2769 = vsel %vm2760, %v2579, 0.0
      %v2770 = vadd.f32 %v2761, %v2762
      %v2771 = vadd.f32 %v2770, %v2763
      %v2772 = vadd.f32 %v2771, %v2764
      %v2773 = vadd.f32 %v2772, %v2765
      %v2774 = vadd.f32 %v2773, %v2766
      %v2775 = vadd.f32 %v2774, %v2767
      %v2776 = vadd.f32 %v2775, %v2768
      %v2777 = vadd.f32 %v2776, %v2769
      %v2778 = vrot.slane %v2777, 4
      %v2779 = vadd.f32 %v2777, %v2778
      %v2780 = vrot.slane %v2779, 2
      %v2781 = vadd.f32 %v2779, %v2780
      %v2782 = vrot.slane %v2781, 1
      %v2783 = vadd.f32 %v2781, %v2782
      %2784 = vst [vmem:[%s292] sm:$0x1] %v2783
      %v2785 = vmul.f32 %v2761, %v2571
      %v2786 = vmul.f32 %v2762, %v2572
      %v2787 = vmul.f32 %v2763, %v2573
      %v2788 = vmul.f32 %v2764, %v2574
      %v2789 = vmul.f32 %v2765, %v2575
      %v2790 = vmul.f32 %v2766, %v2576
      %v2791 = vmul.f32 %v2767, %v2577
      %v2792 = vmul.f32 %v2768, %v2578
      %v2793 = vmul.f32 %v2769, %v2579
      %v2794 = vadd.f32 %v2785, %v2786
      %v2795 = vadd.f32 %v2794, %v2787
      %v2796 = vadd.f32 %v2795, %v2788
      %v2797 = vadd.f32 %v2796, %v2789
      %v2798 = vadd.f32 %v2797, %v2790
      %v2799 = vadd.f32 %v2798, %v2791
      %v2800 = vadd.f32 %v2799, %v2792
      %v2801 = vadd.f32 %v2800, %v2793
      %v2802 = vrot.slane %v2801, 4
      %v2803 = vadd.f32 %v2801, %v2802
      %v2804 = vrot.slane %v2803, 2
      %v2805 = vadd.f32 %v2803, %v2804
      %v2806 = vrot.slane %v2805, 1
      %v2807 = vadd.f32 %v2805, %v2806
      %2808 = vst [vmem:[%s295] sm:$0x1] %v2807
      %v2809 = vpack.c.bf16 %v2572, %v2571
      %v2810 = vpack.c.bf16 %v2574, %v2573
      %v2811 = vpack.c.bf16 %v2576, %v2575
      %v2812 = vpack.c.bf16 %v2578, %v2577
      %v2813 = vpack.c.bf16 %v2579, %v2579
      %v2819 = vunpack.c.l.b16 %v2809
      %v2820 = vunpack.c.h.b16 %v2809
      %v2821 = vunpack.c.l.b16 %v2810
      %v2822 = vunpack.c.h.b16 %v2810
      %v2823 = vunpack.c.l.b16 %v2811
      %v2824 = vunpack.c.h.b16 %v2811
      %v2825 = vunpack.c.l.b16 %v2812
      %v2826 = vunpack.c.h.b16 %v2812
      %v2827 = vunpack.c.l.b16 %v2813
      %v2828 = vpack.c.b16 %v2819, %v2819
      %v2829 = vpack.c.b16 %v2820, %v2820
      %v2830 = vpack.c.b16 %v2821, %v2821
      %v2831 = vpack.c.b16 %v2822, %v2822
      %v2832 = vpack.c.b16 %v2823, %v2823
      %v2833 = vpack.c.b16 %v2824, %v2824
      %v2834 = vpack.c.b16 %v2825, %v2825
      %v2835 = vpack.c.b16 %v2826, %v2826
      %v2836 = vpack.c.b16 %v2827, %v2827
      %2846 = vst [vmem:[%s289] sm:$0xf] %v2828
      %2847 = vst [vmem:[%s289 + $0x4] sm:$0xf] %v2829
      %2848 = vst [vmem:[%s289 + $0x8] sm:$0xf] %v2830
      %2849 = vst [vmem:[%s289 + $0xc] sm:$0xf] %v2831
      %2850 = vst [vmem:[%s289 + $0x10] sm:$0xf] %v2832
      %2851 = vst [vmem:[%s289 + $0x14] sm:$0xf] %v2833
      %2852 = vst [vmem:[%s289 + $0x18] sm:$0xf] %v2834
      %2853 = vst [vmem:[%s289 + $0x1c] sm:$0xf] %v2835
      %2854 = vst [vmem:[%s289 + $0x20] sm:$0xf] %v2836
      %p2855 = scmp.lt.s32.totalorder %s19, 1
      %s2856 = scalar_select %p2855, %s19, 1
      %s2857 = smul.addr %s2856, 9
      %s2858 = smul.addr %s2857, 4
      %s2859 = scalar_lea.vmem %s5, %s2858
      %p2860 = scmp.lt.s32.totalorder %s19, 1
      %s2861 = scalar_select %p2860, %s19, 1
      %s2862 = scalar_lea.vmem %s6, %s2861
      %p2863 = scmp.lt.s32.totalorder %s19, 1
      %s2864 = scalar_select %p2863, %s19, 1
      %s2865 = scalar_lea.vmem %s7, %s2864
      // Predicated region
      $region41: #{_lambda_.6} parent=39 // pred_check
        %p2866 = pneg %p147
      $region42: #{_lambda_.6} parent=39 // pred_check_branch
        %2868 = sbr.rel (%p2866) target = $region44
      $region43: #{_lambda_.6} parent=39 // pred_region
        _
      $region44: #{_lambda_.6} parent=39 // pred_fallthru
        _
      // Predicated region
      $region45: #{_lambda_.6} parent=39 // pred_check
        %p2869 = pneg %p173
      $region46: #{_lambda_.6} parent=39 // pred_check_branch
        %2871 = sbr.rel (%p2869) target = $region48
      $region47: #{_lambda_.6} parent=39 // pred_region
        _
      $region48: #{_lambda_.6} parent=39 // pred_fallthru
        _
      // Predicated region
      $region49: #{_lambda_.6} parent=39 // pred_check
        %p2872 = pneg %p199
      $region50: #{_lambda_.6} parent=39 // pred_check_branch
        %2874 = sbr.rel (%p2872) target = $region52
      $region51: #{_lambda_.6} parent=39 // pred_region
        _
      $region52: #{_lambda_.6} parent=39 // pred_fallthru
        _
    $region40: #{_lambda_.6} parent=5 // pred_fallthru
      _
    %p2875 = scmp.le.s32.totalorder 2, %s14
    // Predicated region
    $region53: #{_lambda_.6} parent=5 // pred_check
      %p2876 = pneg %p2875
    $region54: #{_lambda_.6} parent=5 // pred_check_branch
      %2878 = sbr.rel (%p2876) target = $region56
    $region55: #{_lambda_.6} parent=5 // pred_region
      %s2879 = ssub.s32 %s14, 2
      // Predicated region
      $region57: #{_lambda_.6} parent=55 // pred_check
        %p2880 = pneg %p153
      $region58: #{_lambda_.6} parent=55 // pred_check_branch
        %2882 = sbr.rel (%p2880) target = $region60
      $region59: #{_lambda_.6} parent=55 // pred_region
        %p2883 = scmp.lt.s32.totalorder %s20, 1
        %s2884 = scalar_select %p2883, %s20, 1
        %s2885 = smul.addr %s2884, 9
        %s2886 = smul.addr %s2885, 4
        %s2887 = scalar_lea.vmem %s5, %s2886
      $region60: #{_lambda_.6} parent=55 // pred_fallthru
        _
      // Predicated region
      $region61: #{_lambda_.6} parent=55 // pred_check
        %p2888 = pneg %p179
      $region62: #{_lambda_.6} parent=55 // pred_check_branch
        %2890 = sbr.rel (%p2888) target = $region64
      $region63: #{_lambda_.6} parent=55 // pred_region
        %p2891 = scmp.lt.s32.totalorder %s20, 1
        %s2892 = scalar_select %p2891, %s20, 1
        %s2893 = scalar_lea.vmem %s6, %s2892
      $region64: #{_lambda_.6} parent=55 // pred_fallthru
        _
      // Predicated region
      $region65: #{_lambda_.6} parent=55 // pred_check
        %p2894 = pneg %p205
      $region66: #{_lambda_.6} parent=55 // pred_check_branch
        %2896 = sbr.rel (%p2894) target = $region68
      $region67: #{_lambda_.6} parent=55 // pred_region
        %p2897 = scmp.lt.s32.totalorder %s20, 1
        %s2898 = scalar_select %p2897, %s20, 1
        %s2899 = scalar_lea.vmem %s7, %s2898
      $region68: #{_lambda_.6} parent=55 // pred_fallthru
        _
    $region56: #{_lambda_.6} parent=5 // pred_fallthru
      _
  $region6: #{_lambda_.6} parent=0 // loop_footer
    %s18 = sadd.s32 1, %s14
  $region7: #{_lambda_.6} parent=0 // loop_footer_branch
    %13 = sbr.rel target = $region3
  $region8: #{_lambda_.6} parent=0 // loop_exit
    _

// kernel: _lambda_.7
$region0: #{_lambda_.7}
  #allocation0 [shape = 'u32[]', space=smem, size = 0x4, offset = 0x4, fixed_abs, tag = 'smem constant byte address 0x4 - core index']
  #allocation1 [shape = 'u32[144,128]{1,0:T(1,128)}', space=vmem, size = 0x12000, scoped, tag = 'internal scratch']
  #allocation2 [shape = 'bf16[32,512]{1,0:T(16,128)(2,1)}', space=vmem, size = 0x8000, scoped, tag = 'scratch operand']
  %s0 = inlined_call_operand.vmem [shape: f32[1,512], index: 0, kind: input, shape index: {}]
  %s1 = inlined_call_operand.vmem [shape: f32[1,512], index: 1, kind: input, shape index: {}]
  %s2 = inlined_call_operand.vmem [shape: bf16[2,32,512], index: 2, kind: input, shape index: {}]
  %s3 = inlined_call_operand.vmem [shape: bf16[4,512,128], index: 3, kind: input, shape index: {}]
  %s4 = inlined_call_operand.vmem [shape: f32[1,128], index: 4, kind: input, shape index: {}]
  %s5 = inlined_call_operand.vmem [shape: bf16[2,20,128], index: 5, kind: output, shape index: {0}]
  %s6 = inlined_call_operand.vmem [shape: f32[2,1,128], index: 6, kind: output, shape index: {1}]
  %s7 = inlined_call_operand.vmem [shape: f32[2,1,128], index: 7, kind: output, shape index: {2}]
  %8 = xla_tuple %s5, %s6, %s7
  %s9 = sld [smem:[#allocation0]]
  $region69: #{_lambda_.7} parent=0
    _
  %s11 = ssub.s32 1, %s9
  %s12 = scalar_select 0, %s11, %s9
  loop: start=0, step=1, limit=4
  $region2: #{_lambda_.7} parent=0 // loop_pre_header
    _
  $region3: #{_lambda_.7} parent=0 // loop_header
    %s14 = sphi 0, %s18
    %p15 = scmp.ge.s32.totalorder %s14, 4
    %s22 = sphi 0, %s22
    %s24 = sphi 0, %s22
    %s25 = sphi 0, %s24
    %s39 = sphi 0, %s25
    %s43 = sphi 0, %s43
    %s45 = sphi 0, %s43
    %s46 = sphi 0, %s45
    %s60 = sphi 0, %s46
    %s66 = sphi 0, %s68
    %s69 = sphi 0, %s66
    %s70 = sphi 0, %s69
    %s86 = sphi 0, %s70
    %s90 = sphi 0, %s90
    %s92 = sphi 0, %s90
    %s93 = sphi 0, %s92
    %s107 = sphi 0, %s93
    %s111 = sphi 0, %s111
    %s113 = sphi 0, %s111
    %s114 = sphi 0, %s113
    %s128 = sphi 0, %s114
    %s134 = sphi 0, %s136
    %s137 = sphi 0, %s134
    %s138 = sphi 0, %s137
    %s154 = sphi 0, %s138
    %s160 = sphi 0, %s162
    %s163 = sphi 0, %s160
    %s164 = sphi 0, %s163
    %s180 = sphi 0, %s164
    %s186 = sphi 0, %s188
    %s189 = sphi 0, %s186
    %s190 = sphi 0, %s189
    %s206 = sphi 0, %s190
  $region4: #{_lambda_.7} parent=0 // loop_header_branch
    %17 = sbr.rel (%p15) target = $region8
  $region5: #{_lambda_.7} parent=0 // loop_body
    %s19 = ssub.s32 %s14, 1
    %s20 = ssub.s32 %s14, 2
    %s21 = sadd.s32 %s14, 1
    %s23 = sadd.s32 %s22, 1
    %p26 = scmp.eq.s32.totalorder %s14, 1
    %p27 = scmp.ne.s32.totalorder %s22, %s24
    %p28 = scmp.eq.s32.totalorder %s14, 0
    %p29 = por %p27, %p28
    %p30 = scmp.ne.s32.totalorder %s22, %s24
    %p31 = scmp.eq.s32.totalorder %s19, 1
    %p32 = por %p30, %p31
    %p33 = scmp.ne.s32.totalorder %s24, %s25
    %p34 = scmp.eq.s32.totalorder %s19, 0
    %p35 = por %p33, %p34
    %p36 = scmp.ne.s32.totalorder %s24, %s25
    %p37 = scmp.eq.s32.totalorder %s20, 1
    %p38 = por %p36, %p37
    %p40 = scmp.ne.s32.totalorder %s25, %s39
    %p41 = scmp.eq.s32.totalorder %s20, 0
    %p42 = por %p40, %p41
    %s44 = sadd.s32 %s43, 1
    %p47 = scmp.eq.s32.totalorder %s14, 1
    %p48 = scmp.ne.s32.totalorder %s43, %s45
    %p49 = scmp.eq.s32.totalorder %s14, 0
    %p50 = por %p48, %p49
    %p51 = scmp.ne.s32.totalorder %s43, %s45
    %p52 = scmp.eq.s32.totalorder %s19, 1
    %p53 = por %p51, %p52
    %p54 = scmp.ne.s32.totalorder %s45, %s46
    %p55 = scmp.eq.s32.totalorder %s19, 0
    %p56 = por %p54, %p55
    %p57 = scmp.ne.s32.totalorder %s45, %s46
    %p58 = scmp.eq.s32.totalorder %s20, 1
    %p59 = por %p57, %p58
    %p61 = scmp.ne.s32.totalorder %s46, %s60
    %p62 = scmp.eq.s32.totalorder %s20, 0
    %p63 = por %p61, %p62
    %s64 = ssub.s32 %s14, %s21
    %p65 = scmp.eq.s32.totalorder %s64, 0
    %s67 = sadd.s32 %s66, 1
    %s68 = scalar_select %p65, %s66, %s67
    %p71 = pneg %p65
    %p72 = scmp.eq.s32.totalorder %s14, 1
    %p73 = por %p71, %p72
    %p74 = scmp.ne.s32.totalorder %s66, %s69
    %p75 = scmp.eq.s32.totalorder %s14, 0
    %p76 = por %p74, %p75
    %p77 = scmp.ne.s32.totalorder %s66, %s69
    %p78 = scmp.eq.s32.totalorder %s19, 1
    %p79 = por %p77, %p78
    %p80 = scmp.ne.s32.totalorder %s69, %s70
    %p81 = scmp.eq.s32.totalorder %s19, 0
    %p82 = por %p80, %p81
    %p83 = scmp.ne.s32.totalorder %s69, %s70
    %p84 = scmp.eq.s32.totalorder %s20, 1
    %p85 = por %p83, %p84
    %p87 = scmp.ne.s32.totalorder %s70, %s86
    %p88 = scmp.eq.s32.totalorder %s20, 0
    %p89 = por %p87, %p88
    %s91 = sadd.s32 %s90, 1
    %p94 = scmp.eq.s32.totalorder %s14, 1
    %p95 = scmp.ne.s32.totalorder %s90, %s92
    %p96 = scmp.eq.s32.totalorder %s14, 0
    %p97 = por %p95, %p96
    %p98 = scmp.ne.s32.totalorder %s90, %s92
    %p99 = scmp.eq.s32.totalorder %s19, 1
    %p100 = por %p98, %p99
    %p101 = scmp.ne.s32.totalorder %s92, %s93
    %p102 = scmp.eq.s32.totalorder %s19, 0
    %p103 = por %p101, %p102
    %p104 = scmp.ne.s32.totalorder %s92, %s93
    %p105 = scmp.eq.s32.totalorder %s20, 1
    %p106 = por %p104, %p105
    %p108 = scmp.ne.s32.totalorder %s93, %s107
    %p109 = scmp.eq.s32.totalorder %s20, 0
    %p110 = por %p108, %p109
    %s112 = sadd.s32 %s111, 1
    %p115 = scmp.eq.s32.totalorder %s14, 1
    %p116 = scmp.ne.s32.totalorder %s111, %s113
    %p117 = scmp.eq.s32.totalorder %s14, 0
    %p118 = por %p116, %p117
    %p119 = scmp.ne.s32.totalorder %s111, %s113
    %p120 = scmp.eq.s32.totalorder %s19, 1
    %p121 = por %p119, %p120
    %p122 = scmp.ne.s32.totalorder %s113, %s114
    %p123 = scmp.eq.s32.totalorder %s19, 0
    %p124 = por %p122, %p123
    %p125 = scmp.ne.s32.totalorder %s113, %s114
    %p126 = scmp.eq.s32.totalorder %s20, 1
    %p127 = por %p125, %p126
    %p129 = scmp.ne.s32.totalorder %s114, %s128
    %p130 = scmp.eq.s32.totalorder %s20, 0
    %p131 = por %p129, %p130
    %s132 = ssub.s32 %s14, %s21
    %p133 = scmp.eq.s32.totalorder %s132, 0
    %s135 = sadd.s32 %s134, 1
    %s136 = scalar_select %p133, %s134, %s135
    %p139 = pneg %p133
    %p140 = scmp.eq.s32.totalorder %s14, 1
    %p141 = por %p139, %p140
    %p142 = scmp.ne.s32.totalorder %s134, %s137
    %p143 = scmp.eq.s32.totalorder %s14, 0
    %p144 = por %p142, %p143
    %p145 = scmp.ne.s32.totalorder %s134, %s137
    %p146 = scmp.eq.s32.totalorder %s19, 1
    %p147 = por %p145, %p146
    %p148 = scmp.ne.s32.totalorder %s137, %s138
    %p149 = scmp.eq.s32.totalorder %s19, 0
    %p150 = por %p148, %p149
    %p151 = scmp.ne.s32.totalorder %s137, %s138
    %p152 = scmp.eq.s32.totalorder %s20, 1
    %p153 = por %p151, %p152
    %p155 = scmp.ne.s32.totalorder %s138, %s154
    %p156 = scmp.eq.s32.totalorder %s20, 0
    %p157 = por %p155, %p156
    %s158 = ssub.s32 %s14, %s21
    %p159 = scmp.eq.s32.totalorder %s158, 0
    %s161 = sadd.s32 %s160, 1
    %s162 = scalar_select %p159, %s160, %s161
    %p165 = pneg %p159
    %p166 = scmp.eq.s32.totalorder %s14, 1
    %p167 = por %p165, %p166
    %p168 = scmp.ne.s32.totalorder %s160, %s163
    %p169 = scmp.eq.s32.totalorder %s14, 0
    %p170 = por %p168, %p169
    %p171 = scmp.ne.s32.totalorder %s160, %s163
    %p172 = scmp.eq.s32.totalorder %s19, 1
    %p173 = por %p171, %p172
    %p174 = scmp.ne.s32.totalorder %s163, %s164
    %p175 = scmp.eq.s32.totalorder %s19, 0
    %p176 = por %p174, %p175
    %p177 = scmp.ne.s32.totalorder %s163, %s164
    %p178 = scmp.eq.s32.totalorder %s20, 1
    %p179 = por %p177, %p178
    %p181 = scmp.ne.s32.totalorder %s164, %s180
    %p182 = scmp.eq.s32.totalorder %s20, 0
    %p183 = por %p181, %p182
    %s184 = ssub.s32 %s14, %s21
    %p185 = scmp.eq.s32.totalorder %s184, 0
    %s187 = sadd.s32 %s186, 1
    %s188 = scalar_select %p185, %s186, %s187
    %p191 = pneg %p185
    %p192 = scmp.eq.s32.totalorder %s14, 1
    %p193 = por %p191, %p192
    %p194 = scmp.ne.s32.totalorder %s186, %s189
    %p195 = scmp.eq.s32.totalorder %s14, 0
    %p196 = por %p194, %p195
    %p197 = scmp.ne.s32.totalorder %s186, %s189
    %p198 = scmp.eq.s32.totalorder %s19, 1
    %p199 = por %p197, %p198
    %p200 = scmp.ne.s32.totalorder %s189, %s190
    %p201 = scmp.eq.s32.totalorder %s19, 0
    %p202 = por %p200, %p201
    %p203 = scmp.ne.s32.totalorder %s189, %s190
    %p204 = scmp.eq.s32.totalorder %s20, 1
    %p205 = por %p203, %p204
    %p207 = scmp.ne.s32.totalorder %s190, %s206
    %p208 = scmp.eq.s32.totalorder %s20, 0
    %p209 = por %p207, %p208
    %p210 = scmp.le.s32.totalorder 1, %s14
    %p211 = scmp.lt.s32.totalorder %s14, 3
    %p212 = pnand %p210, %p211
    %p213 = pneg %p212
    // Predicated region
    $region9: #{_lambda_.7} parent=5 // pred_check
      _
    $region10: #{_lambda_.7} parent=5 // pred_check_branch
      %215 = sbr.rel (%p212) target = $region12
    $region11: #{_lambda_.7} parent=5 // pred_region
      %s216 = ssub.s32 %s14, 1
      // Predicated region
      $region13: #{_lambda_.7} parent=11 // pred_check
        %p217 = pneg %p35
      $region14: #{_lambda_.7} parent=11 // pred_check_branch
        %219 = sbr.rel (%p217) target = $region16
      $region15: #{_lambda_.7} parent=11 // pred_region
        _
      $region16: #{_lambda_.7} parent=11 // pred_fallthru
        _
      // Predicated region
      $region17: #{_lambda_.7} parent=11 // pred_check
        %p220 = pneg %p56
      $region18: #{_lambda_.7} parent=11 // pred_check_branch
        %222 = sbr.rel (%p220) target = $region20
      $region19: #{_lambda_.7} parent=11 // pred_region
        _
      $region20: #{_lambda_.7} parent=11 // pred_fallthru
        _
      // Predicated region
      $region21: #{_lambda_.7} parent=11 // pred_check
        %p223 = pneg %p103
      $region22: #{_lambda_.7} parent=11 // pred_check_branch
        %225 = sbr.rel (%p223) target = $region24
      $region23: #{_lambda_.7} parent=11 // pred_region
        _
      $region24: #{_lambda_.7} parent=11 // pred_fallthru
        _
      // Predicated region
      $region25: #{_lambda_.7} parent=11 // pred_check
        %p226 = pneg %p124
      $region26: #{_lambda_.7} parent=11 // pred_check_branch
        %228 = sbr.rel (%p226) target = $region28
      $region27: #{_lambda_.7} parent=11 // pred_region
        _
      $region28: #{_lambda_.7} parent=11 // pred_fallthru
        _
    $region12: #{_lambda_.7} parent=5 // pred_fallthru
      _
    %p229 = scmp.lt.s32.totalorder %s14, 2
    // Predicated region
    $region29: #{_lambda_.7} parent=5 // pred_check
      %p230 = pneg %p229
    $region30: #{_lambda_.7} parent=5 // pred_check_branch
      %232 = sbr.rel (%p230) target = $region32
    $region31: #{_lambda_.7} parent=5 // pred_region
      // Predicated region
      $region33: #{_lambda_.7} parent=31 // pred_check
        %p233 = pneg %p76
      $region34: #{_lambda_.7} parent=31 // pred_check_branch
        %235 = sbr.rel (%p233) target = $region36
      $region35: #{_lambda_.7} parent=31 // pred_region
        %p236 = scmp.lt.s32.totalorder %s14, 1
        %s237 = scalar_select %p236, %s14, 1
        %s238 = smul.addr %s237, 16
        %s239 = smul.addr %s238, 4
        %s240 = scalar_lea.vmem %s2, %s239
      $region36: #{_lambda_.7} parent=31 // pred_fallthru
        _
    $region32: #{_lambda_.7} parent=5 // pred_fallthru
      _
    %p241 = scmp.le.s32.totalorder 1, %s14
    %p242 = scmp.lt.s32.totalorder %s14, 3
    %p243 = pnand %p241, %p242
    %p244 = pneg %p243
    // Predicated region
    $region37: #{_lambda_.7} parent=5 // pred_check
      _
    $region38: #{_lambda_.7} parent=5 // pred_check_branch
      %246 = sbr.rel (%p243) target = $region40
    $region39: #{_lambda_.7} parent=5 // pred_region
      %s247 = ssub.s32 %s14, 1
      %p248 = pneg %p35
      %p249 = pneg %p32
      %p250 = pneg %p56
      %p251 = pneg %p53
      %p252 = scmp.lt.s32.totalorder %s19, 1
      %s253 = scalar_select %p252, %s19, 1
      %s254 = smul.addr %s253, 16
      %s255 = smul.addr %s254, 4
      %s256 = scalar_lea.vmem %s2, %s255
      %p257 = pneg %p82
      %p258 = pneg %p79
      %p259 = pneg %p103
      %p260 = pneg %p100
      %p261 = pneg %p124
      %p262 = pneg %p121
      %p263 = pneg %p150
      %p264 = pneg %p147
      %p265 = scmp.lt.s32.totalorder %s19, 1
      %s266 = scalar_select %p265, %s19, 1
      %s267 = smul.addr %s266, 3
      %s268 = smul.addr %s267, 4
      %s269 = scalar_lea.vmem %s5, %s268
      %p270 = pneg %p176
      %p271 = pneg %p173
      %p272 = scmp.lt.s32.totalorder %s19, 1
      %s273 = scalar_select %p272, %s19, 1
      %s274 = scalar_lea.vmem %s6, %s273
      %p275 = pneg %p202
      %p276 = pneg %p199
      %p277 = scmp.lt.s32.totalorder %s19, 1
      %s278 = scalar_select %p277, %s19, 1
      %s279 = scalar_lea.vmem %s7, %s278
      %p280 = scmp.lt.s32.totalorder %s19, 1
      %s281 = scalar_select %p280, %s19, 1
      %s282 = smul.addr %s281, 16
      %s283 = smul.addr %s282, 4
      %s284 = scalar_lea.vmem %s2, %s283
      %p285 = scmp.lt.s32.totalorder %s19, 1
      %s286 = scalar_select %p285, %s19, 1
      %s287 = smul.addr %s286, 3
      %s288 = smul.addr %s287, 4
      %s289 = scalar_lea.vmem %s5, %s288
      %p290 = scmp.lt.s32.totalorder %s19, 1
      %s291 = scalar_select %p290, %s19, 1
      %s292 = scalar_lea.vmem %s6, %s291
      %p293 = scmp.lt.s32.totalorder %s19, 1
      %s294 = scalar_select %p293, %s19, 1
      %s295 = scalar_lea.vmem %s7, %s294
      %v297 = vld [vmem:[%s284] sm:$0xff]
      %v298 = vld [vmem:[%s284 + $0x8] sm:$0xff]
      %v299 = vld [vmem:[%s284 + $0x10] sm:$0xff]
      %v300 = vld [vmem:[%s284 + $0x18] sm:$0xff]
      %v301 = vld [vmem:[%s284 + $0x20] sm:$0xff]
      %v302 = vld [vmem:[%s284 + $0x28] sm:$0xff]
      %v303 = vld [vmem:[%s284 + $0x30] sm:$0xff]
      %v304 = vld [vmem:[%s284 + $0x38] sm:$0xff]
      %v305 = vunpack.c.l.bf16 %v297
      %v306 = vunpack.c.h.bf16 %v297
      %v307 = vunpack.c.l.bf16 %v298
      %v308 = vunpack.c.h.bf16 %v298
      %v309 = vunpack.c.l.bf16 %v299
      %v310 = vunpack.c.h.bf16 %v299
      %v311 = vunpack.c.l.bf16 %v300
      %v312 = vunpack.c.h.bf16 %v300
      %v313 = vunpack.c.l.bf16 %v301
      %v314 = vunpack.c.h.bf16 %v301
      %v315 = vunpack.c.l.bf16 %v302
      %v316 = vunpack.c.h.bf16 %v302
      %v317 = vunpack.c.l.bf16 %v303
      %v318 = vunpack.c.h.bf16 %v303
      %v319 = vunpack.c.l.bf16 %v304
      %v320 = vunpack.c.h.bf16 %v304
      %v321 = vld [vmem:[%s0] sm:$0xf]
      %v323 = vlaneseq
      %v324 = vshrl.u32 %v323, 7
      %v325 = vsub.s32 0, %v324
      %v326 = vrot.slane %v321, %v325
      %v327 = vlaneseq
      %v328 = vshrl.u32 %v327, 7
      %v329 = vsub.s32 1, %v328
      %v330 = vrot.slane %v321, %v329
      %v331 = vlaneseq
      %v332 = vshrl.u32 %v331, 7
      %v333 = vsub.s32 2, %v332
      %v334 = vrot.slane %v321, %v333
      %v335 = vlaneseq
      %v336 = vshrl.u32 %v335, 7
      %v337 = vsub.s32 3, %v336
      %v338 = vrot.slane %v321, %v337
      %v343 = vmul.f32 %v305, %v326
      %v344 = vmul.f32 %v306, %v330
      %v345 = vmul.f32 %v307, %v334
      %v346 = vmul.f32 %v308, %v338
      %v347 = vmul.f32 %v309, %v326
      %v348 = vmul.f32 %v310, %v330
      %v349 = vmul.f32 %v311, %v334
      %v350 = vmul.f32 %v312, %v338
      %v351 = vmul.f32 %v313, %v326
      %v352 = vmul.f32 %v314, %v330
      %v353 = vmul.f32 %v315, %v334
      %v354 = vmul.f32 %v316, %v338
      %v355 = vmul.f32 %v317, %v326
      %v356 = vmul.f32 %v318, %v330
      %v357 = vmul.f32 %v319, %v334
      %v358 = vmul.f32 %v320, %v338
      %v359 = vld [vmem:[%s1] sm:$0xf]
      %v361 = vlaneseq
      %v362 = vshrl.u32 %v361, 7
      %v363 = vsub.s32 0, %v362
      %v364 = vrot.slane %v359, %v363
      %v365 = vlaneseq
      %v366 = vshrl.u32 %v365, 7
      %v367 = vsub.s32 1, %v366
      %v368 = vrot.slane %v359, %v367
      %v369 = vlaneseq
      %v370 = vshrl.u32 %v369, 7
      %v371 = vsub.s32 2, %v370
      %v372 = vrot.slane %v359, %v371
      %v373 = vlaneseq
      %v374 = vshrl.u32 %v373, 7
      %v375 = vsub.s32 3, %v374
      %v376 = vrot.slane %v359, %v375
      %v381 = vadd.f32 %v343, %v364
      %v382 = vadd.f32 %v344, %v368
      %v383 = vadd.f32 %v345, %v372
      %v384 = vadd.f32 %v346, %v376
      %v385 = vadd.f32 %v347, %v364
      %v386 = vadd.f32 %v348, %v368
      %v387 = vadd.f32 %v349, %v372
      %v388 = vadd.f32 %v350, %v376
      %v389 = vadd.f32 %v351, %v364
      %v390 = vadd.f32 %v352, %v368
      %v391 = vadd.f32 %v353, %v372
      %v392 = vadd.f32 %v354, %v376
      %v393 = vadd.f32 %v355, %v364
      %v394 = vadd.f32 %v356, %v368
      %v395 = vadd.f32 %v357, %v372
      %v396 = vadd.f32 %v358, %v376
      %v397 = vmul.f32 %v381, 0.2
      %v398 = vmul.f32 %v382, 0.2
      %v399 = vmul.f32 %v383, 0.2
      %v400 = vmul.f32 %v384, 0.2
      %v401 = vmul.f32 %v385, 0.2
      %v402 = vmul.f32 %v386, 0.2
      %v403 = vmul.f32 %v387, 0.2
      %v404 = vmul.f32 %v388, 0.2
      %v405 = vmul.f32 %v389, 0.2
      %v406 = vmul.f32 %v390, 0.2
      %v407 = vmul.f32 %v391, 0.2
      %v408 = vmul.f32 %v392, 0.2
      %v409 = vmul.f32 %v393, 0.2
      %v410 = vmul.f32 %v394, 0.2
      %v411 = vmul.f32 %v395, 0.2
      %v412 = vmul.f32 %v396, 0.2
      %v413 = vmax.f32 %v381, %v397
      %v414 = vmax.f32 %v382, %v398
      %v415 = vmax.f32 %v383, %v399
      %v416 = vmax.f32 %v384, %v400
      %v417 = vmax.f32 %v385, %v401
      %v418 = vmax.f32 %v386, %v402
      %v419 = vmax.f32 %v387, %v403
      %v420 = vmax.f32 %v388, %v404
      %v421 = vmax.f32 %v389, %v405
      %v422 = vmax.f32 %v390, %v406
      %v423 = vmax.f32 %v391, %v407
      %v424 = vmax.f32 %v392, %v408
      %v425 = vmax.f32 %v393, %v409
      %v426 = vmax.f32 %v394, %v410
      %v427 = vmax.f32 %v395, %v411
      %v428 = vmax.f32 %v396, %v412
      %v429 = vpack.c.bf16 %v417, %v413
      %v430 = vpack.c.bf16 %v418, %v414
      %v431 = vpack.c.bf16 %v419, %v415
      %v432 = vpack.c.bf16 %v420, %v416
      %v433 = vpack.c.bf16 %v425, %v421
      %v434 = vpack.c.bf16 %v426, %v422
      %v435 = vpack.c.bf16 %v427, %v423
      %v436 = vpack.c.bf16 %v428, %v424
      %437 = vst [vmem:[#allocation2] sm:$0xff] %v429
      %438 = vst [vmem:[#allocation2 + $0x8] sm:$0xff] %v430
      %439 = vst [vmem:[#allocation2 + $0x10] sm:$0xff] %v431
      %440 = vst [vmem:[#allocation2 + $0x18] sm:$0xff] %v432
      %441 = vst [vmem:[#allocation2 + $0x20] sm:$0xff] %v433
      %442 = vst [vmem:[#allocation2 + $0x28] sm:$0xff] %v434
      %443 = vst [vmem:[#allocation2 + $0x30] sm:$0xff] %v435
      %444 = vst [vmem:[#allocation2 + $0x38] sm:$0xff] %v436
      %v445 = vld [vmem:[#allocation2] sm:$0xff]
      %v446 = vld [vmem:[#allocation2 + $0x8] sm:$0xff]
      %v447 = vld [vmem:[#allocation2 + $0x10] sm:$0xff]
      %v448 = vld [vmem:[#allocation2 + $0x18] sm:$0xff]
      %v449 = vld [vmem:[#allocation2 + $0x20] sm:$0x3]
      %v450 = vld [vmem:[#allocation2 + $0x28] sm:$0x3]
      %v451 = vld [vmem:[#allocation2 + $0x30] sm:$0x3]
      %v452 = vld [vmem:[#allocation2 + $0x38] sm:$0x3]
      %v453 = vld [vmem:[%s3] sm:$0xf]
      %v454 = vld [vmem:[%s3 + $0x4] sm:$0xf]
      %v455 = vld [vmem:[%s3 + $0x8] sm:$0xf]
      %v456 = vld [vmem:[%s3 + $0xc] sm:$0xf]
      %v457 = vld [vmem:[%s3 + $0x10] sm:$0xf]
      %v458 = vld [vmem:[%s3 + $0x14] sm:$0xf]
      %v459 = vld [vmem:[%s3 + $0x18] sm:$0xf]
      %v460 = vld [vmem:[%s3 + $0x1c] sm:$0xf]
      %v461 = vld [vmem:[%s3 + $0x20] sm:$0xf]
      %v462 = vld [vmem:[%s3 + $0x24] sm:$0xf]
      %v463 = vld [vmem:[%s3 + $0x28] sm:$0xf]
      %v464 = vld [vmem:[%s3 + $0x2c] sm:$0xf]
      %v465 = vld [vmem:[%s3 + $0x30] sm:$0xf]
      %v466 = vld [vmem:[%s3 + $0x34] sm:$0xf]
      %v467 = vld [vmem:[%s3 + $0x38] sm:$0xf]
      %v468 = vld [vmem:[%s3 + $0x3c] sm:$0xf]
      %v469 = vld [vmem:[%s3 + $0x40] sm:$0xf]
      %v470 = vld [vmem:[%s3 + $0x44] sm:$0xf]
      %v471 = vld [vmem:[%s3 + $0x48] sm:$0xf]
      %v472 = vld [vmem:[%s3 + $0x4c] sm:$0xf]
      %v473 = vld [vmem:[%s3 + $0x50] sm:$0xf]
      %v474 = vld [vmem:[%s3 + $0x54] sm:$0xf]
      %v475 = vld [vmem:[%s3 + $0x58] sm:$0xf]
      %v476 = vld [vmem:[%s3 + $0x5c] sm:$0xf]
      %v477 = vld [vmem:[%s3 + $0x60] sm:$0xf]
      %v478 = vld [vmem:[%s3 + $0x64] sm:$0xf]
      %v479 = vld [vmem:[%s3 + $0x68] sm:$0xf]
      %v480 = vld [vmem:[%s3 + $0x6c] sm:$0xf]
      %v481 = vld [vmem:[%s3 + $0x70] sm:$0xf]
      %v482 = vld [vmem:[%s3 + $0x74] sm:$0xf]
      %v483 = vld [vmem:[%s3 + $0x78] sm:$0xf]
      %v484 = vld [vmem:[%s3 + $0x7c] sm:$0xf]
      %v485 = vld [vmem:[%s3 + $0x80] sm:$0xf]
      %v486 = vld [vmem:[%s3 + $0x84] sm:$0xf]
      %v487 = vld [vmem:[%s3 + $0x88] sm:$0xf]
      %v488 = vld [vmem:[%s3 + $0x8c] sm:$0xf]
      %v489 = vld [vmem:[%s3 + $0x90] sm:$0xf]
      %v490 = vld [vmem:[%s3 + $0x94] sm:$0xf]
      %v491 = vld [vmem:[%s3 + $0x98] sm:$0xf]
      %v492 = vld [vmem:[%s3 + $0x9c] sm:$0xf]
      %v493 = vld [vmem:[%s3 + $0xa0] sm:$0xf]
      %v494 = vld [vmem:[%s3 + $0xa4] sm:$0xf]
      %v495 = vld [vmem:[%s3 + $0xa8] sm:$0xf]
      %v496 = vld [vmem:[%s3 + $0xac] sm:$0xf]
      %v497 = vld [vmem:[%s3 + $0xb0] sm:$0xf]
      %v498 = vld [vmem:[%s3 + $0xb4] sm:$0xf]
      %v499 = vld [vmem:[%s3 + $0xb8] sm:$0xf]
      %v500 = vld [vmem:[%s3 + $0xbc] sm:$0xf]
      %v501 = vld [vmem:[%s3 + $0xc0] sm:$0xf]
      %v502 = vld [vmem:[%s3 + $0xc4] sm:$0xf]
      %v503 = vld [vmem:[%s3 + $0xc8] sm:$0xf]
      %v504 = vld [vmem:[%s3 + $0xcc] sm:$0xf]
      %v505 = vld [vmem:[%s3 + $0xd0] sm:$0xf]
      %v506 = vld [vmem:[%s3 + $0xd4] sm:$0xf]
      %v507 = vld [vmem:[%s3 + $0xd8] sm:$0xf]
      %v508 = vld [vmem:[%s3 + $0xdc] sm:$0xf]
      %v509 = vld [vmem:[%s3 + $0xe0] sm:$0xf]
      %v510 = vld [vmem:[%s3 + $0xe4] sm:$0xf]
      %v511 = vld [vmem:[%s3 + $0xe8] sm:$0xf]
      %v512 = vld [vmem:[%s3 + $0xec] sm:$0xf]
      %v513 = vld [vmem:[%s3 + $0xf0] sm:$0xf]
      %v514 = vld [vmem:[%s3 + $0xf4] sm:$0xf]
      %v515 = vld [vmem:[%s3 + $0xf8] sm:$0xf]
      %v516 = vld [vmem:[%s3 + $0xfc] sm:$0xf]
      %v517 = vld [vmem:[#allocation2 + $0x20] sm:$0x7]
      %v518 = vld [vmem:[#allocation2 + $0x28] sm:$0x7]
      %v519 = vld [vmem:[#allocation2 + $0x30] sm:$0x7]
      %v520 = vld [vmem:[#allocation2 + $0x38] sm:$0x7]
      %s521 = scalar_lea.vmem %s3, 256
      %v522 = vld [vmem:[%s521] sm:$0xf]
      %v523 = vld [vmem:[%s521 + $0x4] sm:$0xf]
      %v524 = vld [vmem:[%s521 + $0x8] sm:$0xf]
      %v525 = vld [vmem:[%s521 + $0xc] sm:$0xf]
      %v526 = vld [vmem:[%s521 + $0x10] sm:$0xf]
      %v527 = vld [vmem:[%s521 + $0x14] sm:$0xf]
      %v528 = vld [vmem:[%s521 + $0x18] sm:$0xf]
      %v529 = vld [vmem:[%s521 + $0x1c] sm:$0xf]
      %v530 = vld [vmem:[%s521 + $0x20] sm:$0xf]
      %v531 = vld [vmem:[%s521 + $0x24] sm:$0xf]
      %v532 = vld [vmem:[%s521 + $0x28] sm:$0xf]
      %v533 = vld [vmem:[%s521 + $0x2c] sm:$0xf]
      %v534 = vld [vmem:[%s521 + $0x30] sm:$0xf]
      %v535 = vld [vmem:[%s521 + $0x34] sm:$0xf]
      %v536 = vld [vmem:[%s521 + $0x38] sm:$0xf]
      %v537 = vld [vmem:[%s521 + $0x3c] sm:$0xf]
      %v538 = vld [vmem:[%s521 + $0x40] sm:$0xf]
      %v539 = vld [vmem:[%s521 + $0x44] sm:$0xf]
      %v540 = vld [vmem:[%s521 + $0x48] sm:$0xf]
      %v541 = vld [vmem:[%s521 + $0x4c] sm:$0xf]
      %v542 = vld [vmem:[%s521 + $0x50] sm:$0xf]
      %v543 = vld [vmem:[%s521 + $0x54] sm:$0xf]
      %v544 = vld [vmem:[%s521 + $0x58] sm:$0xf]
      %v545 = vld [vmem:[%s521 + $0x5c] sm:$0xf]
      %v546 = vld [vmem:[%s521 + $0x60] sm:$0xf]
      %v547 = vld [vmem:[%s521 + $0x64] sm:$0xf]
      %v548 = vld [vmem:[%s521 + $0x68] sm:$0xf]
      %v549 = vld [vmem:[%s521 + $0x6c] sm:$0xf]
      %v550 = vld [vmem:[%s521 + $0x70] sm:$0xf]
      %v551 = vld [vmem:[%s521 + $0x74] sm:$0xf]
      %v552 = vld [vmem:[%s521 + $0x78] sm:$0xf]
      %v553 = vld [vmem:[%s521 + $0x7c] sm:$0xf]
      %v554 = vld [vmem:[%s521 + $0x80] sm:$0xf]
      %v555 = vld [vmem:[%s521 + $0x84] sm:$0xf]
      %v556 = vld [vmem:[%s521 + $0x88] sm:$0xf]
      %v557 = vld [vmem:[%s521 + $0x8c] sm:$0xf]
      %v558 = vld [vmem:[%s521 + $0x90] sm:$0xf]
      %v559 = vld [vmem:[%s521 + $0x94] sm:$0xf]
      %v560 = vld [vmem:[%s521 + $0x98] sm:$0xf]
      %v561 = vld [vmem:[%s521 + $0x9c] sm:$0xf]
      %v562 = vld [vmem:[%s521 + $0xa0] sm:$0xf]
      %v563 = vld [vmem:[%s521 + $0xa4] sm:$0xf]
      %v564 = vld [vmem:[%s521 + $0xa8] sm:$0xf]
      %v565 = vld [vmem:[%s521 + $0xac] sm:$0xf]
      %v566 = vld [vmem:[%s521 + $0xb0] sm:$0xf]
      %v567 = vld [vmem:[%s521 + $0xb4] sm:$0xf]
      %v568 = vld [vmem:[%s521 + $0xb8] sm:$0xf]
      %v569 = vld [vmem:[%s521 + $0xbc] sm:$0xf]
      %v570 = vld [vmem:[%s521 + $0xc0] sm:$0xf]
      %v571 = vld [vmem:[%s521 + $0xc4] sm:$0xf]
      %v572 = vld [vmem:[%s521 + $0xc8] sm:$0xf]
      %v573 = vld [vmem:[%s521 + $0xcc] sm:$0xf]
      %v574 = vld [vmem:[%s521 + $0xd0] sm:$0xf]
      %v575 = vld [vmem:[%s521 + $0xd4] sm:$0xf]
      %v576 = vld [vmem:[%s521 + $0xd8] sm:$0xf]
      %v577 = vld [vmem:[%s521 + $0xdc] sm:$0xf]
      %v578 = vld [vmem:[%s521 + $0xe0] sm:$0xf]
      %v579 = vld [vmem:[%s521 + $0xe4] sm:$0xf]
      %v580 = vld [vmem:[%s521 + $0xe8] sm:$0xf]
      %v581 = vld [vmem:[%s521 + $0xec] sm:$0xf]
      %v582 = vld [vmem:[%s521 + $0xf0] sm:$0xf]
      %v583 = vld [vmem:[%s521 + $0xf4] sm:$0xf]
      %v584 = vld [vmem:[%s521 + $0xf8] sm:$0xf]
      %v585 = vld [vmem:[%s521 + $0xfc] sm:$0xf]
      %vm586 = vsmask.f32 7424
      %v588 = vshrl.u32 %v445, 16
      %v590 = vshll.u32 %v445, 16
      %v592 = vrot.slane %v590, 1
      %v593 = vor.u32 %v588, %v592
      %v595 = vshll.u32 %v517, 16
      %v597 = vrot.slane %v595, 1
      %v598 = vsel %vm586, %v593, %v597
      %v600 = vshrl.u32 %v446, 16
      %v602 = vshll.u32 %v446, 16
      %v604 = vrot.slane %v602, 1
      %v605 = vor.u32 %v600, %v604
      %v607 = vshll.u32 %v518, 16
      %v609 = vrot.slane %v607, 1
      %v610 = vsel %vm586, %v605, %v609
      %v612 = vshrl.u32 %v447, 16
      %v614 = vshll.u32 %v447, 16
      %v616 = vrot.slane %v614, 1
      %v617 = vor.u32 %v612, %v616
      %v619 = vshll.u32 %v519, 16
      %v621 = vrot.slane %v619, 1
      %v622 = vsel %vm586, %v617, %v621
      %v624 = vshrl.u32 %v448, 16
      %v626 = vshll.u32 %v448, 16
      %v628 = vrot.slane %v626, 1
      %v629 = vor.u32 %v624, %v628
      %v631 = vshll.u32 %v520, 16
      %v633 = vrot.slane %v631, 1
      %v634 = vsel %vm586, %v629, %v633
      %v635 = vshrl.u32 %v517, 16
      %v637 = vor.u32 %v635, %v597
      %v638 = vshrl.u32 %v518, 16
      %v640 = vor.u32 %v638, %v609
      %v641 = vshrl.u32 %v519, 16
      %v643 = vor.u32 %v641, %v621
      %v644 = vshrl.u32 %v520, 16
      %v646 = vor.u32 %v644, %v633
      %v719 = vunpack.c.l.b16 %v522
      %v720 = vunpack.c.l.b16 %v523
      %v721 = vunpack.c.l.b16 %v524
      %v722 = vunpack.c.l.b16 %v525
      %v723 = vunpack.c.l.b16 %v526
      %v724 = vunpack.c.l.b16 %v527
      %v725 = vunpack.c.l.b16 %v528
      %v726 = vunpack.c.l.b16 %v529
      %v727 = vunpack.c.l.b16 %v530
      %v728 = vunpack.c.l.b16 %v531
      %v729 = vunpack.c.l.b16 %v532
      %v730 = vunpack.c.l.b16 %v533
      %v731 = vunpack.c.l.b16 %v534
      %v732 = vunpack.c.l.b16 %v535
      %v733 = vunpack.c.l.b16 %v536
      %v734 = vunpack.c.l.b16 %v537
      %v735 = vunpack.c.l.b16 %v538
      %v736 = vunpack.c.l.b16 %v539
      %v737 = vunpack.c.l.b16 %v540
      %v738 = vunpack.c.l.b16 %v541
      %v739 = vunpack.c.l.b16 %v542
      %v740 = vunpack.c.l.b16 %v543
      %v741 = vunpack.c.l.b16 %v544
      %v742 = vunpack.c.l.b16 %v545
      %v743 = vunpack.c.l.b16 %v546
      %v744 = vunpack.c.l.b16 %v547
      %v745 = vunpack.c.l.b16 %v548
      %v746 = vunpack.c.l.b16 %v549
      %v747 = vunpack.c.l.b16 %v550
      %v748 = vunpack.c.l.b16 %v551
      %v749 = vunpack.c.l.b16 %v552
      %v750 = vunpack.c.l.b16 %v553
      %v751 = vunpack.c.l.b16 %v554
      %v752 = vunpack.c.l.b16 %v555
      %v753 = vunpack.c.l.b16 %v556
      %v754 = vunpack.c.l.b16 %v557
      %v755 = vunpack.c.l.b16 %v558
      %v756 = vunpack.c.l.b16 %v559
      %v757 = vunpack.c.l.b16 %v560
      %v758 = vunpack.c.l.b16 %v561
      %v759 = vunpack.c.l.b16 %v562
      %v760 = vunpack.c.l.b16 %v563
      %v761 = vunpack.c.l.b16 %v564
      %v762 = vunpack.c.l.b16 %v565
      %v763 = vunpack.c.l.b16 %v566
      %v764 = vunpack.c.l.b16 %v567
      %v765 = vunpack.c.l.b16 %v568
      %v766 = vunpack.c.l.b16 %v569
      %v767 = vunpack.c.l.b16 %v570
      %v768 = vunpack.c.l.b16 %v571
      %v769 = vunpack.c.l.b16 %v572
      %v770 = vunpack.c.l.b16 %v573
      %v771 = vunpack.c.l.b16 %v574
      %v772 = vunpack.c.l.b16 %v575
      %v773 = vunpack.c.l.b16 %v576
      %v774 = vunpack.c.l.b16 %v577
      %v775 = vunpack.c.l.b16 %v578
      %v776 = vunpack.c.l.b16 %v579
      %v777 = vunpack.c.l.b16 %v580
      %v778 = vunpack.c.l.b16 %v581
      %v779 = vunpack.c.l.b16 %v582
      %v780 = vunpack.c.l.b16 %v583
      %v781 = vunpack.c.l.b16 %v584
      %v782 = vunpack.c.l.b16 %v585
      %v783 = vpack.c.b16 %v720, %v719
      %v784 = vpack.c.b16 %v722, %v721
      %v785 = vpack.c.b16 %v724, %v723
      %v786 = vpack.c.b16 %v726, %v725
      %v787 = vpack.c.b16 %v728, %v727
      %v788 = vpack.c.b16 %v730, %v729
      %v789 = vpack.c.b16 %v732, %v731
      %v790 = vpack.c.b16 %v734, %v733
      %v791 = vpack.c.b16 %v736, %v735
      %v792 = vpack.c.b16 %v738, %v737
      %v793 = vpack.c.b16 %v740, %v739
      %v794 = vpack.c.b16 %v742, %v741
      %v795 = vpack.c.b16 %v744, %v743
      %v796 = vpack.c.b16 %v746, %v745
      %v797 = vpack.c.b16 %v748, %v747
      %v798 = vpack.c.b16 %v750, %v749
      %v799 = vpack.c.b16 %v752, %v751
      %v800 = vpack.c.b16 %v754, %v753
      %v801 = vpack.c.b16 %v756, %v755
      %v802 = vpack.c.b16 %v758, %v757
      %v803 = vpack.c.b16 %v760, %v759
      %v804 = vpack.c.b16 %v762, %v761
      %v805 = vpack.c.b16 %v764, %v763
      %v806 = vpack.c.b16 %v766, %v765
      %v807 = vpack.c.b16 %v768, %v767
      %v808 = vpack.c.b16 %v770, %v769
      %v809 = vpack.c.b16 %v772, %v771
      %v810 = vpack.c.b16 %v774, %v773
      %v811 = vpack.c.b16 %v776, %v775
      %v812 = vpack.c.b16 %v778, %v777
      %v813 = vpack.c.b16 %v780, %v779
      %v814 = vpack.c.b16 %v782, %v781
      %847 = vmatprep.subr.bf16.mxu0 0
      %848 = vmatpush1.bf16.msra.mxu0 %v783
      %849 = vmatprep.subr.bf16.mxu0 0
      %850 = vmatpush1.bf16.msra.mxu0 %v784
      %851 = vmatprep.subr.bf16.mxu0 0
      %852 = vmatpush1.bf16.msra.mxu0 %v785
      %853 = vmatprep.subr.bf16.mxu0 0
      %854 = vmatpush1.bf16.msra.mxu0 %v786
      %855 = vmatprep.subr.bf16.mxu0 0
      %856 = vmatpush1.bf16.msra.mxu0 %v787
      %857 = vmatprep.subr.bf16.mxu0 0
      %858 = vmatpush1.bf16.msra.mxu0 %v788
      %859 = vmatprep.subr.bf16.mxu0 0
      %860 = vmatpush1.bf16.msra.mxu0 %v789
      %861 = vmatprep.subr.bf16.mxu0 0
      %862 = vmatpush1.bf16.msra.mxu0 %v790
      %863 = vmatprep.subr.bf16.mxu0 0
      %864 = vmatpush1.bf16.msra.mxu0 %v791
      %865 = vmatprep.subr.bf16.mxu0 0
      %866 = vmatpush1.bf16.msra.mxu0 %v792
      %867 = vmatprep.subr.bf16.mxu0 0
      %868 = vmatpush1.bf16.msra.mxu0 %v793
      %869 = vmatprep.subr.bf16.mxu0 0
      %870 = vmatpush1.bf16.msra.mxu0 %v794
      %871 = vmatprep.subr.bf16.mxu0 0
      %872 = vmatpush1.bf16.msra.mxu0 %v795
      %873 = vmatprep.subr.bf16.mxu0 0
      %874 = vmatpush1.bf16.msra.mxu0 %v796
      %875 = vmatprep.subr.bf16.mxu0 0
      %876 = vmatpush1.bf16.msra.mxu0 %v797
      %877 = vmatprep.subr.bf16.mxu0 0
      %878 = vmatpush1.bf16.msra.mxu0 %v798
      %879 = vmatprep.mubr.bf16.mxu0 %v610
      %880 = vmatmul.mubr.bf16.gmra.mrb[0].mxu0 %v598
      %v881 = vpop.f32.mrb[0].mxu0
      %v882 = vadd.f32 0.0, %v881
      %v883 = vpop.f32.mrb[0].mxu0
      %v884 = vpop.f32.mrb[0].mxu0
      %v885 = vadd.f32 0.0, %v884
      %v886 = vpop.f32.mrb[0].mxu0
      %887 = vmatprep.mubr.bf16.mxu0 %v640
      %888 = vmatmul.mubr.bf16.gmra.mrb[0].mxu0 %v637
      %v889 = vpop.f32.mrb[0].mxu0
      %v890 = vadd.f32 0.0, %v889
      %v891 = vpop.f32.mrb[0].mxu0
      %v892 = vpop.f32.mrb[0].mxu0
      %v893 = vpop.f32.mrb[0].mxu0
      %894 = vdwg.mxu0
      %895 = vmatprep.subr.bf16.mxu0 0
      %896 = vmatpush1.bf16.msra.mxu0 %v799
      %897 = vmatprep.subr.bf16.mxu0 0
      %898 = vmatpush1.bf16.msra.mxu0 %v800
      %899 = vmatprep.subr.bf16.mxu0 0
      %900 = vmatpush1.bf16.msra.mxu0 %v801
      %901 = vmatprep.subr.bf16.mxu0 0
      %902 = vmatpush1.bf16.msra.mxu0 %v802
      %903 = vmatprep.subr.bf16.mxu0 0
      %904 = vmatpush1.bf16.msra.mxu0 %v803
      %905 = vmatprep.subr.bf16.mxu0 0
      %906 = vmatpush1.bf16.msra.mxu0 %v804
      %907 = vmatprep.subr.bf16.mxu0 0
      %908 = vmatpush1.bf16.msra.mxu0 %v805
      %909 = vmatprep.subr.bf16.mxu0 0
      %910 = vmatpush1.bf16.msra.mxu0 %v806
      %911 = vmatprep.subr.bf16.mxu0 0
      %912 = vmatpush1.bf16.msra.mxu0 %v807
      %913 = vmatprep.subr.bf16.mxu0 0
      %914 = vmatpush1.bf16.msra.mxu0 %v808
      %915 = vmatprep.subr.bf16.mxu0 0
      %916 = vmatpush1.bf16.msra.mxu0 %v809
      %917 = vmatprep.subr.bf16.mxu0 0
      %918 = vmatpush1.bf16.msra.mxu0 %v810
      %919 = vmatprep.subr.bf16.mxu0 0
      %920 = vmatpush1.bf16.msra.mxu0 %v811
      %921 = vmatprep.subr.bf16.mxu0 0
      %922 = vmatpush1.bf16.msra.mxu0 %v812
      %923 = vmatprep.subr.bf16.mxu0 0
      %924 = vmatpush1.bf16.msra.mxu0 %v813
      %925 = vmatprep.subr.bf16.mxu0 0
      %926 = vmatpush1.bf16.msra.mxu0 %v814
      %927 = vmatprep.mubr.bf16.mxu0 %v634
      %928 = vmatmul.mubr.bf16.gmra.mrb[0].mxu0 %v622
      %v929 = vpop.f32.mrb[0].mxu0
      %v930 = vadd.f32 %v882, %v929
      %v931 = vpop.f32.mrb[0].mxu0
      %v932 = vpop.f32.mrb[0].mxu0
      %v933 = vadd.f32 %v885, %v932
      %v934 = vpop.f32.mrb[0].mxu0
      %935 = vmatprep.mubr.bf16.mxu0 %v646
      %936 = vmatmul.mubr.bf16.gmra.mrb[0].mxu0 %v643
      %v937 = vpop.f32.mrb[0].mxu0
      %v938 = vadd.f32 %v890, %v937
      %v939 = vpop.f32.mrb[0].mxu0
      %v940 = vpop.f32.mrb[0].mxu0
      %v941 = vpop.f32.mrb[0].mxu0
      %942 = vdwg.mxu0
      %v1007 = vunpack.c.l.b16 %v453
      %v1008 = vunpack.c.l.b16 %v454
      %v1009 = vunpack.c.l.b16 %v455
      %v1010 = vunpack.c.l.b16 %v456
      %v1011 = vunpack.c.l.b16 %v457
      %v1012 = vunpack.c.l.b16 %v458
      %v1013 = vunpack.c.l.b16 %v459
      %v1014 = vunpack.c.l.b16 %v460
      %v1015 = vunpack.c.l.b16 %v461
      %v1016 = vunpack.c.l.b16 %v462
      %v1017 = vunpack.c.l.b16 %v463
      %v1018 = vunpack.c.l.b16 %v464
      %v1019 = vunpack.c.l.b16 %v465
      %v1020 = vunpack.c.l.b16 %v466
      %v1021 = vunpack.c.l.b16 %v467
      %v1022 = vunpack.c.l.b16 %v468
      %v1023 = vunpack.c.l.b16 %v469
      %v1024 = vunpack.c.l.b16 %v470
      %v1025 = vunpack.c.l.b16 %v471
      %v1026 = vunpack.c.l.b16 %v472
      %v1027 = vunpack.c.l.b16 %v473
      %v1028 = vunpack.c.l.b16 %v474
      %v1029 = vunpack.c.l.b16 %v475
      %v1030 = vunpack.c.l.b16 %v476
      %v1031 = vunpack.c.l.b16 %v477
      %v1032 = vunpack.c.l.b16 %v478
      %v1033 = vunpack.c.l.b16 %v479
      %v1034 = vunpack.c.l.b16 %v480
      %v1035 = vunpack.c.l.b16 %v481
      %v1036 = vunpack.c.l.b16 %v482
      %v1037 = vunpack.c.l.b16 %v483
      %v1038 = vunpack.c.l.b16 %v484
      %v1039 = vunpack.c.l.b16 %v485
      %v1040 = vunpack.c.l.b16 %v486
      %v1041 = vunpack.c.l.b16 %v487
      %v1042 = vunpack.c.l.b16 %v488
      %v1043 = vunpack.c.l.b16 %v489
      %v1044 = vunpack.c.l.b16 %v490
      %v1045 = vunpack.c.l.b16 %v491
      %v1046 = vunpack.c.l.b16 %v492
      %v1047 = vunpack.c.l.b16 %v493
      %v1048 = vunpack.c.l.b16 %v494
      %v1049 = vunpack.c.l.b16 %v495
      %v1050 = vunpack.c.l.b16 %v496
      %v1051 = vunpack.c.l.b16 %v497
      %v1052 = vunpack.c.l.b16 %v498
      %v1053 = vunpack.c.l.b16 %v499
      %v1054 = vunpack.c.l.b16 %v500
      %v1055 = vunpack.c.l.b16 %v501
      %v1056 = vunpack.c.l.b16 %v502
      %v1057 = vunpack.c.l.b16 %v503
      %v1058 = vunpack.c.l.b16 %v504
      %v1059 = vunpack.c.l.b16 %v505
      %v1060 = vunpack.c.l.b16 %v506
      %v1061 = vunpack.c.l.b16 %v507
      %v1062 = vunpack.c.l.b16 %v508
      %v1063 = vunpack.c.l.b16 %v509
      %v1064 = vunpack.c.l.b16 %v510
      %v1065 = vunpack.c.l.b16 %v511
      %v1066 = vunpack.c.l.b16 %v512
      %v1067 = vunpack.c.l.b16 %v513
      %v1068 = vunpack.c.l.b16 %v514
      %v1069 = vunpack.c.l.b16 %v515
      %v1070 = vunpack.c.l.b16 %v516
      %v1071 = vpack.c.b16 %v1008, %v1007
      %v1072 = vpack.c.b16 %v1010, %v1009
      %v1073 = vpack.c.b16 %v1012, %v1011
      %v1074 = vpack.c.b16 %v1014, %v1013
      %v1075 = vpack.c.b16 %v1016, %v1015
      %v1076 = vpack.c.b16 %v1018, %v1017
      %v1077 = vpack.c.b16 %v1020, %v1019
      %v1078 = vpack.c.b16 %v1022, %v1021
      %v1079 = vpack.c.b16 %v1024, %v1023
      %v1080 = vpack.c.b16 %v1026, %v1025
      %v1081 = vpack.c.b16 %v1028, %v1027
      %v1082 = vpack.c.b16 %v1030, %v1029
      %v1083 = vpack.c.b16 %v1032, %v1031
      %v1084 = vpack.c.b16 %v1034, %v1033
      %v1085 = vpack.c.b16 %v1036, %v1035
      %v1086 = vpack.c.b16 %v1038, %v1037
      %v1087 = vpack.c.b16 %v1040, %v1039
      %v1088 = vpack.c.b16 %v1042, %v1041
      %v1089 = vpack.c.b16 %v1044, %v1043
      %v1090 = vpack.c.b16 %v1046, %v1045
      %v1091 = vpack.c.b16 %v1048, %v1047
      %v1092 = vpack.c.b16 %v1050, %v1049
      %v1093 = vpack.c.b16 %v1052, %v1051
      %v1094 = vpack.c.b16 %v1054, %v1053
      %v1095 = vpack.c.b16 %v1056, %v1055
      %v1096 = vpack.c.b16 %v1058, %v1057
      %v1097 = vpack.c.b16 %v1060, %v1059
      %v1098 = vpack.c.b16 %v1062, %v1061
      %v1099 = vpack.c.b16 %v1064, %v1063
      %v1100 = vpack.c.b16 %v1066, %v1065
      %v1101 = vpack.c.b16 %v1068, %v1067
      %v1102 = vpack.c.b16 %v1070, %v1069
      %1135 = vmatprep.subr.bf16.mxu0 0
      %1136 = vmatpush1.bf16.msra.mxu0 %v1071
      %1137 = vmatprep.subr.bf16.mxu0 0
      %1138 = vmatpush1.bf16.msra.mxu0 %v1072
      %1139 = vmatprep.subr.bf16.mxu0 0
      %1140 = vmatpush1.bf16.msra.mxu0 %v1073
      %1141 = vmatprep.subr.bf16.mxu0 0
      %1142 = vmatpush1.bf16.msra.mxu0 %v1074
      %1143 = vmatprep.subr.bf16.mxu0 0
      %1144 = vmatpush1.bf16.msra.mxu0 %v1075
      %1145 = vmatprep.subr.bf16.mxu0 0
      %1146 = vmatpush1.bf16.msra.mxu0 %v1076
      %1147 = vmatprep.subr.bf16.mxu0 0
      %1148 = vmatpush1.bf16.msra.mxu0 %v1077
      %1149 = vmatprep.subr.bf16.mxu0 0
      %1150 = vmatpush1.bf16.msra.mxu0 %v1078
      %1151 = vmatprep.subr.bf16.mxu0 0
      %1152 = vmatpush1.bf16.msra.mxu0 %v1079
      %1153 = vmatprep.subr.bf16.mxu0 0
      %1154 = vmatpush1.bf16.msra.mxu0 %v1080
      %1155 = vmatprep.subr.bf16.mxu0 0
      %1156 = vmatpush1.bf16.msra.mxu0 %v1081
      %1157 = vmatprep.subr.bf16.mxu0 0
      %1158 = vmatpush1.bf16.msra.mxu0 %v1082
      %1159 = vmatprep.subr.bf16.mxu0 0
      %1160 = vmatpush1.bf16.msra.mxu0 %v1083
      %1161 = vmatprep.subr.bf16.mxu0 0
      %1162 = vmatpush1.bf16.msra.mxu0 %v1084
      %1163 = vmatprep.subr.bf16.mxu0 0
      %1164 = vmatpush1.bf16.msra.mxu0 %v1085
      %1165 = vmatprep.subr.bf16.mxu0 0
      %1166 = vmatpush1.bf16.msra.mxu0 %v1086
      %1167 = vmatprep.mubr.bf16.mxu0 %v446
      %1168 = vmatmul.mubr.bf16.gmra.mrb[0].mxu0 %v445
      %v1169 = vpop.f32.mrb[0].mxu0
      %v1170 = vadd.f32 %v930, %v1169
      %v1171 = vpop.f32.mrb[0].mxu0
      %v1172 = vpop.f32.mrb[0].mxu0
      %v1173 = vadd.f32 %v933, %v1172
      %v1174 = vpop.f32.mrb[0].mxu0
      %1175 = vmatprep.mubr.bf16.mxu0 %v450
      %1176 = vmatmul.mubr.bf16.gmra.mrb[0].mxu0 %v449
      %v1177 = vpop.f32.mrb[0].mxu0
      %v1178 = vadd.f32 %v938, %v1177
      %v1179 = vpop.f32.mrb[0].mxu0
      %v1180 = vpop.f32.mrb[0].mxu0
      %v1181 = vpop.f32.mrb[0].mxu0
      %1182 = vdwg.mxu0
      %1183 = vmatprep.subr.bf16.mxu0 0
      %1184 = vmatpush1.bf16.msra.mxu0 %v1087
      %1185 = vmatprep.subr.bf16.mxu0 0
      %1186 = vmatpush1.bf16.msra.mxu0 %v1088
      %1187 = vmatprep.subr.bf16.mxu0 0
      %1188 = vmatpush1.bf16.msra.mxu0 %v1089
      %1189 = vmatprep.subr.bf16.mxu0 0
      %1190 = vmatpush1.bf16.msra.mxu0 %v1090
      %1191 = vmatprep.subr.bf16.mxu0 0
      %1192 = vmatpush1.bf16.msra.mxu0 %v1091
      %1193 = vmatprep.subr.bf16.mxu0 0
      %1194 = vmatpush1.bf16.msra.mxu0 %v1092
      %1195 = vmatprep.subr.bf16.mxu0 0
      %1196 = vmatpush1.bf16.msra.mxu0 %v1093
      %1197 = vmatprep.subr.bf16.mxu0 0
      %1198 = vmatpush1.bf16.msra.mxu0 %v1094
      %1199 = vmatprep.subr.bf16.mxu0 0
      %1200 = vmatpush1.bf16.msra.mxu0 %v1095
      %1201 = vmatprep.subr.bf16.mxu0 0
      %1202 = vmatpush1.bf16.msra.mxu0 %v1096
      %1203 = vmatprep.subr.bf16.mxu0 0
      %1204 = vmatpush1.bf16.msra.mxu0 %v1097
      %1205 = vmatprep.subr.bf16.mxu0 0
      %1206 = vmatpush1.bf16.msra.mxu0 %v1098
      %1207 = vmatprep.subr.bf16.mxu0 0
      %1208 = vmatpush1.bf16.msra.mxu0 %v1099
      %1209 = vmatprep.subr.bf16.mxu0 0
      %1210 = vmatpush1.bf16.msra.mxu0 %v1100
      %1211 = vmatprep.subr.bf16.mxu0 0
      %1212 = vmatpush1.bf16.msra.mxu0 %v1101
      %1213 = vmatprep.subr.bf16.mxu0 0
      %1214 = vmatpush1.bf16.msra.mxu0 %v1102
      %1215 = vmatprep.mubr.bf16.mxu0 %v448
      %1216 = vmatmul.mubr.bf16.gmra.mrb[0].mxu0 %v447
      %v1217 = vpop.f32.mrb[0].mxu0
      %v1218 = vadd.f32 %v1170, %v1217
      %v1219 = vpop.f32.mrb[0].mxu0
      %v1220 = vpop.f32.mrb[0].mxu0
      %v1221 = vadd.f32 %v1173, %v1220
      %v1222 = vpop.f32.mrb[0].mxu0
      %1223 = vmatprep.mubr.bf16.mxu0 %v452
      %1224 = vmatmul.mubr.bf16.gmra.mrb[0].mxu0 %v451
      %v1225 = vpop.f32.mrb[0].mxu0
      %v1226 = vadd.f32 %v1178, %v1225
      %v1227 = vpop.f32.mrb[0].mxu0
      %v1228 = vpop.f32.mrb[0].mxu0
      %v1229 = vpop.f32.mrb[0].mxu0
      %1230 = vdwg.mxu0
      %v1231 = vld [vmem:[#allocation2] sm:$0xfc]
      %v1232 = vld [vmem:[#allocation2 + $0x8] sm:$0xfc]
      %v1233 = vld [vmem:[#allocation2 + $0x10] sm:$0xfc]
      %v1234 = vld [vmem:[#allocation2 + $0x18] sm:$0xfc]
      %v1235 = vld [vmem:[#allocation2 + $0x20] sm:$0x1f]
      %v1236 = vld [vmem:[#allocation2 + $0x28] sm:$0x1f]
      %v1237 = vld [vmem:[#allocation2 + $0x30] sm:$0x1f]
      %v1238 = vld [vmem:[#allocation2 + $0x38] sm:$0x1f]
      %s1239 = scalar_lea.vmem %s3, 512
      %v1240 = vld [vmem:[%s1239] sm:$0xf]
      %v1241 = vld [vmem:[%s1239 + $0x4] sm:$0xf]
      %v1242 = vld [vmem:[%s1239 + $0x8] sm:$0xf]
      %v1243 = vld [vmem:[%s1239 + $0xc] sm:$0xf]
      %v1244 = vld [vmem:[%s1239 + $0x10] sm:$0xf]
      %v1245 = vld [vmem:[%s1239 + $0x14] sm:$0xf]
      %v1246 = vld [vmem:[%s1239 + $0x18] sm:$0xf]
      %v1247 = vld [vmem:[%s1239 + $0x1c] sm:$0xf]
      %v1248 = vld [vmem:[%s1239 + $0x20] sm:$0xf]
      %v1249 = vld [vmem:[%s1239 + $0x24] sm:$0xf]
      %v1250 = vld [vmem:[%s1239 + $0x28] sm:$0xf]
      %v1251 = vld [vmem:[%s1239 + $0x2c] sm:$0xf]
      %v1252 = vld [vmem:[%s1239 + $0x30] sm:$0xf]
      %v1253 = vld [vmem:[%s1239 + $0x34] sm:$0xf]
      %v1254 = vld [vmem:[%s1239 + $0x38] sm:$0xf]
      %v1255 = vld [vmem:[%s1239 + $0x3c] sm:$0xf]
      %v1256 = vld [vmem:[%s1239 + $0x40] sm:$0xf]
      %v1257 = vld [vmem:[%s1239 + $0x44] sm:$0xf]
      %v1258 = vld [vmem:[%s1239 + $0x48] sm:$0xf]
      %v1259 = vld [vmem:[%s1239 + $0x4c] sm:$0xf]
      %v1260 = vld [vmem:[%s1239 + $0x50] sm:$0xf]
      %v1261 = vld [vmem:[%s1239 + $0x54] sm:$0xf]
      %v1262 = vld [vmem:[%s1239 + $0x58] sm:$0xf]
      %v1263 = vld [vmem:[%s1239 + $0x5c] sm:$0xf]
      %v1264 = vld [vmem:[%s1239 + $0x60] sm:$0xf]
      %v1265 = vld [vmem:[%s1239 + $0x64] sm:$0xf]
      %v1266 = vld [vmem:[%s1239 + $0x68] sm:$0xf]
      %v1267 = vld [vmem:[%s1239 + $0x6c] sm:$0xf]
      %v1268 = vld [vmem:[%s1239 + $0x70] sm:$0xf]
      %v1269 = vld [vmem:[%s1239 + $0x74] sm:$0xf]
      %v1270 = vld [vmem:[%s1239 + $0x78] sm:$0xf]
      %v1271 = vld [vmem:[%s1239 + $0x7c] sm:$0xf]
      %v1272 = vld [vmem:[%s1239 + $0x80] sm:$0xf]
      %v1273 = vld [vmem:[%s1239 + $0x84] sm:$0xf]
      %v1274 = vld [vmem:[%s1239 + $0x88] sm:$0xf]
      %v1275 = vld [vmem:[%s1239 + $0x8c] sm:$0xf]
      %v1276 = vld [vmem:[%s1239 + $0x90] sm:$0xf]
      %v1277 = vld [vmem:[%s1239 + $0x94] sm:$0xf]
      %v1278 = vld [vmem:[%s1239 + $0x98] sm:$0xf]
      %v1279 = vld [vmem:[%s1239 + $0x9c] sm:$0xf]
      %v1280 = vld [vmem:[%s1239 + $0xa0] sm:$0xf]
      %v1281 = vld [vmem:[%s1239 + $0xa4] sm:$0xf]
      %v1282 = vld [vmem:[%s1239 + $0xa8] sm:$0xf]
      %v1283 = vld [vmem:[%s1239 + $0xac] sm:$0xf]
      %v1284 = vld [vmem:[%s1239 + $0xb0] sm:$0xf]
      %v1285 = vld [vmem:[%s1239 + $0xb4] sm:$0xf]
      %v1286 = vld [vmem:[%s1239 + $0xb8] sm:$0xf]
      %v1287 = vld [vmem:[%s1239 + $0xbc] sm:$0xf]
      %v1288 = vld [vmem:[%s1239 + $0xc0] sm:$0xf]
      %v1289 = vld [vmem:[%s1239 + $0xc4] sm:$0xf]
      %v1290 = vld [vmem:[%s1239 + $0xc8] sm:$0xf]
      %v1291 = vld [vmem:[%s1239 + $0xcc] sm:$0xf]
      %v1292 = vld [vmem:[%s1239 + $0xd0] sm:$0xf]
      %v1293 = vld [vmem:[%s1239 + $0xd4] sm:$0xf]
      %v1294 = vld [vmem:[%s1239 + $0xd8] sm:$0xf]
      %v1295 = vld [vmem:[%s1239 + $0xdc] sm:$0xf]
      %v1296 = vld [vmem:[%s1239 + $0xe0] sm:$0xf]
      %v1297 = vld [vmem:[%s1239 + $0xe4] sm:$0xf]
      %v1298 = vld [vmem:[%s1239 + $0xe8] sm:$0xf]
      %v1299 = vld [vmem:[%s1239 + $0xec] sm:$0xf]
      %v1300 = vld [vmem:[%s1239 + $0xf0] sm:$0xf]
      %v1301 = vld [vmem:[%s1239 + $0xf4] sm:$0xf]
      %v1302 = vld [vmem:[%s1239 + $0xf8] sm:$0xf]
      %v1303 = vld [vmem:[%s1239 + $0xfc] sm:$0xf]
      %vm1304 = vsmask.f32 5376
      %v1306 = vshrl.u32 %v1231, 16
      %v1308 = vrot.slane %v1306, 2
      %v1309 = vshll.u32 %v1231, 16
      %v1311 = vrot.slane %v1309, 3
      %v1312 = vor.u32 %v1308, %v1311
      %v1314 = vshrl.u32 %v1235, 16
      %v1316 = vrot.slane %v1314, 2
      %v1317 = vshll.u32 %v1235, 16
      %v1319 = vrot.slane %v1317, 3
      %v1320 = vor.u32 %v1316, %v1319
      %v1321 = vsel %vm1304, %v1312, %v1320
      %v1323 = vshrl.u32 %v1232, 16
      %v1325 = vrot.slane %v1323, 2
      %v1326 = vshll.u32 %v1232, 16
      %v1328 = vrot.slane %v1326, 3
      %v1329 = vor.u32 %v1325, %v1328
      %v1331 = vshrl.u32 %v1236, 16
      %v1333 = vrot.slane %v1331, 2
      %v1334 = vshll.u32 %v1236, 16
      %v1336 = vrot.slane %v1334, 3
      %v1337 = vor.u32 %v1333, %v1336
      %v1338 = vsel %vm1304, %v1329, %v1337
      %v1340 = vshrl.u32 %v1233, 16
      %v1342 = vrot.slane %v1340, 2
      %v1343 = vshll.u32 %v1233, 16
      %v1345 = vrot.slane %v1343, 3
      %v1346 = vor.u32 %v1342, %v1345
      %v1348 = vshrl.u32 %v1237, 16
      %v1350 = vrot.slane %v1348, 2
      %v1351 = vshll.u32 %v1237, 16
      %v1353 = vrot.slane %v1351, 3
      %v1354 = vor.u32 %v1350, %v1353
      %v1355 = vsel %vm1304, %v1346, %v1354
      %v1357 = vshrl.u32 %v1234, 16
      %v1359 = vrot.slane %v1357, 2
      %v1360 = vshll.u32 %v1234, 16
      %v1362 = vrot.slane %v1360, 3
      %v1363 = vor.u32 %v1359, %v1362
      %v1365 = vshrl.u32 %v1238, 16
      %v1367 = vrot.slane %v1365, 2
      %v1368 = vshll.u32 %v1238, 16
      %v1370 = vrot.slane %v1368, 3
      %v1371 = vor.u32 %v1367, %v1370
      %v1372 = vsel %vm1304, %v1363, %v1371
      %v1445 = vunpack.c.l.b16 %v1240
      %v1446 = vunpack.c.l.b16 %v1241
      %v1447 = vunpack.c.l.b16 %v1242
      %v1448 = vunpack.c.l.b16 %v1243
      %v1449 = vunpack.c.l.b16 %v1244
      %v1450 = vunpack.c.l.b16 %v1245
      %v1451 = vunpack.c.l.b16 %v1246
      %v1452 = vunpack.c.l.b16 %v1247
      %v1453 = vunpack.c.l.b16 %v1248
      %v1454 = vunpack.c.l.b16 %v1249
      %v1455 = vunpack.c.l.b16 %v1250
      %v1456 = vunpack.c.l.b16 %v1251
      %v1457 = vunpack.c.l.b16 %v1252
      %v1458 = vunpack.c.l.b16 %v1253
      %v1459 = vunpack.c.l.b16 %v1254
      %v1460 = vunpack.c.l.b16 %v1255
      %v1461 = vunpack.c.l.b16 %v1256
      %v1462 = vunpack.c.l.b16 %v1257
      %v1463 = vunpack.c.l.b16 %v1258
      %v1464 = vunpack.c.l.b16 %v1259
      %v1465 = vunpack.c.l.b16 %v1260
      %v1466 = vunpack.c.l.b16 %v1261
      %v1467 = vunpack.c.l.b16 %v1262
      %v1468 = vunpack.c.l.b16 %v1263
      %v1469 = vunpack.c.l.b16 %v1264
      %v1470 = vunpack.c.l.b16 %v1265
      %v1471 = vunpack.c.l.b16 %v1266
      %v1472 = vunpack.c.l.b16 %v1267
      %v1473 = vunpack.c.l.b16 %v1268
      %v1474 = vunpack.c.l.b16 %v1269
      %v1475 = vunpack.c.l.b16 %v1270
      %v1476 = vunpack.c.l.b16 %v1271
      %v1477 = vunpack.c.l.b16 %v1272
      %v1478 = vunpack.c.l.b16 %v1273
      %v1479 = vunpack.c.l.b16 %v1274
      %v1480 = vunpack.c.l.b16 %v1275
      %v1481 = vunpack.c.l.b16 %v1276
      %v1482 = vunpack.c.l.b16 %v1277
      %v1483 = vunpack.c.l.b16 %v1278
      %v1484 = vunpack.c.l.b16 %v1279
      %v1485 = vunpack.c.l.b16 %v1280
      %v1486 = vunpack.c.l.b16 %v1281
      %v1487 = vunpack.c.l.b16 %v1282
      %v1488 = vunpack.c.l.b16 %v1283
      %v1489 = vunpack.c.l.b16 %v1284
      %v1490 = vunpack.c.l.b16 %v1285
      %v1491 = vunpack.c.l.b16 %v1286
      %v1492 = vunpack.c.l.b16 %v1287
      %v1493 = vunpack.c.l.b16 %v1288
      %v1494 = vunpack.c.l.b16 %v1289
      %v1495 = vunpack.c.l.b16 %v1290
      %v1496 = vunpack.c.l.b16 %v1291
      %v1497 = vunpack.c.l.b16 %v1292
      %v1498 = vunpack.c.l.b16 %v1293
      %v1499 = vunpack.c.l.b16 %v1294
      %v1500 = vunpack.c.l.b16 %v1295
      %v1501 = vunpack.c.l.b16 %v1296
      %v1502 = vunpack.c.l.b16 %v1297
      %v1503 = vunpack.c.l.b16 %v1298
      %v1504 = vunpack.c.l.b16 %v1299
      %v1505 = vunpack.c.l.b16 %v1300
      %v1506 = vunpack.c.l.b16 %v1301
      %v1507 = vunpack.c.l.b16 %v1302
      %v1508 = vunpack.c.l.b16 %v1303
      %v1509 = vpack.c.b16 %v1446, %v1445
      %v1510 = vpack.c.b16 %v1448, %v1447
      %v1511 = vpack.c.b16 %v1450, %v1449
      %v1512 = vpack.c.b16 %v1452, %v1451
      %v1513 = vpack.c.b16 %v1454, %v1453
      %v1514 = vpack.c.b16 %v1456, %v1455
      %v1515 = vpack.c.b16 %v1458, %v1457
      %v1516 = vpack.c.b16 %v1460, %v1459
      %v1517 = vpack.c.b16 %v1462, %v1461
      %v1518 = vpack.c.b16 %v1464, %v1463
      %v1519 = vpack.c.b16 %v1466, %v1465
      %v1520 = vpack.c.b16 %v1468, %v1467
      %v1521 = vpack.c.b16 %v1470, %v1469
      %v1522 = vpack.c.b16 %v1472, %v1471
      %v1523 = vpack.c.b16 %v1474, %v1473
      %v1524 = vpack.c.b16 %v1476, %v1475
      %v1525 = vpack.c.b16 %v1478, %v1477
      %v1526 = vpack.c.b16 %v1480, %v1479
      %v1527 = vpack.c.b16 %v1482, %v1481
      %v1528 = vpack.c.b16 %v1484, %v1483
      %v1529 = vpack.c.b16 %v1486, %v1485
      %v1530 = vpack.c.b16 %v1488, %v1487
      %v1531 = vpack.c.b16 %v1490, %v1489
      %v1532 = vpack.c.b16 %v1492, %v1491
      %v1533 = vpack.c.b16 %v1494, %v1493
      %v1534 = vpack.c.b16 %v1496, %v1495
      %v1535 = vpack.c.b16 %v1498, %v1497
      %v1536 = vpack.c.b16 %v1500, %v1499
      %v1537 = vpack.c.b16 %v1502, %v1501
      %v1538 = vpack.c.b16 %v1504, %v1503
      %v1539 = vpack.c.b16 %v1506, %v1505
      %v1540 = vpack.c.b16 %v1508, %v1507
      %1573 = vmatprep.subr.bf16.mxu0 0
      %1574 = vmatpush1.bf16.msra.mxu0 %v1509
      %1575 = vmatprep.subr.bf16.mxu0 0
      %1576 = vmatpush1.bf16.msra.mxu0 %v1510
      %1577 = vmatprep.subr.bf16.mxu0 0
      %1578 = vmatpush1.bf16.msra.mxu0 %v1511
      %1579 = vmatprep.subr.bf16.mxu0 0
      %1580 = vmatpush1.bf16.msra.mxu0 %v1512
      %1581 = vmatprep.subr.bf16.mxu0 0
      %1582 = vmatpush1.bf16.msra.mxu0 %v1513
      %1583 = vmatprep.subr.bf16.mxu0 0
      %1584 = vmatpush1.bf16.msra.mxu0 %v1514
      %1585 = vmatprep.subr.bf16.mxu0 0
      %1586 = vmatpush1.bf16.msra.mxu0 %v1515
      %1587 = vmatprep.subr.bf16.mxu0 0
      %1588 = vmatpush1.bf16.msra.mxu0 %v1516
      %1589 = vmatprep.subr.bf16.mxu0 0
      %1590 = vmatpush1.bf16.msra.mxu0 %v1517
      %1591 = vmatprep.subr.bf16.mxu0 0
      %1592 = vmatpush1.bf16.msra.mxu0 %v1518
      %1593 = vmatprep.subr.bf16.mxu0 0
      %1594 = vmatpush1.bf16.msra.mxu0 %v1519
      %1595 = vmatprep.subr.bf16.mxu0 0
      %1596 = vmatpush1.bf16.msra.mxu0 %v1520
      %1597 = vmatprep.subr.bf16.mxu0 0
      %1598 = vmatpush1.bf16.msra.mxu0 %v1521
      %1599 = vmatprep.subr.bf16.mxu0 0
      %1600 = vmatpush1.bf16.msra.mxu0 %v1522
      %1601 = vmatprep.subr.bf16.mxu0 0
      %1602 = vmatpush1.bf16.msra.mxu0 %v1523
      %1603 = vmatprep.subr.bf16.mxu0 0
      %1604 = vmatpush1.bf16.msra.mxu0 %v1524
      %1605 = vmatprep.mubr.bf16.mxu0 %v1338
      %1606 = vmatmul.mubr.bf16.gmra.mrb[0].mxu0 %v1321
      %v1607 = vpop.f32.mrb[0].mxu0
      %v1608 = vadd.f32 0.0, %v1607
      %v1609 = vpop.f32.mrb[0].mxu0
      %v1610 = vpop.f32.mrb[0].mxu0
      %v1611 = vadd.f32 0.0, %v1610
      %v1612 = vpop.f32.mrb[0].mxu0
      %1613 = vmatprep.mubr.bf16.mxu0 %v1337
      %1614 = vmatmul.mubr.bf16.gmra.mrb[0].mxu0 %v1320
      %v1615 = vpop.f32.mrb[0].mxu0
      %v1616 = vadd.f32 0.0, %v1615
      %v1617 = vpop.f32.mrb[0].mxu0
      %v1618 = vpop.f32.mrb[0].mxu0
      %v1619 = vpop.f32.mrb[0].mxu0
      %1620 = vdwg.mxu0
      %1621 = vmatprep.subr.bf16.mxu0 0
      %1622 = vmatpush1.bf16.msra.mxu0 %v1525
      %1623 = vmatprep.subr.bf16.mxu0 0
      %1624 = vmatpush1.bf16.msra.mxu0 %v1526
      %1625 = vmatprep.subr.bf16.mxu0 0
      %1626 = vmatpush1.bf16.msra.mxu0 %v1527
      %1627 = vmatprep.subr.bf16.mxu0 0
      %1628 = vmatpush1.bf16.msra.mxu0 %v1528
      %1629 = vmatprep.subr.bf16.mxu0 0
      %1630 = vmatpush1.bf16.msra.mxu0 %v1529
      %1631 = vmatprep.subr.bf16.mxu0 0
      %1632 = vmatpush1.bf16.msra.mxu0 %v1530
      %1633 = vmatprep.subr.bf16.mxu0 0
      %1634 = vmatpush1.bf16.msra.mxu0 %v1531
      %1635 = vmatprep.subr.bf16.mxu0 0
      %1636 = vmatpush1.bf16.msra.mxu0 %v1532
      %1637 = vmatprep.subr.bf16.mxu0 0
      %1638 = vmatpush1.bf16.msra.mxu0 %v1533
      %1639 = vmatprep.subr.bf16.mxu0 0
      %1640 = vmatpush1.bf16.msra.mxu0 %v1534
      %1641 = vmatprep.subr.bf16.mxu0 0
      %1642 = vmatpush1.bf16.msra.mxu0 %v1535
      %1643 = vmatprep.subr.bf16.mxu0 0
      %1644 = vmatpush1.bf16.msra.mxu0 %v1536
      %1645 = vmatprep.subr.bf16.mxu0 0
      %1646 = vmatpush1.bf16.msra.mxu0 %v1537
      %1647 = vmatprep.subr.bf16.mxu0 0
      %1648 = vmatpush1.bf16.msra.mxu0 %v1538
      %1649 = vmatprep.subr.bf16.mxu0 0
      %1650 = vmatpush1.bf16.msra.mxu0 %v1539
      %1651 = vmatprep.subr.bf16.mxu0 0
      %1652 = vmatpush1.bf16.msra.mxu0 %v1540
      %1653 = vmatprep.mubr.bf16.mxu0 %v1372
      %1654 = vmatmul.mubr.bf16.gmra.mrb[0].mxu0 %v1355
      %v1655 = vpop.f32.mrb[0].mxu0
      %v1656 = vadd.f32 %v1608, %v1655
      %v1657 = vpop.f32.mrb[0].mxu0
      %v1658 = vpop.f32.mrb[0].mxu0
      %v1659 = vadd.f32 %v1611, %v1658
      %v1660 = vpop.f32.mrb[0].mxu0
      %1661 = vmatprep.mubr.bf16.mxu0 %v1371
      %1662 = vmatmul.mubr.bf16.gmra.mrb[0].mxu0 %v1354
      %v1663 = vpop.f32.mrb[0].mxu0
      %v1664 = vadd.f32 %v1616, %v1663
      %v1665 = vpop.f32.mrb[0].mxu0
      %v1666 = vpop.f32.mrb[0].mxu0
      %v1667 = vpop.f32.mrb[0].mxu0
      %1668 = vdwg.mxu0
      %v1669 = vadd.f32 %v1218, %v1656
      %v1670 = vadd.f32 %v1221, %v1659
      %v1671 = vadd.f32 %v1226, %v1664
      %v1672 = vld [vmem:[#allocation2] sm:$0xf8]
      %v1673 = vld [vmem:[#allocation2 + $0x8] sm:$0xf8]
      %v1674 = vld [vmem:[#allocation2 + $0x10] sm:$0xf8]
      %v1675 = vld [vmem:[#allocation2 + $0x18] sm:$0xf8]
      %s1676 = scalar_lea.vmem %s3, 768
      %v1677 = vld [vmem:[%s1676] sm:$0xf]
      %v1678 = vld [vmem:[%s1676 + $0x4] sm:$0xf]
      %v1679 = vld [vmem:[%s1676 + $0x8] sm:$0xf]
      %v1680 = vld [vmem:[%s1676 + $0xc] sm:$0xf]
      %v1681 = vld [vmem:[%s1676 + $0x10] sm:$0xf]
      %v1682 = vld [vmem:[%s1676 + $0x14] sm:$0xf]
      %v1683 = vld [vmem:[%s1676 + $0x18] sm:$0xf]
      %v1684 = vld [vmem:[%s1676 + $0x1c] sm:$0xf]
      %v1685 = vld [vmem:[%s1676 + $0x20] sm:$0xf]
      %v1686 = vld [vmem:[%s1676 + $0x24] sm:$0xf]
      %v1687 = vld [vmem:[%s1676 + $0x28] sm:$0xf]
      %v1688 = vld [vmem:[%s1676 + $0x2c] sm:$0xf]
      %v1689 = vld [vmem:[%s1676 + $0x30] sm:$0xf]
      %v1690 = vld [vmem:[%s1676 + $0x34] sm:$0xf]
      %v1691 = vld [vmem:[%s1676 + $0x38] sm:$0xf]
      %v1692 = vld [vmem:[%s1676 + $0x3c] sm:$0xf]
      %v1693 = vld [vmem:[%s1676 + $0x40] sm:$0xf]
      %v1694 = vld [vmem:[%s1676 + $0x44] sm:$0xf]
      %v1695 = vld [vmem:[%s1676 + $0x48] sm:$0xf]
      %v1696 = vld [vmem:[%s1676 + $0x4c] sm:$0xf]
      %v1697 = vld [vmem:[%s1676 + $0x50] sm:$0xf]
      %v1698 = vld [vmem:[%s1676 + $0x54] sm:$0xf]
      %v1699 = vld [vmem:[%s1676 + $0x58] sm:$0xf]
      %v1700 = vld [vmem:[%s1676 + $0x5c] sm:$0xf]
      %v1701 = vld [vmem:[%s1676 + $0x60] sm:$0xf]
      %v1702 = vld [vmem:[%s1676 + $0x64] sm:$0xf]
      %v1703 = vld [vmem:[%s1676 + $0x68] sm:$0xf]
      %v1704 = vld [vmem:[%s1676 + $0x6c] sm:$0xf]
      %v1705 = vld [vmem:[%s1676 + $0x70] sm:$0xf]
      %v1706 = vld [vmem:[%s1676 + $0x74] sm:$0xf]
      %v1707 = vld [vmem:[%s1676 + $0x78] sm:$0xf]
      %v1708 = vld [vmem:[%s1676 + $0x7c] sm:$0xf]
      %v1709 = vld [vmem:[%s1676 + $0x80] sm:$0xf]
      %v1710 = vld [vmem:[%s1676 + $0x84] sm:$0xf]
      %v1711 = vld [vmem:[%s1676 + $0x88] sm:$0xf]
      %v1712 = vld [vmem:[%s1676 + $0x8c] sm:$0xf]
      %v1713 = vld [vmem:[%s1676 + $0x90] sm:$0xf]
      %v1714 = vld [vmem:[%s1676 + $0x94] sm:$0xf]
      %v1715 = vld [vmem:[%s1676 + $0x98] sm:$0xf]
      %v1716 = vld [vmem:[%s1676 + $0x9c] sm:$0xf]
      %v1717 = vld [vmem:[%s1676 + $0xa0] sm:$0xf]
      %v1718 = vld [vmem:[%s1676 + $0xa4] sm:$0xf]
      %v1719 = vld [vmem:[%s1676 + $0xa8] sm:$0xf]
      %v1720 = vld [vmem:[%s1676 + $0xac] sm:$0xf]
      %v1721 = vld [vmem:[%s1676 + $0xb0] sm:$0xf]
      %v1722 = vld [vmem:[%s1676 + $0xb4] sm:$0xf]
      %v1723 = vld [vmem:[%s1676 + $0xb8] sm:$0xf]
      %v1724 = vld [vmem:[%s1676 + $0xbc] sm:$0xf]
      %v1725 = vld [vmem:[%s1676 + $0xc0] sm:$0xf]
      %v1726 = vld [vmem:[%s1676 + $0xc4] sm:$0xf]
      %v1727 = vld [vmem:[%s1676 + $0xc8] sm:$0xf]
      %v1728 = vld [vmem:[%s1676 + $0xcc] sm:$0xf]
      %v1729 = vld [vmem:[%s1676 + $0xd0] sm:$0xf]
      %v1730 = vld [vmem:[%s1676 + $0xd4] sm:$0xf]
      %v1731 = vld [vmem:[%s1676 + $0xd8] sm:$0xf]
      %v1732 = vld [vmem:[%s1676 + $0xdc] sm:$0xf]
      %v1733 = vld [vmem:[%s1676 + $0xe0] sm:$0xf]
      %v1734 = vld [vmem:[%s1676 + $0xe4] sm:$0xf]
      %v1735 = vld [vmem:[%s1676 + $0xe8] sm:$0xf]
      %v1736 = vld [vmem:[%s1676 + $0xec] sm:$0xf]
      %v1737 = vld [vmem:[%s1676 + $0xf0] sm:$0xf]
      %v1738 = vld [vmem:[%s1676 + $0xf4] sm:$0xf]
      %v1739 = vld [vmem:[%s1676 + $0xf8] sm:$0xf]
      %v1740 = vld [vmem:[%s1676 + $0xfc] sm:$0xf]
      %vm1749 = vcmask 1044480
      %v1750 = vrot.slane %v1672, 3
      %v1751 = vrot.slane %v1235, 3
      %v1752 = vsel %vm1749, %v1750, %v1751
      %v1753 = vrot.slane %v1673, 3
      %v1754 = vrot.slane %v1236, 3
      %v1755 = vsel %vm1749, %v1753, %v1754
      %v1756 = vrot.slane %v1674, 3
      %v1757 = vrot.slane %v1237, 3
      %v1758 = vsel %vm1749, %v1756, %v1757
      %v1759 = vrot.slane %v1675, 3
      %v1760 = vrot.slane %v1238, 3
      %v1761 = vsel %vm1749, %v1759, %v1760
      %v1834 = vunpack.c.l.b16 %v1677
      %v1835 = vunpack.c.l.b16 %v1678
      %v1836 = vunpack.c.l.b16 %v1679
      %v1837 = vunpack.c.l.b16 %v1680
      %v1838 = vunpack.c.l.b16 %v1681
      %v1839 = vunpack.c.l.b16 %v1682
      %v1840 = vunpack.c.l.b16 %v1683
      %v1841 = vunpack.c.l.b16 %v1684
      %v1842 = vunpack.c.l.b16 %v1685
      %v1843 = vunpack.c.l.b16 %v1686
      %v1844 = vunpack.c.l.b16 %v1687
      %v1845 = vunpack.c.l.b16 %v1688
      %v1846 = vunpack.c.l.b16 %v1689
      %v1847 = vunpack.c.l.b16 %v1690
      %v1848 = vunpack.c.l.b16 %v1691
      %v1849 = vunpack.c.l.b16 %v1692
      %v1850 = vunpack.c.l.b16 %v1693
      %v1851 = vunpack.c.l.b16 %v1694
      %v1852 = vunpack.c.l.b16 %v1695
      %v1853 = vunpack.c.l.b16 %v1696
      %v1854 = vunpack.c.l.b16 %v1697
      %v1855 = vunpack.c.l.b16 %v1698
      %v1856 = vunpack.c.l.b16 %v1699
      %v1857 = vunpack.c.l.b16 %v1700
      %v1858 = vunpack.c.l.b16 %v1701
      %v1859 = vunpack.c.l.b16 %v1702
      %v1860 = vunpack.c.l.b16 %v1703
      %v1861 = vunpack.c.l.b16 %v1704
      %v1862 = vunpack.c.l.b16 %v1705
      %v1863 = vunpack.c.l.b16 %v1706
      %v1864 = vunpack.c.l.b16 %v1707
      %v1865 = vunpack.c.l.b16 %v1708
      %v1866 = vunpack.c.l.b16 %v1709
      %v1867 = vunpack.c.l.b16 %v1710
      %v1868 = vunpack.c.l.b16 %v1711
      %v1869 = vunpack.c.l.b16 %v1712
      %v1870 = vunpack.c.l.b16 %v1713
      %v1871 = vunpack.c.l.b16 %v1714
      %v1872 = vunpack.c.l.b16 %v1715
      %v1873 = vunpack.c.l.b16 %v1716
      %v1874 = vunpack.c.l.b16 %v1717
      %v1875 = vunpack.c.l.b16 %v1718
      %v1876 = vunpack.c.l.b16 %v1719
      %v1877 = vunpack.c.l.b16 %v1720
      %v1878 = vunpack.c.l.b16 %v1721
      %v1879 = vunpack.c.l.b16 %v1722
      %v1880 = vunpack.c.l.b16 %v1723
      %v1881 = vunpack.c.l.b16 %v1724
      %v1882 = vunpack.c.l.b16 %v1725
      %v1883 = vunpack.c.l.b16 %v1726
      %v1884 = vunpack.c.l.b16 %v1727
      %v1885 = vunpack.c.l.b16 %v1728
      %v1886 = vunpack.c.l.b16 %v1729
      %v1887 = vunpack.c.l.b16 %v1730
      %v1888 = vunpack.c.l.b16 %v1731
      %v1889 = vunpack.c.l.b16 %v1732
      %v1890 = vunpack.c.l.b16 %v1733
      %v1891 = vunpack.c.l.b16 %v1734
      %v1892 = vunpack.c.l.b16 %v1735
      %v1893 = vunpack.c.l.b16 %v1736
      %v1894 = vunpack.c.l.b16 %v1737
      %v1895 = vunpack.c.l.b16 %v1738
      %v1896 = vunpack.c.l.b16 %v1739
      %v1897 = vunpack.c.l.b16 %v1740
      %v1898 = vpack.c.b16 %v1835, %v1834
      %v1899 = vpack.c.b16 %v1837, %v1836
      %v1900 = vpack.c.b16 %v1839, %v1838
      %v1901 = vpack.c.b16 %v1841, %v1840
      %v1902 = vpack.c.b16 %v1843, %v1842
      %v1903 = vpack.c.b16 %v1845, %v1844
      %v1904 = vpack.c.b16 %v1847, %v1846
      %v1905 = vpack.c.b16 %v1849, %v1848
      %v1906 = vpack.c.b16 %v1851, %v1850
      %v1907 = vpack.c.b16 %v1853, %v1852
      %v1908 = vpack.c.b16 %v1855, %v1854
      %v1909 = vpack.c.b16 %v1857, %v1856
      %v1910 = vpack.c.b16 %v1859, %v1858
      %v1911 = vpack.c.b16 %v1861, %v1860
      %v1912 = vpack.c.b16 %v1863, %v1862
      %v1913 = vpack.c.b16 %v1865, %v1864
      %v1914 = vpack.c.b16 %v1867, %v1866
      %v1915 = vpack.c.b16 %v1869, %v1868
      %v1916 = vpack.c.b16 %v1871, %v1870
      %v1917 = vpack.c.b16 %v1873, %v1872
      %v1918 = vpack.c.b16 %v1875, %v1874
      %v1919 = vpack.c.b16 %v1877, %v1876
      %v1920 = vpack.c.b16 %v1879, %v1878
      %v1921 = vpack.c.b16 %v1881, %v1880
      %v1922 = vpack.c.b16 %v1883, %v1882
      %v1923 = vpack.c.b16 %v1885, %v1884
      %v1924 = vpack.c.b16 %v1887, %v1886
      %v1925 = vpack.c.b16 %v1889, %v1888
      %v1926 = vpack.c.b16 %v1891, %v1890
      %v1927 = vpack.c.b16 %v1893, %v1892
      %v1928 = vpack.c.b16 %v1895, %v1894
      %v1929 = vpack.c.b16 %v1897, %v1896
      %1962 = vmatprep.subr.bf16.mxu0 0
      %1963 = vmatpush1.bf16.msra.mxu0 %v1898
      %1964 = vmatprep.subr.bf16.mxu0 0
      %1965 = vmatpush1.bf16.msra.mxu0 %v1899
      %1966 = vmatprep.subr.bf16.mxu0 0
      %1967 = vmatpush1.bf16.msra.mxu0 %v1900
      %1968 = vmatprep.subr.bf16.mxu0 0
      %1969 = vmatpush1.bf16.msra.mxu0 %v1901
      %1970 = vmatprep.subr.bf16.mxu0 0
      %1971 = vmatpush1.bf16.msra.mxu0 %v1902
      %1972 = vmatprep.subr.bf16.mxu0 0
      %1973 = vmatpush1.bf16.msra.mxu0 %v1903
      %1974 = vmatprep.subr.bf16.mxu0 0
      %1975 = vmatpush1.bf16.msra.mxu0 %v1904
      %1976 = vmatprep.subr.bf16.mxu0 0
      %1977 = vmatpush1.bf16.msra.mxu0 %v1905
      %1978 = vmatprep.subr.bf16.mxu0 0
      %1979 = vmatpush1.bf16.msra.mxu0 %v1906
      %1980 = vmatprep.subr.bf16.mxu0 0
      %1981 = vmatpush1.bf16.msra.mxu0 %v1907
      %1982 = vmatprep.subr.bf16.mxu0 0
      %1983 = vmatpush1.bf16.msra.mxu0 %v1908
      %1984 = vmatprep.subr.bf16.mxu0 0
      %1985 = vmatpush1.bf16.msra.mxu0 %v1909
      %1986 = vmatprep.subr.bf16.mxu0 0
      %1987 = vmatpush1.bf16.msra.mxu0 %v1910
      %1988 = vmatprep.subr.bf16.mxu0 0
      %1989 = vmatpush1.bf16.msra.mxu0 %v1911
      %1990 = vmatprep.subr.bf16.mxu0 0
      %1991 = vmatpush1.bf16.msra.mxu0 %v1912
      %1992 = vmatprep.subr.bf16.mxu0 0
      %1993 = vmatpush1.bf16.msra.mxu0 %v1913
      %1994 = vmatprep.mubr.bf16.mxu0 %v1755
      %1995 = vmatmul.mubr.bf16.gmra.mrb[0].mxu0 %v1752
      %v1996 = vpop.f32.mrb[0].mxu0
      %v1997 = vadd.f32 0.0, %v1996
      %v1998 = vpop.f32.mrb[0].mxu0
      %v1999 = vpop.f32.mrb[0].mxu0
      %v2000 = vadd.f32 0.0, %v1999
      %v2001 = vpop.f32.mrb[0].mxu0
      %2002 = vmatprep.mubr.bf16.mxu0 %v1754
      %2003 = vmatmul.mubr.bf16.gmra.mrb[0].mxu0 %v1751
      %v2004 = vpop.f32.mrb[0].mxu0
      %v2005 = vadd.f32 0.0, %v2004
      %v2006 = vpop.f32.mrb[0].mxu0
      %v2007 = vpop.f32.mrb[0].mxu0
      %v2008 = vpop.f32.mrb[0].mxu0
      %2009 = vdwg.mxu0
      %2010 = vmatprep.subr.bf16.mxu0 0
      %2011 = vmatpush1.bf16.msra.mxu0 %v1914
      %2012 = vmatprep.subr.bf16.mxu0 0
      %2013 = vmatpush1.bf16.msra.mxu0 %v1915
      %2014 = vmatprep.subr.bf16.mxu0 0
      %2015 = vmatpush1.bf16.msra.mxu0 %v1916
      %2016 = vmatprep.subr.bf16.mxu0 0
      %2017 = vmatpush1.bf16.msra.mxu0 %v1917
      %2018 = vmatprep.subr.bf16.mxu0 0
      %2019 = vmatpush1.bf16.msra.mxu0 %v1918
      %2020 = vmatprep.subr.bf16.mxu0 0
      %2021 = vmatpush1.bf16.msra.mxu0 %v1919
      %2022 = vmatprep.subr.bf16.mxu0 0
      %2023 = vmatpush1.bf16.msra.mxu0 %v1920
      %2024 = vmatprep.subr.bf16.mxu0 0
      %2025 = vmatpush1.bf16.msra.mxu0 %v1921
      %2026 = vmatprep.subr.bf16.mxu0 0
      %2027 = vmatpush1.bf16.msra.mxu0 %v1922
      %2028 = vmatprep.subr.bf16.mxu0 0
      %2029 = vmatpush1.bf16.msra.mxu0 %v1923
      %2030 = vmatprep.subr.bf16.mxu0 0
      %2031 = vmatpush1.bf16.msra.mxu0 %v1924
      %2032 = vmatprep.subr.bf16.mxu0 0
      %2033 = vmatpush1.bf16.msra.mxu0 %v1925
      %2034 = vmatprep.subr.bf16.mxu0 0
      %2035 = vmatpush1.bf16.msra.mxu0 %v1926
      %2036 = vmatprep.subr.bf16.mxu0 0
      %2037 = vmatpush1.bf16.msra.mxu0 %v1927
      %2038 = vmatprep.subr.bf16.mxu0 0
      %2039 = vmatpush1.bf16.msra.mxu0 %v1928
      %2040 = vmatprep.subr.bf16.mxu0 0
      %2041 = vmatpush1.bf16.msra.mxu0 %v1929
      %2042 = vmatprep.mubr.bf16.mxu0 %v1761
      %2043 = vmatmul.mubr.bf16.gmra.mrb[0].mxu0 %v1758
      %v2044 = vpop.f32.mrb[0].mxu0
      %v2045 = vadd.f32 %v1997, %v2044
      %v2046 = vpop.f32.mrb[0].mxu0
      %v2047 = vpop.f32.mrb[0].mxu0
      %v2048 = vadd.f32 %v2000, %v2047
      %v2049 = vpop.f32.mrb[0].mxu0
      %2050 = vmatprep.mubr.bf16.mxu0 %v1760
      %2051 = vmatmul.mubr.bf16.gmra.mrb[0].mxu0 %v1757
      %v2052 = vpop.f32.mrb[0].mxu0
      %v2053 = vadd.f32 %v2005, %v2052
      %v2054 = vpop.f32.mrb[0].mxu0
      %v2055 = vpop.f32.mrb[0].mxu0
      %v2056 = vpop.f32.mrb[0].mxu0
      %2057 = vdwg.mxu0
      %v2058 = vadd.f32 %v1669, %v2045
      %v2059 = vadd.f32 %v1670, %v2048
      %v2060 = vadd.f32 %v1671, %v2053
      %v2061 = vld [vmem:[%s4] sm:$0x1]
      %v2063 = vlaneseq
      %v2064 = vshrl.u32 %v2063, 7
      %v2065 = vsub.s32 0, %v2064
      %v2066 = vrot.slane %v2061, %v2065
      %v2068 = vadd.f32 %v2058, %v2066
      %v2069 = vadd.f32 %v2059, %v2066
      %v2070 = vadd.f32 %v2060, %v2066
      %v2071 = vlaneseq
      %v2072 = vshrl.u32 %v2071, 7
      %v2073 = vadd.s32 %v2072, 8
      %v2074 = vadd.s32 %v2072, 16
      %vm2075 = vcmp.lt.s32.totalorder %v2072, 0
      %v2076 = vsub.s32 0, %v2072
      %v2077 = vsel %vm2075, %v2076, %v2072
      %v2078 = vmul.u32.u64.compose %v2077, 3435973837
      %v2079 = vextract.low.u32 %v2078
      %v2080 = vextract.high.u32 %v2078
      %v2081 = vshrl.u32 %v2080, 2
      %v2082 = vmul.u32 %v2081, 5
      %v2083 = vsub.s32 %v2077, %v2082
      %v2084 = vsub.s32 0, %v2083
      %v2085 = vsel %vm2075, %v2084, %v2083
      %vm2086 = vcmp.lt.s32.totalorder %v2073, 0
      %v2087 = vsub.s32 0, %v2073
      %v2088 = vsel %vm2086, %v2087, %v2073
      %v2089 = vmul.u32.u64.compose %v2088, 3435973837
      %v2090 = vextract.low.u32 %v2089
      %v2091 = vextract.high.u32 %v2089
      %v2092 = vshrl.u32 %v2091, 2
      %v2093 = vmul.u32 %v2092, 5
      %v2094 = vsub.s32 %v2088, %v2093
      %v2095 = vsub.s32 0, %v2094
      %v2096 = vsel %vm2086, %v2095, %v2094
      %vm2097 = vcmp.lt.s32.totalorder %v2074, 0
      %v2098 = vsub.s32 0, %v2074
      %v2099 = vsel %vm2097, %v2098, %v2074
      %v2100 = vmul.u32.u64.compose %v2099, 3435973837
      %v2101 = vextract.low.u32 %v2100
      %v2102 = vextract.high.u32 %v2100
      %v2103 = vshrl.u32 %v2102, 2
      %v2104 = vmul.u32 %v2103, 5
      %v2105 = vsub.s32 %v2099, %v2104
      %v2106 = vsub.s32 0, %v2105
      %v2107 = vsel %vm2097, %v2106, %v2105
      %vm2108 = vcmp.ne.s32.totalorder %v2085, 0
      %vm2109 = vcmp.ne.s32.totalorder %v2096, 0
      %vm2110 = vcmp.ne.s32.totalorder %v2107, 0
      %vm2111 = vcmp.lt.s32.totalorder %v2085, 0
      %vm2112 = vcmp.lt.s32.totalorder %v2096, 0
      %vm2113 = vcmp.lt.s32.totalorder %v2107, 0
      %vm2114 = vmand %vm2111, %vm2108
      %vm2115 = vmand %vm2112, %vm2109
      %vm2116 = vmand %vm2113, %vm2110
      %v2117 = vadd.s32 %v2085, 5
      %v2118 = vadd.s32 %v2096, 5
      %v2119 = vadd.s32 %v2107, 5
      %v2120 = vsel %vm2114, %v2117, %v2085
      %v2121 = vsel %vm2115, %v2118, %v2096
      %v2122 = vsel %vm2116, %v2119, %v2107
      %vm2123 = vcmp.lt.s32.totalorder %v2120, 4
      %vm2124 = vcmp.lt.s32.totalorder %v2121, 4
      %vm2125 = vcmp.lt.s32.totalorder %v2122, 4
      %v2126 = vsel %vm2123, 1, 0
      %v2127 = vsel %vm2124, 1, 0
      %v2128 = vsel %vm2125, 1, 0
      %vm2129 = vcmp.eq.s32.totalorder %v2126, 1
      %vm2130 = vcmp.eq.s32.totalorder %v2127, 1
      %vm2131 = vcmp.eq.s32.totalorder %v2128, 1
      %v2132 = vsel %vm2129, %v2068, 0.0
      %v2133 = vsel %vm2130, %v2069, 0.0
      %v2134 = vsel %vm2131, %v2070, 0.0
      %v2135 = vadd.f32 %v2132, %v2133
      %vm2136 = vcmask 1043456
      %v2137 = vsel %vm2136, %v2134, 0.0
      %v2138 = vadd.f32 %v2135, %v2137
      %v2139 = vrot.slane %v2138, 4
      %v2140 = vadd.f32 %v2138, %v2139
      %v2141 = vrot.slane %v2140, 2
      %v2142 = vadd.f32 %v2140, %v2141
      %v2143 = vrot.slane %v2142, 1
      %v2144 = vadd.f32 %v2142, %v2143
      %2145 = vst [vmem:[%s292] sm:$0x1] %v2144
      %v2146 = vmul.f32 %v2132, %v2068
      %v2147 = vmul.f32 %v2133, %v2069
      %v2148 = vmul.f32 %v2134, %v2070
      %v2149 = vadd.f32 %v2146, %v2147
      %v2150 = vsel %vm2136, %v2148, 0.0
      %v2151 = vadd.f32 %v2149, %v2150
      %v2152 = vrot.slane %v2151, 4
      %v2153 = vadd.f32 %v2151, %v2152
      %v2154 = vrot.slane %v2153, 2
      %v2155 = vadd.f32 %v2153, %v2154
      %v2156 = vrot.slane %v2155, 1
      %v2157 = vadd.f32 %v2155, %v2156
      %2158 = vst [vmem:[%s295] sm:$0x1] %v2157
      %v2159 = vpack.c.bf16 %v2069, %v2068
      %v2160 = vpack.c.bf16 %v2070, %v2070
      %v2163 = vunpack.c.l.b16 %v2159
      %v2164 = vunpack.c.h.b16 %v2159
      %v2165 = vunpack.c.l.b16 %v2160
      %v2166 = vpack.c.b16 %v2163, %v2163
      %v2167 = vpack.c.b16 %v2164, %v2164
      %v2168 = vpack.c.b16 %v2165, %v2165
      %2172 = vst [vmem:[%s289] sm:$0xf] %v2166
      %2173 = vst [vmem:[%s289 + $0x4] sm:$0xf] %v2167
      %2174 = vst [vmem:[%s289 + $0x8] sm:$0x3] %v2168
      %p2175 = scmp.lt.s32.totalorder %s19, 1
      %s2176 = scalar_select %p2175, %s19, 1
      %s2177 = smul.addr %s2176, 3
      %s2178 = smul.addr %s2177, 4
      %s2179 = scalar_lea.vmem %s5, %s2178
      %p2180 = scmp.lt.s32.totalorder %s19, 1
      %s2181 = scalar_select %p2180, %s19, 1
      %s2182 = scalar_lea.vmem %s6, %s2181
      %p2183 = scmp.lt.s32.totalorder %s19, 1
      %s2184 = scalar_select %p2183, %s19, 1
      %s2185 = scalar_lea.vmem %s7, %s2184
      // Predicated region
      $region41: #{_lambda_.7} parent=39 // pred_check
        %p2186 = pneg %p147
      $region42: #{_lambda_.7} parent=39 // pred_check_branch
        %2188 = sbr.rel (%p2186) target = $region44
      $region43: #{_lambda_.7} parent=39 // pred_region
        _
      $region44: #{_lambda_.7} parent=39 // pred_fallthru
        _
      // Predicated region
      $region45: #{_lambda_.7} parent=39 // pred_check
        %p2189 = pneg %p173
      $region46: #{_lambda_.7} parent=39 // pred_check_branch
        %2191 = sbr.rel (%p2189) target = $region48
      $region47: #{_lambda_.7} parent=39 // pred_region
        _
      $region48: #{_lambda_.7} parent=39 // pred_fallthru
        _
      // Predicated region
      $region49: #{_lambda_.7} parent=39 // pred_check
        %p2192 = pneg %p199
      $region50: #{_lambda_.7} parent=39 // pred_check_branch
        %2194 = sbr.rel (%p2192) target = $region52
      $region51: #{_lambda_.7} parent=39 // pred_region
        _
      $region52: #{_lambda_.7} parent=39 // pred_fallthru
        _
    $region40: #{_lambda_.7} parent=5 // pred_fallthru
      _
    %p2195 = scmp.le.s32.totalorder 2, %s14
    // Predicated region
    $region53: #{_lambda_.7} parent=5 // pred_check
      %p2196 = pneg %p2195
    $region54: #{_lambda_.7} parent=5 // pred_check_branch
      %2198 = sbr.rel (%p2196) target = $region56
    $region55: #{_lambda_.7} parent=5 // pred_region
      %s2199 = ssub.s32 %s14, 2
      // Predicated region
      $region57: #{_lambda_.7} parent=55 // pred_check
        %p2200 = pneg %p153
      $region58: #{_lambda_.7} parent=55 // pred_check_branch
        %2202 = sbr.rel (%p2200) target = $region60
      $region59: #{_lambda_.7} parent=55 // pred_region
        %p2203 = scmp.lt.s32.totalorder %s20, 1
        %s2204 = scalar_select %p2203, %s20, 1
        %s2205 = smul.addr %s2204, 3
        %s2206 = smul.addr %s2205, 4
        %s2207 = scalar_lea.vmem %s5, %s2206
      $region60: #{_lambda_.7} parent=55 // pred_fallthru
        _
      // Predicated region
      $region61: #{_lambda_.7} parent=55 // pred_check
        %p2208 = pneg %p179
      $region62: #{_lambda_.7} parent=55 // pred_check_branch
        %2210 = sbr.rel (%p2208) target = $region64
      $region63: #{_lambda_.7} parent=55 // pred_region
        %p2211 = scmp.lt.s32.totalorder %s20, 1
        %s2212 = scalar_select %p2211, %s20, 1
        %s2213 = scalar_lea.vmem %s6, %s2212
      $region64: #{_lambda_.7} parent=55 // pred_fallthru
        _
      // Predicated region
      $region65: #{_lambda_.7} parent=55 // pred_check
        %p2214 = pneg %p205
      $region66: #{_lambda_.7} parent=55 // pred_check_branch
        %2216 = sbr.rel (%p2214) target = $region68
      $region67: #{_lambda_.7} parent=55 // pred_region
        %p2217 = scmp.lt.s32.totalorder %s20, 1
        %s2218 = scalar_select %p2217, %s20, 1
        %s2219 = scalar_lea.vmem %s7, %s2218
      $region68: #{_lambda_.7} parent=55 // pred_fallthru
        _
    $region56: #{_lambda_.7} parent=5 // pred_fallthru
      _
  $region6: #{_lambda_.7} parent=0 // loop_footer
    %s18 = sadd.s32 1, %s14
  $region7: #{_lambda_.7} parent=0 // loop_footer_branch
    %13 = sbr.rel target = $region3
  $region8: #{_lambda_.7} parent=0 // loop_exit
    _

// kernel: _lambda_.8
$region0: #{_lambda_.8}
  #allocation0 [shape = 'u32[]', space=smem, size = 0x4, offset = 0x4, fixed_abs, tag = 'smem constant byte address 0x4 - core index']
  #allocation1 [shape = 'u32[144,128]{1,0:T(1,128)}', space=vmem, size = 0x12000, scoped, tag = 'internal scratch']
  #allocation2 [shape = 'bf16[40,128]{1,0:T(8,128)(2,1)}', space=vmem, size = 0x2800, scoped, tag = 'scratch operand']
  %s0 = inlined_call_operand.vmem [shape: f32[1,128], index: 0, kind: input, shape index: {}]
  %s1 = inlined_call_operand.vmem [shape: f32[1,128], index: 1, kind: input, shape index: {}]
  %s2 = inlined_call_operand.vmem [shape: bf16[2,40,128], index: 2, kind: input, shape index: {}]
  %s3 = inlined_call_operand.vmem [shape: bf16[16,128,128], index: 3, kind: input, shape index: {}]
  %s4 = inlined_call_operand.vmem [shape: f32[1,128], index: 4, kind: input, shape index: {}]
  %s5 = inlined_call_operand.vmem [shape: bf16[2,18,128], index: 5, kind: output, shape index: {0}]
  %s6 = inlined_call_operand.vmem [shape: f32[2,1,128], index: 6, kind: output, shape index: {1}]
  %s7 = inlined_call_operand.vmem [shape: f32[2,1,128], index: 7, kind: output, shape index: {2}]
  %8 = xla_tuple %s5, %s6, %s7
  %s9 = sld [smem:[#allocation0]]
  $region69: #{_lambda_.8} parent=0
    _
  %s11 = ssub.s32 1, %s9
  %s12 = scalar_select 0, %s11, %s9
  loop: start=0, step=1, limit=4
  $region2: #{_lambda_.8} parent=0 // loop_pre_header
    _
  $region3: #{_lambda_.8} parent=0 // loop_header
    %s14 = sphi 0, %s18
    %p15 = scmp.ge.s32.totalorder %s14, 4
    %s22 = sphi 0, %s22
    %s24 = sphi 0, %s22
    %s25 = sphi 0, %s24
    %s39 = sphi 0, %s25
    %s43 = sphi 0, %s43
    %s45 = sphi 0, %s43
    %s46 = sphi 0, %s45
    %s60 = sphi 0, %s46
    %s66 = sphi 0, %s68
    %s69 = sphi 0, %s66
    %s70 = sphi 0, %s69
    %s86 = sphi 0, %s70
    %s90 = sphi 0, %s90
    %s92 = sphi 0, %s90
    %s93 = sphi 0, %s92
    %s107 = sphi 0, %s93
    %s111 = sphi 0, %s111
    %s113 = sphi 0, %s111
    %s114 = sphi 0, %s113
    %s128 = sphi 0, %s114
    %s134 = sphi 0, %s136
    %s137 = sphi 0, %s134
    %s138 = sphi 0, %s137
    %s154 = sphi 0, %s138
    %s160 = sphi 0, %s162
    %s163 = sphi 0, %s160
    %s164 = sphi 0, %s163
    %s180 = sphi 0, %s164
    %s186 = sphi 0, %s188
    %s189 = sphi 0, %s186
    %s190 = sphi 0, %s189
    %s206 = sphi 0, %s190
  $region4: #{_lambda_.8} parent=0 // loop_header_branch
    %17 = sbr.rel (%p15) target = $region8
  $region5: #{_lambda_.8} parent=0 // loop_body
    %s19 = ssub.s32 %s14, 1
    %s20 = ssub.s32 %s14, 2
    %s21 = sadd.s32 %s14, 1
    %s23 = sadd.s32 %s22, 1
    %p26 = scmp.eq.s32.totalorder %s14, 1
    %p27 = scmp.ne.s32.totalorder %s22, %s24
    %p28 = scmp.eq.s32.totalorder %s14, 0
    %p29 = por %p27, %p28
    %p30 = scmp.ne.s32.totalorder %s22, %s24
    %p31 = scmp.eq.s32.totalorder %s19, 1
    %p32 = por %p30, %p31
    %p33 = scmp.ne.s32.totalorder %s24, %s25
    %p34 = scmp.eq.s32.totalorder %s19, 0
    %p35 = por %p33, %p34
    %p36 = scmp.ne.s32.totalorder %s24, %s25
    %p37 = scmp.eq.s32.totalorder %s20, 1
    %p38 = por %p36, %p37
    %p40 = scmp.ne.s32.totalorder %s25, %s39
    %p41 = scmp.eq.s32.totalorder %s20, 0
    %p42 = por %p40, %p41
    %s44 = sadd.s32 %s43, 1
    %p47 = scmp.eq.s32.totalorder %s14, 1
    %p48 = scmp.ne.s32.totalorder %s43, %s45
    %p49 = scmp.eq.s32.totalorder %s14, 0
    %p50 = por %p48, %p49
    %p51 = scmp.ne.s32.totalorder %s43, %s45
    %p52 = scmp.eq.s32.totalorder %s19, 1
    %p53 = por %p51, %p52
    %p54 = scmp.ne.s32.totalorder %s45, %s46
    %p55 = scmp.eq.s32.totalorder %s19, 0
    %p56 = por %p54, %p55
    %p57 = scmp.ne.s32.totalorder %s45, %s46
    %p58 = scmp.eq.s32.totalorder %s20, 1
    %p59 = por %p57, %p58
    %p61 = scmp.ne.s32.totalorder %s46, %s60
    %p62 = scmp.eq.s32.totalorder %s20, 0
    %p63 = por %p61, %p62
    %s64 = ssub.s32 %s14, %s21
    %p65 = scmp.eq.s32.totalorder %s64, 0
    %s67 = sadd.s32 %s66, 1
    %s68 = scalar_select %p65, %s66, %s67
    %p71 = pneg %p65
    %p72 = scmp.eq.s32.totalorder %s14, 1
    %p73 = por %p71, %p72
    %p74 = scmp.ne.s32.totalorder %s66, %s69
    %p75 = scmp.eq.s32.totalorder %s14, 0
    %p76 = por %p74, %p75
    %p77 = scmp.ne.s32.totalorder %s66, %s69
    %p78 = scmp.eq.s32.totalorder %s19, 1
    %p79 = por %p77, %p78
    %p80 = scmp.ne.s32.totalorder %s69, %s70
    %p81 = scmp.eq.s32.totalorder %s19, 0
    %p82 = por %p80, %p81
    %p83 = scmp.ne.s32.totalorder %s69, %s70
    %p84 = scmp.eq.s32.totalorder %s20, 1
    %p85 = por %p83, %p84
    %p87 = scmp.ne.s32.totalorder %s70, %s86
    %p88 = scmp.eq.s32.totalorder %s20, 0
    %p89 = por %p87, %p88
    %s91 = sadd.s32 %s90, 1
    %p94 = scmp.eq.s32.totalorder %s14, 1
    %p95 = scmp.ne.s32.totalorder %s90, %s92
    %p96 = scmp.eq.s32.totalorder %s14, 0
    %p97 = por %p95, %p96
    %p98 = scmp.ne.s32.totalorder %s90, %s92
    %p99 = scmp.eq.s32.totalorder %s19, 1
    %p100 = por %p98, %p99
    %p101 = scmp.ne.s32.totalorder %s92, %s93
    %p102 = scmp.eq.s32.totalorder %s19, 0
    %p103 = por %p101, %p102
    %p104 = scmp.ne.s32.totalorder %s92, %s93
    %p105 = scmp.eq.s32.totalorder %s20, 1
    %p106 = por %p104, %p105
    %p108 = scmp.ne.s32.totalorder %s93, %s107
    %p109 = scmp.eq.s32.totalorder %s20, 0
    %p110 = por %p108, %p109
    %s112 = sadd.s32 %s111, 1
    %p115 = scmp.eq.s32.totalorder %s14, 1
    %p116 = scmp.ne.s32.totalorder %s111, %s113
    %p117 = scmp.eq.s32.totalorder %s14, 0
    %p118 = por %p116, %p117
    %p119 = scmp.ne.s32.totalorder %s111, %s113
    %p120 = scmp.eq.s32.totalorder %s19, 1
    %p121 = por %p119, %p120
    %p122 = scmp.ne.s32.totalorder %s113, %s114
    %p123 = scmp.eq.s32.totalorder %s19, 0
    %p124 = por %p122, %p123
    %p125 = scmp.ne.s32.totalorder %s113, %s114
    %p126 = scmp.eq.s32.totalorder %s20, 1
    %p127 = por %p125, %p126
    %p129 = scmp.ne.s32.totalorder %s114, %s128
    %p130 = scmp.eq.s32.totalorder %s20, 0
    %p131 = por %p129, %p130
    %s132 = ssub.s32 %s14, %s21
    %p133 = scmp.eq.s32.totalorder %s132, 0
    %s135 = sadd.s32 %s134, 1
    %s136 = scalar_select %p133, %s134, %s135
    %p139 = pneg %p133
    %p140 = scmp.eq.s32.totalorder %s14, 1
    %p141 = por %p139, %p140
    %p142 = scmp.ne.s32.totalorder %s134, %s137
    %p143 = scmp.eq.s32.totalorder %s14, 0
    %p144 = por %p142, %p143
    %p145 = scmp.ne.s32.totalorder %s134, %s137
    %p146 = scmp.eq.s32.totalorder %s19, 1
    %p147 = por %p145, %p146
    %p148 = scmp.ne.s32.totalorder %s137, %s138
    %p149 = scmp.eq.s32.totalorder %s19, 0
    %p150 = por %p148, %p149
    %p151 = scmp.ne.s32.totalorder %s137, %s138
    %p152 = scmp.eq.s32.totalorder %s20, 1
    %p153 = por %p151, %p152
    %p155 = scmp.ne.s32.totalorder %s138, %s154
    %p156 = scmp.eq.s32.totalorder %s20, 0
    %p157 = por %p155, %p156
    %s158 = ssub.s32 %s14, %s21
    %p159 = scmp.eq.s32.totalorder %s158, 0
    %s161 = sadd.s32 %s160, 1
    %s162 = scalar_select %p159, %s160, %s161
    %p165 = pneg %p159
    %p166 = scmp.eq.s32.totalorder %s14, 1
    %p167 = por %p165, %p166
    %p168 = scmp.ne.s32.totalorder %s160, %s163
    %p169 = scmp.eq.s32.totalorder %s14, 0
    %p170 = por %p168, %p169
    %p171 = scmp.ne.s32.totalorder %s160, %s163
    %p172 = scmp.eq.s32.totalorder %s19, 1
    %p173 = por %p171, %p172
    %p174 = scmp.ne.s32.totalorder %s163, %s164
    %p175 = scmp.eq.s32.totalorder %s19, 0
    %p176 = por %p174, %p175
    %p177 = scmp.ne.s32.totalorder %s163, %s164
    %p178 = scmp.eq.s32.totalorder %s20, 1
    %p179 = por %p177, %p178
    %p181 = scmp.ne.s32.totalorder %s164, %s180
    %p182 = scmp.eq.s32.totalorder %s20, 0
    %p183 = por %p181, %p182
    %s184 = ssub.s32 %s14, %s21
    %p185 = scmp.eq.s32.totalorder %s184, 0
    %s187 = sadd.s32 %s186, 1
    %s188 = scalar_select %p185, %s186, %s187
    %p191 = pneg %p185
    %p192 = scmp.eq.s32.totalorder %s14, 1
    %p193 = por %p191, %p192
    %p194 = scmp.ne.s32.totalorder %s186, %s189
    %p195 = scmp.eq.s32.totalorder %s14, 0
    %p196 = por %p194, %p195
    %p197 = scmp.ne.s32.totalorder %s186, %s189
    %p198 = scmp.eq.s32.totalorder %s19, 1
    %p199 = por %p197, %p198
    %p200 = scmp.ne.s32.totalorder %s189, %s190
    %p201 = scmp.eq.s32.totalorder %s19, 0
    %p202 = por %p200, %p201
    %p203 = scmp.ne.s32.totalorder %s189, %s190
    %p204 = scmp.eq.s32.totalorder %s20, 1
    %p205 = por %p203, %p204
    %p207 = scmp.ne.s32.totalorder %s190, %s206
    %p208 = scmp.eq.s32.totalorder %s20, 0
    %p209 = por %p207, %p208
    %p210 = scmp.le.s32.totalorder 1, %s14
    %p211 = scmp.lt.s32.totalorder %s14, 3
    %p212 = pnand %p210, %p211
    %p213 = pneg %p212
    // Predicated region
    $region9: #{_lambda_.8} parent=5 // pred_check
      _
    $region10: #{_lambda_.8} parent=5 // pred_check_branch
      %215 = sbr.rel (%p212) target = $region12
    $region11: #{_lambda_.8} parent=5 // pred_region
      %s216 = ssub.s32 %s14, 1
      // Predicated region
      $region13: #{_lambda_.8} parent=11 // pred_check
        %p217 = pneg %p35
      $region14: #{_lambda_.8} parent=11 // pred_check_branch
        %219 = sbr.rel (%p217) target = $region16
      $region15: #{_lambda_.8} parent=11 // pred_region
        _
      $region16: #{_lambda_.8} parent=11 // pred_fallthru
        _
      // Predicated region
      $region17: #{_lambda_.8} parent=11 // pred_check
        %p220 = pneg %p56
      $region18: #{_lambda_.8} parent=11 // pred_check_branch
        %222 = sbr.rel (%p220) target = $region20
      $region19: #{_lambda_.8} parent=11 // pred_region
        _
      $region20: #{_lambda_.8} parent=11 // pred_fallthru
        _
      // Predicated region
      $region21: #{_lambda_.8} parent=11 // pred_check
        %p223 = pneg %p103
      $region22: #{_lambda_.8} parent=11 // pred_check_branch
        %225 = sbr.rel (%p223) target = $region24
      $region23: #{_lambda_.8} parent=11 // pred_region
        _
      $region24: #{_lambda_.8} parent=11 // pred_fallthru
        _
      // Predicated region
      $region25: #{_lambda_.8} parent=11 // pred_check
        %p226 = pneg %p124
      $region26: #{_lambda_.8} parent=11 // pred_check_branch
        %228 = sbr.rel (%p226) target = $region28
      $region27: #{_lambda_.8} parent=11 // pred_region
        _
      $region28: #{_lambda_.8} parent=11 // pred_fallthru
        _
    $region12: #{_lambda_.8} parent=5 // pred_fallthru
      _
    %p229 = scmp.lt.s32.totalorder %s14, 2
    // Predicated region
    $region29: #{_lambda_.8} parent=5 // pred_check
      %p230 = pneg %p229
    $region30: #{_lambda_.8} parent=5 // pred_check_branch
      %232 = sbr.rel (%p230) target = $region32
    $region31: #{_lambda_.8} parent=5 // pred_region
      // Predicated region
      $region33: #{_lambda_.8} parent=31 // pred_check
        %p233 = pneg %p76
      $region34: #{_lambda_.8} parent=31 // pred_check_branch
        %235 = sbr.rel (%p233) target = $region36
      $region35: #{_lambda_.8} parent=31 // pred_region
        %p236 = scmp.lt.s32.totalorder %s14, 1
        %s237 = scalar_select %p236, %s14, 1
        %s238 = smul.addr %s237, 5
        %s239 = smul.addr %s238, 4
        %s240 = scalar_lea.vmem %s2, %s239
      $region36: #{_lambda_.8} parent=31 // pred_fallthru
        _
    $region32: #{_lambda_.8} parent=5 // pred_fallthru
      _
    %p241 = scmp.le.s32.totalorder 1, %s14
    %p242 = scmp.lt.s32.totalorder %s14, 3
    %p243 = pnand %p241, %p242
    %p244 = pneg %p243
    // Predicated region
    $region37: #{_lambda_.8} parent=5 // pred_check
      _
    $region38: #{_lambda_.8} parent=5 // pred_check_branch
      %246 = sbr.rel (%p243) target = $region40
    $region39: #{_lambda_.8} parent=5 // pred_region
      %s247 = ssub.s32 %s14, 1
      %p248 = pneg %p35
      %p249 = pneg %p32
      %p250 = pneg %p56
      %p251 = pneg %p53
      %p252 = scmp.lt.s32.totalorder %s19, 1
      %s253 = scalar_select %p252, %s19, 1
      %s254 = smul.addr %s253, 5
      %s255 = smul.addr %s254, 4
      %s256 = scalar_lea.vmem %s2, %s255
      %p257 = pneg %p82
      %p258 = pneg %p79
      %p259 = pneg %p103
      %p260 = pneg %p100
      %p261 = pneg %p124
      %p262 = pneg %p121
      %p263 = pneg %p150
      %p264 = pneg %p147
      %p265 = scmp.lt.s32.totalorder %s19, 1
      %s266 = scalar_select %p265, %s19, 1
      %s267 = smul.addr %s266, 3
      %s268 = smul.addr %s267, 4
      %s269 = scalar_lea.vmem %s5, %s268
      %p270 = pneg %p176
      %p271 = pneg %p173
      %p272 = scmp.lt.s32.totalorder %s19, 1
      %s273 = scalar_select %p272, %s19, 1
      %s274 = scalar_lea.vmem %s6, %s273
      %p275 = pneg %p202
      %p276 = pneg %p199
      %p277 = scmp.lt.s32.totalorder %s19, 1
      %s278 = scalar_select %p277, %s19, 1
      %s279 = scalar_lea.vmem %s7, %s278
      %p280 = scmp.lt.s32.totalorder %s19, 1
      %s281 = scalar_select %p280, %s19, 1
      %s282 = smul.addr %s281, 5
      %s283 = smul.addr %s282, 4
      %s284 = scalar_lea.vmem %s2, %s283
      %p285 = scmp.lt.s32.totalorder %s19, 1
      %s286 = scalar_select %p285, %s19, 1
      %s287 = smul.addr %s286, 3
      %s288 = smul.addr %s287, 4
      %s289 = scalar_lea.vmem %s5, %s288
      %p290 = scmp.lt.s32.totalorder %s19, 1
      %s291 = scalar_select %p290, %s19, 1
      %s292 = scalar_lea.vmem %s6, %s291
      %p293 = scmp.lt.s32.totalorder %s19, 1
      %s294 = scalar_select %p293, %s19, 1
      %s295 = scalar_lea.vmem %s7, %s294
      %v297 = vld [vmem:[%s284] sm:$0xf]
      %v298 = vld [vmem:[%s284 + $0x4] sm:$0xf]
      %v299 = vld [vmem:[%s284 + $0x8] sm:$0xf]
      %v300 = vld [vmem:[%s284 + $0xc] sm:$0xf]
      %v301 = vld [vmem:[%s284 + $0x10] sm:$0xf]
      %v302 = vunpack.c.l.bf16 %v297
      %v303 = vunpack.c.l.bf16 %v298
      %v304 = vunpack.c.l.bf16 %v299
      %v305 = vunpack.c.l.bf16 %v300
      %v306 = vunpack.c.l.bf16 %v301
      %v307 = vld [vmem:[%s0] sm:$0x1]
      %v309 = vlaneseq
      %v310 = vshrl.u32 %v309, 7
      %v311 = vsub.s32 0, %v310
      %v312 = vrot.slane %v307, %v311
      %v314 = vmul.f32 %v302, %v312
      %v315 = vmul.f32 %v303, %v312
      %v316 = vmul.f32 %v304, %v312
      %v317 = vmul.f32 %v305, %v312
      %v318 = vmul.f32 %v306, %v312
      %v319 = vld [vmem:[%s1] sm:$0x1]
      %v321 = vlaneseq
      %v322 = vshrl.u32 %v321, 7
      %v323 = vsub.s32 0, %v322
      %v324 = vrot.slane %v319, %v323
      %v326 = vadd.f32 %v314, %v324
      %v327 = vadd.f32 %v315, %v324
      %v328 = vadd.f32 %v316, %v324
      %v329 = vadd.f32 %v317, %v324
      %v330 = vadd.f32 %v318, %v324
      %v331 = vmul.f32 %v326, 0.2
      %v332 = vmul.f32 %v327, 0.2
      %v333 = vmul.f32 %v328, 0.2
      %v334 = vmul.f32 %v329, 0.2
      %v335 = vmul.f32 %v330, 0.2
      %v336 = vmax.f32 %v326, %v331
      %v337 = vmax.f32 %v327, %v332
      %v338 = vmax.f32 %v328, %v333
      %v339 = vmax.f32 %v329, %v334
      %v340 = vmax.f32 %v330, %v335
      %v341 = vpack.c.bf16 %v337, %v336
      %v342 = vpack.c.bf16 %v339, %v338
      %v343 = vpack.c.bf16 %v340, %v340
      %v347 = vunpack.c.l.b16 %v341
      %v348 = vunpack.c.h.b16 %v341
      %v349 = vunpack.c.l.b16 %v342
      %v350 = vunpack.c.h.b16 %v342
      %v351 = vunpack.c.l.b16 %v343
      %v352 = vpack.c.b16 %v347, %v347
      %v353 = vpack.c.b16 %v348, %v348
      %v354 = vpack.c.b16 %v349, %v349
      %v355 = vpack.c.b16 %v350, %v350
      %v356 = vpack.c.b16 %v351, %v351
      %362 = vst [vmem:[#allocation2] sm:$0xf] %v352
      %363 = vst [vmem:[#allocation2 + $0x4] sm:$0xf] %v353
      %364 = vst [vmem:[#allocation2 + $0x8] sm:$0xf] %v354
      %365 = vst [vmem:[#allocation2 + $0xc] sm:$0xf] %v355
      %366 = vst [vmem:[#allocation2 + $0x10] sm:$0xf] %v356
      %v367 = vld [vmem:[#allocation2] sm:$0xf]
      %v368 = vld [vmem:[#allocation2 + $0x4] sm:$0xf]
      %v369 = vld [vmem:[#allocation2 + $0x8] sm:$0x1]
      %v370 = vld [vmem:[%s3] sm:$0xf]
      %v371 = vld [vmem:[%s3 + $0x4] sm:$0xf]
      %v372 = vld [vmem:[%s3 + $0x8] sm:$0xf]
      %v373 = vld [vmem:[%s3 + $0xc] sm:$0xf]
      %v374 = vld [vmem:[%s3 + $0x10] sm:$0xf]
      %v375 = vld [vmem:[%s3 + $0x14] sm:$0xf]
      %v376 = vld [vmem:[%s3 + $0x18] sm:$0xf]
      %v377 = vld [vmem:[%s3 + $0x1c] sm:$0xf]
      %v378 = vld [vmem:[%s3 + $0x20] sm:$0xf]
      %v379 = vld [vmem:[%s3 + $0x24] sm:$0xf]
      %v380 = vld [vmem:[%s3 + $0x28] sm:$0xf]
      %v381 = vld [vmem:[%s3 + $0x2c] sm:$0xf]
      %v382 = vld [vmem:[%s3 + $0x30] sm:$0xf]
      %v383 = vld [vmem:[%s3 + $0x34] sm:$0xf]
      %v384 = vld [vmem:[%s3 + $0x38] sm:$0xf]
      %v385 = vld [vmem:[%s3 + $0x3c] sm:$0xf]
      %v386 = vld [vmem:[#allocation2 + $0x8] sm:$0x3]
      %s387 = scalar_lea.vmem %s3, 64
      %v388 = vld [vmem:[%s387] sm:$0xf]
      %v389 = vld [vmem:[%s387 + $0x4] sm:$0xf]
      %v390 = vld [vmem:[%s387 + $0x8] sm:$0xf]
      %v391 = vld [vmem:[%s387 + $0xc] sm:$0xf]
      %v392 = vld [vmem:[%s387 + $0x10] sm:$0xf]
      %v393 = vld [vmem:[%s387 + $0x14] sm:$0xf]
      %v394 = vld [vmem:[%s387 + $0x18] sm:$0xf]
      %v395 = vld [vmem:[%s387 + $0x1c] sm:$0xf]
      %v396 = vld [vmem:[%s387 + $0x20] sm:$0xf]
      %v397 = vld [vmem:[%s387 + $0x24] sm:$0xf]
      %v398 = vld [vmem:[%s387 + $0x28] sm:$0xf]
      %v399 = vld [vmem:[%s387 + $0x2c] sm:$0xf]
      %v400 = vld [vmem:[%s387 + $0x30] sm:$0xf]
      %v401 = vld [vmem:[%s387 + $0x34] sm:$0xf]
      %v402 = vld [vmem:[%s387 + $0x38] sm:$0xf]
      %v403 = vld [vmem:[%s387 + $0x3c] sm:$0xf]
      %v407 = vunpack.c.l.b16 %v367
      %v408 = vunpack.c.l.b16 %v368
      %v409 = vunpack.c.l.b16 %v386
      %v410 = vpack.c.b16 %v408, %v407
      %v411 = vpack.c.b16 %v409, %v409
      %vm412 = vsmask.f32 7424
      %v414 = vshrl.u32 %v410, 16
      %v416 = vshll.u32 %v410, 16
      %v418 = vrot.slane %v416, 1
      %v419 = vor.u32 %v414, %v418
      %v421 = vshll.u32 %v411, 16
      %v423 = vrot.slane %v421, 1
      %v424 = vsel %vm412, %v419, %v423
      %v425 = vshrl.u32 %v411, 16
      %v427 = vor.u32 %v425, %v423
      %v446 = vunpack.c.l.b16 %v388
      %v447 = vunpack.c.l.b16 %v389
      %v448 = vunpack.c.l.b16 %v390
      %v449 = vunpack.c.l.b16 %v391
      %v450 = vunpack.c.l.b16 %v392
      %v451 = vunpack.c.l.b16 %v393
      %v452 = vunpack.c.l.b16 %v394
      %v453 = vunpack.c.l.b16 %v395
      %v454 = vunpack.c.l.b16 %v396
      %v455 = vunpack.c.l.b16 %v397
      %v456 = vunpack.c.l.b16 %v398
      %v457 = vunpack.c.l.b16 %v399
      %v458 = vunpack.c.l.b16 %v400
      %v459 = vunpack.c.l.b16 %v401
      %v460 = vunpack.c.l.b16 %v402
      %v461 = vunpack.c.l.b16 %v403
      %v462 = vpack.c.b16 %v447, %v446
      %v463 = vpack.c.b16 %v449, %v448
      %v464 = vpack.c.b16 %v451, %v450
      %v465 = vpack.c.b16 %v453, %v452
      %v466 = vpack.c.b16 %v455, %v454
      %v467 = vpack.c.b16 %v457, %v456
      %v468 = vpack.c.b16 %v459, %v458
      %v469 = vpack.c.b16 %v461, %v460
      %478 = vmatprep.subr.bf16.mxu0 0
      %479 = vmatpush1.bf16.msra.mxu0 %v462
      %480 = vmatprep.subr.bf16.mxu0 0
      %481 = vmatpush1.bf16.msra.mxu0 %v463
      %482 = vmatprep.subr.bf16.mxu0 0
      %483 = vmatpush1.bf16.msra.mxu0 %v464
      %484 = vmatprep.subr.bf16.mxu0 0
      %485 = vmatpush1.bf16.msra.mxu0 %v465
      %486 = vmatprep.subr.bf16.mxu0 0
      %487 = vmatpush1.bf16.msra.mxu0 %v466
      %488 = vmatprep.subr.bf16.mxu0 0
      %489 = vmatpush1.bf16.msra.mxu0 %v467
      %490 = vmatprep.subr.bf16.mxu0 0
      %491 = vmatpush1.bf16.msra.mxu0 %v468
      %492 = vmatprep.subr.bf16.mxu0 0
      %493 = vmatpush1.bf16.msra.mxu0 %v469
      %494 = vmatprep.subr.bf16.mxu0 0
      %495 = vmatpush1.bf16.msra.mxu0 0
      %496 = vmatprep.subr.bf16.mxu0 0
      %497 = vmatpush1.bf16.msra.mxu0 0
      %498 = vmatprep.subr.bf16.mxu0 0
      %499 = vmatpush1.bf16.msra.mxu0 0
      %500 = vmatprep.subr.bf16.mxu0 0
      %501 = vmatpush1.bf16.msra.mxu0 0
      %502 = vmatprep.subr.bf16.mxu0 0
      %503 = vmatpush1.bf16.msra.mxu0 0
      %504 = vmatprep.subr.bf16.mxu0 0
      %505 = vmatpush1.bf16.msra.mxu0 0
      %506 = vmatprep.subr.bf16.mxu0 0
      %507 = vmatpush1.bf16.msra.mxu0 0
      %508 = vmatprep.subr.bf16.mxu0 0
      %509 = vmatpush1.bf16.msra.mxu0 0
      %510 = vmatprep.mubr.bf16.mxu0 0
      %511 = vmatmul.mubr.bf16.gmra.mrb[0].mxu0 %v424
      %v512 = vpop.f32.mrb[0].mxu0
      %v513 = vadd.f32 0.0, %v512
      %v514 = vpop.f32.mrb[0].mxu0
      %v515 = vpop.f32.mrb[0].mxu0
      %v516 = vadd.f32 0.0, %v515
      %v517 = vpop.f32.mrb[0].mxu0
      %518 = vmatprep.mubr.bf16.mxu0 0
      %519 = vmatmul.mubr.bf16.gmra.mrb[0].mxu0 %v427
      %v520 = vpop.f32.mrb[0].mxu0
      %v521 = vadd.f32 0.0, %v520
      %v522 = vpop.f32.mrb[0].mxu0
      %v523 = vpop.f32.mrb[0].mxu0
      %v524 = vpop.f32.mrb[0].mxu0
      %525 = vdwg.mxu0
      %v527 = vunpack.c.l.b16 %v369
      %v528 = vpack.c.b16 %v527, %v527
      %v547 = vunpack.c.l.b16 %v370
      %v548 = vunpack.c.l.b16 %v371
      %v549 = vunpack.c.l.b16 %v372
      %v550 = vunpack.c.l.b16 %v373
      %v551 = vunpack.c.l.b16 %v374
      %v552 = vunpack.c.l.b16 %v375
      %v553 = vunpack.c.l.b16 %v376
      %v554 = vunpack.c.l.b16 %v377
      %v555 = vunpack.c.l.b16 %v378
      %v556 = vunpack.c.l.b16 %v379
      %v557 = vunpack.c.l.b16 %v380
      %v558 = vunpack.c.l.b16 %v381
      %v559 = vunpack.c.l.b16 %v382
      %v560 = vunpack.c.l.b16 %v383
      %v561 = vunpack.c.l.b16 %v384
      %v562 = vunpack.c.l.b16 %v385
      %v563 = vpack.c.b16 %v548, %v547
      %v564 = vpack.c.b16 %v550, %v549
      %v565 = vpack.c.b16 %v552, %v551
      %v566 = vpack.c.b16 %v554, %v553
      %v567 = vpack.c.b16 %v556, %v555
      %v568 = vpack.c.b16 %v558, %v557
      %v569 = vpack.c.b16 %v560, %v559
      %v570 = vpack.c.b16 %v562, %v561
      %579 = vmatprep.subr.bf16.mxu0 0
      %580 = vmatpush1.bf16.msra.mxu0 %v563
      %581 = vmatprep.subr.bf16.mxu0 0
      %582 = vmatpush1.bf16.msra.mxu0 %v564
      %583 = vmatprep.subr.bf16.mxu0 0
      %584 = vmatpush1.bf16.msra.mxu0 %v565
      %585 = vmatprep.subr.bf16.mxu0 0
      %586 = vmatpush1.bf16.msra.mxu0 %v566
      %587 = vmatprep.subr.bf16.mxu0 0
      %588 = vmatpush1.bf16.msra.mxu0 %v567
      %589 = vmatprep.subr.bf16.mxu0 0
      %590 = vmatpush1.bf16.msra.mxu0 %v568
      %591 = vmatprep.subr.bf16.mxu0 0
      %592 = vmatpush1.bf16.msra.mxu0 %v569
      %593 = vmatprep.subr.bf16.mxu0 0
      %594 = vmatpush1.bf16.msra.mxu0 %v570
      %595 = vmatprep.subr.bf16.mxu0 0
      %596 = vmatpush1.bf16.msra.mxu0 0
      %597 = vmatprep.subr.bf16.mxu0 0
      %598 = vmatpush1.bf16.msra.mxu0 0
      %599 = vmatprep.subr.bf16.mxu0 0
      %600 = vmatpush1.bf16.msra.mxu0 0
      %601 = vmatprep.subr.bf16.mxu0 0
      %602 = vmatpush1.bf16.msra.mxu0 0
      %603 = vmatprep.subr.bf16.mxu0 0
      %604 = vmatpush1.bf16.msra.mxu0 0
      %605 = vmatprep.subr.bf16.mxu0 0
      %606 = vmatpush1.bf16.msra.mxu0 0
      %607 = vmatprep.subr.bf16.mxu0 0
      %608 = vmatpush1.bf16.msra.mxu0 0
      %609 = vmatprep.subr.bf16.mxu0 0
      %610 = vmatpush1.bf16.msra.mxu0 0
      %611 = vmatprep.mubr.bf16.mxu0 0
      %612 = vmatmul.mubr.bf16.gmra.mrb[0].mxu0 %v410
      %v613 = vpop.f32.mrb[0].mxu0
      %v614 = vadd.f32 %v513, %v613
      %v615 = vpop.f32.mrb[0].mxu0
      %v616 = vpop.f32.mrb[0].mxu0
      %v617 = vadd.f32 %v516, %v616
      %v618 = vpop.f32.mrb[0].mxu0
      %619 = vmatprep.mubr.bf16.mxu0 0
      %620 = vmatmul.mubr.bf16.gmra.mrb[0].mxu0 %v528
      %v621 = vpop.f32.mrb[0].mxu0
      %v622 = vadd.f32 %v521, %v621
      %v623 = vpop.f32.mrb[0].mxu0
      %v624 = vpop.f32.mrb[0].mxu0
      %v625 = vpop.f32.mrb[0].mxu0
      %626 = vdwg.mxu0
      %v627 = vld [vmem:[#allocation2] sm:$0xe]
      %s628 = scalar_lea.vmem %s3, 128
      %v629 = vld [vmem:[%s628] sm:$0xf]
      %v630 = vld [vmem:[%s628 + $0x4] sm:$0xf]
      %v631 = vld [vmem:[%s628 + $0x8] sm:$0xf]
      %v632 = vld [vmem:[%s628 + $0xc] sm:$0xf]
      %v633 = vld [vmem:[%s628 + $0x10] sm:$0xf]
      %v634 = vld [vmem:[%s628 + $0x14] sm:$0xf]
      %v635 = vld [vmem:[%s628 + $0x18] sm:$0xf]
      %v636 = vld [vmem:[%s628 + $0x1c] sm:$0xf]
      %v637 = vld [vmem:[%s628 + $0x20] sm:$0xf]
      %v638 = vld [vmem:[%s628 + $0x24] sm:$0xf]
      %v639 = vld [vmem:[%s628 + $0x28] sm:$0xf]
      %v640 = vld [vmem:[%s628 + $0x2c] sm:$0xf]
      %v641 = vld [vmem:[%s628 + $0x30] sm:$0xf]
      %v642 = vld [vmem:[%s628 + $0x34] sm:$0xf]
      %v643 = vld [vmem:[%s628 + $0x38] sm:$0xf]
      %v644 = vld [vmem:[%s628 + $0x3c] sm:$0xf]
      %v646 = vunpack.c.l.b16 %v627
      %v647 = vpack.c.b16 %v408, %v646
      %vm648 = vcmask 1046528
      %v649 = vrot.slane %v647, 1
      %v650 = vrot.slane %v411, 1
      %v651 = vsel %vm648, %v649, %v650
      %v670 = vunpack.c.l.b16 %v629
      %v671 = vunpack.c.l.b16 %v630
      %v672 = vunpack.c.l.b16 %v631
      %v673 = vunpack.c.l.b16 %v632
      %v674 = vunpack.c.l.b16 %v633
      %v675 = vunpack.c.l.b16 %v634
      %v676 = vunpack.c.l.b16 %v635
      %v677 = vunpack.c.l.b16 %v636
      %v678 = vunpack.c.l.b16 %v637
      %v679 = vunpack.c.l.b16 %v638
      %v680 = vunpack.c.l.b16 %v639
      %v681 = vunpack.c.l.b16 %v640
      %v682 = vunpack.c.l.b16 %v641
      %v683 = vunpack.c.l.b16 %v642
      %v684 = vunpack.c.l.b16 %v643
      %v685 = vunpack.c.l.b16 %v644
      %v686 = vpack.c.b16 %v671, %v670
      %v687 = vpack.c.b16 %v673, %v672
      %v688 = vpack.c.b16 %v675, %v674
      %v689 = vpack.c.b16 %v677, %v676
      %v690 = vpack.c.b16 %v679, %v678
      %v691 = vpack.c.b16 %v681, %v680
      %v692 = vpack.c.b16 %v683, %v682
      %v693 = vpack.c.b16 %v685, %v684
      %702 = vmatprep.subr.bf16.mxu0 0
      %703 = vmatpush1.bf16.msra.mxu0 %v686
      %704 = vmatprep.subr.bf16.mxu0 0
      %705 = vmatpush1.bf16.msra.mxu0 %v687
      %706 = vmatprep.subr.bf16.mxu0 0
      %707 = vmatpush1.bf16.msra.mxu0 %v688
      %708 = vmatprep.subr.bf16.mxu0 0
      %709 = vmatpush1.bf16.msra.mxu0 %v689
      %710 = vmatprep.subr.bf16.mxu0 0
      %711 = vmatpush1.bf16.msra.mxu0 %v690
      %712 = vmatprep.subr.bf16.mxu0 0
      %713 = vmatpush1.bf16.msra.mxu0 %v691
      %714 = vmatprep.subr.bf16.mxu0 0
      %715 = vmatpush1.bf16.msra.mxu0 %v692
      %716 = vmatprep.subr.bf16.mxu0 0
      %717 = vmatpush1.bf16.msra.mxu0 %v693
      %718 = vmatprep.subr.bf16.mxu0 0
      %719 = vmatpush1.bf16.msra.mxu0 0
      %720 = vmatprep.subr.bf16.mxu0 0
      %721 = vmatpush1.bf16.msra.mxu0 0
      %722 = vmatprep.subr.bf16.mxu0 0
      %723 = vmatpush1.bf16.msra.mxu0 0
      %724 = vmatprep.subr.bf16.mxu0 0
      %725 = vmatpush1.bf16.msra.mxu0 0
      %726 = vmatprep.subr.bf16.mxu0 0
      %727 = vmatpush1.bf16.msra.mxu0 0
      %728 = vmatprep.subr.bf16.mxu0 0
      %729 = vmatpush1.bf16.msra.mxu0 0
      %730 = vmatprep.subr.bf16.mxu0 0
      %731 = vmatpush1.bf16.msra.mxu0 0
      %732 = vmatprep.subr.bf16.mxu0 0
      %733 = vmatpush1.bf16.msra.mxu0 0
      %734 = vmatprep.mubr.bf16.mxu0 0
      %735 = vmatmul.mubr.bf16.gmra.mrb[0].mxu0 %v651
      %v736 = vpop.f32.mrb[0].mxu0
      %v737 = vadd.f32 0.0, %v736
      %v738 = vpop.f32.mrb[0].mxu0
      %v739 = vpop.f32.mrb[0].mxu0
      %v740 = vadd.f32 0.0, %v739
      %v741 = vpop.f32.mrb[0].mxu0
      %742 = vmatprep.mubr.bf16.mxu0 0
      %743 = vmatmul.mubr.bf16.gmra.mrb[0].mxu0 %v650
      %v744 = vpop.f32.mrb[0].mxu0
      %v745 = vadd.f32 0.0, %v744
      %v746 = vpop.f32.mrb[0].mxu0
      %v747 = vpop.f32.mrb[0].mxu0
      %v748 = vpop.f32.mrb[0].mxu0
      %749 = vdwg.mxu0
      %v750 = vadd.f32 %v614, %v737
      %v751 = vadd.f32 %v617, %v740
      %v752 = vadd.f32 %v622, %v745
      %v753 = vld [vmem:[#allocation2 + $0x8] sm:$0x7]
      %s754 = scalar_lea.vmem %s3, 192
      %v755 = vld [vmem:[%s754] sm:$0xf]
      %v756 = vld [vmem:[%s754 + $0x4] sm:$0xf]
      %v757 = vld [vmem:[%s754 + $0x8] sm:$0xf]
      %v758 = vld [vmem:[%s754 + $0xc] sm:$0xf]
      %v759 = vld [vmem:[%s754 + $0x10] sm:$0xf]
      %v760 = vld [vmem:[%s754 + $0x14] sm:$0xf]
      %v761 = vld [vmem:[%s754 + $0x18] sm:$0xf]
      %v762 = vld [vmem:[%s754 + $0x1c] sm:$0xf]
      %v763 = vld [vmem:[%s754 + $0x20] sm:$0xf]
      %v764 = vld [vmem:[%s754 + $0x24] sm:$0xf]
      %v765 = vld [vmem:[%s754 + $0x28] sm:$0xf]
      %v766 = vld [vmem:[%s754 + $0x2c] sm:$0xf]
      %v767 = vld [vmem:[%s754 + $0x30] sm:$0xf]
      %v768 = vld [vmem:[%s754 + $0x34] sm:$0xf]
      %v769 = vld [vmem:[%s754 + $0x38] sm:$0xf]
      %v770 = vld [vmem:[%s754 + $0x3c] sm:$0xf]
      %v772 = vunpack.c.l.b16 %v753
      %v773 = vpack.c.b16 %v772, %v772
      %vm774 = vsmask.f32 6400
      %v776 = vshrl.u32 %v647, 16
      %v778 = vrot.slane %v776, 1
      %v779 = vshll.u32 %v647, 16
      %v781 = vrot.slane %v779, 2
      %v782 = vor.u32 %v778, %v781
      %v784 = vshrl.u32 %v773, 16
      %v786 = vrot.slane %v784, 1
      %v787 = vshll.u32 %v773, 16
      %v789 = vrot.slane %v787, 2
      %v790 = vor.u32 %v786, %v789
      %v791 = vsel %vm774, %v782, %v790
      %v810 = vunpack.c.l.b16 %v755
      %v811 = vunpack.c.l.b16 %v756
      %v812 = vunpack.c.l.b16 %v757
      %v813 = vunpack.c.l.b16 %v758
      %v814 = vunpack.c.l.b16 %v759
      %v815 = vunpack.c.l.b16 %v760
      %v816 = vunpack.c.l.b16 %v761
      %v817 = vunpack.c.l.b16 %v762
      %v818 = vunpack.c.l.b16 %v763
      %v819 = vunpack.c.l.b16 %v764
      %v820 = vunpack.c.l.b16 %v765
      %v821 = vunpack.c.l.b16 %v766
      %v822 = vunpack.c.l.b16 %v767
      %v823 = vunpack.c.l.b16 %v768
      %v824 = vunpack.c.l.b16 %v769
      %v825 = vunpack.c.l.b16 %v770
      %v826 = vpack.c.b16 %v811, %v810
      %v827 = vpack.c.b16 %v813, %v812
      %v828 = vpack.c.b16 %v815, %v814
      %v829 = vpack.c.b16 %v817, %v816
      %v830 = vpack.c.b16 %v819, %v818
      %v831 = vpack.c.b16 %v821, %v820
      %v832 = vpack.c.b16 %v823, %v822
      %v833 = vpack.c.b16 %v825, %v824
      %842 = vmatprep.subr.bf16.mxu0 0
      %843 = vmatpush1.bf16.msra.mxu0 %v826
      %844 = vmatprep.subr.bf16.mxu0 0
      %845 = vmatpush1.bf16.msra.mxu0 %v827
      %846 = vmatprep.subr.bf16.mxu0 0
      %847 = vmatpush1.bf16.msra.mxu0 %v828
      %848 = vmatprep.subr.bf16.mxu0 0
      %849 = vmatpush1.bf16.msra.mxu0 %v829
      %850 = vmatprep.subr.bf16.mxu0 0
      %851 = vmatpush1.bf16.msra.mxu0 %v830
      %852 = vmatprep.subr.bf16.mxu0 0
      %853 = vmatpush1.bf16.msra.mxu0 %v831
      %854 = vmatprep.subr.bf16.mxu0 0
      %855 = vmatpush1.bf16.msra.mxu0 %v832
      %856 = vmatprep.subr.bf16.mxu0 0
      %857 = vmatpush1.bf16.msra.mxu0 %v833
      %858 = vmatprep.subr.bf16.mxu0 0
      %859 = vmatpush1.bf16.msra.mxu0 0
      %860 = vmatprep.subr.bf16.mxu0 0
      %861 = vmatpush1.bf16.msra.mxu0 0
      %862 = vmatprep.subr.bf16.mxu0 0
      %863 = vmatpush1.bf16.msra.mxu0 0
      %864 = vmatprep.subr.bf16.mxu0 0
      %865 = vmatpush1.bf16.msra.mxu0 0
      %866 = vmatprep.subr.bf16.mxu0 0
      %867 = vmatpush1.bf16.msra.mxu0 0
      %868 = vmatprep.subr.bf16.mxu0 0
      %869 = vmatpush1.bf16.msra.mxu0 0
      %870 = vmatprep.subr.bf16.mxu0 0
      %871 = vmatpush1.bf16.msra.mxu0 0
      %872 = vmatprep.subr.bf16.mxu0 0
      %873 = vmatpush1.bf16.msra.mxu0 0
      %874 = vmatprep.mubr.bf16.mxu0 0
      %875 = vmatmul.mubr.bf16.gmra.mrb[0].mxu0 %v791
      %v876 = vpop.f32.mrb[0].mxu0
      %v877 = vadd.f32 0.0, %v876
      %v878 = vpop.f32.mrb[0].mxu0
      %v879 = vpop.f32.mrb[0].mxu0
      %v880 = vadd.f32 0.0, %v879
      %v881 = vpop.f32.mrb[0].mxu0
      %882 = vmatprep.mubr.bf16.mxu0 0
      %883 = vmatmul.mubr.bf16.gmra.mrb[0].mxu0 %v790
      %v884 = vpop.f32.mrb[0].mxu0
      %v885 = vadd.f32 0.0, %v884
      %v886 = vpop.f32.mrb[0].mxu0
      %v887 = vpop.f32.mrb[0].mxu0
      %v888 = vpop.f32.mrb[0].mxu0
      %889 = vdwg.mxu0
      %v890 = vadd.f32 %v750, %v877
      %v891 = vadd.f32 %v751, %v880
      %v892 = vadd.f32 %v752, %v885
      %v893 = vld [vmem:[#allocation2] sm:$0x8]
      %v894 = vld [vmem:[#allocation2 + $0x8] sm:$0xf]
      %s895 = scalar_lea.vmem %s3, 256
      %v896 = vld [vmem:[%s895] sm:$0xf]
      %v897 = vld [vmem:[%s895 + $0x4] sm:$0xf]
      %v898 = vld [vmem:[%s895 + $0x8] sm:$0xf]
      %v899 = vld [vmem:[%s895 + $0xc] sm:$0xf]
      %v900 = vld [vmem:[%s895 + $0x10] sm:$0xf]
      %v901 = vld [vmem:[%s895 + $0x14] sm:$0xf]
      %v902 = vld [vmem:[%s895 + $0x18] sm:$0xf]
      %v903 = vld [vmem:[%s895 + $0x1c] sm:$0xf]
      %v904 = vld [vmem:[%s895 + $0x20] sm:$0xf]
      %v905 = vld [vmem:[%s895 + $0x24] sm:$0xf]
      %v906 = vld [vmem:[%s895 + $0x28] sm:$0xf]
      %v907 = vld [vmem:[%s895 + $0x2c] sm:$0xf]
      %v908 = vld [vmem:[%s895 + $0x30] sm:$0xf]
      %v909 = vld [vmem:[%s895 + $0x34] sm:$0xf]
      %v910 = vld [vmem:[%s895 + $0x38] sm:$0xf]
      %v911 = vld [vmem:[%s895 + $0x3c] sm:$0xf]
      %v914 = vunpack.c.l.b16 %v893
      %v915 = vunpack.c.l.b16 %v894
      %v916 = vpack.c.b16 %v408, %v914
      %v917 = vpack.c.b16 %v915, %v915
      %vm918 = vcmask 1044480
      %v919 = vrot.slane %v916, 3
      %v920 = vrot.slane %v917, 3
      %v921 = vsel %vm918, %v919, %v920
      %v940 = vunpack.c.l.b16 %v896
      %v941 = vunpack.c.l.b16 %v897
      %v942 = vunpack.c.l.b16 %v898
      %v943 = vunpack.c.l.b16 %v899
      %v944 = vunpack.c.l.b16 %v900
      %v945 = vunpack.c.l.b16 %v901
      %v946 = vunpack.c.l.b16 %v902
      %v947 = vunpack.c.l.b16 %v903
      %v948 = vunpack.c.l.b16 %v904
      %v949 = vunpack.c.l.b16 %v905
      %v950 = vunpack.c.l.b16 %v906
      %v951 = vunpack.c.l.b16 %v907
      %v952 = vunpack.c.l.b16 %v908
      %v953 = vunpack.c.l.b16 %v909
      %v954 = vunpack.c.l.b16 %v910
      %v955 = vunpack.c.l.b16 %v911
      %v956 = vpack.c.b16 %v941, %v940
      %v957 = vpack.c.b16 %v943, %v942
      %v958 = vpack.c.b16 %v945, %v944
      %v959 = vpack.c.b16 %v947, %v946
      %v960 = vpack.c.b16 %v949, %v948
      %v961 = vpack.c.b16 %v951, %v950
      %v962 = vpack.c.b16 %v953, %v952
      %v963 = vpack.c.b16 %v955, %v954
      %972 = vmatprep.subr.bf16.mxu0 0
      %973 = vmatpush1.bf16.msra.mxu0 %v956
      %974 = vmatprep.subr.bf16.mxu0 0
      %975 = vmatpush1.bf16.msra.mxu0 %v957
      %976 = vmatprep.subr.bf16.mxu0 0
      %977 = vmatpush1.bf16.msra.mxu0 %v958
      %978 = vmatprep.subr.bf16.mxu0 0
      %979 = vmatpush1.bf16.msra.mxu0 %v959
      %980 = vmatprep.subr.bf16.mxu0 0
      %981 = vmatpush1.bf16.msra.mxu0 %v960
      %982 = vmatprep.subr.bf16.mxu0 0
      %983 = vmatpush1.bf16.msra.mxu0 %v961
      %984 = vmatprep.subr.bf16.mxu0 0
      %985 = vmatpush1.bf16.msra.mxu0 %v962
      %986 = vmatprep.subr.bf16.mxu0 0
      %987 = vmatpush1.bf16.msra.mxu0 %v963
      %988 = vmatprep.subr.bf16.mxu0 0
      %989 = vmatpush1.bf16.msra.mxu0 0
      %990 = vmatprep.subr.bf16.mxu0 0
      %991 = vmatpush1.bf16.msra.mxu0 0
      %992 = vmatprep.subr.bf16.mxu0 0
      %993 = vmatpush1.bf16.msra.mxu0 0
      %994 = vmatprep.subr.bf16.mxu0 0
      %995 = vmatpush1.bf16.msra.mxu0 0
      %996 = vmatprep.subr.bf16.mxu0 0
      %997 = vmatpush1.bf16.msra.mxu0 0
      %998 = vmatprep.subr.bf16.mxu0 0
      %999 = vmatpush1.bf16.msra.mxu0 0
      %1000 = vmatprep.subr.bf16.mxu0 0
      %1001 = vmatpush1.bf16.msra.mxu0 0
      %1002 = vmatprep.subr.bf16.mxu0 0
      %1003 = vmatpush1.bf16.msra.mxu0 0
      %1004 = vmatprep.mubr.bf16.mxu0 0
      %1005 = vmatmul.mubr.bf16.gmra.mrb[0].mxu0 %v921
      %v1006 = vpop.f32.mrb[0].mxu0
      %v1007 = vadd.f32 0.0, %v1006
      %v1008 = vpop.f32.mrb[0].mxu0
      %v1009 = vpop.f32.mrb[0].mxu0
      %v1010 = vadd.f32 0.0, %v1009
      %v1011 = vpop.f32.mrb[0].mxu0
      %1012 = vmatprep.mubr.bf16.mxu0 0
      %1013 = vmatmul.mubr.bf16.gmra.mrb[0].mxu0 %v920
      %v1014 = vpop.f32.mrb[0].mxu0
      %v1015 = vadd.f32 0.0, %v1014
      %v1016 = vpop.f32.mrb[0].mxu0
      %v1017 = vpop.f32.mrb[0].mxu0
      %v1018 = vpop.f32.mrb[0].mxu0
      %1019 = vdwg.mxu0
      %v1020 = vadd.f32 %v890, %v1007
      %v1021 = vadd.f32 %v891, %v1010
      %v1022 = vadd.f32 %v892, %v1015
      %v1023 = vld [vmem:[#allocation2] sm:$0x8]
      %v1024 = vld [vmem:[#allocation2 + $0x4] sm:$0xf]
      %v1025 = vld [vmem:[#allocation2 + $0x8] sm:$0xf]
      %v1026 = vld [vmem:[#allocation2 + $0xc] sm:$0x1]
      %s1027 = scalar_lea.vmem %s3, 320
      %v1028 = vld [vmem:[%s1027] sm:$0xf]
      %v1029 = vld [vmem:[%s1027 + $0x4] sm:$0xf]
      %v1030 = vld [vmem:[%s1027 + $0x8] sm:$0xf]
      %v1031 = vld [vmem:[%s1027 + $0xc] sm:$0xf]
      %v1032 = vld [vmem:[%s1027 + $0x10] sm:$0xf]
      %v1033 = vld [vmem:[%s1027 + $0x14] sm:$0xf]
      %v1034 = vld [vmem:[%s1027 + $0x18] sm:$0xf]
      %v1035 = vld [vmem:[%s1027 + $0x1c] sm:$0xf]
      %v1036 = vld [vmem:[%s1027 + $0x20] sm:$0xf]
      %v1037 = vld [vmem:[%s1027 + $0x24] sm:$0xf]
      %v1038 = vld [vmem:[%s1027 + $0x28] sm:$0xf]
      %v1039 = vld [vmem:[%s1027 + $0x2c] sm:$0xf]
      %v1040 = vld [vmem:[%s1027 + $0x30] sm:$0xf]
      %v1041 = vld [vmem:[%s1027 + $0x34] sm:$0xf]
      %v1042 = vld [vmem:[%s1027 + $0x38] sm:$0xf]
      %v1043 = vld [vmem:[%s1027 + $0x3c] sm:$0xf]
      %v1048 = vunpack.c.l.b16 %v1023
      %v1049 = vunpack.c.l.b16 %v1024
      %v1050 = vunpack.c.l.b16 %v1025
      %v1051 = vunpack.c.l.b16 %v1026
      %v1052 = vpack.c.b16 %v1049, %v1048
      %v1053 = vpack.c.b16 %v1051, %v1050
      %vm1054 = vsmask.f32 4352
      %v1056 = vshrl.u32 %v1052, 16
      %v1058 = vrot.slane %v1056, 3
      %v1059 = vshll.u32 %v1052, 16
      %v1061 = vrot.slane %v1059, 4
      %v1062 = vor.u32 %v1058, %v1061
      %v1064 = vshrl.u32 %v1053, 16
      %v1066 = vrot.slane %v1064, 3
      %v1067 = vshll.u32 %v1053, 16
      %v1069 = vrot.slane %v1067, 4
      %v1070 = vor.u32 %v1066, %v1069
      %v1071 = vsel %vm1054, %v1062, %v1070
      %v1090 = vunpack.c.l.b16 %v1028
      %v1091 = vunpack.c.l.b16 %v1029
      %v1092 = vunpack.c.l.b16 %v1030
      %v1093 = vunpack.c.l.b16 %v1031
      %v1094 = vunpack.c.l.b16 %v1032
      %v1095 = vunpack.c.l.b16 %v1033
      %v1096 = vunpack.c.l.b16 %v1034
      %v1097 = vunpack.c.l.b16 %v1035
      %v1098 = vunpack.c.l.b16 %v1036
      %v1099 = vunpack.c.l.b16 %v1037
      %v1100 = vunpack.c.l.b16 %v1038
      %v1101 = vunpack.c.l.b16 %v1039
      %v1102 = vunpack.c.l.b16 %v1040
      %v1103 = vunpack.c.l.b16 %v1041
      %v1104 = vunpack.c.l.b16 %v1042
      %v1105 = vunpack.c.l.b16 %v1043
      %v1106 = vpack.c.b16 %v1091, %v1090
      %v1107 = vpack.c.b16 %v1093, %v1092
      %v1108 = vpack.c.b16 %v1095, %v1094
      %v1109 = vpack.c.b16 %v1097, %v1096
      %v1110 = vpack.c.b16 %v1099, %v1098
      %v1111 = vpack.c.b16 %v1101, %v1100
      %v1112 = vpack.c.b16 %v1103, %v1102
      %v1113 = vpack.c.b16 %v1105, %v1104
      %1122 = vmatprep.subr.bf16.mxu0 0
      %1123 = vmatpush1.bf16.msra.mxu0 %v1106
      %1124 = vmatprep.subr.bf16.mxu0 0
      %1125 = vmatpush1.bf16.msra.mxu0 %v1107
      %1126 = vmatprep.subr.bf16.mxu0 0
      %1127 = vmatpush1.bf16.msra.mxu0 %v1108
      %1128 = vmatprep.subr.bf16.mxu0 0
      %1129 = vmatpush1.bf16.msra.mxu0 %v1109
      %1130 = vmatprep.subr.bf16.mxu0 0
      %1131 = vmatpush1.bf16.msra.mxu0 %v1110
      %1132 = vmatprep.subr.bf16.mxu0 0
      %1133 = vmatpush1.bf16.msra.mxu0 %v1111
      %1134 = vmatprep.subr.bf16.mxu0 0
      %1135 = vmatpush1.bf16.msra.mxu0 %v1112
      %1136 = vmatprep.subr.bf16.mxu0 0
      %1137 = vmatpush1.bf16.msra.mxu0 %v1113
      %1138 = vmatprep.subr.bf16.mxu0 0
      %1139 = vmatpush1.bf16.msra.mxu0 0
      %1140 = vmatprep.subr.bf16.mxu0 0
      %1141 = vmatpush1.bf16.msra.mxu0 0
      %1142 = vmatprep.subr.bf16.mxu0 0
      %1143 = vmatpush1.bf16.msra.mxu0 0
      %1144 = vmatprep.subr.bf16.mxu0 0
      %1145 = vmatpush1.bf16.msra.mxu0 0
      %1146 = vmatprep.subr.bf16.mxu0 0
      %1147 = vmatpush1.bf16.msra.mxu0 0
      %1148 = vmatprep.subr.bf16.mxu0 0
      %1149 = vmatpush1.bf16.msra.mxu0 0
      %1150 = vmatprep.subr.bf16.mxu0 0
      %1151 = vmatpush1.bf16.msra.mxu0 0
      %1152 = vmatprep.subr.bf16.mxu0 0
      %1153 = vmatpush1.bf16.msra.mxu0 0
      %1154 = vmatprep.mubr.bf16.mxu0 0
      %1155 = vmatmul.mubr.bf16.gmra.mrb[0].mxu0 %v1071
      %v1156 = vpop.f32.mrb[0].mxu0
      %v1157 = vadd.f32 0.0, %v1156
      %v1158 = vpop.f32.mrb[0].mxu0
      %v1159 = vpop.f32.mrb[0].mxu0
      %v1160 = vadd.f32 0.0, %v1159
      %v1161 = vpop.f32.mrb[0].mxu0
      %1162 = vmatprep.mubr.bf16.mxu0 0
      %1163 = vmatmul.mubr.bf16.gmra.mrb[0].mxu0 %v1070
      %v1164 = vpop.f32.mrb[0].mxu0
      %v1165 = vadd.f32 0.0, %v1164
      %v1166 = vpop.f32.mrb[0].mxu0
      %v1167 = vpop.f32.mrb[0].mxu0
      %v1168 = vpop.f32.mrb[0].mxu0
      %1169 = vdwg.mxu0
      %v1170 = vadd.f32 %v1020, %v1157
      %v1171 = vadd.f32 %v1021, %v1160
      %v1172 = vadd.f32 %v1022, %v1165
      %s1173 = scalar_lea.vmem %s3, 384
      %v1174 = vld [vmem:[%s1173] sm:$0xf]
      %v1175 = vld [vmem:[%s1173 + $0x4] sm:$0xf]
      %v1176 = vld [vmem:[%s1173 + $0x8] sm:$0xf]
      %v1177 = vld [vmem:[%s1173 + $0xc] sm:$0xf]
      %v1178 = vld [vmem:[%s1173 + $0x10] sm:$0xf]
      %v1179 = vld [vmem:[%s1173 + $0x14] sm:$0xf]
      %v1180 = vld [vmem:[%s1173 + $0x18] sm:$0xf]
      %v1181 = vld [vmem:[%s1173 + $0x1c] sm:$0xf]
      %v1182 = vld [vmem:[%s1173 + $0x20] sm:$0xf]
      %v1183 = vld [vmem:[%s1173 + $0x24] sm:$0xf]
      %v1184 = vld [vmem:[%s1173 + $0x28] sm:$0xf]
      %v1185 = vld [vmem:[%s1173 + $0x2c] sm:$0xf]
      %v1186 = vld [vmem:[%s1173 + $0x30] sm:$0xf]
      %v1187 = vld [vmem:[%s1173 + $0x34] sm:$0xf]
      %v1188 = vld [vmem:[%s1173 + $0x38] sm:$0xf]
      %v1189 = vld [vmem:[%s1173 + $0x3c] sm:$0xf]
      %v1190 = vpack.c.b16 %v1050, %v1049
      %v1191 = vpack.c.b16 %v1051, %v1051
      %v1210 = vunpack.c.l.b16 %v1174
      %v1211 = vunpack.c.l.b16 %v1175
      %v1212 = vunpack.c.l.b16 %v1176
      %v1213 = vunpack.c.l.b16 %v1177
      %v1214 = vunpack.c.l.b16 %v1178
      %v1215 = vunpack.c.l.b16 %v1179
      %v1216 = vunpack.c.l.b16 %v1180
      %v1217 = vunpack.c.l.b16 %v1181
      %v1218 = vunpack.c.l.b16 %v1182
      %v1219 = vunpack.c.l.b16 %v1183
      %v1220 = vunpack.c.l.b16 %v1184
      %v1221 = vunpack.c.l.b16 %v1185
      %v1222 = vunpack.c.l.b16 %v1186
      %v1223 = vunpack.c.l.b16 %v1187
      %v1224 = vunpack.c.l.b16 %v1188
      %v1225 = vunpack.c.l.b16 %v1189
      %v1226 = vpack.c.b16 %v1211, %v1210
      %v1227 = vpack.c.b16 %v1213, %v1212
      %v1228 = vpack.c.b16 %v1215, %v1214
      %v1229 = vpack.c.b16 %v1217, %v1216
      %v1230 = vpack.c.b16 %v1219, %v1218
      %v1231 = vpack.c.b16 %v1221, %v1220
      %v1232 = vpack.c.b16 %v1223, %v1222
      %v1233 = vpack.c.b16 %v1225, %v1224
      %1242 = vmatprep.subr.bf16.mxu0 0
      %1243 = vmatpush1.bf16.msra.mxu0 %v1226
      %1244 = vmatprep.subr.bf16.mxu0 0
      %1245 = vmatpush1.bf16.msra.mxu0 %v1227
      %1246 = vmatprep.subr.bf16.mxu0 0
      %1247 = vmatpush1.bf16.msra.mxu0 %v1228
      %1248 = vmatprep.subr.bf16.mxu0 0
      %1249 = vmatpush1.bf16.msra.mxu0 %v1229
      %1250 = vmatprep.subr.bf16.mxu0 0
      %1251 = vmatpush1.bf16.msra.mxu0 %v1230
      %1252 = vmatprep.subr.bf16.mxu0 0
      %1253 = vmatpush1.bf16.msra.mxu0 %v1231
      %1254 = vmatprep.subr.bf16.mxu0 0
      %1255 = vmatpush1.bf16.msra.mxu0 %v1232
      %1256 = vmatprep.subr.bf16.mxu0 0
      %1257 = vmatpush1.bf16.msra.mxu0 %v1233
      %1258 = vmatprep.subr.bf16.mxu0 0
      %1259 = vmatpush1.bf16.msra.mxu0 0
      %1260 = vmatprep.subr.bf16.mxu0 0
      %1261 = vmatpush1.bf16.msra.mxu0 0
      %1262 = vmatprep.subr.bf16.mxu0 0
      %1263 = vmatpush1.bf16.msra.mxu0 0
      %1264 = vmatprep.subr.bf16.mxu0 0
      %1265 = vmatpush1.bf16.msra.mxu0 0
      %1266 = vmatprep.subr.bf16.mxu0 0
      %1267 = vmatpush1.bf16.msra.mxu0 0
      %1268 = vmatprep.subr.bf16.mxu0 0
      %1269 = vmatpush1.bf16.msra.mxu0 0
      %1270 = vmatprep.subr.bf16.mxu0 0
      %1271 = vmatpush1.bf16.msra.mxu0 0
      %1272 = vmatprep.subr.bf16.mxu0 0
      %1273 = vmatpush1.bf16.msra.mxu0 0
      %1274 = vmatprep.mubr.bf16.mxu0 0
      %1275 = vmatmul.mubr.bf16.gmra.mrb[0].mxu0 %v1190
      %v1276 = vpop.f32.mrb[0].mxu0
      %v1277 = vadd.f32 0.0, %v1276
      %v1278 = vpop.f32.mrb[0].mxu0
      %v1279 = vpop.f32.mrb[0].mxu0
      %v1280 = vadd.f32 0.0, %v1279
      %v1281 = vpop.f32.mrb[0].mxu0
      %1282 = vmatprep.mubr.bf16.mxu0 0
      %1283 = vmatmul.mubr.bf16.gmra.mrb[0].mxu0 %v1191
      %v1284 = vpop.f32.mrb[0].mxu0
      %v1285 = vadd.f32 0.0, %v1284
      %v1286 = vpop.f32.mrb[0].mxu0
      %v1287 = vpop.f32.mrb[0].mxu0
      %v1288 = vpop.f32.mrb[0].mxu0
      %1289 = vdwg.mxu0
      %v1290 = vadd.f32 %v1170, %v1277
      %v1291 = vadd.f32 %v1171, %v1280
      %v1292 = vadd.f32 %v1172, %v1285
      %v1293 = vld [vmem:[#allocation2 + $0xc] sm:$0x3]
      %s1294 = scalar_lea.vmem %s3, 448
      %v1295 = vld [vmem:[%s1294] sm:$0xf]
      %v1296 = vld [vmem:[%s1294 + $0x4] sm:$0xf]
      %v1297 = vld [vmem:[%s1294 + $0x8] sm:$0xf]
      %v1298 = vld [vmem:[%s1294 + $0xc] sm:$0xf]
      %v1299 = vld [vmem:[%s1294 + $0x10] sm:$0xf]
      %v1300 = vld [vmem:[%s1294 + $0x14] sm:$0xf]
      %v1301 = vld [vmem:[%s1294 + $0x18] sm:$0xf]
      %v1302 = vld [vmem:[%s1294 + $0x1c] sm:$0xf]
      %v1303 = vld [vmem:[%s1294 + $0x20] sm:$0xf]
      %v1304 = vld [vmem:[%s1294 + $0x24] sm:$0xf]
      %v1305 = vld [vmem:[%s1294 + $0x28] sm:$0xf]
      %v1306 = vld [vmem:[%s1294 + $0x2c] sm:$0xf]
      %v1307 = vld [vmem:[%s1294 + $0x30] sm:$0xf]
      %v1308 = vld [vmem:[%s1294 + $0x34] sm:$0xf]
      %v1309 = vld [vmem:[%s1294 + $0x38] sm:$0xf]
      %v1310 = vld [vmem:[%s1294 + $0x3c] sm:$0xf]
      %v1312 = vunpack.c.l.b16 %v1293
      %v1313 = vpack.c.b16 %v1312, %v1312
      %v1315 = vshrl.u32 %v1190, 16
      %v1317 = vshll.u32 %v1190, 16
      %v1319 = vrot.slane %v1317, 1
      %v1320 = vor.u32 %v1315, %v1319
      %v1322 = vshll.u32 %v1313, 16
      %v1324 = vrot.slane %v1322, 1
      %v1325 = vsel %vm412, %v1320, %v1324
      %v1326 = vshrl.u32 %v1313, 16
      %v1328 = vor.u32 %v1326, %v1324
      %v1347 = vunpack.c.l.b16 %v1295
      %v1348 = vunpack.c.l.b16 %v1296
      %v1349 = vunpack.c.l.b16 %v1297
      %v1350 = vunpack.c.l.b16 %v1298
      %v1351 = vunpack.c.l.b16 %v1299
      %v1352 = vunpack.c.l.b16 %v1300
      %v1353 = vunpack.c.l.b16 %v1301
      %v1354 = vunpack.c.l.b16 %v1302
      %v1355 = vunpack.c.l.b16 %v1303
      %v1356 = vunpack.c.l.b16 %v1304
      %v1357 = vunpack.c.l.b16 %v1305
      %v1358 = vunpack.c.l.b16 %v1306
      %v1359 = vunpack.c.l.b16 %v1307
      %v1360 = vunpack.c.l.b16 %v1308
      %v1361 = vunpack.c.l.b16 %v1309
      %v1362 = vunpack.c.l.b16 %v1310
      %v1363 = vpack.c.b16 %v1348, %v1347
      %v1364 = vpack.c.b16 %v1350, %v1349
      %v1365 = vpack.c.b16 %v1352, %v1351
      %v1366 = vpack.c.b16 %v1354, %v1353
      %v1367 = vpack.c.b16 %v1356, %v1355
      %v1368 = vpack.c.b16 %v1358, %v1357
      %v1369 = vpack.c.b16 %v1360, %v1359
      %v1370 = vpack.c.b16 %v1362, %v1361
      %1379 = vmatprep.subr.bf16.mxu0 0
      %1380 = vmatpush1.bf16.msra.mxu0 %v1363
      %1381 = vmatprep.subr.bf16.mxu0 0
      %1382 = vmatpush1.bf16.msra.mxu0 %v1364
      %1383 = vmatprep.subr.bf16.mxu0 0
      %1384 = vmatpush1.bf16.msra.mxu0 %v1365
      %1385 = vmatprep.subr.bf16.mxu0 0
      %1386 = vmatpush1.bf16.msra.mxu0 %v1366
      %1387 = vmatprep.subr.bf16.mxu0 0
      %1388 = vmatpush1.bf16.msra.mxu0 %v1367
      %1389 = vmatprep.subr.bf16.mxu0 0
      %1390 = vmatpush1.bf16.msra.mxu0 %v1368
      %1391 = vmatprep.subr.bf16.mxu0 0
      %1392 = vmatpush1.bf16.msra.mxu0 %v1369
      %1393 = vmatprep.subr.bf16.mxu0 0
      %1394 = vmatpush1.bf16.msra.mxu0 %v1370
      %1395 = vmatprep.subr.bf16.mxu0 0
      %1396 = vmatpush1.bf16.msra.mxu0 0
      %1397 = vmatprep.subr.bf16.mxu0 0
      %1398 = vmatpush1.bf16.msra.mxu0 0
      %1399 = vmatprep.subr.bf16.mxu0 0
      %1400 = vmatpush1.bf16.msra.mxu0 0
      %1401 = vmatprep.subr.bf16.mxu0 0
      %1402 = vmatpush1.bf16.msra.mxu0 0
      %1403 = vmatprep.subr.bf16.mxu0 0
      %1404 = vmatpush1.bf16.msra.mxu0 0
      %1405 = vmatprep.subr.bf16.mxu0 0
      %1406 = vmatpush1.bf16.msra.mxu0 0
      %1407 = vmatprep.subr.bf16.mxu0 0
      %1408 = vmatpush1.bf16.msra.mxu0 0
      %1409 = vmatprep.subr.bf16.mxu0 0
      %1410 = vmatpush1.bf16.msra.mxu0 0
      %1411 = vmatprep.mubr.bf16.mxu0 0
      %1412 = vmatmul.mubr.bf16.gmra.mrb[0].mxu0 %v1325
      %v1413 = vpop.f32.mrb[0].mxu0
      %v1414 = vadd.f32 0.0, %v1413
      %v1415 = vpop.f32.mrb[0].mxu0
      %v1416 = vpop.f32.mrb[0].mxu0
      %v1417 = vadd.f32 0.0, %v1416
      %v1418 = vpop.f32.mrb[0].mxu0
      %1419 = vmatprep.mubr.bf16.mxu0 0
      %1420 = vmatmul.mubr.bf16.gmra.mrb[0].mxu0 %v1328
      %v1421 = vpop.f32.mrb[0].mxu0
      %v1422 = vadd.f32 0.0, %v1421
      %v1423 = vpop.f32.mrb[0].mxu0
      %v1424 = vpop.f32.mrb[0].mxu0
      %v1425 = vpop.f32.mrb[0].mxu0
      %1426 = vdwg.mxu0
      %v1427 = vadd.f32 %v1290, %v1414
      %v1428 = vadd.f32 %v1291, %v1417
      %v1429 = vadd.f32 %v1292, %v1422
      %v1430 = vld [vmem:[#allocation2 + $0x4] sm:$0xc]
      %v1431 = vld [vmem:[#allocation2 + $0xc] sm:$0x7]
      %s1432 = scalar_lea.vmem %s3, 512
      %v1433 = vld [vmem:[%s1432] sm:$0xf]
      %v1434 = vld [vmem:[%s1432 + $0x4] sm:$0xf]
      %v1435 = vld [vmem:[%s1432 + $0x8] sm:$0xf]
      %v1436 = vld [vmem:[%s1432 + $0xc] sm:$0xf]
      %v1437 = vld [vmem:[%s1432 + $0x10] sm:$0xf]
      %v1438 = vld [vmem:[%s1432 + $0x14] sm:$0xf]
      %v1439 = vld [vmem:[%s1432 + $0x18] sm:$0xf]
      %v1440 = vld [vmem:[%s1432 + $0x1c] sm:$0xf]
      %v1441 = vld [vmem:[%s1432 + $0x20] sm:$0xf]
      %v1442 = vld [vmem:[%s1432 + $0x24] sm:$0xf]
      %v1443 = vld [vmem:[%s1432 + $0x28] sm:$0xf]
      %v1444 = vld [vmem:[%s1432 + $0x2c] sm:$0xf]
      %v1445 = vld [vmem:[%s1432 + $0x30] sm:$0xf]
      %v1446 = vld [vmem:[%s1432 + $0x34] sm:$0xf]
      %v1447 = vld [vmem:[%s1432 + $0x38] sm:$0xf]
      %v1448 = vld [vmem:[%s1432 + $0x3c] sm:$0xf]
      %v1451 = vunpack.c.l.b16 %v1430
      %v1452 = vunpack.c.l.b16 %v1431
      %v1453 = vpack.c.b16 %v1050, %v1451
      %v1454 = vpack.c.b16 %v1452, %v1452
      %vm1455 = vcmask 1045504
      %v1456 = vrot.slane %v1453, 2
      %v1457 = vrot.slane %v1454, 2
      %v1458 = vsel %vm1455, %v1456, %v1457
      %v1477 = vunpack.c.l.b16 %v1433
      %v1478 = vunpack.c.l.b16 %v1434
      %v1479 = vunpack.c.l.b16 %v1435
      %v1480 = vunpack.c.l.b16 %v1436
      %v1481 = vunpack.c.l.b16 %v1437
      %v1482 = vunpack.c.l.b16 %v1438
      %v1483 = vunpack.c.l.b16 %v1439
      %v1484 = vunpack.c.l.b16 %v1440
      %v1485 = vunpack.c.l.b16 %v1441
      %v1486 = vunpack.c.l.b16 %v1442
      %v1487 = vunpack.c.l.b16 %v1443
      %v1488 = vunpack.c.l.b16 %v1444
      %v1489 = vunpack.c.l.b16 %v1445
      %v1490 = vunpack.c.l.b16 %v1446
      %v1491 = vunpack.c.l.b16 %v1447
      %v1492 = vunpack.c.l.b16 %v1448
      %v1493 = vpack.c.b16 %v1478, %v1477
      %v1494 = vpack.c.b16 %v1480, %v1479
      %v1495 = vpack.c.b16 %v1482, %v1481
      %v1496 = vpack.c.b16 %v1484, %v1483
      %v1497 = vpack.c.b16 %v1486, %v1485
      %v1498 = vpack.c.b16 %v1488, %v1487
      %v1499 = vpack.c.b16 %v1490, %v1489
      %v1500 = vpack.c.b16 %v1492, %v1491
      %1509 = vmatprep.subr.bf16.mxu0 0
      %1510 = vmatpush1.bf16.msra.mxu0 %v1493
      %1511 = vmatprep.subr.bf16.mxu0 0
      %1512 = vmatpush1.bf16.msra.mxu0 %v1494
      %1513 = vmatprep.subr.bf16.mxu0 0
      %1514 = vmatpush1.bf16.msra.mxu0 %v1495
      %1515 = vmatprep.subr.bf16.mxu0 0
      %1516 = vmatpush1.bf16.msra.mxu0 %v1496
      %1517 = vmatprep.subr.bf16.mxu0 0
      %1518 = vmatpush1.bf16.msra.mxu0 %v1497
      %1519 = vmatprep.subr.bf16.mxu0 0
      %1520 = vmatpush1.bf16.msra.mxu0 %v1498
      %1521 = vmatprep.subr.bf16.mxu0 0
      %1522 = vmatpush1.bf16.msra.mxu0 %v1499
      %1523 = vmatprep.subr.bf16.mxu0 0
      %1524 = vmatpush1.bf16.msra.mxu0 %v1500
      %1525 = vmatprep.subr.bf16.mxu0 0
      %1526 = vmatpush1.bf16.msra.mxu0 0
      %1527 = vmatprep.subr.bf16.mxu0 0
      %1528 = vmatpush1.bf16.msra.mxu0 0
      %1529 = vmatprep.subr.bf16.mxu0 0
      %1530 = vmatpush1.bf16.msra.mxu0 0
      %1531 = vmatprep.subr.bf16.mxu0 0
      %1532 = vmatpush1.bf16.msra.mxu0 0
      %1533 = vmatprep.subr.bf16.mxu0 0
      %1534 = vmatpush1.bf16.msra.mxu0 0
      %1535 = vmatprep.subr.bf16.mxu0 0
      %1536 = vmatpush1.bf16.msra.mxu0 0
      %1537 = vmatprep.subr.bf16.mxu0 0
      %1538 = vmatpush1.bf16.msra.mxu0 0
      %1539 = vmatprep.subr.bf16.mxu0 0
      %1540 = vmatpush1.bf16.msra.mxu0 0
      %1541 = vmatprep.mubr.bf16.mxu0 0
      %1542 = vmatmul.mubr.bf16.gmra.mrb[0].mxu0 %v1458
      %v1543 = vpop.f32.mrb[0].mxu0
      %v1544 = vadd.f32 0.0, %v1543
      %v1545 = vpop.f32.mrb[0].mxu0
      %v1546 = vpop.f32.mrb[0].mxu0
      %v1547 = vadd.f32 0.0, %v1546
      %v1548 = vpop.f32.mrb[0].mxu0
      %1549 = vmatprep.mubr.bf16.mxu0 0
      %1550 = vmatmul.mubr.bf16.gmra.mrb[0].mxu0 %v1457
      %v1551 = vpop.f32.mrb[0].mxu0
      %v1552 = vadd.f32 0.0, %v1551
      %v1553 = vpop.f32.mrb[0].mxu0
      %v1554 = vpop.f32.mrb[0].mxu0
      %v1555 = vpop.f32.mrb[0].mxu0
      %1556 = vdwg.mxu0
      %v1557 = vadd.f32 %v1427, %v1544
      %v1558 = vadd.f32 %v1428, %v1547
      %v1559 = vadd.f32 %v1429, %v1552
      %v1560 = vld [vmem:[#allocation2 + $0xc] sm:$0xf]
      %s1561 = scalar_lea.vmem %s3, 576
      %v1562 = vld [vmem:[%s1561] sm:$0xf]
      %v1563 = vld [vmem:[%s1561 + $0x4] sm:$0xf]
      %v1564 = vld [vmem:[%s1561 + $0x8] sm:$0xf]
      %v1565 = vld [vmem:[%s1561 + $0xc] sm:$0xf]
      %v1566 = vld [vmem:[%s1561 + $0x10] sm:$0xf]
      %v1567 = vld [vmem:[%s1561 + $0x14] sm:$0xf]
      %v1568 = vld [vmem:[%s1561 + $0x18] sm:$0xf]
      %v1569 = vld [vmem:[%s1561 + $0x1c] sm:$0xf]
      %v1570 = vld [vmem:[%s1561 + $0x20] sm:$0xf]
      %v1571 = vld [vmem:[%s1561 + $0x24] sm:$0xf]
      %v1572 = vld [vmem:[%s1561 + $0x28] sm:$0xf]
      %v1573 = vld [vmem:[%s1561 + $0x2c] sm:$0xf]
      %v1574 = vld [vmem:[%s1561 + $0x30] sm:$0xf]
      %v1575 = vld [vmem:[%s1561 + $0x34] sm:$0xf]
      %v1576 = vld [vmem:[%s1561 + $0x38] sm:$0xf]
      %v1577 = vld [vmem:[%s1561 + $0x3c] sm:$0xf]
      %v1579 = vunpack.c.l.b16 %v1560
      %v1580 = vpack.c.b16 %v1579, %v1579
      %vm1581 = vsmask.f32 5376
      %v1583 = vshrl.u32 %v1453, 16
      %v1585 = vrot.slane %v1583, 2
      %v1586 = vshll.u32 %v1453, 16
      %v1588 = vrot.slane %v1586, 3
      %v1589 = vor.u32 %v1585, %v1588
      %v1591 = vshrl.u32 %v1580, 16
      %v1593 = vrot.slane %v1591, 2
      %v1594 = vshll.u32 %v1580, 16
      %v1596 = vrot.slane %v1594, 3
      %v1597 = vor.u32 %v1593, %v1596
      %v1598 = vsel %vm1581, %v1589, %v1597
      %v1617 = vunpack.c.l.b16 %v1562
      %v1618 = vunpack.c.l.b16 %v1563
      %v1619 = vunpack.c.l.b16 %v1564
      %v1620 = vunpack.c.l.b16 %v1565
      %v1621 = vunpack.c.l.b16 %v1566
      %v1622 = vunpack.c.l.b16 %v1567
      %v1623 = vunpack.c.l.b16 %v1568
      %v1624 = vunpack.c.l.b16 %v1569
      %v1625 = vunpack.c.l.b16 %v1570
      %v1626 = vunpack.c.l.b16 %v1571
      %v1627 = vunpack.c.l.b16 %v1572
      %v1628 = vunpack.c.l.b16 %v1573
      %v1629 = vunpack.c.l.b16 %v1574
      %v1630 = vunpack.c.l.b16 %v1575
      %v1631 = vunpack.c.l.b16 %v1576
      %v1632 = vunpack.c.l.b16 %v1577
      %v1633 = vpack.c.b16 %v1618, %v1617
      %v1634 = vpack.c.b16 %v1620, %v1619
      %v1635 = vpack.c.b16 %v1622, %v1621
      %v1636 = vpack.c.b16 %v1624, %v1623
      %v1637 = vpack.c.b16 %v1626, %v1625
      %v1638 = vpack.c.b16 %v1628, %v1627
      %v1639 = vpack.c.b16 %v1630, %v1629
      %v1640 = vpack.c.b16 %v1632, %v1631
      %1649 = vmatprep.subr.bf16.mxu0 0
      %1650 = vmatpush1.bf16.msra.mxu0 %v1633
      %1651 = vmatprep.subr.bf16.mxu0 0
      %1652 = vmatpush1.bf16.msra.mxu0 %v1634
      %1653 = vmatprep.subr.bf16.mxu0 0
      %1654 = vmatpush1.bf16.msra.mxu0 %v1635
      %1655 = vmatprep.subr.bf16.mxu0 0
      %1656 = vmatpush1.bf16.msra.mxu0 %v1636
      %1657 = vmatprep.subr.bf16.mxu0 0
      %1658 = vmatpush1.bf16.msra.mxu0 %v1637
      %1659 = vmatprep.subr.bf16.mxu0 0
      %1660 = vmatpush1.bf16.msra.mxu0 %v1638
      %1661 = vmatprep.subr.bf16.mxu0 0
      %1662 = vmatpush1.bf16.msra.mxu0 %v1639
      %1663 = vmatprep.subr.bf16.mxu0 0
      %1664 = vmatpush1.bf16.msra.mxu0 %v1640
      %1665 = vmatprep.subr.bf16.mxu0 0
      %1666 = vmatpush1.bf16.msra.mxu0 0
      %1667 = vmatprep.subr.bf16.mxu0 0
      %1668 = vmatpush1.bf16.msra.mxu0 0
      %1669 = vmatprep.subr.bf16.mxu0 0
      %1670 = vmatpush1.bf16.msra.mxu0 0
      %1671 = vmatprep.subr.bf16.mxu0 0
      %1672 = vmatpush1.bf16.msra.mxu0 0
      %1673 = vmatprep.subr.bf16.mxu0 0
      %1674 = vmatpush1.bf16.msra.mxu0 0
      %1675 = vmatprep.subr.bf16.mxu0 0
      %1676 = vmatpush1.bf16.msra.mxu0 0
      %1677 = vmatprep.subr.bf16.mxu0 0
      %1678 = vmatpush1.bf16.msra.mxu0 0
      %1679 = vmatprep.subr.bf16.mxu0 0
      %1680 = vmatpush1.bf16.msra.mxu0 0
      %1681 = vmatprep.mubr.bf16.mxu0 0
      %1682 = vmatmul.mubr.bf16.gmra.mrb[0].mxu0 %v1598
      %v1683 = vpop.f32.mrb[0].mxu0
      %v1684 = vadd.f32 0.0, %v1683
      %v1685 = vpop.f32.mrb[0].mxu0
      %v1686 = vpop.f32.mrb[0].mxu0
      %v1687 = vadd.f32 0.0, %v1686
      %v1688 = vpop.f32.mrb[0].mxu0
      %1689 = vmatprep.mubr.bf16.mxu0 0
      %1690 = vmatmul.mubr.bf16.gmra.mrb[0].mxu0 %v1597
      %v1691 = vpop.f32.mrb[0].mxu0
      %v1692 = vadd.f32 0.0, %v1691
      %v1693 = vpop.f32.mrb[0].mxu0
      %v1694 = vpop.f32.mrb[0].mxu0
      %v1695 = vpop.f32.mrb[0].mxu0
      %1696 = vdwg.mxu0
      %v1697 = vadd.f32 %v1557, %v1684
      %v1698 = vadd.f32 %v1558, %v1687
      %v1699 = vadd.f32 %v1559, %v1692
      %v1700 = vld [vmem:[#allocation2 + $0x4] sm:$0x8]
      %s1701 = scalar_lea.vmem %s3, 640
      %v1702 = vld [vmem:[%s1701] sm:$0xf]
      %v1703 = vld [vmem:[%s1701 + $0x4] sm:$0xf]
      %v1704 = vld [vmem:[%s1701 + $0x8] sm:$0xf]
      %v1705 = vld [vmem:[%s1701 + $0xc] sm:$0xf]
      %v1706 = vld [vmem:[%s1701 + $0x10] sm:$0xf]
      %v1707 = vld [vmem:[%s1701 + $0x14] sm:$0xf]
      %v1708 = vld [vmem:[%s1701 + $0x18] sm:$0xf]
      %v1709 = vld [vmem:[%s1701 + $0x1c] sm:$0xf]
      %v1710 = vld [vmem:[%s1701 + $0x20] sm:$0xf]
      %v1711 = vld [vmem:[%s1701 + $0x24] sm:$0xf]
      %v1712 = vld [vmem:[%s1701 + $0x28] sm:$0xf]
      %v1713 = vld [vmem:[%s1701 + $0x2c] sm:$0xf]
      %v1714 = vld [vmem:[%s1701 + $0x30] sm:$0xf]
      %v1715 = vld [vmem:[%s1701 + $0x34] sm:$0xf]
      %v1716 = vld [vmem:[%s1701 + $0x38] sm:$0xf]
      %v1717 = vld [vmem:[%s1701 + $0x3c] sm:$0xf]
      %v1719 = vunpack.c.l.b16 %v1700
      %v1720 = vpack.c.b16 %v1050, %v1719
      %v1721 = vrot.slane %v1720, 3
      %v1722 = vrot.slane %v1580, 3
      %v1723 = vsel %vm918, %v1721, %v1722
      %v1742 = vunpack.c.l.b16 %v1702
      %v1743 = vunpack.c.l.b16 %v1703
      %v1744 = vunpack.c.l.b16 %v1704
      %v1745 = vunpack.c.l.b16 %v1705
      %v1746 = vunpack.c.l.b16 %v1706
      %v1747 = vunpack.c.l.b16 %v1707
      %v1748 = vunpack.c.l.b16 %v1708
      %v1749 = vunpack.c.l.b16 %v1709
      %v1750 = vunpack.c.l.b16 %v1710
      %v1751 = vunpack.c.l.b16 %v1711
      %v1752 = vunpack.c.l.b16 %v1712
      %v1753 = vunpack.c.l.b16 %v1713
      %v1754 = vunpack.c.l.b16 %v1714
      %v1755 = vunpack.c.l.b16 %v1715
      %v1756 = vunpack.c.l.b16 %v1716
      %v1757 = vunpack.c.l.b16 %v1717
      %v1758 = vpack.c.b16 %v1743, %v1742
      %v1759 = vpack.c.b16 %v1745, %v1744
      %v1760 = vpack.c.b16 %v1747, %v1746
      %v1761 = vpack.c.b16 %v1749, %v1748
      %v1762 = vpack.c.b16 %v1751, %v1750
      %v1763 = vpack.c.b16 %v1753, %v1752
      %v1764 = vpack.c.b16 %v1755, %v1754
      %v1765 = vpack.c.b16 %v1757, %v1756
      %1774 = vmatprep.subr.bf16.mxu0 0
      %1775 = vmatpush1.bf16.msra.mxu0 %v1758
      %1776 = vmatprep.subr.bf16.mxu0 0
      %1777 = vmatpush1.bf16.msra.mxu0 %v1759
      %1778 = vmatprep.subr.bf16.mxu0 0
      %1779 = vmatpush1.bf16.msra.mxu0 %v1760
      %1780 = vmatprep.subr.bf16.mxu0 0
      %1781 = vmatpush1.bf16.msra.mxu0 %v1761
      %1782 = vmatprep.subr.bf16.mxu0 0
      %1783 = vmatpush1.bf16.msra.mxu0 %v1762
      %1784 = vmatprep.subr.bf16.mxu0 0
      %1785 = vmatpush1.bf16.msra.mxu0 %v1763
      %1786 = vmatprep.subr.bf16.mxu0 0
      %1787 = vmatpush1.bf16.msra.mxu0 %v1764
      %1788 = vmatprep.subr.bf16.mxu0 0
      %1789 = vmatpush1.bf16.msra.mxu0 %v1765
      %1790 = vmatprep.subr.bf16.mxu0 0
      %1791 = vmatpush1.bf16.msra.mxu0 0
      %1792 = vmatprep.subr.bf16.mxu0 0
      %1793 = vmatpush1.bf16.msra.mxu0 0
      %1794 = vmatprep.subr.bf16.mxu0 0
      %1795 = vmatpush1.bf16.msra.mxu0 0
      %1796 = vmatprep.subr.bf16.mxu0 0
      %1797 = vmatpush1.bf16.msra.mxu0 0
      %1798 = vmatprep.subr.bf16.mxu0 0
      %1799 = vmatpush1.bf16.msra.mxu0 0
      %1800 = vmatprep.subr.bf16.mxu0 0
      %1801 = vmatpush1.bf16.msra.mxu0 0
      %1802 = vmatprep.subr.bf16.mxu0 0
      %1803 = vmatpush1.bf16.msra.mxu0 0
      %1804 = vmatprep.subr.bf16.mxu0 0
      %1805 = vmatpush1.bf16.msra.mxu0 0
      %1806 = vmatprep.mubr.bf16.mxu0 0
      %1807 = vmatmul.mubr.bf16.gmra.mrb[0].mxu0 %v1723
      %v1808 = vpop.f32.mrb[0].mxu0
      %v1809 = vadd.f32 0.0, %v1808
      %v1810 = vpop.f32.mrb[0].mxu0
      %v1811 = vpop.f32.mrb[0].mxu0
      %v1812 = vadd.f32 0.0, %v1811
      %v1813 = vpop.f32.mrb[0].mxu0
      %1814 = vmatprep.mubr.bf16.mxu0 0
      %1815 = vmatmul.mubr.bf16.gmra.mrb[0].mxu0 %v1722
      %v1816 = vpop.f32.mrb[0].mxu0
      %v1817 = vadd.f32 0.0, %v1816
      %v1818 = vpop.f32.mrb[0].mxu0
      %v1819 = vpop.f32.mrb[0].mxu0
      %v1820 = vpop.f32.mrb[0].mxu0
      %1821 = vdwg.mxu0
      %v1822 = vadd.f32 %v1697, %v1809
      %v1823 = vadd.f32 %v1698, %v1812
      %v1824 = vadd.f32 %v1699, %v1817
      %v1825 = vld [vmem:[#allocation2 + $0x4] sm:$0x8]
      %v1826 = vld [vmem:[#allocation2 + $0x8] sm:$0xf]
      %v1827 = vld [vmem:[#allocation2 + $0xc] sm:$0xf]
      %v1828 = vld [vmem:[#allocation2 + $0x10] sm:$0x1]
      %s1829 = scalar_lea.vmem %s3, 704
      %v1830 = vld [vmem:[%s1829] sm:$0xf]
      %v1831 = vld [vmem:[%s1829 + $0x4] sm:$0xf]
      %v1832 = vld [vmem:[%s1829 + $0x8] sm:$0xf]
      %v1833 = vld [vmem:[%s1829 + $0xc] sm:$0xf]
      %v1834 = vld [vmem:[%s1829 + $0x10] sm:$0xf]
      %v1835 = vld [vmem:[%s1829 + $0x14] sm:$0xf]
      %v1836 = vld [vmem:[%s1829 + $0x18] sm:$0xf]
      %v1837 = vld [vmem:[%s1829 + $0x1c] sm:$0xf]
      %v1838 = vld [vmem:[%s1829 + $0x20] sm:$0xf]
      %v1839 = vld [vmem:[%s1829 + $0x24] sm:$0xf]
      %v1840 = vld [vmem:[%s1829 + $0x28] sm:$0xf]
      %v1841 = vld [vmem:[%s1829 + $0x2c] sm:$0xf]
      %v1842 = vld [vmem:[%s1829 + $0x30] sm:$0xf]
      %v1843 = vld [vmem:[%s1829 + $0x34] sm:$0xf]
      %v1844 = vld [vmem:[%s1829 + $0x38] sm:$0xf]
      %v1845 = vld [vmem:[%s1829 + $0x3c] sm:$0xf]
      %v1850 = vunpack.c.l.b16 %v1825
      %v1851 = vunpack.c.l.b16 %v1826
      %v1852 = vunpack.c.l.b16 %v1827
      %v1853 = vunpack.c.l.b16 %v1828
      %v1854 = vpack.c.b16 %v1851, %v1850
      %v1855 = vpack.c.b16 %v1853, %v1852
      %v1857 = vshrl.u32 %v1854, 16
      %v1859 = vrot.slane %v1857, 3
      %v1860 = vshll.u32 %v1854, 16
      %v1862 = vrot.slane %v1860, 4
      %v1863 = vor.u32 %v1859, %v1862
      %v1865 = vshrl.u32 %v1855, 16
      %v1867 = vrot.slane %v1865, 3
      %v1868 = vshll.u32 %v1855, 16
      %v1870 = vrot.slane %v1868, 4
      %v1871 = vor.u32 %v1867, %v1870
      %v1872 = vsel %vm1054, %v1863, %v1871
      %v1891 = vunpack.c.l.b16 %v1830
      %v1892 = vunpack.c.l.b16 %v1831
      %v1893 = vunpack.c.l.b16 %v1832
      %v1894 = vunpack.c.l.b16 %v1833
      %v1895 = vunpack.c.l.b16 %v1834
      %v1896 = vunpack.c.l.b16 %v1835
      %v1897 = vunpack.c.l.b16 %v1836
      %v1898 = vunpack.c.l.b16 %v1837
      %v1899 = vunpack.c.l.b16 %v1838
      %v1900 = vunpack.c.l.b16 %v1839
      %v1901 = vunpack.c.l.b16 %v1840
      %v1902 = vunpack.c.l.b16 %v1841
      %v1903 = vunpack.c.l.b16 %v1842
      %v1904 = vunpack.c.l.b16 %v1843
      %v1905 = vunpack.c.l.b16 %v1844
      %v1906 = vunpack.c.l.b16 %v1845
      %v1907 = vpack.c.b16 %v1892, %v1891
      %v1908 = vpack.c.b16 %v1894, %v1893
      %v1909 = vpack.c.b16 %v1896, %v1895
      %v1910 = vpack.c.b16 %v1898, %v1897
      %v1911 = vpack.c.b16 %v1900, %v1899
      %v1912 = vpack.c.b16 %v1902, %v1901
      %v1913 = vpack.c.b16 %v1904, %v1903
      %v1914 = vpack.c.b16 %v1906, %v1905
      %1923 = vmatprep.subr.bf16.mxu0 0
      %1924 = vmatpush1.bf16.msra.mxu0 %v1907
      %1925 = vmatprep.subr.bf16.mxu0 0
      %1926 = vmatpush1.bf16.msra.mxu0 %v1908
      %1927 = vmatprep.subr.bf16.mxu0 0
      %1928 = vmatpush1.bf16.msra.mxu0 %v1909
      %1929 = vmatprep.subr.bf16.mxu0 0
      %1930 = vmatpush1.bf16.msra.mxu0 %v1910
      %1931 = vmatprep.subr.bf16.mxu0 0
      %1932 = vmatpush1.bf16.msra.mxu0 %v1911
      %1933 = vmatprep.subr.bf16.mxu0 0
      %1934 = vmatpush1.bf16.msra.mxu0 %v1912
      %1935 = vmatprep.subr.bf16.mxu0 0
      %1936 = vmatpush1.bf16.msra.mxu0 %v1913
      %1937 = vmatprep.subr.bf16.mxu0 0
      %1938 = vmatpush1.bf16.msra.mxu0 %v1914
      %1939 = vmatprep.subr.bf16.mxu0 0
      %1940 = vmatpush1.bf16.msra.mxu0 0
      %1941 = vmatprep.subr.bf16.mxu0 0
      %1942 = vmatpush1.bf16.msra.mxu0 0
      %1943 = vmatprep.subr.bf16.mxu0 0
      %1944 = vmatpush1.bf16.msra.mxu0 0
      %1945 = vmatprep.subr.bf16.mxu0 0
      %1946 = vmatpush1.bf16.msra.mxu0 0
      %1947 = vmatprep.subr.bf16.mxu0 0
      %1948 = vmatpush1.bf16.msra.mxu0 0
      %1949 = vmatprep.subr.bf16.mxu0 0
      %1950 = vmatpush1.bf16.msra.mxu0 0
      %1951 = vmatprep.subr.bf16.mxu0 0
      %1952 = vmatpush1.bf16.msra.mxu0 0
      %1953 = vmatprep.subr.bf16.mxu0 0
      %1954 = vmatpush1.bf16.msra.mxu0 0
      %1955 = vmatprep.mubr.bf16.mxu0 0
      %1956 = vmatmul.mubr.bf16.gmra.mrb[0].mxu0 %v1872
      %v1957 = vpop.f32.mrb[0].mxu0
      %v1958 = vadd.f32 0.0, %v1957
      %v1959 = vpop.f32.mrb[0].mxu0
      %v1960 = vpop.f32.mrb[0].mxu0
      %v1961 = vadd.f32 0.0, %v1960
      %v1962 = vpop.f32.mrb[0].mxu0
      %1963 = vmatprep.mubr.bf16.mxu0 0
      %1964 = vmatmul.mubr.bf16.gmra.mrb[0].mxu0 %v1871
      %v1965 = vpop.f32.mrb[0].mxu0
      %v1966 = vadd.f32 0.0, %v1965
      %v1967 = vpop.f32.mrb[0].mxu0
      %v1968 = vpop.f32.mrb[0].mxu0
      %v1969 = vpop.f32.mrb[0].mxu0
      %1970 = vdwg.mxu0
      %v1971 = vadd.f32 %v1822, %v1958
      %v1972 = vadd.f32 %v1823, %v1961
      %v1973 = vadd.f32 %v1824, %v1966
      %v1974 = vld [vmem:[#allocation2 + $0x8] sm:$0xe]
      %v1975 = vld [vmem:[#allocation2 + $0x10] sm:$0x3]
      %s1976 = scalar_lea.vmem %s3, 768
      %v1977 = vld [vmem:[%s1976] sm:$0xf]
      %v1978 = vld [vmem:[%s1976 + $0x4] sm:$0xf]
      %v1979 = vld [vmem:[%s1976 + $0x8] sm:$0xf]
      %v1980 = vld [vmem:[%s1976 + $0xc] sm:$0xf]
      %v1981 = vld [vmem:[%s1976 + $0x10] sm:$0xf]
      %v1982 = vld [vmem:[%s1976 + $0x14] sm:$0xf]
      %v1983 = vld [vmem:[%s1976 + $0x18] sm:$0xf]
      %v1984 = vld [vmem:[%s1976 + $0x1c] sm:$0xf]
      %v1985 = vld [vmem:[%s1976 + $0x20] sm:$0xf]
      %v1986 = vld [vmem:[%s1976 + $0x24] sm:$0xf]
      %v1987 = vld [vmem:[%s1976 + $0x28] sm:$0xf]
      %v1988 = vld [vmem:[%s1976 + $0x2c] sm:$0xf]
      %v1989 = vld [vmem:[%s1976 + $0x30] sm:$0xf]
      %v1990 = vld [vmem:[%s1976 + $0x34] sm:$0xf]
      %v1991 = vld [vmem:[%s1976 + $0x38] sm:$0xf]
      %v1992 = vld [vmem:[%s1976 + $0x3c] sm:$0xf]
      %v1995 = vunpack.c.l.b16 %v1974
      %v1996 = vunpack.c.l.b16 %v1975
      %v1997 = vpack.c.b16 %v1852, %v1995
      %v1998 = vpack.c.b16 %v1996, %v1996
      %v1999 = vrot.slane %v1997, 1
      %v2000 = vrot.slane %v1998, 1
      %v2001 = vsel %vm648, %v1999, %v2000
      %v2020 = vunpack.c.l.b16 %v1977
      %v2021 = vunpack.c.l.b16 %v1978
      %v2022 = vunpack.c.l.b16 %v1979
      %v2023 = vunpack.c.l.b16 %v1980
      %v2024 = vunpack.c.l.b16 %v1981
      %v2025 = vunpack.c.l.b16 %v1982
      %v2026 = vunpack.c.l.b16 %v1983
      %v2027 = vunpack.c.l.b16 %v1984
      %v2028 = vunpack.c.l.b16 %v1985
      %v2029 = vunpack.c.l.b16 %v1986
      %v2030 = vunpack.c.l.b16 %v1987
      %v2031 = vunpack.c.l.b16 %v1988
      %v2032 = vunpack.c.l.b16 %v1989
      %v2033 = vunpack.c.l.b16 %v1990
      %v2034 = vunpack.c.l.b16 %v1991
      %v2035 = vunpack.c.l.b16 %v1992
      %v2036 = vpack.c.b16 %v2021, %v2020
      %v2037 = vpack.c.b16 %v2023, %v2022
      %v2038 = vpack.c.b16 %v2025, %v2024
      %v2039 = vpack.c.b16 %v2027, %v2026
      %v2040 = vpack.c.b16 %v2029, %v2028
      %v2041 = vpack.c.b16 %v2031, %v2030
      %v2042 = vpack.c.b16 %v2033, %v2032
      %v2043 = vpack.c.b16 %v2035, %v2034
      %2052 = vmatprep.subr.bf16.mxu0 0
      %2053 = vmatpush1.bf16.msra.mxu0 %v2036
      %2054 = vmatprep.subr.bf16.mxu0 0
      %2055 = vmatpush1.bf16.msra.mxu0 %v2037
      %2056 = vmatprep.subr.bf16.mxu0 0
      %2057 = vmatpush1.bf16.msra.mxu0 %v2038
      %2058 = vmatprep.subr.bf16.mxu0 0
      %2059 = vmatpush1.bf16.msra.mxu0 %v2039
      %2060 = vmatprep.subr.bf16.mxu0 0
      %2061 = vmatpush1.bf16.msra.mxu0 %v2040
      %2062 = vmatprep.subr.bf16.mxu0 0
      %2063 = vmatpush1.bf16.msra.mxu0 %v2041
      %2064 = vmatprep.subr.bf16.mxu0 0
      %2065 = vmatpush1.bf16.msra.mxu0 %v2042
      %2066 = vmatprep.subr.bf16.mxu0 0
      %2067 = vmatpush1.bf16.msra.mxu0 %v2043
      %2068 = vmatprep.subr.bf16.mxu0 0
      %2069 = vmatpush1.bf16.msra.mxu0 0
      %2070 = vmatprep.subr.bf16.mxu0 0
      %2071 = vmatpush1.bf16.msra.mxu0 0
      %2072 = vmatprep.subr.bf16.mxu0 0
      %2073 = vmatpush1.bf16.msra.mxu0 0
      %2074 = vmatprep.subr.bf16.mxu0 0
      %2075 = vmatpush1.bf16.msra.mxu0 0
      %2076 = vmatprep.subr.bf16.mxu0 0
      %2077 = vmatpush1.bf16.msra.mxu0 0
      %2078 = vmatprep.subr.bf16.mxu0 0
      %2079 = vmatpush1.bf16.msra.mxu0 0
      %2080 = vmatprep.subr.bf16.mxu0 0
      %2081 = vmatpush1.bf16.msra.mxu0 0
      %2082 = vmatprep.subr.bf16.mxu0 0
      %2083 = vmatpush1.bf16.msra.mxu0 0
      %2084 = vmatprep.mubr.bf16.mxu0 0
      %2085 = vmatmul.mubr.bf16.gmra.mrb[0].mxu0 %v2001
      %v2086 = vpop.f32.mrb[0].mxu0
      %v2087 = vadd.f32 0.0, %v2086
      %v2088 = vpop.f32.mrb[0].mxu0
      %v2089 = vpop.f32.mrb[0].mxu0
      %v2090 = vadd.f32 0.0, %v2089
      %v2091 = vpop.f32.mrb[0].mxu0
      %2092 = vmatprep.mubr.bf16.mxu0 0
      %2093 = vmatmul.mubr.bf16.gmra.mrb[0].mxu0 %v2000
      %v2094 = vpop.f32.mrb[0].mxu0
      %v2095 = vadd.f32 0.0, %v2094
      %v2096 = vpop.f32.mrb[0].mxu0
      %v2097 = vpop.f32.mrb[0].mxu0
      %v2098 = vpop.f32.mrb[0].mxu0
      %2099 = vdwg.mxu0
      %v2100 = vadd.f32 %v1971, %v2087
      %v2101 = vadd.f32 %v1972, %v2090
      %v2102 = vadd.f32 %v1973, %v2095
      %v2103 = vld [vmem:[#allocation2 + $0x10] sm:$0x7]
      %s2104 = scalar_lea.vmem %s3, 832
      %v2105 = vld [vmem:[%s2104] sm:$0xf]
      %v2106 = vld [vmem:[%s2104 + $0x4] sm:$0xf]
      %v2107 = vld [vmem:[%s2104 + $0x8] sm:$0xf]
      %v2108 = vld [vmem:[%s2104 + $0xc] sm:$0xf]
      %v2109 = vld [vmem:[%s2104 + $0x10] sm:$0xf]
      %v2110 = vld [vmem:[%s2104 + $0x14] sm:$0xf]
      %v2111 = vld [vmem:[%s2104 + $0x18] sm:$0xf]
      %v2112 = vld [vmem:[%s2104 + $0x1c] sm:$0xf]
      %v2113 = vld [vmem:[%s2104 + $0x20] sm:$0xf]
      %v2114 = vld [vmem:[%s2104 + $0x24] sm:$0xf]
      %v2115 = vld [vmem:[%s2104 + $0x28] sm:$0xf]
      %v2116 = vld [vmem:[%s2104 + $0x2c] sm:$0xf]
      %v2117 = vld [vmem:[%s2104 + $0x30] sm:$0xf]
      %v2118 = vld [vmem:[%s2104 + $0x34] sm:$0xf]
      %v2119 = vld [vmem:[%s2104 + $0x38] sm:$0xf]
      %v2120 = vld [vmem:[%s2104 + $0x3c] sm:$0xf]
      %v2122 = vunpack.c.l.b16 %v2103
      %v2123 = vpack.c.b16 %v2122, %v2122
      %v2125 = vshrl.u32 %v1997, 16
      %v2127 = vrot.slane %v2125, 1
      %v2128 = vshll.u32 %v1997, 16
      %v2130 = vrot.slane %v2128, 2
      %v2131 = vor.u32 %v2127, %v2130
      %v2133 = vshrl.u32 %v2123, 16
      %v2135 = vrot.slane %v2133, 1
      %v2136 = vshll.u32 %v2123, 16
      %v2138 = vrot.slane %v2136, 2
      %v2139 = vor.u32 %v2135, %v2138
      %v2140 = vsel %vm774, %v2131, %v2139
      %v2159 = vunpack.c.l.b16 %v2105
      %v2160 = vunpack.c.l.b16 %v2106
      %v2161 = vunpack.c.l.b16 %v2107
      %v2162 = vunpack.c.l.b16 %v2108
      %v2163 = vunpack.c.l.b16 %v2109
      %v2164 = vunpack.c.l.b16 %v2110
      %v2165 = vunpack.c.l.b16 %v2111
      %v2166 = vunpack.c.l.b16 %v2112
      %v2167 = vunpack.c.l.b16 %v2113
      %v2168 = vunpack.c.l.b16 %v2114
      %v2169 = vunpack.c.l.b16 %v2115
      %v2170 = vunpack.c.l.b16 %v2116
      %v2171 = vunpack.c.l.b16 %v2117
      %v2172 = vunpack.c.l.b16 %v2118
      %v2173 = vunpack.c.l.b16 %v2119
      %v2174 = vunpack.c.l.b16 %v2120
      %v2175 = vpack.c.b16 %v2160, %v2159
      %v2176 = vpack.c.b16 %v2162, %v2161
      %v2177 = vpack.c.b16 %v2164, %v2163
      %v2178 = vpack.c.b16 %v2166, %v2165
      %v2179 = vpack.c.b16 %v2168, %v2167
      %v2180 = vpack.c.b16 %v2170, %v2169
      %v2181 = vpack.c.b16 %v2172, %v2171
      %v2182 = vpack.c.b16 %v2174, %v2173
      %2191 = vmatprep.subr.bf16.mxu0 0
      %2192 = vmatpush1.bf16.msra.mxu0 %v2175
      %2193 = vmatprep.subr.bf16.mxu0 0
      %2194 = vmatpush1.bf16.msra.mxu0 %v2176
      %2195 = vmatprep.subr.bf16.mxu0 0
      %2196 = vmatpush1.bf16.msra.mxu0 %v2177
      %2197 = vmatprep.subr.bf16.mxu0 0
      %2198 = vmatpush1.bf16.msra.mxu0 %v2178
      %2199 = vmatprep.subr.bf16.mxu0 0
      %2200 = vmatpush1.bf16.msra.mxu0 %v2179
      %2201 = vmatprep.subr.bf16.mxu0 0
      %2202 = vmatpush1.bf16.msra.mxu0 %v2180
      %2203 = vmatprep.subr.bf16.mxu0 0
      %2204 = vmatpush1.bf16.msra.mxu0 %v2181
      %2205 = vmatprep.subr.bf16.mxu0 0
      %2206 = vmatpush1.bf16.msra.mxu0 %v2182
      %2207 = vmatprep.subr.bf16.mxu0 0
      %2208 = vmatpush1.bf16.msra.mxu0 0
      %2209 = vmatprep.subr.bf16.mxu0 0
      %2210 = vmatpush1.bf16.msra.mxu0 0
      %2211 = vmatprep.subr.bf16.mxu0 0
      %2212 = vmatpush1.bf16.msra.mxu0 0
      %2213 = vmatprep.subr.bf16.mxu0 0
      %2214 = vmatpush1.bf16.msra.mxu0 0
      %2215 = vmatprep.subr.bf16.mxu0 0
      %2216 = vmatpush1.bf16.msra.mxu0 0
      %2217 = vmatprep.subr.bf16.mxu0 0
      %2218 = vmatpush1.bf16.msra.mxu0 0
      %2219 = vmatprep.subr.bf16.mxu0 0
      %2220 = vmatpush1.bf16.msra.mxu0 0
      %2221 = vmatprep.subr.bf16.mxu0 0
      %2222 = vmatpush1.bf16.msra.mxu0 0
      %2223 = vmatprep.mubr.bf16.mxu0 0
      %2224 = vmatmul.mubr.bf16.gmra.mrb[0].mxu0 %v2140
      %v2225 = vpop.f32.mrb[0].mxu0
      %v2226 = vadd.f32 0.0, %v2225
      %v2227 = vpop.f32.mrb[0].mxu0
      %v2228 = vpop.f32.mrb[0].mxu0
      %v2229 = vadd.f32 0.0, %v2228
      %v2230 = vpop.f32.mrb[0].mxu0
      %2231 = vmatprep.mubr.bf16.mxu0 0
      %2232 = vmatmul.mubr.bf16.gmra.mrb[0].mxu0 %v2139
      %v2233 = vpop.f32.mrb[0].mxu0
      %v2234 = vadd.f32 0.0, %v2233
      %v2235 = vpop.f32.mrb[0].mxu0
      %v2236 = vpop.f32.mrb[0].mxu0
      %v2237 = vpop.f32.mrb[0].mxu0
      %2238 = vdwg.mxu0
      %v2239 = vadd.f32 %v2100, %v2226
      %v2240 = vadd.f32 %v2101, %v2229
      %v2241 = vadd.f32 %v2102, %v2234
      %v2242 = vld [vmem:[#allocation2 + $0x8] sm:$0xc]
      %s2243 = scalar_lea.vmem %s3, 896
      %v2244 = vld [vmem:[%s2243] sm:$0xf]
      %v2245 = vld [vmem:[%s2243 + $0x4] sm:$0xf]
      %v2246 = vld [vmem:[%s2243 + $0x8] sm:$0xf]
      %v2247 = vld [vmem:[%s2243 + $0xc] sm:$0xf]
      %v2248 = vld [vmem:[%s2243 + $0x10] sm:$0xf]
      %v2249 = vld [vmem:[%s2243 + $0x14] sm:$0xf]
      %v2250 = vld [vmem:[%s2243 + $0x18] sm:$0xf]
      %v2251 = vld [vmem:[%s2243 + $0x1c] sm:$0xf]
      %v2252 = vld [vmem:[%s2243 + $0x20] sm:$0xf]
      %v2253 = vld [vmem:[%s2243 + $0x24] sm:$0xf]
      %v2254 = vld [vmem:[%s2243 + $0x28] sm:$0xf]
      %v2255 = vld [vmem:[%s2243 + $0x2c] sm:$0xf]
      %v2256 = vld [vmem:[%s2243 + $0x30] sm:$0xf]
      %v2257 = vld [vmem:[%s2243 + $0x34] sm:$0xf]
      %v2258 = vld [vmem:[%s2243 + $0x38] sm:$0xf]
      %v2259 = vld [vmem:[%s2243 + $0x3c] sm:$0xf]
      %v2261 = vunpack.c.l.b16 %v2242
      %v2262 = vpack.c.b16 %v1852, %v2261
      %v2263 = vrot.slane %v2262, 2
      %v2264 = vrot.slane %v2123, 2
      %v2265 = vsel %vm1455, %v2263, %v2264
      %v2284 = vunpack.c.l.b16 %v2244
      %v2285 = vunpack.c.l.b16 %v2245
      %v2286 = vunpack.c.l.b16 %v2246
      %v2287 = vunpack.c.l.b16 %v2247
      %v2288 = vunpack.c.l.b16 %v2248
      %v2289 = vunpack.c.l.b16 %v2249
      %v2290 = vunpack.c.l.b16 %v2250
      %v2291 = vunpack.c.l.b16 %v2251
      %v2292 = vunpack.c.l.b16 %v2252
      %v2293 = vunpack.c.l.b16 %v2253
      %v2294 = vunpack.c.l.b16 %v2254
      %v2295 = vunpack.c.l.b16 %v2255
      %v2296 = vunpack.c.l.b16 %v2256
      %v2297 = vunpack.c.l.b16 %v2257
      %v2298 = vunpack.c.l.b16 %v2258
      %v2299 = vunpack.c.l.b16 %v2259
      %v2300 = vpack.c.b16 %v2285, %v2284
      %v2301 = vpack.c.b16 %v2287, %v2286
      %v2302 = vpack.c.b16 %v2289, %v2288
      %v2303 = vpack.c.b16 %v2291, %v2290
      %v2304 = vpack.c.b16 %v2293, %v2292
      %v2305 = vpack.c.b16 %v2295, %v2294
      %v2306 = vpack.c.b16 %v2297, %v2296
      %v2307 = vpack.c.b16 %v2299, %v2298
      %2316 = vmatprep.subr.bf16.mxu0 0
      %2317 = vmatpush1.bf16.msra.mxu0 %v2300
      %2318 = vmatprep.subr.bf16.mxu0 0
      %2319 = vmatpush1.bf16.msra.mxu0 %v2301
      %2320 = vmatprep.subr.bf16.mxu0 0
      %2321 = vmatpush1.bf16.msra.mxu0 %v2302
      %2322 = vmatprep.subr.bf16.mxu0 0
      %2323 = vmatpush1.bf16.msra.mxu0 %v2303
      %2324 = vmatprep.subr.bf16.mxu0 0
      %2325 = vmatpush1.bf16.msra.mxu0 %v2304
      %2326 = vmatprep.subr.bf16.mxu0 0
      %2327 = vmatpush1.bf16.msra.mxu0 %v2305
      %2328 = vmatprep.subr.bf16.mxu0 0
      %2329 = vmatpush1.bf16.msra.mxu0 %v2306
      %2330 = vmatprep.subr.bf16.mxu0 0
      %2331 = vmatpush1.bf16.msra.mxu0 %v2307
      %2332 = vmatprep.subr.bf16.mxu0 0
      %2333 = vmatpush1.bf16.msra.mxu0 0
      %2334 = vmatprep.subr.bf16.mxu0 0
      %2335 = vmatpush1.bf16.msra.mxu0 0
      %2336 = vmatprep.subr.bf16.mxu0 0
      %2337 = vmatpush1.bf16.msra.mxu0 0
      %2338 = vmatprep.subr.bf16.mxu0 0
      %2339 = vmatpush1.bf16.msra.mxu0 0
      %2340 = vmatprep.subr.bf16.mxu0 0
      %2341 = vmatpush1.bf16.msra.mxu0 0
      %2342 = vmatprep.subr.bf16.mxu0 0
      %2343 = vmatpush1.bf16.msra.mxu0 0
      %2344 = vmatprep.subr.bf16.mxu0 0
      %2345 = vmatpush1.bf16.msra.mxu0 0
      %2346 = vmatprep.subr.bf16.mxu0 0
      %2347 = vmatpush1.bf16.msra.mxu0 0
      %2348 = vmatprep.mubr.bf16.mxu0 0
      %2349 = vmatmul.mubr.bf16.gmra.mrb[0].mxu0 %v2265
      %v2350 = vpop.f32.mrb[0].mxu0
      %v2351 = vadd.f32 0.0, %v2350
      %v2352 = vpop.f32.mrb[0].mxu0
      %v2353 = vpop.f32.mrb[0].mxu0
      %v2354 = vadd.f32 0.0, %v2353
      %v2355 = vpop.f32.mrb[0].mxu0
      %2356 = vmatprep.mubr.bf16.mxu0 0
      %2357 = vmatmul.mubr.bf16.gmra.mrb[0].mxu0 %v2264
      %v2358 = vpop.f32.mrb[0].mxu0
      %v2359 = vadd.f32 0.0, %v2358
      %v2360 = vpop.f32.mrb[0].mxu0
      %v2361 = vpop.f32.mrb[0].mxu0
      %v2362 = vpop.f32.mrb[0].mxu0
      %2363 = vdwg.mxu0
      %v2364 = vadd.f32 %v2239, %v2351
      %v2365 = vadd.f32 %v2240, %v2354
      %v2366 = vadd.f32 %v2241, %v2359
      %v2367 = vld [vmem:[#allocation2 + $0x10] sm:$0xf]
      %s2368 = scalar_lea.vmem %s3, 960
      %v2369 = vld [vmem:[%s2368] sm:$0xf]
      %v2370 = vld [vmem:[%s2368 + $0x4] sm:$0xf]
      %v2371 = vld [vmem:[%s2368 + $0x8] sm:$0xf]
      %v2372 = vld [vmem:[%s2368 + $0xc] sm:$0xf]
      %v2373 = vld [vmem:[%s2368 + $0x10] sm:$0xf]
      %v2374 = vld [vmem:[%s2368 + $0x14] sm:$0xf]
      %v2375 = vld [vmem:[%s2368 + $0x18] sm:$0xf]
      %v2376 = vld [vmem:[%s2368 + $0x1c] sm:$0xf]
      %v2377 = vld [vmem:[%s2368 + $0x20] sm:$0xf]
      %v2378 = vld [vmem:[%s2368 + $0x24] sm:$0xf]
      %v2379 = vld [vmem:[%s2368 + $0x28] sm:$0xf]
      %v2380 = vld [vmem:[%s2368 + $0x2c] sm:$0xf]
      %v2381 = vld [vmem:[%s2368 + $0x30] sm:$0xf]
      %v2382 = vld [vmem:[%s2368 + $0x34] sm:$0xf]
      %v2383 = vld [vmem:[%s2368 + $0x38] sm:$0xf]
      %v2384 = vld [vmem:[%s2368 + $0x3c] sm:$0xf]
      %v2386 = vunpack.c.l.b16 %v2367
      %v2387 = vpack.c.b16 %v2386, %v2386
      %v2389 = vshrl.u32 %v2262, 16
      %v2391 = vrot.slane %v2389, 2
      %v2392 = vshll.u32 %v2262, 16
      %v2394 = vrot.slane %v2392, 3
      %v2395 = vor.u32 %v2391, %v2394
      %v2397 = vshrl.u32 %v2387, 16
      %v2399 = vrot.slane %v2397, 2
      %v2400 = vshll.u32 %v2387, 16
      %v2402 = vrot.slane %v2400, 3
      %v2403 = vor.u32 %v2399, %v2402
      %v2404 = vsel %vm1581, %v2395, %v2403
      %v2423 = vunpack.c.l.b16 %v2369
      %v2424 = vunpack.c.l.b16 %v2370
      %v2425 = vunpack.c.l.b16 %v2371
      %v2426 = vunpack.c.l.b16 %v2372
      %v2427 = vunpack.c.l.b16 %v2373
      %v2428 = vunpack.c.l.b16 %v2374
      %v2429 = vunpack.c.l.b16 %v2375
      %v2430 = vunpack.c.l.b16 %v2376
      %v2431 = vunpack.c.l.b16 %v2377
      %v2432 = vunpack.c.l.b16 %v2378
      %v2433 = vunpack.c.l.b16 %v2379
      %v2434 = vunpack.c.l.b16 %v2380
      %v2435 = vunpack.c.l.b16 %v2381
      %v2436 = vunpack.c.l.b16 %v2382
      %v2437 = vunpack.c.l.b16 %v2383
      %v2438 = vunpack.c.l.b16 %v2384
      %v2439 = vpack.c.b16 %v2424, %v2423
      %v2440 = vpack.c.b16 %v2426, %v2425
      %v2441 = vpack.c.b16 %v2428, %v2427
      %v2442 = vpack.c.b16 %v2430, %v2429
      %v2443 = vpack.c.b16 %v2432, %v2431
      %v2444 = vpack.c.b16 %v2434, %v2433
      %v2445 = vpack.c.b16 %v2436, %v2435
      %v2446 = vpack.c.b16 %v2438, %v2437
      %2455 = vmatprep.subr.bf16.mxu0 0
      %2456 = vmatpush1.bf16.msra.mxu0 %v2439
      %2457 = vmatprep.subr.bf16.mxu0 0
      %2458 = vmatpush1.bf16.msra.mxu0 %v2440
      %2459 = vmatprep.subr.bf16.mxu0 0
      %2460 = vmatpush1.bf16.msra.mxu0 %v2441
      %2461 = vmatprep.subr.bf16.mxu0 0
      %2462 = vmatpush1.bf16.msra.mxu0 %v2442
      %2463 = vmatprep.subr.bf16.mxu0 0
      %2464 = vmatpush1.bf16.msra.mxu0 %v2443
      %2465 = vmatprep.subr.bf16.mxu0 0
      %2466 = vmatpush1.bf16.msra.mxu0 %v2444
      %2467 = vmatprep.subr.bf16.mxu0 0
      %2468 = vmatpush1.bf16.msra.mxu0 %v2445
      %2469 = vmatprep.subr.bf16.mxu0 0
      %2470 = vmatpush1.bf16.msra.mxu0 %v2446
      %2471 = vmatprep.subr.bf16.mxu0 0
      %2472 = vmatpush1.bf16.msra.mxu0 0
      %2473 = vmatprep.subr.bf16.mxu0 0
      %2474 = vmatpush1.bf16.msra.mxu0 0
      %2475 = vmatprep.subr.bf16.mxu0 0
      %2476 = vmatpush1.bf16.msra.mxu0 0
      %2477 = vmatprep.subr.bf16.mxu0 0
      %2478 = vmatpush1.bf16.msra.mxu0 0
      %2479 = vmatprep.subr.bf16.mxu0 0
      %2480 = vmatpush1.bf16.msra.mxu0 0
      %2481 = vmatprep.subr.bf16.mxu0 0
      %2482 = vmatpush1.bf16.msra.mxu0 0
      %2483 = vmatprep.subr.bf16.mxu0 0
      %2484 = vmatpush1.bf16.msra.mxu0 0
      %2485 = vmatprep.subr.bf16.mxu0 0
      %2486 = vmatpush1.bf16.msra.mxu0 0
      %2487 = vmatprep.mubr.bf16.mxu0 0
      %2488 = vmatmul.mubr.bf16.gmra.mrb[0].mxu0 %v2404
      %v2489 = vpop.f32.mrb[0].mxu0
      %v2490 = vadd.f32 0.0, %v2489
      %v2491 = vpop.f32.mrb[0].mxu0
      %v2492 = vpop.f32.mrb[0].mxu0
      %v2493 = vadd.f32 0.0, %v2492
      %v2494 = vpop.f32.mrb[0].mxu0
      %2495 = vmatprep.mubr.bf16.mxu0 0
      %2496 = vmatmul.mubr.bf16.gmra.mrb[0].mxu0 %v2403
      %v2497 = vpop.f32.mrb[0].mxu0
      %v2498 = vadd.f32 0.0, %v2497
      %v2499 = vpop.f32.mrb[0].mxu0
      %v2500 = vpop.f32.mrb[0].mxu0
      %v2501 = vpop.f32.mrb[0].mxu0
      %2502 = vdwg.mxu0
      %v2503 = vadd.f32 %v2364, %v2490
      %v2504 = vadd.f32 %v2365, %v2493
      %v2505 = vadd.f32 %v2366, %v2498
      %v2506 = vld [vmem:[%s4] sm:$0x1]
      %v2508 = vlaneseq
      %v2509 = vshrl.u32 %v2508, 7
      %v2510 = vsub.s32 0, %v2509
      %v2511 = vrot.slane %v2506, %v2510
      %v2513 = vadd.f32 %v2503, %v2511
      %v2514 = vadd.f32 %v2504, %v2511
      %v2515 = vadd.f32 %v2505, %v2511
      %v2516 = vlaneseq
      %v2517 = vshrl.u32 %v2516, 7
      %v2518 = vadd.s32 %v2517, 8
      %v2519 = vadd.s32 %v2517, 16
      %vm2520 = vcmp.lt.s32.totalorder %v2517, 0
      %v2521 = vsub.s32 0, %v2517
      %v2522 = vsel %vm2520, %v2521, %v2517
      %v2523 = vmul.u32.u64.compose %v2522, 2863311531
      %v2524 = vextract.low.u32 %v2523
      %v2525 = vextract.high.u32 %v2523
      %v2526 = vshrl.u32 %v2525, 2
      %v2527 = vmul.u32 %v2526, 6
      %v2528 = vsub.s32 %v2522, %v2527
      %v2529 = vsub.s32 0, %v2528
      %v2530 = vsel %vm2520, %v2529, %v2528
      %vm2531 = vcmp.lt.s32.totalorder %v2518, 0
      %v2532 = vsub.s32 0, %v2518
      %v2533 = vsel %vm2531, %v2532, %v2518
      %v2534 = vmul.u32.u64.compose %v2533, 2863311531
      %v2535 = vextract.low.u32 %v2534
      %v2536 = vextract.high.u32 %v2534
      %v2537 = vshrl.u32 %v2536, 2
      %v2538 = vmul.u32 %v2537, 6
      %v2539 = vsub.s32 %v2533, %v2538
      %v2540 = vsub.s32 0, %v2539
      %v2541 = vsel %vm2531, %v2540, %v2539
      %vm2542 = vcmp.lt.s32.totalorder %v2519, 0
      %v2543 = vsub.s32 0, %v2519
      %v2544 = vsel %vm2542, %v2543, %v2519
      %v2545 = vmul.u32.u64.compose %v2544, 2863311531
      %v2546 = vextract.low.u32 %v2545
      %v2547 = vextract.high.u32 %v2545
      %v2548 = vshrl.u32 %v2547, 2
      %v2549 = vmul.u32 %v2548, 6
      %v2550 = vsub.s32 %v2544, %v2549
      %v2551 = vsub.s32 0, %v2550
      %v2552 = vsel %vm2542, %v2551, %v2550
      %vm2553 = vcmp.ne.s32.totalorder %v2530, 0
      %vm2554 = vcmp.ne.s32.totalorder %v2541, 0
      %vm2555 = vcmp.ne.s32.totalorder %v2552, 0
      %vm2556 = vcmp.lt.s32.totalorder %v2530, 0
      %vm2557 = vcmp.lt.s32.totalorder %v2541, 0
      %vm2558 = vcmp.lt.s32.totalorder %v2552, 0
      %vm2559 = vmand %vm2556, %vm2553
      %vm2560 = vmand %vm2557, %vm2554
      %vm2561 = vmand %vm2558, %vm2555
      %v2562 = vadd.s32 %v2530, 6
      %v2563 = vadd.s32 %v2541, 6
      %v2564 = vadd.s32 %v2552, 6
      %v2565 = vsel %vm2559, %v2562, %v2530
      %v2566 = vsel %vm2560, %v2563, %v2541
      %v2567 = vsel %vm2561, %v2564, %v2552
      %vm2568 = vcmp.lt.s32.totalorder %v2565, 3
      %vm2569 = vcmp.lt.s32.totalorder %v2566, 3
      %vm2570 = vcmp.lt.s32.totalorder %v2567, 3
      %v2571 = vsel %vm2568, 1, 0
      %v2572 = vsel %vm2569, 1, 0
      %v2573 = vsel %vm2570, 1, 0
      %vm2574 = vcmp.eq.s32.totalorder %v2571, 1
      %vm2575 = vcmp.eq.s32.totalorder %v2572, 1
      %vm2576 = vcmp.eq.s32.totalorder %v2573, 1
      %v2577 = vsel %vm2574, %v2513, 0.0
      %v2578 = vsel %vm2575, %v2514, 0.0
      %v2579 = vsel %vm2576, %v2515, 0.0
      %v2580 = vadd.f32 %v2577, %v2578
      %vm2581 = vcmask 1041408
      %v2582 = vsel %vm2581, %v2579, 0.0
      %v2583 = vadd.f32 %v2580, %v2582
      %v2584 = vrot.slane %v2583, 4
      %v2585 = vadd.f32 %v2583, %v2584
      %v2586 = vrot.slane %v2585, 2
      %v2587 = vadd.f32 %v2585, %v2586
      %v2588 = vrot.slane %v2587, 1
      %v2589 = vadd.f32 %v2587, %v2588
      %2590 = vst [vmem:[%s292] sm:$0x1] %v2589
      %v2591 = vmul.f32 %v2577, %v2513
      %v2592 = vmul.f32 %v2578, %v2514
      %v2593 = vmul.f32 %v2579, %v2515
      %v2594 = vadd.f32 %v2591, %v2592
      %v2595 = vsel %vm2581, %v2593, 0.0
      %v2596 = vadd.f32 %v2594, %v2595
      %v2597 = vrot.slane %v2596, 4
      %v2598 = vadd.f32 %v2596, %v2597
      %v2599 = vrot.slane %v2598, 2
      %v2600 = vadd.f32 %v2598, %v2599
      %v2601 = vrot.slane %v2600, 1
      %v2602 = vadd.f32 %v2600, %v2601
      %2603 = vst [vmem:[%s295] sm:$0x1] %v2602
      %v2604 = vpack.c.bf16 %v2514, %v2513
      %v2605 = vpack.c.bf16 %v2515, %v2515
      %v2608 = vunpack.c.l.b16 %v2604
      %v2609 = vunpack.c.h.b16 %v2604
      %v2610 = vunpack.c.l.b16 %v2605
      %v2611 = vpack.c.b16 %v2608, %v2608
      %v2612 = vpack.c.b16 %v2609, %v2609
      %v2613 = vpack.c.b16 %v2610, %v2610
      %2617 = vst [vmem:[%s289] sm:$0xf] %v2611
      %2618 = vst [vmem:[%s289 + $0x4] sm:$0xf] %v2612
      %2619 = vst [vmem:[%s289 + $0x8] sm:$0x1] %v2613
      %p2620 = scmp.lt.s32.totalorder %s19, 1
      %s2621 = scalar_select %p2620, %s19, 1
      %s2622 = smul.addr %s2621, 3
      %s2623 = smul.addr %s2622, 4
      %s2624 = scalar_lea.vmem %s5, %s2623
      %p2625 = scmp.lt.s32.totalorder %s19, 1
      %s2626 = scalar_select %p2625, %s19, 1
      %s2627 = scalar_lea.vmem %s6, %s2626
      %p2628 = scmp.lt.s32.totalorder %s19, 1
      %s2629 = scalar_select %p2628, %s19, 1
      %s2630 = scalar_lea.vmem %s7, %s2629
      // Predicated region
      $region41: #{_lambda_.8} parent=39 // pred_check
        %p2631 = pneg %p147
      $region42: #{_lambda_.8} parent=39 // pred_check_branch
        %2633 = sbr.rel (%p2631) target = $region44
      $region43: #{_lambda_.8} parent=39 // pred_region
        _
      $region44: #{_lambda_.8} parent=39 // pred_fallthru
        _
      // Predicated region
      $region45: #{_lambda_.8} parent=39 // pred_check
        %p2634 = pneg %p173
      $region46: #{_lambda_.8} parent=39 // pred_check_branch
        %2636 = sbr.rel (%p2634) target = $region48
      $region47: #{_lambda_.8} parent=39 // pred_region
        _
      $region48: #{_lambda_.8} parent=39 // pred_fallthru
        _
      // Predicated region
      $region49: #{_lambda_.8} parent=39 // pred_check
        %p2637 = pneg %p199
      $region50: #{_lambda_.8} parent=39 // pred_check_branch
        %2639 = sbr.rel (%p2637) target = $region52
      $region51: #{_lambda_.8} parent=39 // pred_region
        _
      $region52: #{_lambda_.8} parent=39 // pred_fallthru
        _
    $region40: #{_lambda_.8} parent=5 // pred_fallthru
      _
    %p2640 = scmp.le.s32.totalorder 2, %s14
    // Predicated region
    $region53: #{_lambda_.8} parent=5 // pred_check
      %p2641 = pneg %p2640
    $region54: #{_lambda_.8} parent=5 // pred_check_branch
      %2643 = sbr.rel (%p2641) target = $region56
    $region55: #{_lambda_.8} parent=5 // pred_region
      %s2644 = ssub.s32 %s14, 2
      // Predicated region
      $region57: #{_lambda_.8} parent=55 // pred_check
        %p2645 = pneg %p153
      $region58: #{_lambda_.8} parent=55 // pred_check_branch
        %2647 = sbr.rel (%p2645) target = $region60
      $region59: #{_lambda_.8} parent=55 // pred_region
        %p2648 = scmp.lt.s32.totalorder %s20, 1
        %s2649 = scalar_select %p2648, %s20, 1
        %s2650 = smul.addr %s2649, 3
        %s2651 = smul.addr %s2650, 4
        %s2652 = scalar_lea.vmem %s5, %s2651
      $region60: #{_lambda_.8} parent=55 // pred_fallthru
        _
      // Predicated region
      $region61: #{_lambda_.8} parent=55 // pred_check
        %p2653 = pneg %p179
      $region62: #{_lambda_.8} parent=55 // pred_check_branch
        %2655 = sbr.rel (%p2653) target = $region64
      $region63: #{_lambda_.8} parent=55 // pred_region
        %p2656 = scmp.lt.s32.totalorder %s20, 1
        %s2657 = scalar_select %p2656, %s20, 1
        %s2658 = scalar_lea.vmem %s6, %s2657
      $region64: #{_lambda_.8} parent=55 // pred_fallthru
        _
      // Predicated region
      $region65: #{_lambda_.8} parent=55 // pred_check
        %p2659 = pneg %p205
      $region66: #{_lambda_.8} parent=55 // pred_check_branch
        %2661 = sbr.rel (%p2659) target = $region68
      $region67: #{_lambda_.8} parent=55 // pred_region
        %p2662 = scmp.lt.s32.totalorder %s20, 1
        %s2663 = scalar_select %p2662, %s20, 1
        %s2664 = scalar_lea.vmem %s7, %s2663
      $region68: #{_lambda_.8} parent=55 // pred_fallthru
        _
    $region56: #{_lambda_.8} parent=5 // pred_fallthru
      _
  $region6: #{_lambda_.8} parent=0 // loop_footer
    %s18 = sadd.s32 1, %s14
  $region7: #{_lambda_.8} parent=0 // loop_footer_branch
    %13 = sbr.rel target = $region3
  $region8: #{_lambda_.8} parent=0 // loop_exit
    _

// kernel: _lambda_.9
$region0: #{_lambda_.9}
  #allocation0 [shape = 'u32[]', space=smem, size = 0x4, offset = 0x4, fixed_abs, tag = 'smem constant byte address 0x4 - core index']
  #allocation1 [shape = 'u32[144,128]{1,0:T(1,128)}', space=vmem, size = 0x12000, scoped, tag = 'internal scratch']
  #allocation2 [shape = 'bf16[32,128]{1,0:T(16,128)(2,1)}', space=vmem, size = 0x2000, scoped, tag = 'scratch operand']
  %s0 = inlined_call_operand.vmem [shape: f32[1,128], index: 0, kind: input, shape index: {}]
  %s1 = inlined_call_operand.vmem [shape: f32[1,128], index: 1, kind: input, shape index: {}]
  %s2 = inlined_call_operand.vmem [shape: bf16[2,32,128], index: 2, kind: input, shape index: {}]
  %s3 = inlined_call_operand.vmem [shape: bf16[16,128,128], index: 3, kind: input, shape index: {}]
  %s4 = inlined_call_operand.vmem [shape: f32[1,128], index: 4, kind: input, shape index: {}]
  %s5 = inlined_call_operand.vmem [shape: f32[2,10,128], index: 5, kind: output, shape index: {}]
  %s6 = sld [smem:[#allocation0]]
  $region53: #{_lambda_.9} parent=0
    _
  %s8 = ssub.s32 1, %s6
  %s9 = scalar_select 0, %s8, %s6
  loop: start=0, step=1, limit=4
  $region2: #{_lambda_.9} parent=0 // loop_pre_header
    _
  $region3: #{_lambda_.9} parent=0 // loop_header
    %s11 = sphi 0, %s15
    %p12 = scmp.ge.s32.totalorder %s11, 4
    %s19 = sphi 0, %s19
    %s21 = sphi 0, %s19
    %s22 = sphi 0, %s21
    %s36 = sphi 0, %s22
    %s40 = sphi 0, %s40
    %s42 = sphi 0, %s40
    %s43 = sphi 0, %s42
    %s57 = sphi 0, %s43
    %s63 = sphi 0, %s65
    %s66 = sphi 0, %s63
    %s67 = sphi 0, %s66
    %s83 = sphi 0, %s67
    %s87 = sphi 0, %s87
    %s89 = sphi 0, %s87
    %s90 = sphi 0, %s89
    %s104 = sphi 0, %s90
    %s108 = sphi 0, %s108
    %s110 = sphi 0, %s108
    %s111 = sphi 0, %s110
    %s125 = sphi 0, %s111
    %s131 = sphi 0, %s133
    %s134 = sphi 0, %s131
    %s135 = sphi 0, %s134
    %s151 = sphi 0, %s135
  $region4: #{_lambda_.9} parent=0 // loop_header_branch
    %14 = sbr.rel (%p12) target = $region8
  $region5: #{_lambda_.9} parent=0 // loop_body
    %s16 = ssub.s32 %s11, 1
    %s17 = ssub.s32 %s11, 2
    %s18 = sadd.s32 %s11, 1
    %s20 = sadd.s32 %s19, 1
    %p23 = scmp.eq.s32.totalorder %s11, 1
    %p24 = scmp.ne.s32.totalorder %s19, %s21
    %p25 = scmp.eq.s32.totalorder %s11, 0
    %p26 = por %p24, %p25
    %p27 = scmp.ne.s32.totalorder %s19, %s21
    %p28 = scmp.eq.s32.totalorder %s16, 1
    %p29 = por %p27, %p28
    %p30 = scmp.ne.s32.totalorder %s21, %s22
    %p31 = scmp.eq.s32.totalorder %s16, 0
    %p32 = por %p30, %p31
    %p33 = scmp.ne.s32.totalorder %s21, %s22
    %p34 = scmp.eq.s32.totalorder %s17, 1
    %p35 = por %p33, %p34
    %p37 = scmp.ne.s32.totalorder %s22, %s36
    %p38 = scmp.eq.s32.totalorder %s17, 0
    %p39 = por %p37, %p38
    %s41 = sadd.s32 %s40, 1
    %p44 = scmp.eq.s32.totalorder %s11, 1
    %p45 = scmp.ne.s32.totalorder %s40, %s42
    %p46 = scmp.eq.s32.totalorder %s11, 0
    %p47 = por %p45, %p46
    %p48 = scmp.ne.s32.totalorder %s40, %s42
    %p49 = scmp.eq.s32.totalorder %s16, 1
    %p50 = por %p48, %p49
    %p51 = scmp.ne.s32.totalorder %s42, %s43
    %p52 = scmp.eq.s32.totalorder %s16, 0
    %p53 = por %p51, %p52
    %p54 = scmp.ne.s32.totalorder %s42, %s43
    %p55 = scmp.eq.s32.totalorder %s17, 1
    %p56 = por %p54, %p55
    %p58 = scmp.ne.s32.totalorder %s43, %s57
    %p59 = scmp.eq.s32.totalorder %s17, 0
    %p60 = por %p58, %p59
    %s61 = ssub.s32 %s11, %s18
    %p62 = scmp.eq.s32.totalorder %s61, 0
    %s64 = sadd.s32 %s63, 1
    %s65 = scalar_select %p62, %s63, %s64
    %p68 = pneg %p62
    %p69 = scmp.eq.s32.totalorder %s11, 1
    %p70 = por %p68, %p69
    %p71 = scmp.ne.s32.totalorder %s63, %s66
    %p72 = scmp.eq.s32.totalorder %s11, 0
    %p73 = por %p71, %p72
    %p74 = scmp.ne.s32.totalorder %s63, %s66
    %p75 = scmp.eq.s32.totalorder %s16, 1
    %p76 = por %p74, %p75
    %p77 = scmp.ne.s32.totalorder %s66, %s67
    %p78 = scmp.eq.s32.totalorder %s16, 0
    %p79 = por %p77, %p78
    %p80 = scmp.ne.s32.totalorder %s66, %s67
    %p81 = scmp.eq.s32.totalorder %s17, 1
    %p82 = por %p80, %p81
    %p84 = scmp.ne.s32.totalorder %s67, %s83
    %p85 = scmp.eq.s32.totalorder %s17, 0
    %p86 = por %p84, %p85
    %s88 = sadd.s32 %s87, 1
    %p91 = scmp.eq.s32.totalorder %s11, 1
    %p92 = scmp.ne.s32.totalorder %s87, %s89
    %p93 = scmp.eq.s32.totalorder %s11, 0
    %p94 = por %p92, %p93
    %p95 = scmp.ne.s32.totalorder %s87, %s89
    %p96 = scmp.eq.s32.totalorder %s16, 1
    %p97 = por %p95, %p96
    %p98 = scmp.ne.s32.totalorder %s89, %s90
    %p99 = scmp.eq.s32.totalorder %s16, 0
    %p100 = por %p98, %p99
    %p101 = scmp.ne.s32.totalorder %s89, %s90
    %p102 = scmp.eq.s32.totalorder %s17, 1
    %p103 = por %p101, %p102
    %p105 = scmp.ne.s32.totalorder %s90, %s104
    %p106 = scmp.eq.s32.totalorder %s17, 0
    %p107 = por %p105, %p106
    %s109 = sadd.s32 %s108, 1
    %p112 = scmp.eq.s32.totalorder %s11, 1
    %p113 = scmp.ne.s32.totalorder %s108, %s110
    %p114 = scmp.eq.s32.totalorder %s11, 0
    %p115 = por %p113, %p114
    %p116 = scmp.ne.s32.totalorder %s108, %s110
    %p117 = scmp.eq.s32.totalorder %s16, 1
    %p118 = por %p116, %p117
    %p119 = scmp.ne.s32.totalorder %s110, %s111
    %p120 = scmp.eq.s32.totalorder %s16, 0
    %p121 = por %p119, %p120
    %p122 = scmp.ne.s32.totalorder %s110, %s111
    %p123 = scmp.eq.s32.totalorder %s17, 1
    %p124 = por %p122, %p123
    %p126 = scmp.ne.s32.totalorder %s111, %s125
    %p127 = scmp.eq.s32.totalorder %s17, 0
    %p128 = por %p126, %p127
    %s129 = ssub.s32 %s11, %s18
    %p130 = scmp.eq.s32.totalorder %s129, 0
    %s132 = sadd.s32 %s131, 1
    %s133 = scalar_select %p130, %s131, %s132
    %p136 = pneg %p130
    %p137 = scmp.eq.s32.totalorder %s11, 1
    %p138 = por %p136, %p137
    %p139 = scmp.ne.s32.totalorder %s131, %s134
    %p140 = scmp.eq.s32.totalorder %s11, 0
    %p141 = por %p139, %p140
    %p142 = scmp.ne.s32.totalorder %s131, %s134
    %p143 = scmp.eq.s32.totalorder %s16, 1
    %p144 = por %p142, %p143
    %p145 = scmp.ne.s32.totalorder %s134, %s135
    %p146 = scmp.eq.s32.totalorder %s16, 0
    %p147 = por %p145, %p146
    %p148 = scmp.ne.s32.totalorder %s134, %s135
    %p149 = scmp.eq.s32.totalorder %s17, 1
    %p150 = por %p148, %p149
    %p152 = scmp.ne.s32.totalorder %s135, %s151
    %p153 = scmp.eq.s32.totalorder %s17, 0
    %p154 = por %p152, %p153
    %p155 = scmp.le.s32.totalorder 1, %s11
    %p156 = scmp.lt.s32.totalorder %s11, 3
    %p157 = pnand %p155, %p156
    %p158 = pneg %p157
    // Predicated region
    $region9: #{_lambda_.9} parent=5 // pred_check
      _
    $region10: #{_lambda_.9} parent=5 // pred_check_branch
      %160 = sbr.rel (%p157) target = $region12
    $region11: #{_lambda_.9} parent=5 // pred_region
      %s161 = ssub.s32 %s11, 1
      // Predicated region
      $region13: #{_lambda_.9} parent=11 // pred_check
        %p162 = pneg %p32
      $region14: #{_lambda_.9} parent=11 // pred_check_branch
        %164 = sbr.rel (%p162) target = $region16
      $region15: #{_lambda_.9} parent=11 // pred_region
        _
      $region16: #{_lambda_.9} parent=11 // pred_fallthru
        _
      // Predicated region
      $region17: #{_lambda_.9} parent=11 // pred_check
        %p165 = pneg %p53
      $region18: #{_lambda_.9} parent=11 // pred_check_branch
        %167 = sbr.rel (%p165) target = $region20
      $region19: #{_lambda_.9} parent=11 // pred_region
        _
      $region20: #{_lambda_.9} parent=11 // pred_fallthru
        _
      // Predicated region
      $region21: #{_lambda_.9} parent=11 // pred_check
        %p168 = pneg %p100
      $region22: #{_lambda_.9} parent=11 // pred_check_branch
        %170 = sbr.rel (%p168) target = $region24
      $region23: #{_lambda_.9} parent=11 // pred_region
        _
      $region24: #{_lambda_.9} parent=11 // pred_fallthru
        _
      // Predicated region
      $region25: #{_lambda_.9} parent=11 // pred_check
        %p171 = pneg %p121
      $region26: #{_lambda_.9} parent=11 // pred_check_branch
        %173 = sbr.rel (%p171) target = $region28
      $region27: #{_lambda_.9} parent=11 // pred_region
        _
      $region28: #{_lambda_.9} parent=11 // pred_fallthru
        _
    $region12: #{_lambda_.9} parent=5 // pred_fallthru
      _
    %p174 = scmp.lt.s32.totalorder %s11, 2
    // Predicated region
    $region29: #{_lambda_.9} parent=5 // pred_check
      %p175 = pneg %p174
    $region30: #{_lambda_.9} parent=5 // pred_check_branch
      %177 = sbr.rel (%p175) target = $region32
    $region31: #{_lambda_.9} parent=5 // pred_region
      // Predicated region
      $region33: #{_lambda_.9} parent=31 // pred_check
        %p178 = pneg %p73
      $region34: #{_lambda_.9} parent=31 // pred_check_branch
        %180 = sbr.rel (%p178) target = $region36
      $region35: #{_lambda_.9} parent=31 // pred_region
        %p181 = scmp.lt.s32.totalorder %s11, 1
        %s182 = scalar_select %p181, %s11, 1
        %s183 = smul.addr %s182, 4
        %s184 = smul.addr %s183, 4
        %s185 = scalar_lea.vmem %s2, %s184
      $region36: #{_lambda_.9} parent=31 // pred_fallthru
        _
    $region32: #{_lambda_.9} parent=5 // pred_fallthru
      _
    %p186 = scmp.le.s32.totalorder 1, %s11
    %p187 = scmp.lt.s32.totalorder %s11, 3
    %p188 = pnand %p186, %p187
    %p189 = pneg %p188
    // Predicated region
    $region37: #{_lambda_.9} parent=5 // pred_check
      _
    $region38: #{_lambda_.9} parent=5 // pred_check_branch
      %191 = sbr.rel (%p188) target = $region40
    $region39: #{_lambda_.9} parent=5 // pred_region
      %s192 = ssub.s32 %s11, 1
      %p193 = pneg %p32
      %p194 = pneg %p29
      %p195 = pneg %p53
      %p196 = pneg %p50
      %p197 = scmp.lt.s32.totalorder %s16, 1
      %s198 = scalar_select %p197, %s16, 1
      %s199 = smul.addr %s198, 4
      %s200 = smul.addr %s199, 4
      %s201 = scalar_lea.vmem %s2, %s200
      %p202 = pneg %p79
      %p203 = pneg %p76
      %p204 = pneg %p100
      %p205 = pneg %p97
      %p206 = pneg %p121
      %p207 = pneg %p118
      %p208 = pneg %p147
      %p209 = pneg %p144
      %p210 = scmp.lt.s32.totalorder %s16, 1
      %s211 = scalar_select %p210, %s16, 1
      %s212 = smul.addr %s211, 2
      %s213 = smul.addr %s212, 8
      %s214 = scalar_lea.vmem %s5, %s213
      %p215 = scmp.lt.s32.totalorder %s16, 1
      %s216 = scalar_select %p215, %s16, 1
      %s217 = smul.addr %s216, 4
      %s218 = smul.addr %s217, 4
      %s219 = scalar_lea.vmem %s2, %s218
      %p220 = scmp.lt.s32.totalorder %s16, 1
      %s221 = scalar_select %p220, %s16, 1
      %s222 = smul.addr %s221, 2
      %s223 = smul.addr %s222, 8
      %s224 = scalar_lea.vmem %s5, %s223
      %v226 = vld [vmem:[%s219] sm:$0xf]
      %v227 = vld [vmem:[%s219 + $0x4] sm:$0xf]
      %v228 = vld [vmem:[%s219 + $0x8] sm:$0xf]
      %v229 = vld [vmem:[%s219 + $0xc] sm:$0xf]
      %v230 = vunpack.c.l.bf16 %v226
      %v231 = vunpack.c.l.bf16 %v227
      %v232 = vunpack.c.l.bf16 %v228
      %v233 = vunpack.c.l.bf16 %v229
      %v234 = vld [vmem:[%s0] sm:$0x1]
      %v236 = vlaneseq
      %v237 = vshrl.u32 %v236, 7
      %v238 = vsub.s32 0, %v237
      %v239 = vrot.slane %v234, %v238
      %v241 = vmul.f32 %v230, %v239
      %v242 = vmul.f32 %v231, %v239
      %v243 = vmul.f32 %v232, %v239
      %v244 = vmul.f32 %v233, %v239
      %v245 = vld [vmem:[%s1] sm:$0x1]
      %v247 = vlaneseq
      %v248 = vshrl.u32 %v247, 7
      %v249 = vsub.s32 0, %v248
      %v250 = vrot.slane %v245, %v249
      %v252 = vadd.f32 %v241, %v250
      %v253 = vadd.f32 %v242, %v250
      %v254 = vadd.f32 %v243, %v250
      %v255 = vadd.f32 %v244, %v250
      %v256 = vmul.f32 %v252, 0.2
      %v257 = vmul.f32 %v253, 0.2
      %v258 = vmul.f32 %v254, 0.2
      %v259 = vmul.f32 %v255, 0.2
      %v260 = vmax.f32 %v252, %v256
      %v261 = vmax.f32 %v253, %v257
      %v262 = vmax.f32 %v254, %v258
      %v263 = vmax.f32 %v255, %v259
      %v264 = vpack.c.bf16 %v261, %v260
      %v265 = vpack.c.bf16 %v263, %v262
      %266 = vst [vmem:[#allocation2] sm:$0xff] %v264
      %267 = vst [vmem:[#allocation2 + $0x8] sm:$0xff] %v265
      %v268 = vld [vmem:[#allocation2] sm:$0x1f]
      %v269 = vld [vmem:[%s3] sm:$0xf]
      %v270 = vld [vmem:[%s3 + $0x4] sm:$0xf]
      %v271 = vld [vmem:[%s3 + $0x8] sm:$0xf]
      %v272 = vld [vmem:[%s3 + $0xc] sm:$0xf]
      %v273 = vld [vmem:[%s3 + $0x10] sm:$0xf]
      %v274 = vld [vmem:[%s3 + $0x14] sm:$0xf]
      %v275 = vld [vmem:[%s3 + $0x18] sm:$0xf]
      %v276 = vld [vmem:[%s3 + $0x1c] sm:$0xf]
      %v277 = vld [vmem:[%s3 + $0x20] sm:$0xf]
      %v278 = vld [vmem:[%s3 + $0x24] sm:$0xf]
      %v279 = vld [vmem:[%s3 + $0x28] sm:$0xf]
      %v280 = vld [vmem:[%s3 + $0x2c] sm:$0xf]
      %v281 = vld [vmem:[%s3 + $0x30] sm:$0xf]
      %v282 = vld [vmem:[%s3 + $0x34] sm:$0xf]
      %v283 = vld [vmem:[%s3 + $0x38] sm:$0xf]
      %v284 = vld [vmem:[%s3 + $0x3c] sm:$0xf]
      %v285 = vld [vmem:[#allocation2] sm:$0x3f]
      %s286 = scalar_lea.vmem %s3, 64
      %v287 = vld [vmem:[%s286] sm:$0xf]
      %v288 = vld [vmem:[%s286 + $0x4] sm:$0xf]
      %v289 = vld [vmem:[%s286 + $0x8] sm:$0xf]
      %v290 = vld [vmem:[%s286 + $0xc] sm:$0xf]
      %v291 = vld [vmem:[%s286 + $0x10] sm:$0xf]
      %v292 = vld [vmem:[%s286 + $0x14] sm:$0xf]
      %v293 = vld [vmem:[%s286 + $0x18] sm:$0xf]
      %v294 = vld [vmem:[%s286 + $0x1c] sm:$0xf]
      %v295 = vld [vmem:[%s286 + $0x20] sm:$0xf]
      %v296 = vld [vmem:[%s286 + $0x24] sm:$0xf]
      %v297 = vld [vmem:[%s286 + $0x28] sm:$0xf]
      %v298 = vld [vmem:[%s286 + $0x2c] sm:$0xf]
      %v299 = vld [vmem:[%s286 + $0x30] sm:$0xf]
      %v300 = vld [vmem:[%s286 + $0x34] sm:$0xf]
      %v301 = vld [vmem:[%s286 + $0x38] sm:$0xf]
      %v302 = vld [vmem:[%s286 + $0x3c] sm:$0xf]
      %v304 = vshrl.u32 %v285, 16
      %v306 = vshll.u32 %v285, 16
      %v308 = vrot.slane %v306, 1
      %v309 = vor.u32 %v304, %v308
      %v327 = vunpack.c.l.b16 %v287
      %v328 = vunpack.c.l.b16 %v288
      %v329 = vunpack.c.l.b16 %v289
      %v330 = vunpack.c.l.b16 %v290
      %v331 = vunpack.c.l.b16 %v291
      %v332 = vunpack.c.l.b16 %v292
      %v333 = vunpack.c.l.b16 %v293
      %v334 = vunpack.c.l.b16 %v294
      %v335 = vunpack.c.l.b16 %v295
      %v336 = vunpack.c.l.b16 %v296
      %v337 = vunpack.c.l.b16 %v297
      %v338 = vunpack.c.l.b16 %v298
      %v339 = vunpack.c.l.b16 %v299
      %v340 = vunpack.c.l.b16 %v300
      %v341 = vunpack.c.l.b16 %v301
      %v342 = vunpack.c.l.b16 %v302
      %v343 = vpack.c.b16 %v328, %v327
      %v344 = vpack.c.b16 %v330, %v329
      %v345 = vpack.c.b16 %v332, %v331
      %v346 = vpack.c.b16 %v334, %v333
      %v347 = vpack.c.b16 %v336, %v335
      %v348 = vpack.c.b16 %v338, %v337
      %v349 = vpack.c.b16 %v340, %v339
      %v350 = vpack.c.b16 %v342, %v341
      %359 = vmatprep.subr.bf16.mxu0 0
      %360 = vmatpush1.bf16.msra.mxu0 %v343
      %361 = vmatprep.subr.bf16.mxu0 0
      %362 = vmatpush1.bf16.msra.mxu0 %v344
      %363 = vmatprep.subr.bf16.mxu0 0
      %364 = vmatpush1.bf16.msra.mxu0 %v345
      %365 = vmatprep.subr.bf16.mxu0 0
      %366 = vmatpush1.bf16.msra.mxu0 %v346
      %367 = vmatprep.subr.bf16.mxu0 0
      %368 = vmatpush1.bf16.msra.mxu0 %v347
      %369 = vmatprep.subr.bf16.mxu0 0
      %370 = vmatpush1.bf16.msra.mxu0 %v348
      %371 = vmatprep.subr.bf16.mxu0 0
      %372 = vmatpush1.bf16.msra.mxu0 %v349
      %373 = vmatprep.subr.bf16.mxu0 0
      %374 = vmatpush1.bf16.msra.mxu0 %v350
      %375 = vmatprep.subr.bf16.mxu0 0
      %376 = vmatpush1.bf16.msra.mxu0 0
      %377 = vmatprep.subr.bf16.mxu0 0
      %378 = vmatpush1.bf16.msra.mxu0 0
      %379 = vmatprep.subr.bf16.mxu0 0
      %380 = vmatpush1.bf16.msra.mxu0 0
      %381 = vmatprep.subr.bf16.mxu0 0
      %382 = vmatpush1.bf16.msra.mxu0 0
      %383 = vmatprep.subr.bf16.mxu0 0
      %384 = vmatpush1.bf16.msra.mxu0 0
      %385 = vmatprep.subr.bf16.mxu0 0
      %386 = vmatpush1.bf16.msra.mxu0 0
      %387 = vmatprep.subr.bf16.mxu0 0
      %388 = vmatpush1.bf16.msra.mxu0 0
      %389 = vmatprep.subr.bf16.mxu0 0
      %390 = vmatpush1.bf16.msra.mxu0 0
      %391 = vmatprep.mubr.bf16.mxu0 0
      %392 = vmatmul.mubr.bf16.gmra.mrb[0].mxu0 %v309
      %v393 = vpop.f32.mrb[0].mxu0
      %v394 = vadd.f32 0.0, %v393
      %v395 = vpop.f32.mrb[0].mxu0
      %v396 = vpop.f32.mrb[0].mxu0
      %v397 = vadd.f32 0.0, %v396
      %v398 = vpop.f32.mrb[0].mxu0
      %399 = vdwg.mxu0
      %v416 = vunpack.c.l.b16 %v269
      %v417 = vunpack.c.l.b16 %v270
      %v418 = vunpack.c.l.b16 %v271
      %v419 = vunpack.c.l.b16 %v272
      %v420 = vunpack.c.l.b16 %v273
      %v421 = vunpack.c.l.b16 %v274
      %v422 = vunpack.c.l.b16 %v275
      %v423 = vunpack.c.l.b16 %v276
      %v424 = vunpack.c.l.b16 %v277
      %v425 = vunpack.c.l.b16 %v278
      %v426 = vunpack.c.l.b16 %v279
      %v427 = vunpack.c.l.b16 %v280
      %v428 = vunpack.c.l.b16 %v281
      %v429 = vunpack.c.l.b16 %v282
      %v430 = vunpack.c.l.b16 %v283
      %v431 = vunpack.c.l.b16 %v284
      %v432 = vpack.c.b16 %v417, %v416
      %v433 = vpack.c.b16 %v419, %v418
      %v434 = vpack.c.b16 %v421, %v420
      %v435 = vpack.c.b16 %v423, %v422
      %v436 = vpack.c.b16 %v425, %v424
      %v437 = vpack.c.b16 %v427, %v426
      %v438 = vpack.c.b16 %v429, %v428
      %v439 = vpack.c.b16 %v431, %v430
      %448 = vmatprep.subr.bf16.mxu0 0
      %449 = vmatpush1.bf16.msra.mxu0 %v432
      %450 = vmatprep.subr.bf16.mxu0 0
      %451 = vmatpush1.bf16.msra.mxu0 %v433
      %452 = vmatprep.subr.bf16.mxu0 0
      %453 = vmatpush1.bf16.msra.mxu0 %v434
      %454 = vmatprep.subr.bf16.mxu0 0
      %455 = vmatpush1.bf16.msra.mxu0 %v435
      %456 = vmatprep.subr.bf16.mxu0 0
      %457 = vmatpush1.bf16.msra.mxu0 %v436
      %458 = vmatprep.subr.bf16.mxu0 0
      %459 = vmatpush1.bf16.msra.mxu0 %v437
      %460 = vmatprep.subr.bf16.mxu0 0
      %461 = vmatpush1.bf16.msra.mxu0 %v438
      %462 = vmatprep.subr.bf16.mxu0 0
      %463 = vmatpush1.bf16.msra.mxu0 %v439
      %464 = vmatprep.subr.bf16.mxu0 0
      %465 = vmatpush1.bf16.msra.mxu0 0
      %466 = vmatprep.subr.bf16.mxu0 0
      %467 = vmatpush1.bf16.msra.mxu0 0
      %468 = vmatprep.subr.bf16.mxu0 0
      %469 = vmatpush1.bf16.msra.mxu0 0
      %470 = vmatprep.subr.bf16.mxu0 0
      %471 = vmatpush1.bf16.msra.mxu0 0
      %472 = vmatprep.subr.bf16.mxu0 0
      %473 = vmatpush1.bf16.msra.mxu0 0
      %474 = vmatprep.subr.bf16.mxu0 0
      %475 = vmatpush1.bf16.msra.mxu0 0
      %476 = vmatprep.subr.bf16.mxu0 0
      %477 = vmatpush1.bf16.msra.mxu0 0
      %478 = vmatprep.subr.bf16.mxu0 0
      %479 = vmatpush1.bf16.msra.mxu0 0
      %480 = vmatprep.mubr.bf16.mxu0 0
      %481 = vmatmul.mubr.bf16.gmra.mrb[0].mxu0 %v268
      %v482 = vpop.f32.mrb[0].mxu0
      %v483 = vadd.f32 %v394, %v482
      %v484 = vpop.f32.mrb[0].mxu0
      %v485 = vpop.f32.mrb[0].mxu0
      %v486 = vadd.f32 %v397, %v485
      %v487 = vpop.f32.mrb[0].mxu0
      %488 = vdwg.mxu0
      %v489 = vld [vmem:[#allocation2] sm:$0x3e]
      %s490 = scalar_lea.vmem %s3, 128
      %v491 = vld [vmem:[%s490] sm:$0xf]
      %v492 = vld [vmem:[%s490 + $0x4] sm:$0xf]
      %v493 = vld [vmem:[%s490 + $0x8] sm:$0xf]
      %v494 = vld [vmem:[%s490 + $0xc] sm:$0xf]
      %v495 = vld [vmem:[%s490 + $0x10] sm:$0xf]
      %v496 = vld [vmem:[%s490 + $0x14] sm:$0xf]
      %v497 = vld [vmem:[%s490 + $0x18] sm:$0xf]
      %v498 = vld [vmem:[%s490 + $0x1c] sm:$0xf]
      %v499 = vld [vmem:[%s490 + $0x20] sm:$0xf]
      %v500 = vld [vmem:[%s490 + $0x24] sm:$0xf]
      %v501 = vld [vmem:[%s490 + $0x28] sm:$0xf]
      %v502 = vld [vmem:[%s490 + $0x2c] sm:$0xf]
      %v503 = vld [vmem:[%s490 + $0x30] sm:$0xf]
      %v504 = vld [vmem:[%s490 + $0x34] sm:$0xf]
      %v505 = vld [vmem:[%s490 + $0x38] sm:$0xf]
      %v506 = vld [vmem:[%s490 + $0x3c] sm:$0xf]
      %v508 = vrot.slane %v489, 1
      %v526 = vunpack.c.l.b16 %v491
      %v527 = vunpack.c.l.b16 %v492
      %v528 = vunpack.c.l.b16 %v493
      %v529 = vunpack.c.l.b16 %v494
      %v530 = vunpack.c.l.b16 %v495
      %v531 = vunpack.c.l.b16 %v496
      %v532 = vunpack.c.l.b16 %v497
      %v533 = vunpack.c.l.b16 %v498
      %v534 = vunpack.c.l.b16 %v499
      %v535 = vunpack.c.l.b16 %v500
      %v536 = vunpack.c.l.b16 %v501
      %v537 = vunpack.c.l.b16 %v502
      %v538 = vunpack.c.l.b16 %v503
      %v539 = vunpack.c.l.b16 %v504
      %v540 = vunpack.c.l.b16 %v505
      %v541 = vunpack.c.l.b16 %v506
      %v542 = vpack.c.b16 %v527, %v526
      %v543 = vpack.c.b16 %v529, %v528
      %v544 = vpack.c.b16 %v531, %v530
      %v545 = vpack.c.b16 %v533, %v532
      %v546 = vpack.c.b16 %v535, %v534
      %v547 = vpack.c.b16 %v537, %v536
      %v548 = vpack.c.b16 %v539, %v538
      %v549 = vpack.c.b16 %v541, %v540
      %558 = vmatprep.subr.bf16.mxu0 0
      %559 = vmatpush1.bf16.msra.mxu0 %v542
      %560 = vmatprep.subr.bf16.mxu0 0
      %561 = vmatpush1.bf16.msra.mxu0 %v543
      %562 = vmatprep.subr.bf16.mxu0 0
      %563 = vmatpush1.bf16.msra.mxu0 %v544
      %564 = vmatprep.subr.bf16.mxu0 0
      %565 = vmatpush1.bf16.msra.mxu0 %v545
      %566 = vmatprep.subr.bf16.mxu0 0
      %567 = vmatpush1.bf16.msra.mxu0 %v546
      %568 = vmatprep.subr.bf16.mxu0 0
      %569 = vmatpush1.bf16.msra.mxu0 %v547
      %570 = vmatprep.subr.bf16.mxu0 0
      %571 = vmatpush1.bf16.msra.mxu0 %v548
      %572 = vmatprep.subr.bf16.mxu0 0
      %573 = vmatpush1.bf16.msra.mxu0 %v549
      %574 = vmatprep.subr.bf16.mxu0 0
      %575 = vmatpush1.bf16.msra.mxu0 0
      %576 = vmatprep.subr.bf16.mxu0 0
      %577 = vmatpush1.bf16.msra.mxu0 0
      %578 = vmatprep.subr.bf16.mxu0 0
      %579 = vmatpush1.bf16.msra.mxu0 0
      %580 = vmatprep.subr.bf16.mxu0 0
      %581 = vmatpush1.bf16.msra.mxu0 0
      %582 = vmatprep.subr.bf16.mxu0 0
      %583 = vmatpush1.bf16.msra.mxu0 0
      %584 = vmatprep.subr.bf16.mxu0 0
      %585 = vmatpush1.bf16.msra.mxu0 0
      %586 = vmatprep.subr.bf16.mxu0 0
      %587 = vmatpush1.bf16.msra.mxu0 0
      %588 = vmatprep.subr.bf16.mxu0 0
      %589 = vmatpush1.bf16.msra.mxu0 0
      %590 = vmatprep.mubr.bf16.mxu0 0
      %591 = vmatmul.mubr.bf16.gmra.mrb[0].mxu0 %v508
      %v592 = vpop.f32.mrb[0].mxu0
      %v593 = vadd.f32 0.0, %v592
      %v594 = vpop.f32.mrb[0].mxu0
      %v595 = vpop.f32.mrb[0].mxu0
      %v596 = vadd.f32 0.0, %v595
      %v597 = vpop.f32.mrb[0].mxu0
      %598 = vdwg.mxu0
      %v599 = vadd.f32 %v483, %v593
      %v600 = vadd.f32 %v486, %v596
      %v601 = vld [vmem:[#allocation2] sm:$0x7e]
      %s602 = scalar_lea.vmem %s3, 192
      %v603 = vld [vmem:[%s602] sm:$0xf]
      %v604 = vld [vmem:[%s602 + $0x4] sm:$0xf]
      %v605 = vld [vmem:[%s602 + $0x8] sm:$0xf]
      %v606 = vld [vmem:[%s602 + $0xc] sm:$0xf]
      %v607 = vld [vmem:[%s602 + $0x10] sm:$0xf]
      %v608 = vld [vmem:[%s602 + $0x14] sm:$0xf]
      %v609 = vld [vmem:[%s602 + $0x18] sm:$0xf]
      %v610 = vld [vmem:[%s602 + $0x1c] sm:$0xf]
      %v611 = vld [vmem:[%s602 + $0x20] sm:$0xf]
      %v612 = vld [vmem:[%s602 + $0x24] sm:$0xf]
      %v613 = vld [vmem:[%s602 + $0x28] sm:$0xf]
      %v614 = vld [vmem:[%s602 + $0x2c] sm:$0xf]
      %v615 = vld [vmem:[%s602 + $0x30] sm:$0xf]
      %v616 = vld [vmem:[%s602 + $0x34] sm:$0xf]
      %v617 = vld [vmem:[%s602 + $0x38] sm:$0xf]
      %v618 = vld [vmem:[%s602 + $0x3c] sm:$0xf]
      %v620 = vshrl.u32 %v601, 16
      %v622 = vrot.slane %v620, 1
      %v623 = vshll.u32 %v601, 16
      %v625 = vrot.slane %v623, 2
      %v626 = vor.u32 %v622, %v625
      %v644 = vunpack.c.l.b16 %v603
      %v645 = vunpack.c.l.b16 %v604
      %v646 = vunpack.c.l.b16 %v605
      %v647 = vunpack.c.l.b16 %v606
      %v648 = vunpack.c.l.b16 %v607
      %v649 = vunpack.c.l.b16 %v608
      %v650 = vunpack.c.l.b16 %v609
      %v651 = vunpack.c.l.b16 %v610
      %v652 = vunpack.c.l.b16 %v611
      %v653 = vunpack.c.l.b16 %v612
      %v654 = vunpack.c.l.b16 %v613
      %v655 = vunpack.c.l.b16 %v614
      %v656 = vunpack.c.l.b16 %v615
      %v657 = vunpack.c.l.b16 %v616
      %v658 = vunpack.c.l.b16 %v617
      %v659 = vunpack.c.l.b16 %v618
      %v660 = vpack.c.b16 %v645, %v644
      %v661 = vpack.c.b16 %v647, %v646
      %v662 = vpack.c.b16 %v649, %v648
      %v663 = vpack.c.b16 %v651, %v650
      %v664 = vpack.c.b16 %v653, %v652
      %v665 = vpack.c.b16 %v655, %v654
      %v666 = vpack.c.b16 %v657, %v656
      %v667 = vpack.c.b16 %v659, %v658
      %676 = vmatprep.subr.bf16.mxu0 0
      %677 = vmatpush1.bf16.msra.mxu0 %v660
      %678 = vmatprep.subr.bf16.mxu0 0
      %679 = vmatpush1.bf16.msra.mxu0 %v661
      %680 = vmatprep.subr.bf16.mxu0 0
      %681 = vmatpush1.bf16.msra.mxu0 %v662
      %682 = vmatprep.subr.bf16.mxu0 0
      %683 = vmatpush1.bf16.msra.mxu0 %v663
      %684 = vmatprep.subr.bf16.mxu0 0
      %685 = vmatpush1.bf16.msra.mxu0 %v664
      %686 = vmatprep.subr.bf16.mxu0 0
      %687 = vmatpush1.bf16.msra.mxu0 %v665
      %688 = vmatprep.subr.bf16.mxu0 0
      %689 = vmatpush1.bf16.msra.mxu0 %v666
      %690 = vmatprep.subr.bf16.mxu0 0
      %691 = vmatpush1.bf16.msra.mxu0 %v667
      %692 = vmatprep.subr.bf16.mxu0 0
      %693 = vmatpush1.bf16.msra.mxu0 0
      %694 = vmatprep.subr.bf16.mxu0 0
      %695 = vmatpush1.bf16.msra.mxu0 0
      %696 = vmatprep.subr.bf16.mxu0 0
      %697 = vmatpush1.bf16.msra.mxu0 0
      %698 = vmatprep.subr.bf16.mxu0 0
      %699 = vmatpush1.bf16.msra.mxu0 0
      %700 = vmatprep.subr.bf16.mxu0 0
      %701 = vmatpush1.bf16.msra.mxu0 0
      %702 = vmatprep.subr.bf16.mxu0 0
      %703 = vmatpush1.bf16.msra.mxu0 0
      %704 = vmatprep.subr.bf16.mxu0 0
      %705 = vmatpush1.bf16.msra.mxu0 0
      %706 = vmatprep.subr.bf16.mxu0 0
      %707 = vmatpush1.bf16.msra.mxu0 0
      %708 = vmatprep.mubr.bf16.mxu0 0
      %709 = vmatmul.mubr.bf16.gmra.mrb[0].mxu0 %v626
      %v710 = vpop.f32.mrb[0].mxu0
      %v711 = vadd.f32 0.0, %v710
      %v712 = vpop.f32.mrb[0].mxu0
      %v713 = vpop.f32.mrb[0].mxu0
      %v714 = vadd.f32 0.0, %v713
      %v715 = vpop.f32.mrb[0].mxu0
      %716 = vdwg.mxu0
      %v717 = vadd.f32 %v599, %v711
      %v718 = vadd.f32 %v600, %v714
      %v719 = vld [vmem:[#allocation2] sm:$0xfc]
      %s720 = scalar_lea.vmem %s3, 256
      %v721 = vld [vmem:[%s720] sm:$0xf]
      %v722 = vld [vmem:[%s720 + $0x4] sm:$0xf]
      %v723 = vld [vmem:[%s720 + $0x8] sm:$0xf]
      %v724 = vld [vmem:[%s720 + $0xc] sm:$0xf]
      %v725 = vld [vmem:[%s720 + $0x10] sm:$0xf]
      %v726 = vld [vmem:[%s720 + $0x14] sm:$0xf]
      %v727 = vld [vmem:[%s720 + $0x18] sm:$0xf]
      %v728 = vld [vmem:[%s720 + $0x1c] sm:$0xf]
      %v729 = vld [vmem:[%s720 + $0x20] sm:$0xf]
      %v730 = vld [vmem:[%s720 + $0x24] sm:$0xf]
      %v731 = vld [vmem:[%s720 + $0x28] sm:$0xf]
      %v732 = vld [vmem:[%s720 + $0x2c] sm:$0xf]
      %v733 = vld [vmem:[%s720 + $0x30] sm:$0xf]
      %v734 = vld [vmem:[%s720 + $0x34] sm:$0xf]
      %v735 = vld [vmem:[%s720 + $0x38] sm:$0xf]
      %v736 = vld [vmem:[%s720 + $0x3c] sm:$0xf]
      %v738 = vshrl.u32 %v719, 16
      %v740 = vrot.slane %v738, 2
      %v741 = vshll.u32 %v719, 16
      %v743 = vrot.slane %v741, 3
      %v744 = vor.u32 %v740, %v743
      %v762 = vunpack.c.l.b16 %v721
      %v763 = vunpack.c.l.b16 %v722
      %v764 = vunpack.c.l.b16 %v723
      %v765 = vunpack.c.l.b16 %v724
      %v766 = vunpack.c.l.b16 %v725
      %v767 = vunpack.c.l.b16 %v726
      %v768 = vunpack.c.l.b16 %v727
      %v769 = vunpack.c.l.b16 %v728
      %v770 = vunpack.c.l.b16 %v729
      %v771 = vunpack.c.l.b16 %v730
      %v772 = vunpack.c.l.b16 %v731
      %v773 = vunpack.c.l.b16 %v732
      %v774 = vunpack.c.l.b16 %v733
      %v775 = vunpack.c.l.b16 %v734
      %v776 = vunpack.c.l.b16 %v735
      %v777 = vunpack.c.l.b16 %v736
      %v778 = vpack.c.b16 %v763, %v762
      %v779 = vpack.c.b16 %v765, %v764
      %v780 = vpack.c.b16 %v767, %v766
      %v781 = vpack.c.b16 %v769, %v768
      %v782 = vpack.c.b16 %v771, %v770
      %v783 = vpack.c.b16 %v773, %v772
      %v784 = vpack.c.b16 %v775, %v774
      %v785 = vpack.c.b16 %v777, %v776
      %794 = vmatprep.subr.bf16.mxu0 0
      %795 = vmatpush1.bf16.msra.mxu0 %v778
      %796 = vmatprep.subr.bf16.mxu0 0
      %797 = vmatpush1.bf16.msra.mxu0 %v779
      %798 = vmatprep.subr.bf16.mxu0 0
      %799 = vmatpush1.bf16.msra.mxu0 %v780
      %800 = vmatprep.subr.bf16.mxu0 0
      %801 = vmatpush1.bf16.msra.mxu0 %v781
      %802 = vmatprep.subr.bf16.mxu0 0
      %803 = vmatpush1.bf16.msra.mxu0 %v782
      %804 = vmatprep.subr.bf16.mxu0 0
      %805 = vmatpush1.bf16.msra.mxu0 %v783
      %806 = vmatprep.subr.bf16.mxu0 0
      %807 = vmatpush1.bf16.msra.mxu0 %v784
      %808 = vmatprep.subr.bf16.mxu0 0
      %809 = vmatpush1.bf16.msra.mxu0 %v785
      %810 = vmatprep.subr.bf16.mxu0 0
      %811 = vmatpush1.bf16.msra.mxu0 0
      %812 = vmatprep.subr.bf16.mxu0 0
      %813 = vmatpush1.bf16.msra.mxu0 0
      %814 = vmatprep.subr.bf16.mxu0 0
      %815 = vmatpush1.bf16.msra.mxu0 0
      %816 = vmatprep.subr.bf16.mxu0 0
      %817 = vmatpush1.bf16.msra.mxu0 0
      %818 = vmatprep.subr.bf16.mxu0 0
      %819 = vmatpush1.bf16.msra.mxu0 0
      %820 = vmatprep.subr.bf16.mxu0 0
      %821 = vmatpush1.bf16.msra.mxu0 0
      %822 = vmatprep.subr.bf16.mxu0 0
      %823 = vmatpush1.bf16.msra.mxu0 0
      %824 = vmatprep.subr.bf16.mxu0 0
      %825 = vmatpush1.bf16.msra.mxu0 0
      %826 = vmatprep.mubr.bf16.mxu0 0
      %827 = vmatmul.mubr.bf16.gmra.mrb[0].mxu0 %v744
      %v828 = vpop.f32.mrb[0].mxu0
      %v829 = vadd.f32 0.0, %v828
      %v830 = vpop.f32.mrb[0].mxu0
      %v831 = vpop.f32.mrb[0].mxu0
      %v832 = vadd.f32 0.0, %v831
      %v833 = vpop.f32.mrb[0].mxu0
      %834 = vdwg.mxu0
      %v835 = vadd.f32 %v717, %v829
      %v836 = vadd.f32 %v718, %v832
      %v837 = vld [vmem:[#allocation2] sm:$0xf8]
      %s838 = scalar_lea.vmem %s3, 320
      %v839 = vld [vmem:[%s838] sm:$0xf]
      %v840 = vld [vmem:[%s838 + $0x4] sm:$0xf]
      %v841 = vld [vmem:[%s838 + $0x8] sm:$0xf]
      %v842 = vld [vmem:[%s838 + $0xc] sm:$0xf]
      %v843 = vld [vmem:[%s838 + $0x10] sm:$0xf]
      %v844 = vld [vmem:[%s838 + $0x14] sm:$0xf]
      %v845 = vld [vmem:[%s838 + $0x18] sm:$0xf]
      %v846 = vld [vmem:[%s838 + $0x1c] sm:$0xf]
      %v847 = vld [vmem:[%s838 + $0x20] sm:$0xf]
      %v848 = vld [vmem:[%s838 + $0x24] sm:$0xf]
      %v849 = vld [vmem:[%s838 + $0x28] sm:$0xf]
      %v850 = vld [vmem:[%s838 + $0x2c] sm:$0xf]
      %v851 = vld [vmem:[%s838 + $0x30] sm:$0xf]
      %v852 = vld [vmem:[%s838 + $0x34] sm:$0xf]
      %v853 = vld [vmem:[%s838 + $0x38] sm:$0xf]
      %v854 = vld [vmem:[%s838 + $0x3c] sm:$0xf]
      %v856 = vrot.slane %v837, 3
      %v874 = vunpack.c.l.b16 %v839
      %v875 = vunpack.c.l.b16 %v840
      %v876 = vunpack.c.l.b16 %v841
      %v877 = vunpack.c.l.b16 %v842
      %v878 = vunpack.c.l.b16 %v843
      %v879 = vunpack.c.l.b16 %v844
      %v880 = vunpack.c.l.b16 %v845
      %v881 = vunpack.c.l.b16 %v846
      %v882 = vunpack.c.l.b16 %v847
      %v883 = vunpack.c.l.b16 %v848
      %v884 = vunpack.c.l.b16 %v849
      %v885 = vunpack.c.l.b16 %v850
      %v886 = vunpack.c.l.b16 %v851
      %v887 = vunpack.c.l.b16 %v852
      %v888 = vunpack.c.l.b16 %v853
      %v889 = vunpack.c.l.b16 %v854
      %v890 = vpack.c.b16 %v875, %v874
      %v891 = vpack.c.b16 %v877, %v876
      %v892 = vpack.c.b16 %v879, %v878
      %v893 = vpack.c.b16 %v881, %v880
      %v894 = vpack.c.b16 %v883, %v882
      %v895 = vpack.c.b16 %v885, %v884
      %v896 = vpack.c.b16 %v887, %v886
      %v897 = vpack.c.b16 %v889, %v888
      %906 = vmatprep.subr.bf16.mxu0 0
      %907 = vmatpush1.bf16.msra.mxu0 %v890
      %908 = vmatprep.subr.bf16.mxu0 0
      %909 = vmatpush1.bf16.msra.mxu0 %v891
      %910 = vmatprep.subr.bf16.mxu0 0
      %911 = vmatpush1.bf16.msra.mxu0 %v892
      %912 = vmatprep.subr.bf16.mxu0 0
      %913 = vmatpush1.bf16.msra.mxu0 %v893
      %914 = vmatprep.subr.bf16.mxu0 0
      %915 = vmatpush1.bf16.msra.mxu0 %v894
      %916 = vmatprep.subr.bf16.mxu0 0
      %917 = vmatpush1.bf16.msra.mxu0 %v895
      %918 = vmatprep.subr.bf16.mxu0 0
      %919 = vmatpush1.bf16.msra.mxu0 %v896
      %920 = vmatprep.subr.bf16.mxu0 0
      %921 = vmatpush1.bf16.msra.mxu0 %v897
      %922 = vmatprep.subr.bf16.mxu0 0
      %923 = vmatpush1.bf16.msra.mxu0 0
      %924 = vmatprep.subr.bf16.mxu0 0
      %925 = vmatpush1.bf16.msra.mxu0 0
      %926 = vmatprep.subr.bf16.mxu0 0
      %927 = vmatpush1.bf16.msra.mxu0 0
      %928 = vmatprep.subr.bf16.mxu0 0
      %929 = vmatpush1.bf16.msra.mxu0 0
      %930 = vmatprep.subr.bf16.mxu0 0
      %931 = vmatpush1.bf16.msra.mxu0 0
      %932 = vmatprep.subr.bf16.mxu0 0
      %933 = vmatpush1.bf16.msra.mxu0 0
      %934 = vmatprep.subr.bf16.mxu0 0
      %935 = vmatpush1.bf16.msra.mxu0 0
      %936 = vmatprep.subr.bf16.mxu0 0
      %937 = vmatpush1.bf16.msra.mxu0 0
      %938 = vmatprep.mubr.bf16.mxu0 0
      %939 = vmatmul.mubr.bf16.gmra.mrb[0].mxu0 %v856
      %v940 = vpop.f32.mrb[0].mxu0
      %v941 = vadd.f32 0.0, %v940
      %v942 = vpop.f32.mrb[0].mxu0
      %v943 = vpop.f32.mrb[0].mxu0
      %v944 = vadd.f32 0.0, %v943
      %v945 = vpop.f32.mrb[0].mxu0
      %946 = vdwg.mxu0
      %v947 = vadd.f32 %v835, %v941
      %v948 = vadd.f32 %v836, %v944
      %v949 = vld [vmem:[#allocation2] sm:$0xf8]
      %v950 = vld [vmem:[#allocation2 + $0x8] sm:$0x1]
      %s951 = scalar_lea.vmem %s3, 384
      %v952 = vld [vmem:[%s951] sm:$0xf]
      %v953 = vld [vmem:[%s951 + $0x4] sm:$0xf]
      %v954 = vld [vmem:[%s951 + $0x8] sm:$0xf]
      %v955 = vld [vmem:[%s951 + $0xc] sm:$0xf]
      %v956 = vld [vmem:[%s951 + $0x10] sm:$0xf]
      %v957 = vld [vmem:[%s951 + $0x14] sm:$0xf]
      %v958 = vld [vmem:[%s951 + $0x18] sm:$0xf]
      %v959 = vld [vmem:[%s951 + $0x1c] sm:$0xf]
      %v960 = vld [vmem:[%s951 + $0x20] sm:$0xf]
      %v961 = vld [vmem:[%s951 + $0x24] sm:$0xf]
      %v962 = vld [vmem:[%s951 + $0x28] sm:$0xf]
      %v963 = vld [vmem:[%s951 + $0x2c] sm:$0xf]
      %v964 = vld [vmem:[%s951 + $0x30] sm:$0xf]
      %v965 = vld [vmem:[%s951 + $0x34] sm:$0xf]
      %v966 = vld [vmem:[%s951 + $0x38] sm:$0xf]
      %v967 = vld [vmem:[%s951 + $0x3c] sm:$0xf]
      %vm968 = vsmask.f32 4352
      %v970 = vshrl.u32 %v949, 16
      %v972 = vrot.slane %v970, 3
      %v973 = vshll.u32 %v949, 16
      %v975 = vrot.slane %v973, 4
      %v976 = vor.u32 %v972, %v975
      %v978 = vshll.u32 %v950, 16
      %v980 = vrot.slane %v978, 4
      %v981 = vsel %vm968, %v976, %v980
      %v999 = vunpack.c.l.b16 %v952
      %v1000 = vunpack.c.l.b16 %v953
      %v1001 = vunpack.c.l.b16 %v954
      %v1002 = vunpack.c.l.b16 %v955
      %v1003 = vunpack.c.l.b16 %v956
      %v1004 = vunpack.c.l.b16 %v957
      %v1005 = vunpack.c.l.b16 %v958
      %v1006 = vunpack.c.l.b16 %v959
      %v1007 = vunpack.c.l.b16 %v960
      %v1008 = vunpack.c.l.b16 %v961
      %v1009 = vunpack.c.l.b16 %v962
      %v1010 = vunpack.c.l.b16 %v963
      %v1011 = vunpack.c.l.b16 %v964
      %v1012 = vunpack.c.l.b16 %v965
      %v1013 = vunpack.c.l.b16 %v966
      %v1014 = vunpack.c.l.b16 %v967
      %v1015 = vpack.c.b16 %v1000, %v999
      %v1016 = vpack.c.b16 %v1002, %v1001
      %v1017 = vpack.c.b16 %v1004, %v1003
      %v1018 = vpack.c.b16 %v1006, %v1005
      %v1019 = vpack.c.b16 %v1008, %v1007
      %v1020 = vpack.c.b16 %v1010, %v1009
      %v1021 = vpack.c.b16 %v1012, %v1011
      %v1022 = vpack.c.b16 %v1014, %v1013
      %1031 = vmatprep.subr.bf16.mxu0 0
      %1032 = vmatpush1.bf16.msra.mxu0 %v1015
      %1033 = vmatprep.subr.bf16.mxu0 0
      %1034 = vmatpush1.bf16.msra.mxu0 %v1016
      %1035 = vmatprep.subr.bf16.mxu0 0
      %1036 = vmatpush1.bf16.msra.mxu0 %v1017
      %1037 = vmatprep.subr.bf16.mxu0 0
      %1038 = vmatpush1.bf16.msra.mxu0 %v1018
      %1039 = vmatprep.subr.bf16.mxu0 0
      %1040 = vmatpush1.bf16.msra.mxu0 %v1019
      %1041 = vmatprep.subr.bf16.mxu0 0
      %1042 = vmatpush1.bf16.msra.mxu0 %v1020
      %1043 = vmatprep.subr.bf16.mxu0 0
      %1044 = vmatpush1.bf16.msra.mxu0 %v1021
      %1045 = vmatprep.subr.bf16.mxu0 0
      %1046 = vmatpush1.bf16.msra.mxu0 %v1022
      %1047 = vmatprep.subr.bf16.mxu0 0
      %1048 = vmatpush1.bf16.msra.mxu0 0
      %1049 = vmatprep.subr.bf16.mxu0 0
      %1050 = vmatpush1.bf16.msra.mxu0 0
      %1051 = vmatprep.subr.bf16.mxu0 0
      %1052 = vmatpush1.bf16.msra.mxu0 0
      %1053 = vmatprep.subr.bf16.mxu0 0
      %1054 = vmatpush1.bf16.msra.mxu0 0
      %1055 = vmatprep.subr.bf16.mxu0 0
      %1056 = vmatpush1.bf16.msra.mxu0 0
      %1057 = vmatprep.subr.bf16.mxu0 0
      %1058 = vmatpush1.bf16.msra.mxu0 0
      %1059 = vmatprep.subr.bf16.mxu0 0
      %1060 = vmatpush1.bf16.msra.mxu0 0
      %1061 = vmatprep.subr.bf16.mxu0 0
      %1062 = vmatpush1.bf16.msra.mxu0 0
      %1063 = vmatprep.mubr.bf16.mxu0 0
      %1064 = vmatmul.mubr.bf16.gmra.mrb[0].mxu0 %v981
      %v1065 = vpop.f32.mrb[0].mxu0
      %v1066 = vadd.f32 0.0, %v1065
      %v1067 = vpop.f32.mrb[0].mxu0
      %v1068 = vpop.f32.mrb[0].mxu0
      %v1069 = vadd.f32 0.0, %v1068
      %v1070 = vpop.f32.mrb[0].mxu0
      %1071 = vdwg.mxu0
      %v1072 = vadd.f32 %v947, %v1066
      %v1073 = vadd.f32 %v948, %v1069
      %v1074 = vld [vmem:[#allocation2] sm:$0xf0]
      %s1075 = scalar_lea.vmem %s3, 448
      %v1076 = vld [vmem:[%s1075] sm:$0xf]
      %v1077 = vld [vmem:[%s1075 + $0x4] sm:$0xf]
      %v1078 = vld [vmem:[%s1075 + $0x8] sm:$0xf]
      %v1079 = vld [vmem:[%s1075 + $0xc] sm:$0xf]
      %v1080 = vld [vmem:[%s1075 + $0x10] sm:$0xf]
      %v1081 = vld [vmem:[%s1075 + $0x14] sm:$0xf]
      %v1082 = vld [vmem:[%s1075 + $0x18] sm:$0xf]
      %v1083 = vld [vmem:[%s1075 + $0x1c] sm:$0xf]
      %v1084 = vld [vmem:[%s1075 + $0x20] sm:$0xf]
      %v1085 = vld [vmem:[%s1075 + $0x24] sm:$0xf]
      %v1086 = vld [vmem:[%s1075 + $0x28] sm:$0xf]
      %v1087 = vld [vmem:[%s1075 + $0x2c] sm:$0xf]
      %v1088 = vld [vmem:[%s1075 + $0x30] sm:$0xf]
      %v1089 = vld [vmem:[%s1075 + $0x34] sm:$0xf]
      %v1090 = vld [vmem:[%s1075 + $0x38] sm:$0xf]
      %v1091 = vld [vmem:[%s1075 + $0x3c] sm:$0xf]
      %vm1094 = vcmask 1043456
      %v1095 = vrot.slane %v1074, 4
      %v1096 = vrot.slane %v950, 4
      %v1097 = vsel %vm1094, %v1095, %v1096
      %v1115 = vunpack.c.l.b16 %v1076
      %v1116 = vunpack.c.l.b16 %v1077
      %v1117 = vunpack.c.l.b16 %v1078
      %v1118 = vunpack.c.l.b16 %v1079
      %v1119 = vunpack.c.l.b16 %v1080
      %v1120 = vunpack.c.l.b16 %v1081
      %v1121 = vunpack.c.l.b16 %v1082
      %v1122 = vunpack.c.l.b16 %v1083
      %v1123 = vunpack.c.l.b16 %v1084
      %v1124 = vunpack.c.l.b16 %v1085
      %v1125 = vunpack.c.l.b16 %v1086
      %v1126 = vunpack.c.l.b16 %v1087
      %v1127 = vunpack.c.l.b16 %v1088
      %v1128 = vunpack.c.l.b16 %v1089
      %v1129 = vunpack.c.l.b16 %v1090
      %v1130 = vunpack.c.l.b16 %v1091
      %v1131 = vpack.c.b16 %v1116, %v1115
      %v1132 = vpack.c.b16 %v1118, %v1117
      %v1133 = vpack.c.b16 %v1120, %v1119
      %v1134 = vpack.c.b16 %v1122, %v1121
      %v1135 = vpack.c.b16 %v1124, %v1123
      %v1136 = vpack.c.b16 %v1126, %v1125
      %v1137 = vpack.c.b16 %v1128, %v1127
      %v1138 = vpack.c.b16 %v1130, %v1129
      %1147 = vmatprep.subr.bf16.mxu0 0
      %1148 = vmatpush1.bf16.msra.mxu0 %v1131
      %1149 = vmatprep.subr.bf16.mxu0 0
      %1150 = vmatpush1.bf16.msra.mxu0 %v1132
      %1151 = vmatprep.subr.bf16.mxu0 0
      %1152 = vmatpush1.bf16.msra.mxu0 %v1133
      %1153 = vmatprep.subr.bf16.mxu0 0
      %1154 = vmatpush1.bf16.msra.mxu0 %v1134
      %1155 = vmatprep.subr.bf16.mxu0 0
      %1156 = vmatpush1.bf16.msra.mxu0 %v1135
      %1157 = vmatprep.subr.bf16.mxu0 0
      %1158 = vmatpush1.bf16.msra.mxu0 %v1136
      %1159 = vmatprep.subr.bf16.mxu0 0
      %1160 = vmatpush1.bf16.msra.mxu0 %v1137
      %1161 = vmatprep.subr.bf16.mxu0 0
      %1162 = vmatpush1.bf16.msra.mxu0 %v1138
      %1163 = vmatprep.subr.bf16.mxu0 0
      %1164 = vmatpush1.bf16.msra.mxu0 0
      %1165 = vmatprep.subr.bf16.mxu0 0
      %1166 = vmatpush1.bf16.msra.mxu0 0
      %1167 = vmatprep.subr.bf16.mxu0 0
      %1168 = vmatpush1.bf16.msra.mxu0 0
      %1169 = vmatprep.subr.bf16.mxu0 0
      %1170 = vmatpush1.bf16.msra.mxu0 0
      %1171 = vmatprep.subr.bf16.mxu0 0
      %1172 = vmatpush1.bf16.msra.mxu0 0
      %1173 = vmatprep.subr.bf16.mxu0 0
      %1174 = vmatpush1.bf16.msra.mxu0 0
      %1175 = vmatprep.subr.bf16.mxu0 0
      %1176 = vmatpush1.bf16.msra.mxu0 0
      %1177 = vmatprep.subr.bf16.mxu0 0
      %1178 = vmatpush1.bf16.msra.mxu0 0
      %1179 = vmatprep.mubr.bf16.mxu0 0
      %1180 = vmatmul.mubr.bf16.gmra.mrb[0].mxu0 %v1097
      %v1181 = vpop.f32.mrb[0].mxu0
      %v1182 = vadd.f32 0.0, %v1181
      %v1183 = vpop.f32.mrb[0].mxu0
      %v1184 = vpop.f32.mrb[0].mxu0
      %v1185 = vadd.f32 0.0, %v1184
      %v1186 = vpop.f32.mrb[0].mxu0
      %1187 = vdwg.mxu0
      %v1188 = vadd.f32 %v1072, %v1182
      %v1189 = vadd.f32 %v1073, %v1185
      %v1190 = vld [vmem:[#allocation2] sm:$0xe0]
      %v1191 = vld [vmem:[#allocation2 + $0x8] sm:$0x3]
      %s1192 = scalar_lea.vmem %s3, 512
      %v1193 = vld [vmem:[%s1192] sm:$0xf]
      %v1194 = vld [vmem:[%s1192 + $0x4] sm:$0xf]
      %v1195 = vld [vmem:[%s1192 + $0x8] sm:$0xf]
      %v1196 = vld [vmem:[%s1192 + $0xc] sm:$0xf]
      %v1197 = vld [vmem:[%s1192 + $0x10] sm:$0xf]
      %v1198 = vld [vmem:[%s1192 + $0x14] sm:$0xf]
      %v1199 = vld [vmem:[%s1192 + $0x18] sm:$0xf]
      %v1200 = vld [vmem:[%s1192 + $0x1c] sm:$0xf]
      %v1201 = vld [vmem:[%s1192 + $0x20] sm:$0xf]
      %v1202 = vld [vmem:[%s1192 + $0x24] sm:$0xf]
      %v1203 = vld [vmem:[%s1192 + $0x28] sm:$0xf]
      %v1204 = vld [vmem:[%s1192 + $0x2c] sm:$0xf]
      %v1205 = vld [vmem:[%s1192 + $0x30] sm:$0xf]
      %v1206 = vld [vmem:[%s1192 + $0x34] sm:$0xf]
      %v1207 = vld [vmem:[%s1192 + $0x38] sm:$0xf]
      %v1208 = vld [vmem:[%s1192 + $0x3c] sm:$0xf]
      %vm1211 = vcmask 1042432
      %v1212 = vrot.slane %v1190, 5
      %v1213 = vrot.slane %v1191, 5
      %v1214 = vsel %vm1211, %v1212, %v1213
      %v1232 = vunpack.c.l.b16 %v1193
      %v1233 = vunpack.c.l.b16 %v1194
      %v1234 = vunpack.c.l.b16 %v1195
      %v1235 = vunpack.c.l.b16 %v1196
      %v1236 = vunpack.c.l.b16 %v1197
      %v1237 = vunpack.c.l.b16 %v1198
      %v1238 = vunpack.c.l.b16 %v1199
      %v1239 = vunpack.c.l.b16 %v1200
      %v1240 = vunpack.c.l.b16 %v1201
      %v1241 = vunpack.c.l.b16 %v1202
      %v1242 = vunpack.c.l.b16 %v1203
      %v1243 = vunpack.c.l.b16 %v1204
      %v1244 = vunpack.c.l.b16 %v1205
      %v1245 = vunpack.c.l.b16 %v1206
      %v1246 = vunpack.c.l.b16 %v1207
      %v1247 = vunpack.c.l.b16 %v1208
      %v1248 = vpack.c.b16 %v1233, %v1232
      %v1249 = vpack.c.b16 %v1235, %v1234
      %v1250 = vpack.c.b16 %v1237, %v1236
      %v1251 = vpack.c.b16 %v1239, %v1238
      %v1252 = vpack.c.b16 %v1241, %v1240
      %v1253 = vpack.c.b16 %v1243, %v1242
      %v1254 = vpack.c.b16 %v1245, %v1244
      %v1255 = vpack.c.b16 %v1247, %v1246
      %1264 = vmatprep.subr.bf16.mxu0 0
      %1265 = vmatpush1.bf16.msra.mxu0 %v1248
      %1266 = vmatprep.subr.bf16.mxu0 0
      %1267 = vmatpush1.bf16.msra.mxu0 %v1249
      %1268 = vmatprep.subr.bf16.mxu0 0
      %1269 = vmatpush1.bf16.msra.mxu0 %v1250
      %1270 = vmatprep.subr.bf16.mxu0 0
      %1271 = vmatpush1.bf16.msra.mxu0 %v1251
      %1272 = vmatprep.subr.bf16.mxu0 0
      %1273 = vmatpush1.bf16.msra.mxu0 %v1252
      %1274 = vmatprep.subr.bf16.mxu0 0
      %1275 = vmatpush1.bf16.msra.mxu0 %v1253
      %1276 = vmatprep.subr.bf16.mxu0 0
      %1277 = vmatpush1.bf16.msra.mxu0 %v1254
      %1278 = vmatprep.subr.bf16.mxu0 0
      %1279 = vmatpush1.bf16.msra.mxu0 %v1255
      %1280 = vmatprep.subr.bf16.mxu0 0
      %1281 = vmatpush1.bf16.msra.mxu0 0
      %1282 = vmatprep.subr.bf16.mxu0 0
      %1283 = vmatpush1.bf16.msra.mxu0 0
      %1284 = vmatprep.subr.bf16.mxu0 0
      %1285 = vmatpush1.bf16.msra.mxu0 0
      %1286 = vmatprep.subr.bf16.mxu0 0
      %1287 = vmatpush1.bf16.msra.mxu0 0
      %1288 = vmatprep.subr.bf16.mxu0 0
      %1289 = vmatpush1.bf16.msra.mxu0 0
      %1290 = vmatprep.subr.bf16.mxu0 0
      %1291 = vmatpush1.bf16.msra.mxu0 0
      %1292 = vmatprep.subr.bf16.mxu0 0
      %1293 = vmatpush1.bf16.msra.mxu0 0
      %1294 = vmatprep.subr.bf16.mxu0 0
      %1295 = vmatpush1.bf16.msra.mxu0 0
      %1296 = vmatprep.mubr.bf16.mxu0 0
      %1297 = vmatmul.mubr.bf16.gmra.mrb[0].mxu0 %v1214
      %v1298 = vpop.f32.mrb[0].mxu0
      %v1299 = vadd.f32 0.0, %v1298
      %v1300 = vpop.f32.mrb[0].mxu0
      %v1301 = vpop.f32.mrb[0].mxu0
      %v1302 = vadd.f32 0.0, %v1301
      %v1303 = vpop.f32.mrb[0].mxu0
      %1304 = vdwg.mxu0
      %v1305 = vadd.f32 %v1188, %v1299
      %v1306 = vadd.f32 %v1189, %v1302
      %v1307 = vld [vmem:[#allocation2 + $0x8] sm:$0x7]
      %s1308 = scalar_lea.vmem %s3, 576
      %v1309 = vld [vmem:[%s1308] sm:$0xf]
      %v1310 = vld [vmem:[%s1308 + $0x4] sm:$0xf]
      %v1311 = vld [vmem:[%s1308 + $0x8] sm:$0xf]
      %v1312 = vld [vmem:[%s1308 + $0xc] sm:$0xf]
      %v1313 = vld [vmem:[%s1308 + $0x10] sm:$0xf]
      %v1314 = vld [vmem:[%s1308 + $0x14] sm:$0xf]
      %v1315 = vld [vmem:[%s1308 + $0x18] sm:$0xf]
      %v1316 = vld [vmem:[%s1308 + $0x1c] sm:$0xf]
      %v1317 = vld [vmem:[%s1308 + $0x20] sm:$0xf]
      %v1318 = vld [vmem:[%s1308 + $0x24] sm:$0xf]
      %v1319 = vld [vmem:[%s1308 + $0x28] sm:$0xf]
      %v1320 = vld [vmem:[%s1308 + $0x2c] sm:$0xf]
      %v1321 = vld [vmem:[%s1308 + $0x30] sm:$0xf]
      %v1322 = vld [vmem:[%s1308 + $0x34] sm:$0xf]
      %v1323 = vld [vmem:[%s1308 + $0x38] sm:$0xf]
      %v1324 = vld [vmem:[%s1308 + $0x3c] sm:$0xf]
      %vm1325 = vsmask.f32 2304
      %v1327 = vshrl.u32 %v1190, 16
      %v1329 = vrot.slane %v1327, 5
      %v1330 = vshll.u32 %v1190, 16
      %v1332 = vrot.slane %v1330, 6
      %v1333 = vor.u32 %v1329, %v1332
      %v1335 = vshrl.u32 %v1307, 16
      %v1337 = vrot.slane %v1335, 5
      %v1338 = vshll.u32 %v1307, 16
      %v1340 = vrot.slane %v1338, 6
      %v1341 = vor.u32 %v1337, %v1340
      %v1342 = vsel %vm1325, %v1333, %v1341
      %v1360 = vunpack.c.l.b16 %v1309
      %v1361 = vunpack.c.l.b16 %v1310
      %v1362 = vunpack.c.l.b16 %v1311
      %v1363 = vunpack.c.l.b16 %v1312
      %v1364 = vunpack.c.l.b16 %v1313
      %v1365 = vunpack.c.l.b16 %v1314
      %v1366 = vunpack.c.l.b16 %v1315
      %v1367 = vunpack.c.l.b16 %v1316
      %v1368 = vunpack.c.l.b16 %v1317
      %v1369 = vunpack.c.l.b16 %v1318
      %v1370 = vunpack.c.l.b16 %v1319
      %v1371 = vunpack.c.l.b16 %v1320
      %v1372 = vunpack.c.l.b16 %v1321
      %v1373 = vunpack.c.l.b16 %v1322
      %v1374 = vunpack.c.l.b16 %v1323
      %v1375 = vunpack.c.l.b16 %v1324
      %v1376 = vpack.c.b16 %v1361, %v1360
      %v1377 = vpack.c.b16 %v1363, %v1362
      %v1378 = vpack.c.b16 %v1365, %v1364
      %v1379 = vpack.c.b16 %v1367, %v1366
      %v1380 = vpack.c.b16 %v1369, %v1368
      %v1381 = vpack.c.b16 %v1371, %v1370
      %v1382 = vpack.c.b16 %v1373, %v1372
      %v1383 = vpack.c.b16 %v1375, %v1374
      %1392 = vmatprep.subr.bf16.mxu0 0
      %1393 = vmatpush1.bf16.msra.mxu0 %v1376
      %1394 = vmatprep.subr.bf16.mxu0 0
      %1395 = vmatpush1.bf16.msra.mxu0 %v1377
      %1396 = vmatprep.subr.bf16.mxu0 0
      %1397 = vmatpush1.bf16.msra.mxu0 %v1378
      %1398 = vmatprep.subr.bf16.mxu0 0
      %1399 = vmatpush1.bf16.msra.mxu0 %v1379
      %1400 = vmatprep.subr.bf16.mxu0 0
      %1401 = vmatpush1.bf16.msra.mxu0 %v1380
      %1402 = vmatprep.subr.bf16.mxu0 0
      %1403 = vmatpush1.bf16.msra.mxu0 %v1381
      %1404 = vmatprep.subr.bf16.mxu0 0
      %1405 = vmatpush1.bf16.msra.mxu0 %v1382
      %1406 = vmatprep.subr.bf16.mxu0 0
      %1407 = vmatpush1.bf16.msra.mxu0 %v1383
      %1408 = vmatprep.subr.bf16.mxu0 0
      %1409 = vmatpush1.bf16.msra.mxu0 0
      %1410 = vmatprep.subr.bf16.mxu0 0
      %1411 = vmatpush1.bf16.msra.mxu0 0
      %1412 = vmatprep.subr.bf16.mxu0 0
      %1413 = vmatpush1.bf16.msra.mxu0 0
      %1414 = vmatprep.subr.bf16.mxu0 0
      %1415 = vmatpush1.bf16.msra.mxu0 0
      %1416 = vmatprep.subr.bf16.mxu0 0
      %1417 = vmatpush1.bf16.msra.mxu0 0
      %1418 = vmatprep.subr.bf16.mxu0 0
      %1419 = vmatpush1.bf16.msra.mxu0 0
      %1420 = vmatprep.subr.bf16.mxu0 0
      %1421 = vmatpush1.bf16.msra.mxu0 0
      %1422 = vmatprep.subr.bf16.mxu0 0
      %1423 = vmatpush1.bf16.msra.mxu0 0
      %1424 = vmatprep.mubr.bf16.mxu0 0
      %1425 = vmatmul.mubr.bf16.gmra.mrb[0].mxu0 %v1342
      %v1426 = vpop.f32.mrb[0].mxu0
      %v1427 = vadd.f32 0.0, %v1426
      %v1428 = vpop.f32.mrb[0].mxu0
      %v1429 = vpop.f32.mrb[0].mxu0
      %v1430 = vadd.f32 0.0, %v1429
      %v1431 = vpop.f32.mrb[0].mxu0
      %1432 = vdwg.mxu0
      %v1433 = vadd.f32 %v1305, %v1427
      %v1434 = vadd.f32 %v1306, %v1430
      %v1435 = vld [vmem:[#allocation2] sm:$0xc0]
      %s1436 = scalar_lea.vmem %s3, 640
      %v1437 = vld [vmem:[%s1436] sm:$0xf]
      %v1438 = vld [vmem:[%s1436 + $0x4] sm:$0xf]
      %v1439 = vld [vmem:[%s1436 + $0x8] sm:$0xf]
      %v1440 = vld [vmem:[%s1436 + $0xc] sm:$0xf]
      %v1441 = vld [vmem:[%s1436 + $0x10] sm:$0xf]
      %v1442 = vld [vmem:[%s1436 + $0x14] sm:$0xf]
      %v1443 = vld [vmem:[%s1436 + $0x18] sm:$0xf]
      %v1444 = vld [vmem:[%s1436 + $0x1c] sm:$0xf]
      %v1445 = vld [vmem:[%s1436 + $0x20] sm:$0xf]
      %v1446 = vld [vmem:[%s1436 + $0x24] sm:$0xf]
      %v1447 = vld [vmem:[%s1436 + $0x28] sm:$0xf]
      %v1448 = vld [vmem:[%s1436 + $0x2c] sm:$0xf]
      %v1449 = vld [vmem:[%s1436 + $0x30] sm:$0xf]
      %v1450 = vld [vmem:[%s1436 + $0x34] sm:$0xf]
      %v1451 = vld [vmem:[%s1436 + $0x38] sm:$0xf]
      %v1452 = vld [vmem:[%s1436 + $0x3c] sm:$0xf]
      %vm1455 = vcmask 1041408
      %v1456 = vrot.slane %v1435, 6
      %v1457 = vrot.slane %v1307, 6
      %v1458 = vsel %vm1455, %v1456, %v1457
      %v1476 = vunpack.c.l.b16 %v1437
      %v1477 = vunpack.c.l.b16 %v1438
      %v1478 = vunpack.c.l.b16 %v1439
      %v1479 = vunpack.c.l.b16 %v1440
      %v1480 = vunpack.c.l.b16 %v1441
      %v1481 = vunpack.c.l.b16 %v1442
      %v1482 = vunpack.c.l.b16 %v1443
      %v1483 = vunpack.c.l.b16 %v1444
      %v1484 = vunpack.c.l.b16 %v1445
      %v1485 = vunpack.c.l.b16 %v1446
      %v1486 = vunpack.c.l.b16 %v1447
      %v1487 = vunpack.c.l.b16 %v1448
      %v1488 = vunpack.c.l.b16 %v1449
      %v1489 = vunpack.c.l.b16 %v1450
      %v1490 = vunpack.c.l.b16 %v1451
      %v1491 = vunpack.c.l.b16 %v1452
      %v1492 = vpack.c.b16 %v1477, %v1476
      %v1493 = vpack.c.b16 %v1479, %v1478
      %v1494 = vpack.c.b16 %v1481, %v1480
      %v1495 = vpack.c.b16 %v1483, %v1482
      %v1496 = vpack.c.b16 %v1485, %v1484
      %v1497 = vpack.c.b16 %v1487, %v1486
      %v1498 = vpack.c.b16 %v1489, %v1488
      %v1499 = vpack.c.b16 %v1491, %v1490
      %1508 = vmatprep.subr.bf16.mxu0 0
      %1509 = vmatpush1.bf16.msra.mxu0 %v1492
      %1510 = vmatprep.subr.bf16.mxu0 0
      %1511 = vmatpush1.bf16.msra.mxu0 %v1493
      %1512 = vmatprep.subr.bf16.mxu0 0
      %1513 = vmatpush1.bf16.msra.mxu0 %v1494
      %1514 = vmatprep.subr.bf16.mxu0 0
      %1515 = vmatpush1.bf16.msra.mxu0 %v1495
      %1516 = vmatprep.subr.bf16.mxu0 0
      %1517 = vmatpush1.bf16.msra.mxu0 %v1496
      %1518 = vmatprep.subr.bf16.mxu0 0
      %1519 = vmatpush1.bf16.msra.mxu0 %v1497
      %1520 = vmatprep.subr.bf16.mxu0 0
      %1521 = vmatpush1.bf16.msra.mxu0 %v1498
      %1522 = vmatprep.subr.bf16.mxu0 0
      %1523 = vmatpush1.bf16.msra.mxu0 %v1499
      %1524 = vmatprep.subr.bf16.mxu0 0
      %1525 = vmatpush1.bf16.msra.mxu0 0
      %1526 = vmatprep.subr.bf16.mxu0 0
      %1527 = vmatpush1.bf16.msra.mxu0 0
      %1528 = vmatprep.subr.bf16.mxu0 0
      %1529 = vmatpush1.bf16.msra.mxu0 0
      %1530 = vmatprep.subr.bf16.mxu0 0
      %1531 = vmatpush1.bf16.msra.mxu0 0
      %1532 = vmatprep.subr.bf16.mxu0 0
      %1533 = vmatpush1.bf16.msra.mxu0 0
      %1534 = vmatprep.subr.bf16.mxu0 0
      %1535 = vmatpush1.bf16.msra.mxu0 0
      %1536 = vmatprep.subr.bf16.mxu0 0
      %1537 = vmatpush1.bf16.msra.mxu0 0
      %1538 = vmatprep.subr.bf16.mxu0 0
      %1539 = vmatpush1.bf16.msra.mxu0 0
      %1540 = vmatprep.mubr.bf16.mxu0 0
      %1541 = vmatmul.mubr.bf16.gmra.mrb[0].mxu0 %v1458
      %v1542 = vpop.f32.mrb[0].mxu0
      %v1543 = vadd.f32 0.0, %v1542
      %v1544 = vpop.f32.mrb[0].mxu0
      %v1545 = vpop.f32.mrb[0].mxu0
      %v1546 = vadd.f32 0.0, %v1545
      %v1547 = vpop.f32.mrb[0].mxu0
      %1548 = vdwg.mxu0
      %v1549 = vadd.f32 %v1433, %v1543
      %v1550 = vadd.f32 %v1434, %v1546
      %v1551 = vld [vmem:[#allocation2 + $0x8] sm:$0xf]
      %s1552 = scalar_lea.vmem %s3, 704
      %v1553 = vld [vmem:[%s1552] sm:$0xf]
      %v1554 = vld [vmem:[%s1552 + $0x4] sm:$0xf]
      %v1555 = vld [vmem:[%s1552 + $0x8] sm:$0xf]
      %v1556 = vld [vmem:[%s1552 + $0xc] sm:$0xf]
      %v1557 = vld [vmem:[%s1552 + $0x10] sm:$0xf]
      %v1558 = vld [vmem:[%s1552 + $0x14] sm:$0xf]
      %v1559 = vld [vmem:[%s1552 + $0x18] sm:$0xf]
      %v1560 = vld [vmem:[%s1552 + $0x1c] sm:$0xf]
      %v1561 = vld [vmem:[%s1552 + $0x20] sm:$0xf]
      %v1562 = vld [vmem:[%s1552 + $0x24] sm:$0xf]
      %v1563 = vld [vmem:[%s1552 + $0x28] sm:$0xf]
      %v1564 = vld [vmem:[%s1552 + $0x2c] sm:$0xf]
      %v1565 = vld [vmem:[%s1552 + $0x30] sm:$0xf]
      %v1566 = vld [vmem:[%s1552 + $0x34] sm:$0xf]
      %v1567 = vld [vmem:[%s1552 + $0x38] sm:$0xf]
      %v1568 = vld [vmem:[%s1552 + $0x3c] sm:$0xf]
      %vm1569 = vsmask.f32 1280
      %v1571 = vshrl.u32 %v1435, 16
      %v1573 = vrot.slane %v1571, 6
      %v1574 = vshll.u32 %v1435, 16
      %v1576 = vrot.slane %v1574, 7
      %v1577 = vor.u32 %v1573, %v1576
      %v1579 = vshrl.u32 %v1551, 16
      %v1581 = vrot.slane %v1579, 6
      %v1582 = vshll.u32 %v1551, 16
      %v1584 = vrot.slane %v1582, 7
      %v1585 = vor.u32 %v1581, %v1584
      %v1586 = vsel %vm1569, %v1577, %v1585
      %v1604 = vunpack.c.l.b16 %v1553
      %v1605 = vunpack.c.l.b16 %v1554
      %v1606 = vunpack.c.l.b16 %v1555
      %v1607 = vunpack.c.l.b16 %v1556
      %v1608 = vunpack.c.l.b16 %v1557
      %v1609 = vunpack.c.l.b16 %v1558
      %v1610 = vunpack.c.l.b16 %v1559
      %v1611 = vunpack.c.l.b16 %v1560
      %v1612 = vunpack.c.l.b16 %v1561
      %v1613 = vunpack.c.l.b16 %v1562
      %v1614 = vunpack.c.l.b16 %v1563
      %v1615 = vunpack.c.l.b16 %v1564
      %v1616 = vunpack.c.l.b16 %v1565
      %v1617 = vunpack.c.l.b16 %v1566
      %v1618 = vunpack.c.l.b16 %v1567
      %v1619 = vunpack.c.l.b16 %v1568
      %v1620 = vpack.c.b16 %v1605, %v1604
      %v1621 = vpack.c.b16 %v1607, %v1606
      %v1622 = vpack.c.b16 %v1609, %v1608
      %v1623 = vpack.c.b16 %v1611, %v1610
      %v1624 = vpack.c.b16 %v1613, %v1612
      %v1625 = vpack.c.b16 %v1615, %v1614
      %v1626 = vpack.c.b16 %v1617, %v1616
      %v1627 = vpack.c.b16 %v1619, %v1618
      %1636 = vmatprep.subr.bf16.mxu0 0
      %1637 = vmatpush1.bf16.msra.mxu0 %v1620
      %1638 = vmatprep.subr.bf16.mxu0 0
      %1639 = vmatpush1.bf16.msra.mxu0 %v1621
      %1640 = vmatprep.subr.bf16.mxu0 0
      %1641 = vmatpush1.bf16.msra.mxu0 %v1622
      %1642 = vmatprep.subr.bf16.mxu0 0
      %1643 = vmatpush1.bf16.msra.mxu0 %v1623
      %1644 = vmatprep.subr.bf16.mxu0 0
      %1645 = vmatpush1.bf16.msra.mxu0 %v1624
      %1646 = vmatprep.subr.bf16.mxu0 0
      %1647 = vmatpush1.bf16.msra.mxu0 %v1625
      %1648 = vmatprep.subr.bf16.mxu0 0
      %1649 = vmatpush1.bf16.msra.mxu0 %v1626
      %1650 = vmatprep.subr.bf16.mxu0 0
      %1651 = vmatpush1.bf16.msra.mxu0 %v1627
      %1652 = vmatprep.subr.bf16.mxu0 0
      %1653 = vmatpush1.bf16.msra.mxu0 0
      %1654 = vmatprep.subr.bf16.mxu0 0
      %1655 = vmatpush1.bf16.msra.mxu0 0
      %1656 = vmatprep.subr.bf16.mxu0 0
      %1657 = vmatpush1.bf16.msra.mxu0 0
      %1658 = vmatprep.subr.bf16.mxu0 0
      %1659 = vmatpush1.bf16.msra.mxu0 0
      %1660 = vmatprep.subr.bf16.mxu0 0
      %1661 = vmatpush1.bf16.msra.mxu0 0
      %1662 = vmatprep.subr.bf16.mxu0 0
      %1663 = vmatpush1.bf16.msra.mxu0 0
      %1664 = vmatprep.subr.bf16.mxu0 0
      %1665 = vmatpush1.bf16.msra.mxu0 0
      %1666 = vmatprep.subr.bf16.mxu0 0
      %1667 = vmatpush1.bf16.msra.mxu0 0
      %1668 = vmatprep.mubr.bf16.mxu0 0
      %1669 = vmatmul.mubr.bf16.gmra.mrb[0].mxu0 %v1586
      %v1670 = vpop.f32.mrb[0].mxu0
      %v1671 = vadd.f32 0.0, %v1670
      %v1672 = vpop.f32.mrb[0].mxu0
      %v1673 = vpop.f32.mrb[0].mxu0
      %v1674 = vadd.f32 0.0, %v1673
      %v1675 = vpop.f32.mrb[0].mxu0
      %1676 = vdwg.mxu0
      %v1677 = vadd.f32 %v1549, %v1671
      %v1678 = vadd.f32 %v1550, %v1674
      %v1679 = vld [vmem:[#allocation2] sm:$0x80]
      %v1680 = vld [vmem:[#allocation2 + $0x8] sm:$0x1f]
      %s1681 = scalar_lea.vmem %s3, 768
      %v1682 = vld [vmem:[%s1681] sm:$0xf]
      %v1683 = vld [vmem:[%s1681 + $0x4] sm:$0xf]
      %v1684 = vld [vmem:[%s1681 + $0x8] sm:$0xf]
      %v1685 = vld [vmem:[%s1681 + $0xc] sm:$0xf]
      %v1686 = vld [vmem:[%s1681 + $0x10] sm:$0xf]
      %v1687 = vld [vmem:[%s1681 + $0x14] sm:$0xf]
      %v1688 = vld [vmem:[%s1681 + $0x18] sm:$0xf]
      %v1689 = vld [vmem:[%s1681 + $0x1c] sm:$0xf]
      %v1690 = vld [vmem:[%s1681 + $0x20] sm:$0xf]
      %v1691 = vld [vmem:[%s1681 + $0x24] sm:$0xf]
      %v1692 = vld [vmem:[%s1681 + $0x28] sm:$0xf]
      %v1693 = vld [vmem:[%s1681 + $0x2c] sm:$0xf]
      %v1694 = vld [vmem:[%s1681 + $0x30] sm:$0xf]
      %v1695 = vld [vmem:[%s1681 + $0x34] sm:$0xf]
      %v1696 = vld [vmem:[%s1681 + $0x38] sm:$0xf]
      %v1697 = vld [vmem:[%s1681 + $0x3c] sm:$0xf]
      %vm1698 = vsmask.f32 256
      %v1700 = vshrl.u32 %v1679, 16
      %v1702 = vrot.slane %v1700, 7
      %v1704 = vshrl.u32 %v1680, 16
      %v1706 = vrot.slane %v1704, 7
      %v1707 = vshll.u32 %v1680, 16
      %v1709 = vor.u32 %v1706, %v1707
      %v1710 = vsel %vm1698, %v1702, %v1709
      %v1728 = vunpack.c.l.b16 %v1682
      %v1729 = vunpack.c.l.b16 %v1683
      %v1730 = vunpack.c.l.b16 %v1684
      %v1731 = vunpack.c.l.b16 %v1685
      %v1732 = vunpack.c.l.b16 %v1686
      %v1733 = vunpack.c.l.b16 %v1687
      %v1734 = vunpack.c.l.b16 %v1688
      %v1735 = vunpack.c.l.b16 %v1689
      %v1736 = vunpack.c.l.b16 %v1690
      %v1737 = vunpack.c.l.b16 %v1691
      %v1738 = vunpack.c.l.b16 %v1692
      %v1739 = vunpack.c.l.b16 %v1693
      %v1740 = vunpack.c.l.b16 %v1694
      %v1741 = vunpack.c.l.b16 %v1695
      %v1742 = vunpack.c.l.b16 %v1696
      %v1743 = vunpack.c.l.b16 %v1697
      %v1744 = vpack.c.b16 %v1729, %v1728
      %v1745 = vpack.c.b16 %v1731, %v1730
      %v1746 = vpack.c.b16 %v1733, %v1732
      %v1747 = vpack.c.b16 %v1735, %v1734
      %v1748 = vpack.c.b16 %v1737, %v1736
      %v1749 = vpack.c.b16 %v1739, %v1738
      %v1750 = vpack.c.b16 %v1741, %v1740
      %v1751 = vpack.c.b16 %v1743, %v1742
      %1760 = vmatprep.subr.bf16.mxu0 0
      %1761 = vmatpush1.bf16.msra.mxu0 %v1744
      %1762 = vmatprep.subr.bf16.mxu0 0
      %1763 = vmatpush1.bf16.msra.mxu0 %v1745
      %1764 = vmatprep.subr.bf16.mxu0 0
      %1765 = vmatpush1.bf16.msra.mxu0 %v1746
      %1766 = vmatprep.subr.bf16.mxu0 0
      %1767 = vmatpush1.bf16.msra.mxu0 %v1747
      %1768 = vmatprep.subr.bf16.mxu0 0
      %1769 = vmatpush1.bf16.msra.mxu0 %v1748
      %1770 = vmatprep.subr.bf16.mxu0 0
      %1771 = vmatpush1.bf16.msra.mxu0 %v1749
      %1772 = vmatprep.subr.bf16.mxu0 0
      %1773 = vmatpush1.bf16.msra.mxu0 %v1750
      %1774 = vmatprep.subr.bf16.mxu0 0
      %1775 = vmatpush1.bf16.msra.mxu0 %v1751
      %1776 = vmatprep.subr.bf16.mxu0 0
      %1777 = vmatpush1.bf16.msra.mxu0 0
      %1778 = vmatprep.subr.bf16.mxu0 0
      %1779 = vmatpush1.bf16.msra.mxu0 0
      %1780 = vmatprep.subr.bf16.mxu0 0
      %1781 = vmatpush1.bf16.msra.mxu0 0
      %1782 = vmatprep.subr.bf16.mxu0 0
      %1783 = vmatpush1.bf16.msra.mxu0 0
      %1784 = vmatprep.subr.bf16.mxu0 0
      %1785 = vmatpush1.bf16.msra.mxu0 0
      %1786 = vmatprep.subr.bf16.mxu0 0
      %1787 = vmatpush1.bf16.msra.mxu0 0
      %1788 = vmatprep.subr.bf16.mxu0 0
      %1789 = vmatpush1.bf16.msra.mxu0 0
      %1790 = vmatprep.subr.bf16.mxu0 0
      %1791 = vmatpush1.bf16.msra.mxu0 0
      %1792 = vmatprep.mubr.bf16.mxu0 0
      %1793 = vmatmul.mubr.bf16.gmra.mrb[0].mxu0 %v1710
      %v1794 = vpop.f32.mrb[0].mxu0
      %v1795 = vadd.f32 0.0, %v1794
      %v1796 = vpop.f32.mrb[0].mxu0
      %v1797 = vpop.f32.mrb[0].mxu0
      %v1798 = vadd.f32 0.0, %v1797
      %v1799 = vpop.f32.mrb[0].mxu0
      %1800 = vdwg.mxu0
      %v1801 = vadd.f32 %v1677, %v1795
      %v1802 = vadd.f32 %v1678, %v1798
      %s1803 = scalar_lea.vmem %s3, 832
      %v1804 = vld [vmem:[%s1803] sm:$0xf]
      %v1805 = vld [vmem:[%s1803 + $0x4] sm:$0xf]
      %v1806 = vld [vmem:[%s1803 + $0x8] sm:$0xf]
      %v1807 = vld [vmem:[%s1803 + $0xc] sm:$0xf]
      %v1808 = vld [vmem:[%s1803 + $0x10] sm:$0xf]
      %v1809 = vld [vmem:[%s1803 + $0x14] sm:$0xf]
      %v1810 = vld [vmem:[%s1803 + $0x18] sm:$0xf]
      %v1811 = vld [vmem:[%s1803 + $0x1c] sm:$0xf]
      %v1812 = vld [vmem:[%s1803 + $0x20] sm:$0xf]
      %v1813 = vld [vmem:[%s1803 + $0x24] sm:$0xf]
      %v1814 = vld [vmem:[%s1803 + $0x28] sm:$0xf]
      %v1815 = vld [vmem:[%s1803 + $0x2c] sm:$0xf]
      %v1816 = vld [vmem:[%s1803 + $0x30] sm:$0xf]
      %v1817 = vld [vmem:[%s1803 + $0x34] sm:$0xf]
      %v1818 = vld [vmem:[%s1803 + $0x38] sm:$0xf]
      %v1819 = vld [vmem:[%s1803 + $0x3c] sm:$0xf]
      %v1836 = vunpack.c.l.b16 %v1804
      %v1837 = vunpack.c.l.b16 %v1805
      %v1838 = vunpack.c.l.b16 %v1806
      %v1839 = vunpack.c.l.b16 %v1807
      %v1840 = vunpack.c.l.b16 %v1808
      %v1841 = vunpack.c.l.b16 %v1809
      %v1842 = vunpack.c.l.b16 %v1810
      %v1843 = vunpack.c.l.b16 %v1811
      %v1844 = vunpack.c.l.b16 %v1812
      %v1845 = vunpack.c.l.b16 %v1813
      %v1846 = vunpack.c.l.b16 %v1814
      %v1847 = vunpack.c.l.b16 %v1815
      %v1848 = vunpack.c.l.b16 %v1816
      %v1849 = vunpack.c.l.b16 %v1817
      %v1850 = vunpack.c.l.b16 %v1818
      %v1851 = vunpack.c.l.b16 %v1819
      %v1852 = vpack.c.b16 %v1837, %v1836
      %v1853 = vpack.c.b16 %v1839, %v1838
      %v1854 = vpack.c.b16 %v1841, %v1840
      %v1855 = vpack.c.b16 %v1843, %v1842
      %v1856 = vpack.c.b16 %v1845, %v1844
      %v1857 = vpack.c.b16 %v1847, %v1846
      %v1858 = vpack.c.b16 %v1849, %v1848
      %v1859 = vpack.c.b16 %v1851, %v1850
      %1868 = vmatprep.subr.bf16.mxu0 0
      %1869 = vmatpush1.bf16.msra.mxu0 %v1852
      %1870 = vmatprep.subr.bf16.mxu0 0
      %1871 = vmatpush1.bf16.msra.mxu0 %v1853
      %1872 = vmatprep.subr.bf16.mxu0 0
      %1873 = vmatpush1.bf16.msra.mxu0 %v1854
      %1874 = vmatprep.subr.bf16.mxu0 0
      %1875 = vmatpush1.bf16.msra.mxu0 %v1855
      %1876 = vmatprep.subr.bf16.mxu0 0
      %1877 = vmatpush1.bf16.msra.mxu0 %v1856
      %1878 = vmatprep.subr.bf16.mxu0 0
      %1879 = vmatpush1.bf16.msra.mxu0 %v1857
      %1880 = vmatprep.subr.bf16.mxu0 0
      %1881 = vmatpush1.bf16.msra.mxu0 %v1858
      %1882 = vmatprep.subr.bf16.mxu0 0
      %1883 = vmatpush1.bf16.msra.mxu0 %v1859
      %1884 = vmatprep.subr.bf16.mxu0 0
      %1885 = vmatpush1.bf16.msra.mxu0 0
      %1886 = vmatprep.subr.bf16.mxu0 0
      %1887 = vmatpush1.bf16.msra.mxu0 0
      %1888 = vmatprep.subr.bf16.mxu0 0
      %1889 = vmatpush1.bf16.msra.mxu0 0
      %1890 = vmatprep.subr.bf16.mxu0 0
      %1891 = vmatpush1.bf16.msra.mxu0 0
      %1892 = vmatprep.subr.bf16.mxu0 0
      %1893 = vmatpush1.bf16.msra.mxu0 0
      %1894 = vmatprep.subr.bf16.mxu0 0
      %1895 = vmatpush1.bf16.msra.mxu0 0
      %1896 = vmatprep.subr.bf16.mxu0 0
      %1897 = vmatpush1.bf16.msra.mxu0 0
      %1898 = vmatprep.subr.bf16.mxu0 0
      %1899 = vmatpush1.bf16.msra.mxu0 0
      %1900 = vmatprep.mubr.bf16.mxu0 0
      %1901 = vmatmul.mubr.bf16.gmra.mrb[0].mxu0 %v1680
      %v1902 = vpop.f32.mrb[0].mxu0
      %v1903 = vadd.f32 0.0, %v1902
      %v1904 = vpop.f32.mrb[0].mxu0
      %v1905 = vpop.f32.mrb[0].mxu0
      %v1906 = vadd.f32 0.0, %v1905
      %v1907 = vpop.f32.mrb[0].mxu0
      %1908 = vdwg.mxu0
      %v1909 = vadd.f32 %v1801, %v1903
      %v1910 = vadd.f32 %v1802, %v1906
      %v1911 = vld [vmem:[#allocation2 + $0x8] sm:$0x3f]
      %s1912 = scalar_lea.vmem %s3, 896
      %v1913 = vld [vmem:[%s1912] sm:$0xf]
      %v1914 = vld [vmem:[%s1912 + $0x4] sm:$0xf]
      %v1915 = vld [vmem:[%s1912 + $0x8] sm:$0xf]
      %v1916 = vld [vmem:[%s1912 + $0xc] sm:$0xf]
      %v1917 = vld [vmem:[%s1912 + $0x10] sm:$0xf]
      %v1918 = vld [vmem:[%s1912 + $0x14] sm:$0xf]
      %v1919 = vld [vmem:[%s1912 + $0x18] sm:$0xf]
      %v1920 = vld [vmem:[%s1912 + $0x1c] sm:$0xf]
      %v1921 = vld [vmem:[%s1912 + $0x20] sm:$0xf]
      %v1922 = vld [vmem:[%s1912 + $0x24] sm:$0xf]
      %v1923 = vld [vmem:[%s1912 + $0x28] sm:$0xf]
      %v1924 = vld [vmem:[%s1912 + $0x2c] sm:$0xf]
      %v1925 = vld [vmem:[%s1912 + $0x30] sm:$0xf]
      %v1926 = vld [vmem:[%s1912 + $0x34] sm:$0xf]
      %v1927 = vld [vmem:[%s1912 + $0x38] sm:$0xf]
      %v1928 = vld [vmem:[%s1912 + $0x3c] sm:$0xf]
      %v1930 = vshrl.u32 %v1911, 16
      %v1932 = vshll.u32 %v1911, 16
      %v1934 = vrot.slane %v1932, 1
      %v1935 = vor.u32 %v1930, %v1934
      %v1953 = vunpack.c.l.b16 %v1913
      %v1954 = vunpack.c.l.b16 %v1914
      %v1955 = vunpack.c.l.b16 %v1915
      %v1956 = vunpack.c.l.b16 %v1916
      %v1957 = vunpack.c.l.b16 %v1917
      %v1958 = vunpack.c.l.b16 %v1918
      %v1959 = vunpack.c.l.b16 %v1919
      %v1960 = vunpack.c.l.b16 %v1920
      %v1961 = vunpack.c.l.b16 %v1921
      %v1962 = vunpack.c.l.b16 %v1922
      %v1963 = vunpack.c.l.b16 %v1923
      %v1964 = vunpack.c.l.b16 %v1924
      %v1965 = vunpack.c.l.b16 %v1925
      %v1966 = vunpack.c.l.b16 %v1926
      %v1967 = vunpack.c.l.b16 %v1927
      %v1968 = vunpack.c.l.b16 %v1928
      %v1969 = vpack.c.b16 %v1954, %v1953
      %v1970 = vpack.c.b16 %v1956, %v1955
      %v1971 = vpack.c.b16 %v1958, %v1957
      %v1972 = vpack.c.b16 %v1960, %v1959
      %v1973 = vpack.c.b16 %v1962, %v1961
      %v1974 = vpack.c.b16 %v1964, %v1963
      %v1975 = vpack.c.b16 %v1966, %v1965
      %v1976 = vpack.c.b16 %v1968, %v1967
      %1985 = vmatprep.subr.bf16.mxu0 0
      %1986 = vmatpush1.bf16.msra.mxu0 %v1969
      %1987 = vmatprep.subr.bf16.mxu0 0
      %1988 = vmatpush1.bf16.msra.mxu0 %v1970
      %1989 = vmatprep.subr.bf16.mxu0 0
      %1990 = vmatpush1.bf16.msra.mxu0 %v1971
      %1991 = vmatprep.subr.bf16.mxu0 0
      %1992 = vmatpush1.bf16.msra.mxu0 %v1972
      %1993 = vmatprep.subr.bf16.mxu0 0
      %1994 = vmatpush1.bf16.msra.mxu0 %v1973
      %1995 = vmatprep.subr.bf16.mxu0 0
      %1996 = vmatpush1.bf16.msra.mxu0 %v1974
      %1997 = vmatprep.subr.bf16.mxu0 0
      %1998 = vmatpush1.bf16.msra.mxu0 %v1975
      %1999 = vmatprep.subr.bf16.mxu0 0
      %2000 = vmatpush1.bf16.msra.mxu0 %v1976
      %2001 = vmatprep.subr.bf16.mxu0 0
      %2002 = vmatpush1.bf16.msra.mxu0 0
      %2003 = vmatprep.subr.bf16.mxu0 0
      %2004 = vmatpush1.bf16.msra.mxu0 0
      %2005 = vmatprep.subr.bf16.mxu0 0
      %2006 = vmatpush1.bf16.msra.mxu0 0
      %2007 = vmatprep.subr.bf16.mxu0 0
      %2008 = vmatpush1.bf16.msra.mxu0 0
      %2009 = vmatprep.subr.bf16.mxu0 0
      %2010 = vmatpush1.bf16.msra.mxu0 0
      %2011 = vmatprep.subr.bf16.mxu0 0
      %2012 = vmatpush1.bf16.msra.mxu0 0
      %2013 = vmatprep.subr.bf16.mxu0 0
      %2014 = vmatpush1.bf16.msra.mxu0 0
      %2015 = vmatprep.subr.bf16.mxu0 0
      %2016 = vmatpush1.bf16.msra.mxu0 0
      %2017 = vmatprep.mubr.bf16.mxu0 0
      %2018 = vmatmul.mubr.bf16.gmra.mrb[0].mxu0 %v1935
      %v2019 = vpop.f32.mrb[0].mxu0
      %v2020 = vadd.f32 0.0, %v2019
      %v2021 = vpop.f32.mrb[0].mxu0
      %v2022 = vpop.f32.mrb[0].mxu0
      %v2023 = vadd.f32 0.0, %v2022
      %v2024 = vpop.f32.mrb[0].mxu0
      %2025 = vdwg.mxu0
      %v2026 = vadd.f32 %v1909, %v2020
      %v2027 = vadd.f32 %v1910, %v2023
      %v2028 = vld [vmem:[#allocation2 + $0x8] sm:$0x3e]
      %s2029 = scalar_lea.vmem %s3, 960
      %v2030 = vld [vmem:[%s2029] sm:$0xf]
      %v2031 = vld [vmem:[%s2029 + $0x4] sm:$0xf]
      %v2032 = vld [vmem:[%s2029 + $0x8] sm:$0xf]
      %v2033 = vld [vmem:[%s2029 + $0xc] sm:$0xf]
      %v2034 = vld [vmem:[%s2029 + $0x10] sm:$0xf]
      %v2035 = vld [vmem:[%s2029 + $0x14] sm:$0xf]
      %v2036 = vld [vmem:[%s2029 + $0x18] sm:$0xf]
      %v2037 = vld [vmem:[%s2029 + $0x1c] sm:$0xf]
      %v2038 = vld [vmem:[%s2029 + $0x20] sm:$0xf]
      %v2039 = vld [vmem:[%s2029 + $0x24] sm:$0xf]
      %v2040 = vld [vmem:[%s2029 + $0x28] sm:$0xf]
      %v2041 = vld [vmem:[%s2029 + $0x2c] sm:$0xf]
      %v2042 = vld [vmem:[%s2029 + $0x30] sm:$0xf]
      %v2043 = vld [vmem:[%s2029 + $0x34] sm:$0xf]
      %v2044 = vld [vmem:[%s2029 + $0x38] sm:$0xf]
      %v2045 = vld [vmem:[%s2029 + $0x3c] sm:$0xf]
      %v2047 = vrot.slane %v2028, 1
      %v2065 = vunpack.c.l.b16 %v2030
      %v2066 = vunpack.c.l.b16 %v2031
      %v2067 = vunpack.c.l.b16 %v2032
      %v2068 = vunpack.c.l.b16 %v2033
      %v2069 = vunpack.c.l.b16 %v2034
      %v2070 = vunpack.c.l.b16 %v2035
      %v2071 = vunpack.c.l.b16 %v2036
      %v2072 = vunpack.c.l.b16 %v2037
      %v2073 = vunpack.c.l.b16 %v2038
      %v2074 = vunpack.c.l.b16 %v2039
      %v2075 = vunpack.c.l.b16 %v2040
      %v2076 = vunpack.c.l.b16 %v2041
      %v2077 = vunpack.c.l.b16 %v2042
      %v2078 = vunpack.c.l.b16 %v2043
      %v2079 = vunpack.c.l.b16 %v2044
      %v2080 = vunpack.c.l.b16 %v2045
      %v2081 = vpack.c.b16 %v2066, %v2065
      %v2082 = vpack.c.b16 %v2068, %v2067
      %v2083 = vpack.c.b16 %v2070, %v2069
      %v2084 = vpack.c.b16 %v2072, %v2071
      %v2085 = vpack.c.b16 %v2074, %v2073
      %v2086 = vpack.c.b16 %v2076, %v2075
      %v2087 = vpack.c.b16 %v2078, %v2077
      %v2088 = vpack.c.b16 %v2080, %v2079
      %2097 = vmatprep.subr.bf16.mxu0 0
      %2098 = vmatpush1.bf16.msra.mxu0 %v2081
      %2099 = vmatprep.subr.bf16.mxu0 0
      %2100 = vmatpush1.bf16.msra.mxu0 %v2082
      %2101 = vmatprep.subr.bf16.mxu0 0
      %2102 = vmatpush1.bf16.msra.mxu0 %v2083
      %2103 = vmatprep.subr.bf16.mxu0 0
      %2104 = vmatpush1.bf16.msra.mxu0 %v2084
      %2105 = vmatprep.subr.bf16.mxu0 0
      %2106 = vmatpush1.bf16.msra.mxu0 %v2085
      %2107 = vmatprep.subr.bf16.mxu0 0
      %2108 = vmatpush1.bf16.msra.mxu0 %v2086
      %2109 = vmatprep.subr.bf16.mxu0 0
      %2110 = vmatpush1.bf16.msra.mxu0 %v2087
      %2111 = vmatprep.subr.bf16.mxu0 0
      %2112 = vmatpush1.bf16.msra.mxu0 %v2088
      %2113 = vmatprep.subr.bf16.mxu0 0
      %2114 = vmatpush1.bf16.msra.mxu0 0
      %2115 = vmatprep.subr.bf16.mxu0 0
      %2116 = vmatpush1.bf16.msra.mxu0 0
      %2117 = vmatprep.subr.bf16.mxu0 0
      %2118 = vmatpush1.bf16.msra.mxu0 0
      %2119 = vmatprep.subr.bf16.mxu0 0
      %2120 = vmatpush1.bf16.msra.mxu0 0
      %2121 = vmatprep.subr.bf16.mxu0 0
      %2122 = vmatpush1.bf16.msra.mxu0 0
      %2123 = vmatprep.subr.bf16.mxu0 0
      %2124 = vmatpush1.bf16.msra.mxu0 0
      %2125 = vmatprep.subr.bf16.mxu0 0
      %2126 = vmatpush1.bf16.msra.mxu0 0
      %2127 = vmatprep.subr.bf16.mxu0 0
      %2128 = vmatpush1.bf16.msra.mxu0 0
      %2129 = vmatprep.mubr.bf16.mxu0 0
      %2130 = vmatmul.mubr.bf16.gmra.mrb[0].mxu0 %v2047
      %v2131 = vpop.f32.mrb[0].mxu0
      %v2132 = vadd.f32 0.0, %v2131
      %v2133 = vpop.f32.mrb[0].mxu0
      %v2134 = vpop.f32.mrb[0].mxu0
      %v2135 = vadd.f32 0.0, %v2134
      %v2136 = vpop.f32.mrb[0].mxu0
      %2137 = vdwg.mxu0
      %v2138 = vadd.f32 %v2026, %v2132
      %v2139 = vadd.f32 %v2027, %v2135
      %v2140 = vld [vmem:[%s4] sm:$0x1]
      %v2142 = vlaneseq
      %v2143 = vshrl.u32 %v2142, 7
      %v2144 = vsub.s32 0, %v2143
      %v2145 = vrot.slane %v2140, %v2144
      %v2147 = vadd.f32 %v2138, %v2145
      %v2148 = vadd.f32 %v2139, %v2145
      %2149 = vst [vmem:[%s224] sm:$0xff] %v2147
      %2150 = vst [vmem:[%s224 + $0x8] sm:$0x3] %v2148
      %p2151 = scmp.lt.s32.totalorder %s16, 1
      %s2152 = scalar_select %p2151, %s16, 1
      %s2153 = smul.addr %s2152, 2
      %s2154 = smul.addr %s2153, 8
      %s2155 = scalar_lea.vmem %s5, %s2154
      // Predicated region
      $region41: #{_lambda_.9} parent=39 // pred_check
        %p2156 = pneg %p144
      $region42: #{_lambda_.9} parent=39 // pred_check_branch
        %2158 = sbr.rel (%p2156) target = $region44
      $region43: #{_lambda_.9} parent=39 // pred_region
        _
      $region44: #{_lambda_.9} parent=39 // pred_fallthru
        _
    $region40: #{_lambda_.9} parent=5 // pred_fallthru
      _
    %p2159 = scmp.le.s32.totalorder 2, %s11
    // Predicated region
    $region45: #{_lambda_.9} parent=5 // pred_check
      %p2160 = pneg %p2159
    $region46: #{_lambda_.9} parent=5 // pred_check_branch
      %2162 = sbr.rel (%p2160) target = $region48
    $region47: #{_lambda_.9} parent=5 // pred_region
      %s2163 = ssub.s32 %s11, 2
      // Predicated region
      $region49: #{_lambda_.9} parent=47 // pred_check
        %p2164 = pneg %p150
      $region50: #{_lambda_.9} parent=47 // pred_check_branch
        %2166 = sbr.rel (%p2164) target = $region52
      $region51: #{_lambda_.9} parent=47 // pred_region
        %p2167 = scmp.lt.s32.totalorder %s17, 1
        %s2168 = scalar_select %p2167, %s17, 1
        %s2169 = smul.addr %s2168, 2
        %s2170 = smul.addr %s2169, 8
        %s2171 = scalar_lea.vmem %s5, %s2170
      $region52: #{_lambda_.9} parent=47 // pred_fallthru
        _
    $region48: #{_lambda_.9} parent=5 // pred_fallthru
      _
  $region6: #{_lambda_.9} parent=0 // loop_footer
    %s15 = sadd.s32 1, %s11
  $region7: #{_lambda_.9} parent=0 // loop_footer_branch
    %10 = sbr.rel target = $region3
  $region8: #{_lambda_.9} parent=0 // loop_exit
    _

</llo_original>
